<compile_context>
chip_gen: v5e
topology: v5e:2x2
jax: 0.10.0
libtpu: 0.0.40
codegen_flags: <defaults>
</compile_context>

<pallas_src>
import functools

import jax
import jax.numpy as jnp
from jax.experimental import pallas as pl
from jax.experimental.pallas import tpu as pltpu

VGG11_CFG = [64, "M", 128, "M", 256, 256, "M", 512, 512, "M", 512, 512, "M"]

# 48 MiB: fits v7x's 64 MiB physical VMEM with pipeliner headroom; fine on v5e/v6e too.
_VMEM_LIMIT = 48 * 1024 * 1024


# ---------------------------------------------------------------------------
# Pallas kernel: fused  out = relu?(x @ w + b)  with K-axis accumulation into o_ref
#   x, w are bf16; accumulation and output are f32 (no VMEM scratch needed).
# ---------------------------------------------------------------------------
def _matmul_bias_kernel(x_ref, w_ref, b_ref, o_ref, *, apply_relu):
    k = pl.program_id(1)

    @pl.when(k == 0)
    def _():
        o_ref[...] = jnp.zeros_like(o_ref)

    o_ref[...] += jnp.dot(x_ref[...], w_ref[...],
                          preferred_element_type=jnp.float32)

    @pl.when(k == pl.num_programs(1) - 1)
    def _():
        r = o_ref[...] + b_ref[...]
        if apply_relu:
            r = jnp.maximum(r, 0.0)
        o_ref[...] = r


def _pick_k_tile(k, max_tile=2048):
    """Largest multiple-of-128 divisor of k that is <= max_tile (else full k)."""
    if k <= max_tile:
        return k
    if k % 128 == 0:
        for t in range(max_tile - (max_tile % 128), 0, -128):
            if k % t == 0:
                return t
    return k


def linear_pallas(x, w, b, *, apply_relu):
    """x: (M, K), w: (K, N) [cast to bf16], b: (N,) f32 -> (M, N) f32."""
    x = x.astype(jnp.bfloat16)
    w = w.astype(jnp.bfloat16)
    m, k = x.shape
    k2, n = w.shape
    assert k == k2
    tk = _pick_k_tile(k)          # <=2048 keeps double-buffered bf16 weight tiles small (v5e)
    tn = 512 if (n % 512 == 0) else n
    grid = (n // tn, k // tk)
    b2 = b.reshape(1, n).astype(jnp.float32)

    return pl.pallas_call(
        functools.partial(_matmul_bias_kernel, apply_relu=apply_relu),
        out_shape=jax.ShapeDtypeStruct((m, n), jnp.float32),
        grid_spec=pltpu.PrefetchScalarGridSpec(
            num_scalar_prefetch=0,
            grid=grid,
            in_specs=[
                pl.BlockSpec((m, tk), lambda ni, ki: (0, ki)),
                pl.BlockSpec((tk, tn), lambda ni, ki: (ki, ni)),
                pl.BlockSpec((1, tn), lambda ni, ki: (0, ni)),
            ],
            out_specs=pl.BlockSpec((m, tn), lambda ni, ki: (0, ni)),
        ),
        compiler_params=pltpu.CompilerParams(
            dimension_semantics=("parallel", "arbitrary"),
            vmem_limit_bytes=_VMEM_LIMIT,
        ),
    )(x, w, b2)


# ---------------------------------------------------------------------------
# Pallas kernel: 2x2/stride-2 max-pool, single read of x.
# Wrapper reshapes x (free, row-major) to (N, H/2, 2, W/2, 2C); the kernel reduces the
# row pair by indexing the outer "2" axis and the column pair by two lane slices.
# ---------------------------------------------------------------------------
def _maxpool_kernel(x_ref, o_ref, *, c):
    a = jnp.maximum(x_ref[:, 0, :, :], x_ref[:, 1, :, :])      # (h2, w2, 2c)
    o_ref[...] = jnp.maximum(a[:, :, :c], a[:, :, c:])


def maxpool2x2_pallas(x):
    """x: (N, H, W, C) -> (N, H//2, W//2, C), PyTorch MaxPool2d(2, 2)."""
    n, h, w, c = x.shape
    h2, w2 = h // 2, w // 2
    xr = x.reshape(n, h2, 2, w2, 2 * c)     # zero-copy reshape (row-major contiguous)
    return pl.pallas_call(
        functools.partial(_maxpool_kernel, c=c),
        out_shape=jax.ShapeDtypeStruct((n, h2, w2, c), x.dtype),
        grid_spec=pltpu.PrefetchScalarGridSpec(
            num_scalar_prefetch=0,
            grid=(n,),
            in_specs=[pl.BlockSpec((None, h2, 2, w2, 2 * c),
                                   lambda b_: (b_, 0, 0, 0, 0))],
            out_specs=pl.BlockSpec((None, h2, w2, c), lambda b_: (b_, 0, 0, 0)),
        ),
        compiler_params=pltpu.CompilerParams(
            dimension_semantics=("parallel",),
            vmem_limit_bytes=_VMEM_LIMIT,
        ),
    )(xr)


# ---------------------------------------------------------------------------
# Pallas kernel: fused 3x3 conv (pad=1, stride=1) + bias + ReLU.
# The zero-padded image is flattened to rows ((H+3)*(W+2), Cin); each of the 9 kernel taps
# is then a *contiguous* shifted row window, so the conv is 9 small GEMM accumulations done
# entirely in VMEM ("in-register im2col").  Output rows are on a width-(W+2) raster; the two
# junk columns per row are sliced off in the wrapper.
# ---------------------------------------------------------------------------
def _conv3x3_kernel(xq_ref, w_ref, b_ref, o_ref, *, wp, cin, n_rows):
    acc = jnp.zeros((n_rows, o_ref.shape[-1]), jnp.float32)
    for t in range(9):
        dy, dx = t // 3, t % 3
        off = dy * wp + dx
        lhs = xq_ref[pl.ds(off, n_rows), :]          # (n_rows, cin) bf16, static shift
        rhs = w_ref[pl.ds(t * cin, cin), :]          # (cin, cout)  bf16
        acc = acc + jnp.dot(lhs, rhs, preferred_element_type=jnp.float32)
    out = jnp.maximum(acc + b_ref[...], 0.0)
    o_ref[...] = out.astype(o_ref.dtype)


def conv3x3_relu_pallas(x, w_mat, b):
    """x: (N, H, W, Cin) bf16; w_mat: (9*Cin, Cout) bf16 (tap-major); b: (Cout,) f32."""
    x = x.astype(jnp.bfloat16)
    n, h, w, cin = x.shape
    cout = w_mat.shape[1]
    wp = w + 2
    # pad 1 left/right/top, 2 bottom (extra row keeps the shifted flat windows in bounds)
    xp = jnp.pad(x, ((0, 0), (1, 2), (1, 1), (0, 0)))
    xq = xp.reshape(n, (h + 3) * wp, cin)            # zero-copy reshape
    n_rows = h * wp
    b2 = b.reshape(1, cout).astype(jnp.float32)

    out = pl.pallas_call(
        functools.partial(_conv3x3_kernel, wp=wp, cin=cin, n_rows=n_rows),
        out_shape=jax.ShapeDtypeStruct((n, n_rows, cout), jnp.bfloat16),
        grid_spec=pltpu.PrefetchScalarGridSpec(
            num_scalar_prefetch=0,
            grid=(n,),
            in_specs=[
                pl.BlockSpec((None, (h + 3) * wp, cin), lambda b_: (b_, 0, 0)),
                pl.BlockSpec((9 * cin, cout), lambda b_: (0, 0)),
                pl.BlockSpec((1, cout), lambda b_: (0, 0)),
            ],
            out_specs=pl.BlockSpec((None, n_rows, cout), lambda b_: (b_, 0, 0)),
        ),
        compiler_params=pltpu.CompilerParams(
            dimension_semantics=("parallel",),
            vmem_limit_bytes=_VMEM_LIMIT,
        ),
    )(xq, w_mat, b2)
    # TODO(synk): conv1's 64-wide output block still uses masked stores; padding Cout to 128
    # would make it lane-dense but the layer is tiny here.
    return out.reshape(n, h, wp, cout)[:, :, :w, :]   # drop the 2 junk columns per row


# ---------------------------------------------------------------------------
# AdaptiveAvgPool2d((7,7)) — general path only (the 1x1 case is folded into fc1 below).
# ---------------------------------------------------------------------------
def adaptive_avg_pool_7x7(x):
    """x: (N, H, W, C) f32 -> (N, 7, 7, C)."""
    n, h, w, c = x.shape
    oh = ow = 7
    if h % oh == 0 and w % ow == 0:
        return x.reshape(n, oh, h // oh, ow, w // ow, c).mean(axis=(2, 4))
    rows = []
    for i in range(oh):
        hs, he = (i * h) // oh, -(-((i + 1) * h) // oh)
        cols = []
        for j in range(ow):
            ws, we = (j * w) // ow, -(-((j + 1) * w) // ow)
            cols.append(jnp.mean(x[:, hs:he, ws:we, :], axis=(1, 2)))
        rows.append(jnp.stack(cols, axis=1))
    return jnp.stack(rows, axis=1)


# ---------------------------------------------------------------------------
# Parameter init (deterministic, synthetic) and full forward pass
# ---------------------------------------------------------------------------
def init_params(key, num_classes):
    params = {"convs": [], "fcs": []}
    cin = 3
    for v in VGG11_CFG:
        if v == "M":
            continue
        key, k1, k2 = jax.random.split(key, 3)
        # torch layout (Cout, Cin, 3, 3) -> GEMM layout (9*Cin, Cout), tap-major / channel-minor
        w = jax.random.normal(k1, (v, cin, 3, 3), jnp.float32) * (2.0 / (cin * 9)) ** 0.5
        b = jax.random.normal(k2, (v,), jnp.float32) * 0.01
        w_mat = jnp.transpose(w, (2, 3, 1, 0)).reshape(9 * cin, v).astype(jnp.bfloat16)
        params["convs"].append((w_mat, b))
        cin = v

    fcs = []
    for din, dout in [(512 * 7 * 7, 4096), (4096, 4096), (4096, num_classes)]:
        key, k1, k2 = jax.random.split(key, 3)
        w = jax.random.normal(k1, (din, dout), jnp.float32) * (2.0 / din) ** 0.5
        b = jax.random.normal(k2, (dout,), jnp.float32) * 0.01
        fcs.append((w, b))
    (w1, b1), (w2, b2), (w3, b3) = fcs
    # Pre-sum the 49 avg-pool-replicated K rows of fc1 (done once in f32): exact whenever the
    # feature map entering AdaptiveAvgPool2d((7,7)) is 1x1 (the case for 32x32 inputs).
    w1_pool = w1.reshape(512, 49, -1).sum(axis=1).astype(jnp.bfloat16)
    params["fcs"] = [
        (w1.astype(jnp.bfloat16), w1_pool, b1),
        (w2.astype(jnp.bfloat16), b2),
        (w3.astype(jnp.bfloat16), b3),
    ]
    return params


def sliding_window_cnn_forward(x_nchw, params):
    x = jnp.transpose(x_nchw, (0, 2, 3, 1)).astype(jnp.bfloat16)   # NCHW -> NHWC, bf16 activ.
    ci = 0
    for v in VGG11_CFG:
        if v == "M":
            x = maxpool2x2_pallas(x)
        else:
            w_mat, b = params["convs"][ci]
            ci += 1
            x = conv3x3_relu_pallas(x, w_mat, b)

    n, h, w, c = x.shape
    (w1, w1_pool, b1), (w2, b2), (w3, b3) = params["fcs"]
    if h == 1 and w == 1:
        # AdaptiveAvgPool2d((7,7)) of a 1x1 map just replicates each channel 49x in the
        # NCHW flatten, so fc1 with the pre-summed weight is algebraically exact.
        feats = x.reshape(n, c)
        x = linear_pallas(feats, w1_pool, b1, apply_relu=True)
    else:
        x = adaptive_avg_pool_7x7(x.astype(jnp.float32))                    # (N, 7, 7, 512)
        x = jnp.transpose(x, (0, 3, 1, 2)).reshape(n, -1)                   # torch.flatten(NCHW, 1)
        x = linear_pallas(x, w1, b1, apply_relu=True)
    # Dropout: eval-mode identity.
    # TODO(synk): train-mode stochastic Dropout not implemented (no PRNG state requested).
    x = linear_pallas(x, w2, b2, apply_relu=True)
    x = linear_pallas(x, w3, b3, apply_relu=False)
    return x


if __name__ == "__main__":
    key = jax.random.PRNGKey(0)
    key, k_x, k_p = jax.random.split(key, 3)

    batch, in_ch, spatial, num_classes = 2, 3, 32, 10
    x = jax.random.normal(k_x, (batch, in_ch, spatial, spatial), jnp.float32)  # NCHW like PyTorch
    params = init_params(k_p, num_classes)

    out = sliding_window_cnn_forward(x, params)
    out = jax.block_until_ready(out)

    assert out.shape == (batch, num_classes), out.shape
    assert bool(jnp.all(jnp.isfinite(out)))
    print("KERNEL_OK")
</pallas_src>

<mosaic_0001>
module attributes {stable_mosaic.version = 11 : i64} {
  func.func @_conv3x3_kernel(%arg0: i32, %arg1: memref<1x1190x3xbf16, #tpu.memory_space<vmem>>, %arg2: memref<27x64xbf16, #tpu.memory_space<vmem>>, %arg3: memref<1x64xf32, #tpu.memory_space<vmem>>, %arg4: memref<1x1088x64xbf16, #tpu.memory_space<vmem>>) attributes {dimension_semantics = [#tpu.dimension_semantics<parallel>], iteration_bounds = array<i64: 2>, scalar_prefetch = 0 : i64, scratch_operands = 0 : i64, tpu.core_type = #tpu.core_type<tc>, window_params = [{transform_indices = @transform_0, window_bounds = array<i64: 1, 1190, 3>}, {pipeline_mode = #tpu.pipeline_mode<synchronous>, transform_indices = @transform_1, window_bounds = array<i64: 27, 64>}, {pipeline_mode = #tpu.pipeline_mode<synchronous>, transform_indices = @transform_2, window_bounds = array<i64: 1, 64>}, {transform_indices = @transform_3, window_bounds = array<i64: 1, 1088, 64>}]} {
    %cst = arith.constant 0.000000e+00 : f32
    %0 = vector.broadcast %cst : f32 to vector<1088x64xf32>
    %c0 = arith.constant 0 : index
    %c0_0 = arith.constant 0 : index
    %c0_1 = arith.constant 0 : index
    %1 = vector.load %arg1[%c0, %c0_0, %c0_1] : memref<1x1190x3xbf16, #tpu.memory_space<vmem>>, vector<1x1088x3xbf16>
    %2 = vector.shape_cast %1 : vector<1x1088x3xbf16> to vector<1088x3xbf16>
    %c0_2 = arith.constant 0 : index
    %c0_3 = arith.constant 0 : index
    %3 = vector.load %arg2[%c0_2, %c0_3] : memref<27x64xbf16, #tpu.memory_space<vmem>>, vector<3x64xbf16>
    %cst_4 = arith.constant dense<0.000000e+00> : vector<1088x64xf32>
    %4 = tpu.matmul %2, %3, %cst_4 {dimension_numbers = #tpu.dot_dimension_numbers<[1], [0], [0], [1], [0, 0, 1, 1], [], []>} : vector<1088x3xbf16>, vector<3x64xbf16>, vector<1088x64xf32> -> vector<1088x64xf32>
    %5 = arith.addf %0, %4 : vector<1088x64xf32>
    %c0_5 = arith.constant 0 : index
    %c1 = arith.constant 1 : index
    %c0_6 = arith.constant 0 : index
    %6 = vector.load %arg1[%c0_5, %c1, %c0_6] : memref<1x1190x3xbf16, #tpu.memory_space<vmem>>, vector<1x1088x3xbf16>
    %7 = vector.shape_cast %6 : vector<1x1088x3xbf16> to vector<1088x3xbf16>
    %c3 = arith.constant 3 : index
    %c0_7 = arith.constant 0 : index
    %8 = vector.load %arg2[%c3, %c0_7] : memref<27x64xbf16, #tpu.memory_space<vmem>>, vector<3x64xbf16>
    %cst_8 = arith.constant dense<0.000000e+00> : vector<1088x64xf32>
    %9 = tpu.matmul %7, %8, %cst_8 {dimension_numbers = #tpu.dot_dimension_numbers<[1], [0], [0], [1], [0, 0, 1, 1], [], []>} : vector<1088x3xbf16>, vector<3x64xbf16>, vector<1088x64xf32> -> vector<1088x64xf32>
    %10 = arith.addf %5, %9 : vector<1088x64xf32>
    %c0_9 = arith.constant 0 : index
    %c2 = arith.constant 2 : index
    %c0_10 = arith.constant 0 : index
    %11 = vector.load %arg1[%c0_9, %c2, %c0_10] : memref<1x1190x3xbf16, #tpu.memory_space<vmem>>, vector<1x1088x3xbf16>
    %12 = vector.shape_cast %11 : vector<1x1088x3xbf16> to vector<1088x3xbf16>
    %c6 = arith.constant 6 : index
    %c0_11 = arith.constant 0 : index
    %13 = vector.load %arg2[%c6, %c0_11] : memref<27x64xbf16, #tpu.memory_space<vmem>>, vector<3x64xbf16>
    %cst_12 = arith.constant dense<0.000000e+00> : vector<1088x64xf32>
    %14 = tpu.matmul %12, %13, %cst_12 {dimension_numbers = #tpu.dot_dimension_numbers<[1], [0], [0], [1], [0, 0, 1, 1], [], []>} : vector<1088x3xbf16>, vector<3x64xbf16>, vector<1088x64xf32> -> vector<1088x64xf32>
    %15 = arith.addf %10, %14 : vector<1088x64xf32>
    %c0_13 = arith.constant 0 : index
    %c34 = arith.constant 34 : index
    %c0_14 = arith.constant 0 : index
    %16 = vector.load %arg1[%c0_13, %c34, %c0_14] : memref<1x1190x3xbf16, #tpu.memory_space<vmem>>, vector<1x1088x3xbf16>
    %17 = vector.shape_cast %16 : vector<1x1088x3xbf16> to vector<1088x3xbf16>
    %c9 = arith.constant 9 : index
    %c0_15 = arith.constant 0 : index
    %18 = vector.load %arg2[%c9, %c0_15] : memref<27x64xbf16, #tpu.memory_space<vmem>>, vector<3x64xbf16>
    %cst_16 = arith.constant dense<0.000000e+00> : vector<1088x64xf32>
    %19 = tpu.matmul %17, %18, %cst_16 {dimension_numbers = #tpu.dot_dimension_numbers<[1], [0], [0], [1], [0, 0, 1, 1], [], []>} : vector<1088x3xbf16>, vector<3x64xbf16>, vector<1088x64xf32> -> vector<1088x64xf32>
    %20 = arith.addf %15, %19 : vector<1088x64xf32>
    %c0_17 = arith.constant 0 : index
    %c35 = arith.constant 35 : index
    %c0_18 = arith.constant 0 : index
    %21 = vector.load %arg1[%c0_17, %c35, %c0_18] : memref<1x1190x3xbf16, #tpu.memory_space<vmem>>, vector<1x1088x3xbf16>
    %22 = vector.shape_cast %21 : vector<1x1088x3xbf16> to vector<1088x3xbf16>
    %c12 = arith.constant 12 : index
    %c0_19 = arith.constant 0 : index
    %23 = vector.load %arg2[%c12, %c0_19] : memref<27x64xbf16, #tpu.memory_space<vmem>>, vector<3x64xbf16>
    %cst_20 = arith.constant dense<0.000000e+00> : vector<1088x64xf32>
    %24 = tpu.matmul %22, %23, %cst_20 {dimension_numbers = #tpu.dot_dimension_numbers<[1], [0], [0], [1], [0, 0, 1, 1], [], []>} : vector<1088x3xbf16>, vector<3x64xbf16>, vector<1088x64xf32> -> vector<1088x64xf32>
    %25 = arith.addf %20, %24 : vector<1088x64xf32>
    %c0_21 = arith.constant 0 : index
    %c36 = arith.constant 36 : index
    %c0_22 = arith.constant 0 : index
    %26 = vector.load %arg1[%c0_21, %c36, %c0_22] : memref<1x1190x3xbf16, #tpu.memory_space<vmem>>, vector<1x1088x3xbf16>
    %27 = vector.shape_cast %26 : vector<1x1088x3xbf16> to vector<1088x3xbf16>
    %c15 = arith.constant 15 : index
    %c0_23 = arith.constant 0 : index
    %28 = vector.load %arg2[%c15, %c0_23] : memref<27x64xbf16, #tpu.memory_space<vmem>>, vector<3x64xbf16>
    %cst_24 = arith.constant dense<0.000000e+00> : vector<1088x64xf32>
    %29 = tpu.matmul %27, %28, %cst_24 {dimension_numbers = #tpu.dot_dimension_numbers<[1], [0], [0], [1], [0, 0, 1, 1], [], []>} : vector<1088x3xbf16>, vector<3x64xbf16>, vector<1088x64xf32> -> vector<1088x64xf32>
    %30 = arith.addf %25, %29 : vector<1088x64xf32>
    %c0_25 = arith.constant 0 : index
    %c68 = arith.constant 68 : index
    %c0_26 = arith.constant 0 : index
    %31 = vector.load %arg1[%c0_25, %c68, %c0_26] : memref<1x1190x3xbf16, #tpu.memory_space<vmem>>, vector<1x1088x3xbf16>
    %32 = vector.shape_cast %31 : vector<1x1088x3xbf16> to vector<1088x3xbf16>
    %c18 = arith.constant 18 : index
    %c0_27 = arith.constant 0 : index
    %33 = vector.load %arg2[%c18, %c0_27] : memref<27x64xbf16, #tpu.memory_space<vmem>>, vector<3x64xbf16>
    %cst_28 = arith.constant dense<0.000000e+00> : vector<1088x64xf32>
    %34 = tpu.matmul %32, %33, %cst_28 {dimension_numbers = #tpu.dot_dimension_numbers<[1], [0], [0], [1], [0, 0, 1, 1], [], []>} : vector<1088x3xbf16>, vector<3x64xbf16>, vector<1088x64xf32> -> vector<1088x64xf32>
    %35 = arith.addf %30, %34 : vector<1088x64xf32>
    %c0_29 = arith.constant 0 : index
    %c69 = arith.constant 69 : index
    %c0_30 = arith.constant 0 : index
    %36 = vector.load %arg1[%c0_29, %c69, %c0_30] : memref<1x1190x3xbf16, #tpu.memory_space<vmem>>, vector<1x1088x3xbf16>
    %37 = vector.shape_cast %36 : vector<1x1088x3xbf16> to vector<1088x3xbf16>
    %c21 = arith.constant 21 : index
    %c0_31 = arith.constant 0 : index
    %38 = vector.load %arg2[%c21, %c0_31] : memref<27x64xbf16, #tpu.memory_space<vmem>>, vector<3x64xbf16>
    %cst_32 = arith.constant dense<0.000000e+00> : vector<1088x64xf32>
    %39 = tpu.matmul %37, %38, %cst_32 {dimension_numbers = #tpu.dot_dimension_numbers<[1], [0], [0], [1], [0, 0, 1, 1], [], []>} : vector<1088x3xbf16>, vector<3x64xbf16>, vector<1088x64xf32> -> vector<1088x64xf32>
    %40 = arith.addf %35, %39 : vector<1088x64xf32>
    %c0_33 = arith.constant 0 : index
    %c70 = arith.constant 70 : index
    %c0_34 = arith.constant 0 : index
    %41 = vector.load %arg1[%c0_33, %c70, %c0_34] : memref<1x1190x3xbf16, #tpu.memory_space<vmem>>, vector<1x1088x3xbf16>
    %42 = vector.shape_cast %41 : vector<1x1088x3xbf16> to vector<1088x3xbf16>
    %c24 = arith.constant 24 : index
    %c0_35 = arith.constant 0 : index
    %43 = vector.load %arg2[%c24, %c0_35] : memref<27x64xbf16, #tpu.memory_space<vmem>>, vector<3x64xbf16>
    %cst_36 = arith.constant dense<0.000000e+00> : vector<1088x64xf32>
    %44 = tpu.matmul %42, %43, %cst_36 {dimension_numbers = #tpu.dot_dimension_numbers<[1], [0], [0], [1], [0, 0, 1, 1], [], []>} : vector<1088x3xbf16>, vector<3x64xbf16>, vector<1088x64xf32> -> vector<1088x64xf32>
    %45 = arith.addf %40, %44 : vector<1088x64xf32>
    %c0_37 = arith.constant 0 : index
    %c0_38 = arith.constant 0 : index
    %46 = vector.load %arg3[%c0_37, %c0_38] : memref<1x64xf32, #tpu.memory_space<vmem>>, vector<1x64xf32>
    %47 = vector.broadcast %46 : vector<1x64xf32> to vector<1088x64xf32>
    %48 = arith.addf %45, %47 : vector<1088x64xf32>
    %cst_39 = arith.constant 0.000000e+00 : f32
    %49 = vector.broadcast %cst_39 : f32 to vector<1088x64xf32>
    %50 = arith.maximumf %48, %49 : vector<1088x64xf32>
    %51 = arith.truncf %50 : vector<1088x64xf32> to vector<1088x64xbf16>
    %c0_40 = arith.constant 0 : index
    %c0_41 = arith.constant 0 : index
    %c0_42 = arith.constant 0 : index
    %52 = vector.load %arg4[%c0_40, %c0_41, %c0_42] : memref<1x1088x64xbf16, #tpu.memory_space<vmem>>, vector<1x1088x64xbf16>
    %53 = vector.shape_cast %52 : vector<1x1088x64xbf16> to vector<1088x64xbf16>
    %54 = vector.shape_cast %51 : vector<1088x64xbf16> to vector<1x1088x64xbf16>
    tpu.vector_store %arg4[%c0_40, %c0_41, %c0_42], %54 {strides = array<i32>} : memref<1x1088x64xbf16, #tpu.memory_space<vmem>>, vector<1x1088x64xbf16>,
    return
  }
  func.func @transform_0(%arg0: i32) -> (i32, i32, i32) {
    %c0_i32 = arith.constant 0 : i32
    %c0_i32_0 = arith.constant 0 : i32
    %c0_i32_1 = arith.constant 0 : i32
    return %arg0, %c0_i32, %c0_i32_0 : i32, i32, i32
  }
  func.func @transform_1(%arg0: i32) -> (i32, i32) {
    %c0_i32 = arith.constant 0 : i32
    %c0_i32_0 = arith.constant 0 : i32
    %c0_i32_1 = arith.constant 0 : i32
    return %c0_i32, %c0_i32_0 : i32, i32
  }
  func.func @transform_2(%arg0: i32) -> (i32, i32) {
    %c0_i32 = arith.constant 0 : i32
    %c0_i32_0 = arith.constant 0 : i32
    %c0_i32_1 = arith.constant 0 : i32
    return %c0_i32, %c0_i32_0 : i32, i32
  }
  func.func @transform_3(%arg0: i32) -> (i32, i32, i32) {
    %c0_i32 = arith.constant 0 : i32
    %c0_i32_0 = arith.constant 0 : i32
    %c0_i32_1 = arith.constant 0 : i32
    return %arg0, %c0_i32, %c0_i32_0 : i32, i32, i32
  }
}

</mosaic_0001>

<llo_original>
// kernel: tpu_custom_call.1
$region0: #{tpu_custom_call.1}
  #allocation0 [shape = 'u32[]', space=smem, size = 0x4, offset = 0x4, fixed_abs, tag = 'smem constant byte address 0x4 - core index']
  #allocation1 [shape = 'u32[72,128]{1,0:T(1,128)}', space=vmem, size = 0x9000, scoped, tag = 'internal scratch']
  %s0 = inlined_call_operand.vmem [shape: bf16[2,1190,3], index: 0, kind: input, shape index: {}]
  %s1 = inlined_call_operand.vmem [shape: bf16[27,64], index: 1, kind: input, shape index: {}]
  %s2 = inlined_call_operand.vmem [shape: f32[1,64], index: 2, kind: input, shape index: {}]
  %s3 = inlined_call_operand.vmem [shape: bf16[2,1088,64], index: 3, kind: output, shape index: {}]
  %s4 = sld [smem:[#allocation0]]
  $region45: #{tpu_custom_call.1} parent=0
    _
  %s6 = ssub.s32 1, %s4
  %s7 = scalar_select 0, %s6, %s4
  loop: start=0, step=1, limit=4
  $region2: #{tpu_custom_call.1} parent=0 // loop_pre_header
    _
  $region3: #{tpu_custom_call.1} parent=0 // loop_header
    %s9 = sphi 0, %s13
    %p10 = scmp.ge.s32.totalorder %s9, 4
    %s19 = sphi 0, %s21
    %s22 = sphi 0, %s19
    %s23 = sphi 0, %s22
    %s39 = sphi 0, %s23
    %s43 = sphi 0, %s43
    %s45 = sphi 0, %s43
    %s46 = sphi 0, %s45
    %s60 = sphi 0, %s46
    %s64 = sphi 0, %s64
    %s66 = sphi 0, %s64
    %s67 = sphi 0, %s66
    %s81 = sphi 0, %s67
    %s87 = sphi 0, %s89
    %s90 = sphi 0, %s87
    %s91 = sphi 0, %s90
    %s107 = sphi 0, %s91
  $region4: #{tpu_custom_call.1} parent=0 // loop_header_branch
    %12 = sbr.rel (%p10) target = $region8
  $region5: #{tpu_custom_call.1} parent=0 // loop_body
    %s14 = ssub.s32 %s9, 1
    %s15 = ssub.s32 %s9, 2
    %s16 = sadd.s32 %s9, 1
    %s17 = ssub.s32 %s9, %s16
    %p18 = scmp.eq.s32.totalorder %s17, 0
    %s20 = sadd.s32 %s19, 1
    %s21 = scalar_select %p18, %s19, %s20
    %p24 = pneg %p18
    %p25 = scmp.eq.s32.totalorder %s9, 1
    %p26 = por %p24, %p25
    %p27 = scmp.ne.s32.totalorder %s19, %s22
    %p28 = scmp.eq.s32.totalorder %s9, 0
    %p29 = por %p27, %p28
    %p30 = scmp.ne.s32.totalorder %s19, %s22
    %p31 = scmp.eq.s32.totalorder %s14, 1
    %p32 = por %p30, %p31
    %p33 = scmp.ne.s32.totalorder %s22, %s23
    %p34 = scmp.eq.s32.totalorder %s14, 0
    %p35 = por %p33, %p34
    %p36 = scmp.ne.s32.totalorder %s22, %s23
    %p37 = scmp.eq.s32.totalorder %s15, 1
    %p38 = por %p36, %p37
    %p40 = scmp.ne.s32.totalorder %s23, %s39
    %p41 = scmp.eq.s32.totalorder %s15, 0
    %p42 = por %p40, %p41
    %s44 = sadd.s32 %s43, 1
    %p47 = scmp.eq.s32.totalorder %s9, 1
    %p48 = scmp.ne.s32.totalorder %s43, %s45
    %p49 = scmp.eq.s32.totalorder %s9, 0
    %p50 = por %p48, %p49
    %p51 = scmp.ne.s32.totalorder %s43, %s45
    %p52 = scmp.eq.s32.totalorder %s14, 1
    %p53 = por %p51, %p52
    %p54 = scmp.ne.s32.totalorder %s45, %s46
    %p55 = scmp.eq.s32.totalorder %s14, 0
    %p56 = por %p54, %p55
    %p57 = scmp.ne.s32.totalorder %s45, %s46
    %p58 = scmp.eq.s32.totalorder %s15, 1
    %p59 = por %p57, %p58
    %p61 = scmp.ne.s32.totalorder %s46, %s60
    %p62 = scmp.eq.s32.totalorder %s15, 0
    %p63 = por %p61, %p62
    %s65 = sadd.s32 %s64, 1
    %p68 = scmp.eq.s32.totalorder %s9, 1
    %p69 = scmp.ne.s32.totalorder %s64, %s66
    %p70 = scmp.eq.s32.totalorder %s9, 0
    %p71 = por %p69, %p70
    %p72 = scmp.ne.s32.totalorder %s64, %s66
    %p73 = scmp.eq.s32.totalorder %s14, 1
    %p74 = por %p72, %p73
    %p75 = scmp.ne.s32.totalorder %s66, %s67
    %p76 = scmp.eq.s32.totalorder %s14, 0
    %p77 = por %p75, %p76
    %p78 = scmp.ne.s32.totalorder %s66, %s67
    %p79 = scmp.eq.s32.totalorder %s15, 1
    %p80 = por %p78, %p79
    %p82 = scmp.ne.s32.totalorder %s67, %s81
    %p83 = scmp.eq.s32.totalorder %s15, 0
    %p84 = por %p82, %p83
    %s85 = ssub.s32 %s9, %s16
    %p86 = scmp.eq.s32.totalorder %s85, 0
    %s88 = sadd.s32 %s87, 1
    %s89 = scalar_select %p86, %s87, %s88
    %p92 = pneg %p86
    %p93 = scmp.eq.s32.totalorder %s9, 1
    %p94 = por %p92, %p93
    %p95 = scmp.ne.s32.totalorder %s87, %s90
    %p96 = scmp.eq.s32.totalorder %s9, 0
    %p97 = por %p95, %p96
    %p98 = scmp.ne.s32.totalorder %s87, %s90
    %p99 = scmp.eq.s32.totalorder %s14, 1
    %p100 = por %p98, %p99
    %p101 = scmp.ne.s32.totalorder %s90, %s91
    %p102 = scmp.eq.s32.totalorder %s14, 0
    %p103 = por %p101, %p102
    %p104 = scmp.ne.s32.totalorder %s90, %s91
    %p105 = scmp.eq.s32.totalorder %s15, 1
    %p106 = por %p104, %p105
    %p108 = scmp.ne.s32.totalorder %s91, %s107
    %p109 = scmp.eq.s32.totalorder %s15, 0
    %p110 = por %p108, %p109
    %p111 = scmp.le.s32.totalorder 1, %s9
    %p112 = scmp.lt.s32.totalorder %s9, 3
    %p113 = pnand %p111, %p112
    %p114 = pneg %p113
    // Predicated region
    $region9: #{tpu_custom_call.1} parent=5 // pred_check
      _
    $region10: #{tpu_custom_call.1} parent=5 // pred_check_branch
      %116 = sbr.rel (%p113) target = $region12
    $region11: #{tpu_custom_call.1} parent=5 // pred_region
      %s117 = ssub.s32 %s9, 1
      // Predicated region
      $region13: #{tpu_custom_call.1} parent=11 // pred_check
        %p118 = pneg %p56
      $region14: #{tpu_custom_call.1} parent=11 // pred_check_branch
        %120 = sbr.rel (%p118) target = $region16
      $region15: #{tpu_custom_call.1} parent=11 // pred_region
        _
      $region16: #{tpu_custom_call.1} parent=11 // pred_fallthru
        _
      // Predicated region
      $region17: #{tpu_custom_call.1} parent=11 // pred_check
        %p121 = pneg %p77
      $region18: #{tpu_custom_call.1} parent=11 // pred_check_branch
        %123 = sbr.rel (%p121) target = $region20
      $region19: #{tpu_custom_call.1} parent=11 // pred_region
        _
      $region20: #{tpu_custom_call.1} parent=11 // pred_fallthru
        _
    $region12: #{tpu_custom_call.1} parent=5 // pred_fallthru
      _
    %p124 = scmp.lt.s32.totalorder %s9, 2
    // Predicated region
    $region21: #{tpu_custom_call.1} parent=5 // pred_check
      %p125 = pneg %p124
    $region22: #{tpu_custom_call.1} parent=5 // pred_check_branch
      %127 = sbr.rel (%p125) target = $region24
    $region23: #{tpu_custom_call.1} parent=5 // pred_region
      // Predicated region
      $region25: #{tpu_custom_call.1} parent=23 // pred_check
        %p128 = pneg %p29
      $region26: #{tpu_custom_call.1} parent=23 // pred_check_branch
        %130 = sbr.rel (%p128) target = $region28
      $region27: #{tpu_custom_call.1} parent=23 // pred_region
        %p131 = scmp.lt.s32.totalorder %s9, 1
        %s132 = scalar_select %p131, %s9, 1
        %s133 = smul.addr %s132, 149
        %s134 = smul.addr %s133, 4
        %s135 = scalar_lea.vmem %s0, %s134
      $region28: #{tpu_custom_call.1} parent=23 // pred_fallthru
        _
    $region24: #{tpu_custom_call.1} parent=5 // pred_fallthru
      _
    %p136 = scmp.le.s32.totalorder 1, %s9
    %p137 = scmp.lt.s32.totalorder %s9, 3
    %p138 = pnand %p136, %p137
    %p139 = pneg %p138
    // Predicated region
    $region29: #{tpu_custom_call.1} parent=5 // pred_check
      _
    $region30: #{tpu_custom_call.1} parent=5 // pred_check_branch
      %141 = sbr.rel (%p138) target = $region32
    $region31: #{tpu_custom_call.1} parent=5 // pred_region
      %s142 = ssub.s32 %s9, 1
      %p143 = scmp.lt.s32.totalorder %s14, 1
      %s144 = scalar_select %p143, %s14, 1
      %s145 = smul.addr %s144, 149
      %s146 = smul.addr %s145, 4
      %s147 = scalar_lea.vmem %s0, %s146
      %p148 = pneg %p35
      %p149 = pneg %p32
      %p150 = pneg %p56
      %p151 = pneg %p53
      %p152 = pneg %p77
      %p153 = pneg %p74
      %p154 = pneg %p103
      %p155 = pneg %p100
      %p156 = scmp.lt.s32.totalorder %s14, 1
      %s157 = scalar_select %p156, %s14, 1
      %s158 = smul.addr %s157, 136
      %s159 = smul.addr %s158, 4
      %s160 = scalar_lea.vmem %s3, %s159
      %p161 = scmp.lt.s32.totalorder %s14, 1
      %s162 = scalar_select %p161, %s14, 1
      %s163 = smul.addr %s162, 149
      %s164 = smul.addr %s163, 4
      %s165 = scalar_lea.vmem %s0, %s164
      %p166 = scmp.lt.s32.totalorder %s14, 1
      %s167 = scalar_select %p166, %s14, 1
      %s168 = smul.addr %s167, 136
      %s169 = smul.addr %s168, 4
      %s170 = scalar_lea.vmem %s3, %s169
      %v172 = vld [vmem:[%s165] sm:$0xf]
      %v173 = vld [vmem:[%s165 + $0x4] sm:$0xf]
      %v174 = vld [vmem:[%s165 + $0x8] sm:$0xf]
      %v175 = vld [vmem:[%s165 + $0xc] sm:$0xf]
      %v176 = vld [vmem:[%s165 + $0x10] sm:$0xf]
      %v177 = vld [vmem:[%s165 + $0x14] sm:$0xf]
      %v178 = vld [vmem:[%s165 + $0x18] sm:$0xf]
      %v179 = vld [vmem:[%s165 + $0x1c] sm:$0xf]
      %v180 = vld [vmem:[%s165 + $0x20] sm:$0xf]
      %v181 = vld [vmem:[%s165 + $0x24] sm:$0xf]
      %v182 = vld [vmem:[%s165 + $0x28] sm:$0xf]
      %v183 = vld [vmem:[%s165 + $0x2c] sm:$0xf]
      %v184 = vld [vmem:[%s165 + $0x30] sm:$0xf]
      %v185 = vld [vmem:[%s165 + $0x34] sm:$0xf]
      %v186 = vld [vmem:[%s165 + $0x38] sm:$0xf]
      %v187 = vld [vmem:[%s165 + $0x3c] sm:$0xf]
      %v188 = vld [vmem:[%s165 + $0x40] sm:$0xf]
      %v189 = vld [vmem:[%s165 + $0x44] sm:$0xf]
      %v190 = vld [vmem:[%s165 + $0x48] sm:$0xf]
      %v191 = vld [vmem:[%s165 + $0x4c] sm:$0xf]
      %v192 = vld [vmem:[%s165 + $0x50] sm:$0xf]
      %v193 = vld [vmem:[%s165 + $0x54] sm:$0xf]
      %v194 = vld [vmem:[%s165 + $0x58] sm:$0xf]
      %v195 = vld [vmem:[%s165 + $0x5c] sm:$0xf]
      %v196 = vld [vmem:[%s165 + $0x60] sm:$0xf]
      %v197 = vld [vmem:[%s165 + $0x64] sm:$0xf]
      %v198 = vld [vmem:[%s165 + $0x68] sm:$0xf]
      %v199 = vld [vmem:[%s165 + $0x6c] sm:$0xf]
      %v200 = vld [vmem:[%s165 + $0x70] sm:$0xf]
      %v201 = vld [vmem:[%s165 + $0x74] sm:$0xf]
      %v202 = vld [vmem:[%s165 + $0x78] sm:$0xf]
      %v203 = vld [vmem:[%s165 + $0x7c] sm:$0xf]
      %v204 = vld [vmem:[%s165 + $0x80] sm:$0xf]
      %v205 = vld [vmem:[%s165 + $0x84] sm:$0xf]
      %v206 = vld [vmem:[%s165 + $0x88] sm:$0xf]
      %v207 = vld [vmem:[%s165 + $0x8c] sm:$0xf]
      %v208 = vld [vmem:[%s165 + $0x90] sm:$0xf]
      %v209 = vld [vmem:[%s165 + $0x94] sm:$0xf]
      %v210 = vld [vmem:[%s165 + $0x98] sm:$0xf]
      %v211 = vld [vmem:[%s165 + $0x9c] sm:$0xf]
      %v212 = vld [vmem:[%s165 + $0xa0] sm:$0xf]
      %v213 = vld [vmem:[%s165 + $0xa4] sm:$0xf]
      %v214 = vld [vmem:[%s165 + $0xa8] sm:$0xf]
      %v215 = vld [vmem:[%s165 + $0xac] sm:$0xf]
      %v216 = vld [vmem:[%s165 + $0xb0] sm:$0xf]
      %v217 = vld [vmem:[%s165 + $0xb4] sm:$0xf]
      %v218 = vld [vmem:[%s165 + $0xb8] sm:$0xf]
      %v219 = vld [vmem:[%s165 + $0xbc] sm:$0xf]
      %v220 = vld [vmem:[%s165 + $0xc0] sm:$0xf]
      %v221 = vld [vmem:[%s165 + $0xc4] sm:$0xf]
      %v222 = vld [vmem:[%s165 + $0xc8] sm:$0xf]
      %v223 = vld [vmem:[%s165 + $0xcc] sm:$0xf]
      %v224 = vld [vmem:[%s165 + $0xd0] sm:$0xf]
      %v225 = vld [vmem:[%s165 + $0xd4] sm:$0xf]
      %v226 = vld [vmem:[%s165 + $0xd8] sm:$0xf]
      %v227 = vld [vmem:[%s165 + $0xdc] sm:$0xf]
      %v228 = vld [vmem:[%s165 + $0xe0] sm:$0xf]
      %v229 = vld [vmem:[%s165 + $0xe4] sm:$0xf]
      %v230 = vld [vmem:[%s165 + $0xe8] sm:$0xf]
      %v231 = vld [vmem:[%s165 + $0xec] sm:$0xf]
      %v232 = vld [vmem:[%s165 + $0xf0] sm:$0xf]
      %v233 = vld [vmem:[%s165 + $0xf4] sm:$0xf]
      %v234 = vld [vmem:[%s165 + $0xf8] sm:$0xf]
      %v235 = vld [vmem:[%s165 + $0xfc] sm:$0xf]
      %v236 = vld [vmem:[%s165 + $0x100] sm:$0xf]
      %v237 = vld [vmem:[%s165 + $0x104] sm:$0xf]
      %v238 = vld [vmem:[%s165 + $0x108] sm:$0xf]
      %v239 = vld [vmem:[%s165 + $0x10c] sm:$0xf]
      %v240 = vld [vmem:[%s165 + $0x110] sm:$0xf]
      %v241 = vld [vmem:[%s165 + $0x114] sm:$0xf]
      %v242 = vld [vmem:[%s165 + $0x118] sm:$0xf]
      %v243 = vld [vmem:[%s165 + $0x11c] sm:$0xf]
      %v244 = vld [vmem:[%s165 + $0x120] sm:$0xf]
      %v245 = vld [vmem:[%s165 + $0x124] sm:$0xf]
      %v246 = vld [vmem:[%s165 + $0x128] sm:$0xf]
      %v247 = vld [vmem:[%s165 + $0x12c] sm:$0xf]
      %v248 = vld [vmem:[%s165 + $0x130] sm:$0xf]
      %v249 = vld [vmem:[%s165 + $0x134] sm:$0xf]
      %v250 = vld [vmem:[%s165 + $0x138] sm:$0xf]
      %v251 = vld [vmem:[%s165 + $0x13c] sm:$0xf]
      %v252 = vld [vmem:[%s165 + $0x140] sm:$0xf]
      %v253 = vld [vmem:[%s165 + $0x144] sm:$0xf]
      %v254 = vld [vmem:[%s165 + $0x148] sm:$0xf]
      %v255 = vld [vmem:[%s165 + $0x14c] sm:$0xf]
      %v256 = vld [vmem:[%s165 + $0x150] sm:$0xf]
      %v257 = vld [vmem:[%s165 + $0x154] sm:$0xf]
      %v258 = vld [vmem:[%s165 + $0x158] sm:$0xf]
      %v259 = vld [vmem:[%s165 + $0x15c] sm:$0xf]
      %v260 = vld [vmem:[%s165 + $0x160] sm:$0xf]
      %v261 = vld [vmem:[%s165 + $0x164] sm:$0xf]
      %v262 = vld [vmem:[%s165 + $0x168] sm:$0xf]
      %v263 = vld [vmem:[%s165 + $0x16c] sm:$0xf]
      %v264 = vld [vmem:[%s165 + $0x170] sm:$0xf]
      %v265 = vld [vmem:[%s165 + $0x174] sm:$0xf]
      %v266 = vld [vmem:[%s165 + $0x178] sm:$0xf]
      %v267 = vld [vmem:[%s165 + $0x17c] sm:$0xf]
      %v268 = vld [vmem:[%s165 + $0x180] sm:$0xf]
      %v269 = vld [vmem:[%s165 + $0x184] sm:$0xf]
      %v270 = vld [vmem:[%s165 + $0x188] sm:$0xf]
      %v271 = vld [vmem:[%s165 + $0x18c] sm:$0xf]
      %v272 = vld [vmem:[%s165 + $0x190] sm:$0xf]
      %v273 = vld [vmem:[%s165 + $0x194] sm:$0xf]
      %v274 = vld [vmem:[%s165 + $0x198] sm:$0xf]
      %v275 = vld [vmem:[%s165 + $0x19c] sm:$0xf]
      %v276 = vld [vmem:[%s165 + $0x1a0] sm:$0xf]
      %v277 = vld [vmem:[%s165 + $0x1a4] sm:$0xf]
      %v278 = vld [vmem:[%s165 + $0x1a8] sm:$0xf]
      %v279 = vld [vmem:[%s165 + $0x1ac] sm:$0xf]
      %v280 = vld [vmem:[%s165 + $0x1b0] sm:$0xf]
      %v281 = vld [vmem:[%s165 + $0x1b4] sm:$0xf]
      %v282 = vld [vmem:[%s165 + $0x1b8] sm:$0xf]
      %v283 = vld [vmem:[%s165 + $0x1bc] sm:$0xf]
      %v284 = vld [vmem:[%s165 + $0x1c0] sm:$0xf]
      %v285 = vld [vmem:[%s165 + $0x1c4] sm:$0xf]
      %v286 = vld [vmem:[%s165 + $0x1c8] sm:$0xf]
      %v287 = vld [vmem:[%s165 + $0x1cc] sm:$0xf]
      %v288 = vld [vmem:[%s165 + $0x1d0] sm:$0xf]
      %v289 = vld [vmem:[%s165 + $0x1d4] sm:$0xf]
      %v290 = vld [vmem:[%s165 + $0x1d8] sm:$0xf]
      %v291 = vld [vmem:[%s165 + $0x1dc] sm:$0xf]
      %v292 = vld [vmem:[%s165 + $0x1e0] sm:$0xf]
      %v293 = vld [vmem:[%s165 + $0x1e4] sm:$0xf]
      %v294 = vld [vmem:[%s165 + $0x1e8] sm:$0xf]
      %v295 = vld [vmem:[%s165 + $0x1ec] sm:$0xf]
      %v296 = vld [vmem:[%s165 + $0x1f0] sm:$0xf]
      %v297 = vld [vmem:[%s165 + $0x1f4] sm:$0xf]
      %v298 = vld [vmem:[%s165 + $0x1f8] sm:$0xf]
      %v299 = vld [vmem:[%s165 + $0x1fc] sm:$0xf]
      %v300 = vld [vmem:[%s165 + $0x200] sm:$0xf]
      %v301 = vld [vmem:[%s165 + $0x204] sm:$0xf]
      %v302 = vld [vmem:[%s165 + $0x208] sm:$0xf]
      %v303 = vld [vmem:[%s165 + $0x20c] sm:$0xf]
      %v304 = vld [vmem:[%s165 + $0x210] sm:$0xf]
      %v305 = vld [vmem:[%s165 + $0x214] sm:$0xf]
      %v306 = vld [vmem:[%s165 + $0x218] sm:$0xf]
      %v307 = vld [vmem:[%s165 + $0x21c] sm:$0xf]
      %v308 = vld [vmem:[%s1] sm:$0x3]
      %v309 = vld [vmem:[%s165 + $0x220] sm:$0x1]
      %v310 = vld [vmem:[%s1] sm:$0x6]
      %v448 = vunpack.c.l.b16 %v172
      %v449 = vunpack.c.l.b16 %v173
      %v450 = vunpack.c.l.b16 %v174
      %v451 = vunpack.c.l.b16 %v175
      %v452 = vunpack.c.l.b16 %v176
      %v453 = vunpack.c.l.b16 %v177
      %v454 = vunpack.c.l.b16 %v178
      %v455 = vunpack.c.l.b16 %v179
      %v456 = vunpack.c.l.b16 %v180
      %v457 = vunpack.c.l.b16 %v181
      %v458 = vunpack.c.l.b16 %v182
      %v459 = vunpack.c.l.b16 %v183
      %v460 = vunpack.c.l.b16 %v184
      %v461 = vunpack.c.l.b16 %v185
      %v462 = vunpack.c.l.b16 %v186
      %v463 = vunpack.c.l.b16 %v187
      %v464 = vunpack.c.l.b16 %v188
      %v465 = vunpack.c.l.b16 %v189
      %v466 = vunpack.c.l.b16 %v190
      %v467 = vunpack.c.l.b16 %v191
      %v468 = vunpack.c.l.b16 %v192
      %v469 = vunpack.c.l.b16 %v193
      %v470 = vunpack.c.l.b16 %v194
      %v471 = vunpack.c.l.b16 %v195
      %v472 = vunpack.c.l.b16 %v196
      %v473 = vunpack.c.l.b16 %v197
      %v474 = vunpack.c.l.b16 %v198
      %v475 = vunpack.c.l.b16 %v199
      %v476 = vunpack.c.l.b16 %v200
      %v477 = vunpack.c.l.b16 %v201
      %v478 = vunpack.c.l.b16 %v202
      %v479 = vunpack.c.l.b16 %v203
      %v480 = vunpack.c.l.b16 %v204
      %v481 = vunpack.c.l.b16 %v205
      %v482 = vunpack.c.l.b16 %v206
      %v483 = vunpack.c.l.b16 %v207
      %v484 = vunpack.c.l.b16 %v208
      %v485 = vunpack.c.l.b16 %v209
      %v486 = vunpack.c.l.b16 %v210
      %v487 = vunpack.c.l.b16 %v211
      %v488 = vunpack.c.l.b16 %v212
      %v489 = vunpack.c.l.b16 %v213
      %v490 = vunpack.c.l.b16 %v214
      %v491 = vunpack.c.l.b16 %v215
      %v492 = vunpack.c.l.b16 %v216
      %v493 = vunpack.c.l.b16 %v217
      %v494 = vunpack.c.l.b16 %v218
      %v495 = vunpack.c.l.b16 %v219
      %v496 = vunpack.c.l.b16 %v220
      %v497 = vunpack.c.l.b16 %v221
      %v498 = vunpack.c.l.b16 %v222
      %v499 = vunpack.c.l.b16 %v223
      %v500 = vunpack.c.l.b16 %v224
      %v501 = vunpack.c.l.b16 %v225
      %v502 = vunpack.c.l.b16 %v226
      %v503 = vunpack.c.l.b16 %v227
      %v504 = vunpack.c.l.b16 %v228
      %v505 = vunpack.c.l.b16 %v229
      %v506 = vunpack.c.l.b16 %v230
      %v507 = vunpack.c.l.b16 %v231
      %v508 = vunpack.c.l.b16 %v232
      %v509 = vunpack.c.l.b16 %v233
      %v510 = vunpack.c.l.b16 %v234
      %v511 = vunpack.c.l.b16 %v235
      %v512 = vunpack.c.l.b16 %v236
      %v513 = vunpack.c.l.b16 %v237
      %v514 = vunpack.c.l.b16 %v238
      %v515 = vunpack.c.l.b16 %v239
      %v516 = vunpack.c.l.b16 %v240
      %v517 = vunpack.c.l.b16 %v241
      %v518 = vunpack.c.l.b16 %v242
      %v519 = vunpack.c.l.b16 %v243
      %v520 = vunpack.c.l.b16 %v244
      %v521 = vunpack.c.l.b16 %v245
      %v522 = vunpack.c.l.b16 %v246
      %v523 = vunpack.c.l.b16 %v247
      %v524 = vunpack.c.l.b16 %v248
      %v525 = vunpack.c.l.b16 %v249
      %v526 = vunpack.c.l.b16 %v250
      %v527 = vunpack.c.l.b16 %v251
      %v528 = vunpack.c.l.b16 %v252
      %v529 = vunpack.c.l.b16 %v253
      %v530 = vunpack.c.l.b16 %v254
      %v531 = vunpack.c.l.b16 %v255
      %v532 = vunpack.c.l.b16 %v256
      %v533 = vunpack.c.l.b16 %v257
      %v534 = vunpack.c.l.b16 %v258
      %v535 = vunpack.c.l.b16 %v259
      %v536 = vunpack.c.l.b16 %v260
      %v537 = vunpack.c.l.b16 %v261
      %v538 = vunpack.c.l.b16 %v262
      %v539 = vunpack.c.l.b16 %v263
      %v540 = vunpack.c.l.b16 %v264
      %v541 = vunpack.c.l.b16 %v265
      %v542 = vunpack.c.l.b16 %v266
      %v543 = vunpack.c.l.b16 %v267
      %v544 = vunpack.c.l.b16 %v268
      %v545 = vunpack.c.l.b16 %v269
      %v546 = vunpack.c.l.b16 %v270
      %v547 = vunpack.c.l.b16 %v271
      %v548 = vunpack.c.l.b16 %v272
      %v549 = vunpack.c.l.b16 %v273
      %v550 = vunpack.c.l.b16 %v274
      %v551 = vunpack.c.l.b16 %v275
      %v552 = vunpack.c.l.b16 %v276
      %v553 = vunpack.c.l.b16 %v277
      %v554 = vunpack.c.l.b16 %v278
      %v555 = vunpack.c.l.b16 %v279
      %v556 = vunpack.c.l.b16 %v280
      %v557 = vunpack.c.l.b16 %v281
      %v558 = vunpack.c.l.b16 %v282
      %v559 = vunpack.c.l.b16 %v283
      %v560 = vunpack.c.l.b16 %v284
      %v561 = vunpack.c.l.b16 %v285
      %v562 = vunpack.c.l.b16 %v286
      %v563 = vunpack.c.l.b16 %v287
      %v564 = vunpack.c.l.b16 %v288
      %v565 = vunpack.c.l.b16 %v289
      %v566 = vunpack.c.l.b16 %v290
      %v567 = vunpack.c.l.b16 %v291
      %v568 = vunpack.c.l.b16 %v292
      %v569 = vunpack.c.l.b16 %v293
      %v570 = vunpack.c.l.b16 %v294
      %v571 = vunpack.c.l.b16 %v295
      %v572 = vunpack.c.l.b16 %v296
      %v573 = vunpack.c.l.b16 %v297
      %v574 = vunpack.c.l.b16 %v298
      %v575 = vunpack.c.l.b16 %v299
      %v576 = vunpack.c.l.b16 %v300
      %v577 = vunpack.c.l.b16 %v301
      %v578 = vunpack.c.l.b16 %v302
      %v579 = vunpack.c.l.b16 %v303
      %v580 = vunpack.c.l.b16 %v304
      %v581 = vunpack.c.l.b16 %v305
      %v582 = vunpack.c.l.b16 %v306
      %v583 = vunpack.c.l.b16 %v307
      %v584 = vunpack.c.l.b16 %v309
      %v585 = vpack.c.b16 %v449, %v448
      %v586 = vpack.c.b16 %v451, %v450
      %v587 = vpack.c.b16 %v453, %v452
      %v588 = vpack.c.b16 %v455, %v454
      %v589 = vpack.c.b16 %v457, %v456
      %v590 = vpack.c.b16 %v459, %v458
      %v591 = vpack.c.b16 %v461, %v460
      %v592 = vpack.c.b16 %v463, %v462
      %v593 = vpack.c.b16 %v465, %v464
      %v594 = vpack.c.b16 %v467, %v466
      %v595 = vpack.c.b16 %v469, %v468
      %v596 = vpack.c.b16 %v471, %v470
      %v597 = vpack.c.b16 %v473, %v472
      %v598 = vpack.c.b16 %v475, %v474
      %v599 = vpack.c.b16 %v477, %v476
      %v600 = vpack.c.b16 %v479, %v478
      %v601 = vpack.c.b16 %v481, %v480
      %v602 = vpack.c.b16 %v483, %v482
      %v603 = vpack.c.b16 %v485, %v484
      %v604 = vpack.c.b16 %v487, %v486
      %v605 = vpack.c.b16 %v489, %v488
      %v606 = vpack.c.b16 %v491, %v490
      %v607 = vpack.c.b16 %v493, %v492
      %v608 = vpack.c.b16 %v495, %v494
      %v609 = vpack.c.b16 %v497, %v496
      %v610 = vpack.c.b16 %v499, %v498
      %v611 = vpack.c.b16 %v501, %v500
      %v612 = vpack.c.b16 %v503, %v502
      %v613 = vpack.c.b16 %v505, %v504
      %v614 = vpack.c.b16 %v507, %v506
      %v615 = vpack.c.b16 %v509, %v508
      %v616 = vpack.c.b16 %v511, %v510
      %v617 = vpack.c.b16 %v513, %v512
      %v618 = vpack.c.b16 %v515, %v514
      %v619 = vpack.c.b16 %v517, %v516
      %v620 = vpack.c.b16 %v519, %v518
      %v621 = vpack.c.b16 %v521, %v520
      %v622 = vpack.c.b16 %v523, %v522
      %v623 = vpack.c.b16 %v525, %v524
      %v624 = vpack.c.b16 %v527, %v526
      %v625 = vpack.c.b16 %v529, %v528
      %v626 = vpack.c.b16 %v531, %v530
      %v627 = vpack.c.b16 %v533, %v532
      %v628 = vpack.c.b16 %v535, %v534
      %v629 = vpack.c.b16 %v537, %v536
      %v630 = vpack.c.b16 %v539, %v538
      %v631 = vpack.c.b16 %v541, %v540
      %v632 = vpack.c.b16 %v543, %v542
      %v633 = vpack.c.b16 %v545, %v544
      %v634 = vpack.c.b16 %v547, %v546
      %v635 = vpack.c.b16 %v549, %v548
      %v636 = vpack.c.b16 %v551, %v550
      %v637 = vpack.c.b16 %v553, %v552
      %v638 = vpack.c.b16 %v555, %v554
      %v639 = vpack.c.b16 %v557, %v556
      %v640 = vpack.c.b16 %v559, %v558
      %v641 = vpack.c.b16 %v561, %v560
      %v642 = vpack.c.b16 %v563, %v562
      %v643 = vpack.c.b16 %v565, %v564
      %v644 = vpack.c.b16 %v567, %v566
      %v645 = vpack.c.b16 %v569, %v568
      %v646 = vpack.c.b16 %v571, %v570
      %v647 = vpack.c.b16 %v573, %v572
      %v648 = vpack.c.b16 %v575, %v574
      %v649 = vpack.c.b16 %v577, %v576
      %v650 = vpack.c.b16 %v579, %v578
      %v651 = vpack.c.b16 %v581, %v580
      %v652 = vpack.c.b16 %v583, %v582
      %v653 = vpack.c.b16 %v584, %v584
      %vm654 = vsmask.f32 7424
      %v656 = vshrl.u32 %v585, 16
      %v658 = vshll.u32 %v585, 16
      %v660 = vrot.slane %v658, 1
      %v661 = vor.u32 %v656, %v660
      %v663 = vshll.u32 %v586, 16
      %v665 = vrot.slane %v663, 1
      %v666 = vsel %vm654, %v661, %v665
      %v667 = vshrl.u32 %v586, 16
      %v669 = vor.u32 %v667, %v665
      %v671 = vshll.u32 %v587, 16
      %v673 = vrot.slane %v671, 1
      %v674 = vsel %vm654, %v669, %v673
      %v675 = vshrl.u32 %v587, 16
      %v677 = vor.u32 %v675, %v673
      %v679 = vshll.u32 %v588, 16
      %v681 = vrot.slane %v679, 1
      %v682 = vsel %vm654, %v677, %v681
      %v683 = vshrl.u32 %v588, 16
      %v685 = vor.u32 %v683, %v681
      %v687 = vshll.u32 %v589, 16
      %v689 = vrot.slane %v687, 1
      %v690 = vsel %vm654, %v685, %v689
      %v691 = vshrl.u32 %v589, 16
      %v693 = vor.u32 %v691, %v689
      %v695 = vshll.u32 %v590, 16
      %v697 = vrot.slane %v695, 1
      %v698 = vsel %vm654, %v693, %v697
      %v699 = vshrl.u32 %v590, 16
      %v701 = vor.u32 %v699, %v697
      %v703 = vshll.u32 %v591, 16
      %v705 = vrot.slane %v703, 1
      %v706 = vsel %vm654, %v701, %v705
      %v707 = vshrl.u32 %v591, 16
      %v709 = vor.u32 %v707, %v705
      %v711 = vshll.u32 %v592, 16
      %v713 = vrot.slane %v711, 1
      %v714 = vsel %vm654, %v709, %v713
      %v715 = vshrl.u32 %v592, 16
      %v717 = vor.u32 %v715, %v713
      %v719 = vshll.u32 %v593, 16
      %v721 = vrot.slane %v719, 1
      %v722 = vsel %vm654, %v717, %v721
      %v723 = vshrl.u32 %v593, 16
      %v725 = vor.u32 %v723, %v721
      %v727 = vshll.u32 %v594, 16
      %v729 = vrot.slane %v727, 1
      %v730 = vsel %vm654, %v725, %v729
      %v731 = vshrl.u32 %v594, 16
      %v733 = vor.u32 %v731, %v729
      %v735 = vshll.u32 %v595, 16
      %v737 = vrot.slane %v735, 1
      %v738 = vsel %vm654, %v733, %v737
      %v739 = vshrl.u32 %v595, 16
      %v741 = vor.u32 %v739, %v737
      %v743 = vshll.u32 %v596, 16
      %v745 = vrot.slane %v743, 1
      %v746 = vsel %vm654, %v741, %v745
      %v747 = vshrl.u32 %v596, 16
      %v749 = vor.u32 %v747, %v745
      %v751 = vshll.u32 %v597, 16
      %v753 = vrot.slane %v751, 1
      %v754 = vsel %vm654, %v749, %v753
      %v755 = vshrl.u32 %v597, 16
      %v757 = vor.u32 %v755, %v753
      %v759 = vshll.u32 %v598, 16
      %v761 = vrot.slane %v759, 1
      %v762 = vsel %vm654, %v757, %v761
      %v763 = vshrl.u32 %v598, 16
      %v765 = vor.u32 %v763, %v761
      %v767 = vshll.u32 %v599, 16
      %v769 = vrot.slane %v767, 1
      %v770 = vsel %vm654, %v765, %v769
      %v771 = vshrl.u32 %v599, 16
      %v773 = vor.u32 %v771, %v769
      %v775 = vshll.u32 %v600, 16
      %v777 = vrot.slane %v775, 1
      %v778 = vsel %vm654, %v773, %v777
      %v779 = vshrl.u32 %v600, 16
      %v781 = vor.u32 %v779, %v777
      %v783 = vshll.u32 %v601, 16
      %v785 = vrot.slane %v783, 1
      %v786 = vsel %vm654, %v781, %v785
      %v787 = vshrl.u32 %v601, 16
      %v789 = vor.u32 %v787, %v785
      %v791 = vshll.u32 %v602, 16
      %v793 = vrot.slane %v791, 1
      %v794 = vsel %vm654, %v789, %v793
      %v795 = vshrl.u32 %v602, 16
      %v797 = vor.u32 %v795, %v793
      %v799 = vshll.u32 %v603, 16
      %v801 = vrot.slane %v799, 1
      %v802 = vsel %vm654, %v797, %v801
      %v803 = vshrl.u32 %v603, 16
      %v805 = vor.u32 %v803, %v801
      %v807 = vshll.u32 %v604, 16
      %v809 = vrot.slane %v807, 1
      %v810 = vsel %vm654, %v805, %v809
      %v811 = vshrl.u32 %v604, 16
      %v813 = vor.u32 %v811, %v809
      %v815 = vshll.u32 %v605, 16
      %v817 = vrot.slane %v815, 1
      %v818 = vsel %vm654, %v813, %v817
      %v819 = vshrl.u32 %v605, 16
      %v821 = vor.u32 %v819, %v817
      %v823 = vshll.u32 %v606, 16
      %v825 = vrot.slane %v823, 1
      %v826 = vsel %vm654, %v821, %v825
      %v827 = vshrl.u32 %v606, 16
      %v829 = vor.u32 %v827, %v825
      %v831 = vshll.u32 %v607, 16
      %v833 = vrot.slane %v831, 1
      %v834 = vsel %vm654, %v829, %v833
      %v835 = vshrl.u32 %v607, 16
      %v837 = vor.u32 %v835, %v833
      %v839 = vshll.u32 %v608, 16
      %v841 = vrot.slane %v839, 1
      %v842 = vsel %vm654, %v837, %v841
      %v843 = vshrl.u32 %v608, 16
      %v845 = vor.u32 %v843, %v841
      %v847 = vshll.u32 %v609, 16
      %v849 = vrot.slane %v847, 1
      %v850 = vsel %vm654, %v845, %v849
      %v851 = vshrl.u32 %v609, 16
      %v853 = vor.u32 %v851, %v849
      %v855 = vshll.u32 %v610, 16
      %v857 = vrot.slane %v855, 1
      %v858 = vsel %vm654, %v853, %v857
      %v859 = vshrl.u32 %v610, 16
      %v861 = vor.u32 %v859, %v857
      %v863 = vshll.u32 %v611, 16
      %v865 = vrot.slane %v863, 1
      %v866 = vsel %vm654, %v861, %v865
      %v867 = vshrl.u32 %v611, 16
      %v869 = vor.u32 %v867, %v865
      %v871 = vshll.u32 %v612, 16
      %v873 = vrot.slane %v871, 1
      %v874 = vsel %vm654, %v869, %v873
      %v875 = vshrl.u32 %v612, 16
      %v877 = vor.u32 %v875, %v873
      %v879 = vshll.u32 %v613, 16
      %v881 = vrot.slane %v879, 1
      %v882 = vsel %vm654, %v877, %v881
      %v883 = vshrl.u32 %v613, 16
      %v885 = vor.u32 %v883, %v881
      %v887 = vshll.u32 %v614, 16
      %v889 = vrot.slane %v887, 1
      %v890 = vsel %vm654, %v885, %v889
      %v891 = vshrl.u32 %v614, 16
      %v893 = vor.u32 %v891, %v889
      %v895 = vshll.u32 %v615, 16
      %v897 = vrot.slane %v895, 1
      %v898 = vsel %vm654, %v893, %v897
      %v899 = vshrl.u32 %v615, 16
      %v901 = vor.u32 %v899, %v897
      %v903 = vshll.u32 %v616, 16
      %v905 = vrot.slane %v903, 1
      %v906 = vsel %vm654, %v901, %v905
      %v907 = vshrl.u32 %v616, 16
      %v909 = vor.u32 %v907, %v905
      %v911 = vshll.u32 %v617, 16
      %v913 = vrot.slane %v911, 1
      %v914 = vsel %vm654, %v909, %v913
      %v915 = vshrl.u32 %v617, 16
      %v917 = vor.u32 %v915, %v913
      %v919 = vshll.u32 %v618, 16
      %v921 = vrot.slane %v919, 1
      %v922 = vsel %vm654, %v917, %v921
      %v923 = vshrl.u32 %v618, 16
      %v925 = vor.u32 %v923, %v921
      %v927 = vshll.u32 %v619, 16
      %v929 = vrot.slane %v927, 1
      %v930 = vsel %vm654, %v925, %v929
      %v931 = vshrl.u32 %v619, 16
      %v933 = vor.u32 %v931, %v929
      %v935 = vshll.u32 %v620, 16
      %v937 = vrot.slane %v935, 1
      %v938 = vsel %vm654, %v933, %v937
      %v939 = vshrl.u32 %v620, 16
      %v941 = vor.u32 %v939, %v937
      %v943 = vshll.u32 %v621, 16
      %v945 = vrot.slane %v943, 1
      %v946 = vsel %vm654, %v941, %v945
      %v947 = vshrl.u32 %v621, 16
      %v949 = vor.u32 %v947, %v945
      %v951 = vshll.u32 %v622, 16
      %v953 = vrot.slane %v951, 1
      %v954 = vsel %vm654, %v949, %v953
      %v955 = vshrl.u32 %v622, 16
      %v957 = vor.u32 %v955, %v953
      %v959 = vshll.u32 %v623, 16
      %v961 = vrot.slane %v959, 1
      %v962 = vsel %vm654, %v957, %v961
      %v963 = vshrl.u32 %v623, 16
      %v965 = vor.u32 %v963, %v961
      %v967 = vshll.u32 %v624, 16
      %v969 = vrot.slane %v967, 1
      %v970 = vsel %vm654, %v965, %v969
      %v971 = vshrl.u32 %v624, 16
      %v973 = vor.u32 %v971, %v969
      %v975 = vshll.u32 %v625, 16
      %v977 = vrot.slane %v975, 1
      %v978 = vsel %vm654, %v973, %v977
      %v979 = vshrl.u32 %v625, 16
      %v981 = vor.u32 %v979, %v977
      %v983 = vshll.u32 %v626, 16
      %v985 = vrot.slane %v983, 1
      %v986 = vsel %vm654, %v981, %v985
      %v987 = vshrl.u32 %v626, 16
      %v989 = vor.u32 %v987, %v985
      %v991 = vshll.u32 %v627, 16
      %v993 = vrot.slane %v991, 1
      %v994 = vsel %vm654, %v989, %v993
      %v995 = vshrl.u32 %v627, 16
      %v997 = vor.u32 %v995, %v993
      %v999 = vshll.u32 %v628, 16
      %v1001 = vrot.slane %v999, 1
      %v1002 = vsel %vm654, %v997, %v1001
      %v1003 = vshrl.u32 %v628, 16
      %v1005 = vor.u32 %v1003, %v1001
      %v1007 = vshll.u32 %v629, 16
      %v1009 = vrot.slane %v1007, 1
      %v1010 = vsel %vm654, %v1005, %v1009
      %v1011 = vshrl.u32 %v629, 16
      %v1013 = vor.u32 %v1011, %v1009
      %v1015 = vshll.u32 %v630, 16
      %v1017 = vrot.slane %v1015, 1
      %v1018 = vsel %vm654, %v1013, %v1017
      %v1019 = vshrl.u32 %v630, 16
      %v1021 = vor.u32 %v1019, %v1017
      %v1023 = vshll.u32 %v631, 16
      %v1025 = vrot.slane %v1023, 1
      %v1026 = vsel %vm654, %v1021, %v1025
      %v1027 = vshrl.u32 %v631, 16
      %v1029 = vor.u32 %v1027, %v1025
      %v1031 = vshll.u32 %v632, 16
      %v1033 = vrot.slane %v1031, 1
      %v1034 = vsel %vm654, %v1029, %v1033
      %v1035 = vshrl.u32 %v632, 16
      %v1037 = vor.u32 %v1035, %v1033
      %v1039 = vshll.u32 %v633, 16
      %v1041 = vrot.slane %v1039, 1
      %v1042 = vsel %vm654, %v1037, %v1041
      %v1043 = vshrl.u32 %v633, 16
      %v1045 = vor.u32 %v1043, %v1041
      %v1047 = vshll.u32 %v634, 16
      %v1049 = vrot.slane %v1047, 1
      %v1050 = vsel %vm654, %v1045, %v1049
      %v1051 = vshrl.u32 %v634, 16
      %v1053 = vor.u32 %v1051, %v1049
      %v1055 = vshll.u32 %v635, 16
      %v1057 = vrot.slane %v1055, 1
      %v1058 = vsel %vm654, %v1053, %v1057
      %v1059 = vshrl.u32 %v635, 16
      %v1061 = vor.u32 %v1059, %v1057
      %v1063 = vshll.u32 %v636, 16
      %v1065 = vrot.slane %v1063, 1
      %v1066 = vsel %vm654, %v1061, %v1065
      %v1067 = vshrl.u32 %v636, 16
      %v1069 = vor.u32 %v1067, %v1065
      %v1071 = vshll.u32 %v637, 16
      %v1073 = vrot.slane %v1071, 1
      %v1074 = vsel %vm654, %v1069, %v1073
      %v1075 = vshrl.u32 %v637, 16
      %v1077 = vor.u32 %v1075, %v1073
      %v1079 = vshll.u32 %v638, 16
      %v1081 = vrot.slane %v1079, 1
      %v1082 = vsel %vm654, %v1077, %v1081
      %v1083 = vshrl.u32 %v638, 16
      %v1085 = vor.u32 %v1083, %v1081
      %v1087 = vshll.u32 %v639, 16
      %v1089 = vrot.slane %v1087, 1
      %v1090 = vsel %vm654, %v1085, %v1089
      %v1091 = vshrl.u32 %v639, 16
      %v1093 = vor.u32 %v1091, %v1089
      %v1095 = vshll.u32 %v640, 16
      %v1097 = vrot.slane %v1095, 1
      %v1098 = vsel %vm654, %v1093, %v1097
      %v1099 = vshrl.u32 %v640, 16
      %v1101 = vor.u32 %v1099, %v1097
      %v1103 = vshll.u32 %v641, 16
      %v1105 = vrot.slane %v1103, 1
      %v1106 = vsel %vm654, %v1101, %v1105
      %v1107 = vshrl.u32 %v641, 16
      %v1109 = vor.u32 %v1107, %v1105
      %v1111 = vshll.u32 %v642, 16
      %v1113 = vrot.slane %v1111, 1
      %v1114 = vsel %vm654, %v1109, %v1113
      %v1115 = vshrl.u32 %v642, 16
      %v1117 = vor.u32 %v1115, %v1113
      %v1119 = vshll.u32 %v643, 16
      %v1121 = vrot.slane %v1119, 1
      %v1122 = vsel %vm654, %v1117, %v1121
      %v1123 = vshrl.u32 %v643, 16
      %v1125 = vor.u32 %v1123, %v1121
      %v1127 = vshll.u32 %v644, 16
      %v1129 = vrot.slane %v1127, 1
      %v1130 = vsel %vm654, %v1125, %v1129
      %v1131 = vshrl.u32 %v644, 16
      %v1133 = vor.u32 %v1131, %v1129
      %v1135 = vshll.u32 %v645, 16
      %v1137 = vrot.slane %v1135, 1
      %v1138 = vsel %vm654, %v1133, %v1137
      %v1139 = vshrl.u32 %v645, 16
      %v1141 = vor.u32 %v1139, %v1137
      %v1143 = vshll.u32 %v646, 16
      %v1145 = vrot.slane %v1143, 1
      %v1146 = vsel %vm654, %v1141, %v1145
      %v1147 = vshrl.u32 %v646, 16
      %v1149 = vor.u32 %v1147, %v1145
      %v1151 = vshll.u32 %v647, 16
      %v1153 = vrot.slane %v1151, 1
      %v1154 = vsel %vm654, %v1149, %v1153
      %v1155 = vshrl.u32 %v647, 16
      %v1157 = vor.u32 %v1155, %v1153
      %v1159 = vshll.u32 %v648, 16
      %v1161 = vrot.slane %v1159, 1
      %v1162 = vsel %vm654, %v1157, %v1161
      %v1163 = vshrl.u32 %v648, 16
      %v1165 = vor.u32 %v1163, %v1161
      %v1167 = vshll.u32 %v649, 16
      %v1169 = vrot.slane %v1167, 1
      %v1170 = vsel %vm654, %v1165, %v1169
      %v1171 = vshrl.u32 %v649, 16
      %v1173 = vor.u32 %v1171, %v1169
      %v1175 = vshll.u32 %v650, 16
      %v1177 = vrot.slane %v1175, 1
      %v1178 = vsel %vm654, %v1173, %v1177
      %v1179 = vshrl.u32 %v650, 16
      %v1181 = vor.u32 %v1179, %v1177
      %v1183 = vshll.u32 %v651, 16
      %v1185 = vrot.slane %v1183, 1
      %v1186 = vsel %vm654, %v1181, %v1185
      %v1187 = vshrl.u32 %v651, 16
      %v1189 = vor.u32 %v1187, %v1185
      %v1191 = vshll.u32 %v652, 16
      %v1193 = vrot.slane %v1191, 1
      %v1194 = vsel %vm654, %v1189, %v1193
      %v1195 = vshrl.u32 %v652, 16
      %v1197 = vor.u32 %v1195, %v1193
      %v1199 = vshll.u32 %v653, 16
      %v1201 = vrot.slane %v1199, 1
      %v1202 = vsel %vm654, %v1197, %v1201
      %v1204 = vunpack.c.l.b16 %v310
      %v1205 = vpack.c.b16 %v1204, %v1204
      %v1207 = vshrl.u32 %v1205, 16
      %v1209 = vrot.slane %v1207, 1
      %v1210 = vshll.u32 %v1205, 16
      %v1212 = vrot.slane %v1210, 2
      %v1213 = vor.u32 %v1209, %v1212
      %vm1214 = vcmask 23552
      %v1216 = vsel %vm1214, %v666, 0
      %v1219 = vsel %vm1214, %v674, 0
      %v1222 = vsel %vm1214, %v682, 0
      %v1225 = vsel %vm1214, %v690, 0
      %v1228 = vsel %vm1214, %v698, 0
      %v1231 = vsel %vm1214, %v706, 0
      %v1234 = vsel %vm1214, %v714, 0
      %v1237 = vsel %vm1214, %v722, 0
      %v1240 = vsel %vm1214, %v730, 0
      %v1243 = vsel %vm1214, %v738, 0
      %v1246 = vsel %vm1214, %v746, 0
      %v1249 = vsel %vm1214, %v754, 0
      %v1252 = vsel %vm1214, %v762, 0
      %v1255 = vsel %vm1214, %v770, 0
      %v1258 = vsel %vm1214, %v778, 0
      %v1261 = vsel %vm1214, %v786, 0
      %v1264 = vsel %vm1214, %v794, 0
      %v1267 = vsel %vm1214, %v802, 0
      %v1270 = vsel %vm1214, %v810, 0
      %v1273 = vsel %vm1214, %v818, 0
      %v1276 = vsel %vm1214, %v826, 0
      %v1279 = vsel %vm1214, %v834, 0
      %v1282 = vsel %vm1214, %v842, 0
      %v1285 = vsel %vm1214, %v850, 0
      %v1288 = vsel %vm1214, %v858, 0
      %v1291 = vsel %vm1214, %v866, 0
      %v1294 = vsel %vm1214, %v874, 0
      %v1297 = vsel %vm1214, %v882, 0
      %v1300 = vsel %vm1214, %v890, 0
      %v1303 = vsel %vm1214, %v898, 0
      %v1306 = vsel %vm1214, %v906, 0
      %v1309 = vsel %vm1214, %v914, 0
      %v1312 = vsel %vm1214, %v922, 0
      %v1315 = vsel %vm1214, %v930, 0
      %v1318 = vsel %vm1214, %v938, 0
      %v1321 = vsel %vm1214, %v946, 0
      %v1324 = vsel %vm1214, %v954, 0
      %v1327 = vsel %vm1214, %v962, 0
      %v1330 = vsel %vm1214, %v970, 0
      %v1333 = vsel %vm1214, %v978, 0
      %v1336 = vsel %vm1214, %v986, 0
      %v1339 = vsel %vm1214, %v994, 0
      %v1342 = vsel %vm1214, %v1002, 0
      %v1345 = vsel %vm1214, %v1010, 0
      %v1348 = vsel %vm1214, %v1018, 0
      %v1351 = vsel %vm1214, %v1026, 0
      %v1354 = vsel %vm1214, %v1034, 0
      %v1357 = vsel %vm1214, %v1042, 0
      %v1360 = vsel %vm1214, %v1050, 0
      %v1363 = vsel %vm1214, %v1058, 0
      %v1366 = vsel %vm1214, %v1066, 0
      %v1369 = vsel %vm1214, %v1074, 0
      %v1372 = vsel %vm1214, %v1082, 0
      %v1375 = vsel %vm1214, %v1090, 0
      %v1378 = vsel %vm1214, %v1098, 0
      %v1381 = vsel %vm1214, %v1106, 0
      %v1384 = vsel %vm1214, %v1114, 0
      %v1387 = vsel %vm1214, %v1122, 0
      %v1390 = vsel %vm1214, %v1130, 0
      %v1393 = vsel %vm1214, %v1138, 0
      %v1396 = vsel %vm1214, %v1146, 0
      %v1399 = vsel %vm1214, %v1154, 0
      %v1402 = vsel %vm1214, %v1162, 0
      %v1405 = vsel %vm1214, %v1170, 0
      %v1408 = vsel %vm1214, %v1178, 0
      %v1411 = vsel %vm1214, %v1186, 0
      %v1414 = vsel %vm1214, %v1194, 0
      %v1417 = vsel %vm1214, %v1202, 0
      %vm1419 = vcmask 1040384
      %vm1420 = vcmask 1041408
      %v1421 = vsel %vm1419, 4294967295, 65535
      %v1422 = vsel %vm1420, %v1421, 0
      %v1424 = vand.u32 %v1213, %v1422
      %1426 = vmatpush.bf16.msra.mxu0 0
      %1427 = vmatpush.bf16.msra.mxu0 0
      %1428 = vmatpush.bf16.msra.mxu0 0
      %1429 = vmatpush.bf16.msra.mxu0 0
      %1430 = vmatpush.bf16.msra.mxu0 0
      %1431 = vmatpush.bf16.msra.mxu0 0
      %1432 = vmatpush.bf16.msra.mxu0 0
      %1433 = vmatpush.bf16.msra.mxu0 %v1424
      %1434 = vmatmul.bf16.gmra.mxu0 %v1216
      %v1435 = vpop.f32.mrf.mxu0
      %v1436 = vadd.f32 0.0, %v1435
      %v1437 = vpop.f32.mrf.mxu0
      %v1438 = vadd.f32 0.0, %v1437
      %1439 = vmatmul.bf16.gmra.mxu0 %v1219
      %v1440 = vpop.f32.mrf.mxu0
      %v1441 = vadd.f32 0.0, %v1440
      %v1442 = vpop.f32.mrf.mxu0
      %v1443 = vadd.f32 0.0, %v1442
      %1444 = vmatmul.bf16.gmra.mxu0 %v1222
      %v1445 = vpop.f32.mrf.mxu0
      %v1446 = vadd.f32 0.0, %v1445
      %v1447 = vpop.f32.mrf.mxu0
      %v1448 = vadd.f32 0.0, %v1447
      %1449 = vmatmul.bf16.gmra.mxu0 %v1225
      %v1450 = vpop.f32.mrf.mxu0
      %v1451 = vadd.f32 0.0, %v1450
      %v1452 = vpop.f32.mrf.mxu0
      %v1453 = vadd.f32 0.0, %v1452
      %1454 = vmatmul.bf16.gmra.mxu0 %v1228
      %v1455 = vpop.f32.mrf.mxu0
      %v1456 = vadd.f32 0.0, %v1455
      %v1457 = vpop.f32.mrf.mxu0
      %v1458 = vadd.f32 0.0, %v1457
      %1459 = vmatmul.bf16.gmra.mxu0 %v1231
      %v1460 = vpop.f32.mrf.mxu0
      %v1461 = vadd.f32 0.0, %v1460
      %v1462 = vpop.f32.mrf.mxu0
      %v1463 = vadd.f32 0.0, %v1462
      %1464 = vmatmul.bf16.gmra.mxu0 %v1234
      %v1465 = vpop.f32.mrf.mxu0
      %v1466 = vadd.f32 0.0, %v1465
      %v1467 = vpop.f32.mrf.mxu0
      %v1468 = vadd.f32 0.0, %v1467
      %1469 = vmatmul.bf16.gmra.mxu0 %v1237
      %v1470 = vpop.f32.mrf.mxu0
      %v1471 = vadd.f32 0.0, %v1470
      %v1472 = vpop.f32.mrf.mxu0
      %v1473 = vadd.f32 0.0, %v1472
      %1474 = vmatmul.bf16.gmra.mxu0 %v1240
      %v1475 = vpop.f32.mrf.mxu0
      %v1476 = vadd.f32 0.0, %v1475
      %v1477 = vpop.f32.mrf.mxu0
      %v1478 = vadd.f32 0.0, %v1477
      %1479 = vmatmul.bf16.gmra.mxu0 %v1243
      %v1480 = vpop.f32.mrf.mxu0
      %v1481 = vadd.f32 0.0, %v1480
      %v1482 = vpop.f32.mrf.mxu0
      %v1483 = vadd.f32 0.0, %v1482
      %1484 = vmatmul.bf16.gmra.mxu0 %v1246
      %v1485 = vpop.f32.mrf.mxu0
      %v1486 = vadd.f32 0.0, %v1485
      %v1487 = vpop.f32.mrf.mxu0
      %v1488 = vadd.f32 0.0, %v1487
      %1489 = vmatmul.bf16.gmra.mxu0 %v1249
      %v1490 = vpop.f32.mrf.mxu0
      %v1491 = vadd.f32 0.0, %v1490
      %v1492 = vpop.f32.mrf.mxu0
      %v1493 = vadd.f32 0.0, %v1492
      %1494 = vmatmul.bf16.gmra.mxu0 %v1252
      %v1495 = vpop.f32.mrf.mxu0
      %v1496 = vadd.f32 0.0, %v1495
      %v1497 = vpop.f32.mrf.mxu0
      %v1498 = vadd.f32 0.0, %v1497
      %1499 = vmatmul.bf16.gmra.mxu0 %v1255
      %v1500 = vpop.f32.mrf.mxu0
      %v1501 = vadd.f32 0.0, %v1500
      %v1502 = vpop.f32.mrf.mxu0
      %v1503 = vadd.f32 0.0, %v1502
      %1504 = vmatmul.bf16.gmra.mxu0 %v1258
      %v1505 = vpop.f32.mrf.mxu0
      %v1506 = vadd.f32 0.0, %v1505
      %v1507 = vpop.f32.mrf.mxu0
      %v1508 = vadd.f32 0.0, %v1507
      %1509 = vmatmul.bf16.gmra.mxu0 %v1261
      %v1510 = vpop.f32.mrf.mxu0
      %v1511 = vadd.f32 0.0, %v1510
      %v1512 = vpop.f32.mrf.mxu0
      %v1513 = vadd.f32 0.0, %v1512
      %1514 = vmatmul.bf16.gmra.mxu0 %v1264
      %v1515 = vpop.f32.mrf.mxu0
      %v1516 = vadd.f32 0.0, %v1515
      %v1517 = vpop.f32.mrf.mxu0
      %v1518 = vadd.f32 0.0, %v1517
      %1519 = vmatmul.bf16.gmra.mxu0 %v1267
      %v1520 = vpop.f32.mrf.mxu0
      %v1521 = vadd.f32 0.0, %v1520
      %v1522 = vpop.f32.mrf.mxu0
      %v1523 = vadd.f32 0.0, %v1522
      %1524 = vmatmul.bf16.gmra.mxu0 %v1270
      %v1525 = vpop.f32.mrf.mxu0
      %v1526 = vadd.f32 0.0, %v1525
      %v1527 = vpop.f32.mrf.mxu0
      %v1528 = vadd.f32 0.0, %v1527
      %1529 = vmatmul.bf16.gmra.mxu0 %v1273
      %v1530 = vpop.f32.mrf.mxu0
      %v1531 = vadd.f32 0.0, %v1530
      %v1532 = vpop.f32.mrf.mxu0
      %v1533 = vadd.f32 0.0, %v1532
      %1534 = vmatmul.bf16.gmra.mxu0 %v1276
      %v1535 = vpop.f32.mrf.mxu0
      %v1536 = vadd.f32 0.0, %v1535
      %v1537 = vpop.f32.mrf.mxu0
      %v1538 = vadd.f32 0.0, %v1537
      %1539 = vmatmul.bf16.gmra.mxu0 %v1279
      %v1540 = vpop.f32.mrf.mxu0
      %v1541 = vadd.f32 0.0, %v1540
      %v1542 = vpop.f32.mrf.mxu0
      %v1543 = vadd.f32 0.0, %v1542
      %1544 = vmatmul.bf16.gmra.mxu0 %v1282
      %v1545 = vpop.f32.mrf.mxu0
      %v1546 = vadd.f32 0.0, %v1545
      %v1547 = vpop.f32.mrf.mxu0
      %v1548 = vadd.f32 0.0, %v1547
      %1549 = vmatmul.bf16.gmra.mxu0 %v1285
      %v1550 = vpop.f32.mrf.mxu0
      %v1551 = vadd.f32 0.0, %v1550
      %v1552 = vpop.f32.mrf.mxu0
      %v1553 = vadd.f32 0.0, %v1552
      %1554 = vmatmul.bf16.gmra.mxu0 %v1288
      %v1555 = vpop.f32.mrf.mxu0
      %v1556 = vadd.f32 0.0, %v1555
      %v1557 = vpop.f32.mrf.mxu0
      %v1558 = vadd.f32 0.0, %v1557
      %1559 = vmatmul.bf16.gmra.mxu0 %v1291
      %v1560 = vpop.f32.mrf.mxu0
      %v1561 = vadd.f32 0.0, %v1560
      %v1562 = vpop.f32.mrf.mxu0
      %v1563 = vadd.f32 0.0, %v1562
      %1564 = vmatmul.bf16.gmra.mxu0 %v1294
      %v1565 = vpop.f32.mrf.mxu0
      %v1566 = vadd.f32 0.0, %v1565
      %v1567 = vpop.f32.mrf.mxu0
      %v1568 = vadd.f32 0.0, %v1567
      %1569 = vmatmul.bf16.gmra.mxu0 %v1297
      %v1570 = vpop.f32.mrf.mxu0
      %v1571 = vadd.f32 0.0, %v1570
      %v1572 = vpop.f32.mrf.mxu0
      %v1573 = vadd.f32 0.0, %v1572
      %1574 = vmatmul.bf16.gmra.mxu0 %v1300
      %v1575 = vpop.f32.mrf.mxu0
      %v1576 = vadd.f32 0.0, %v1575
      %v1577 = vpop.f32.mrf.mxu0
      %v1578 = vadd.f32 0.0, %v1577
      %1579 = vmatmul.bf16.gmra.mxu0 %v1303
      %v1580 = vpop.f32.mrf.mxu0
      %v1581 = vadd.f32 0.0, %v1580
      %v1582 = vpop.f32.mrf.mxu0
      %v1583 = vadd.f32 0.0, %v1582
      %1584 = vmatmul.bf16.gmra.mxu0 %v1306
      %v1585 = vpop.f32.mrf.mxu0
      %v1586 = vadd.f32 0.0, %v1585
      %v1587 = vpop.f32.mrf.mxu0
      %v1588 = vadd.f32 0.0, %v1587
      %1589 = vmatmul.bf16.gmra.mxu0 %v1309
      %v1590 = vpop.f32.mrf.mxu0
      %v1591 = vadd.f32 0.0, %v1590
      %v1592 = vpop.f32.mrf.mxu0
      %v1593 = vadd.f32 0.0, %v1592
      %1594 = vmatmul.bf16.gmra.mxu0 %v1312
      %v1595 = vpop.f32.mrf.mxu0
      %v1596 = vadd.f32 0.0, %v1595
      %v1597 = vpop.f32.mrf.mxu0
      %v1598 = vadd.f32 0.0, %v1597
      %1599 = vmatmul.bf16.gmra.mxu0 %v1315
      %v1600 = vpop.f32.mrf.mxu0
      %v1601 = vadd.f32 0.0, %v1600
      %v1602 = vpop.f32.mrf.mxu0
      %v1603 = vadd.f32 0.0, %v1602
      %1604 = vmatmul.bf16.gmra.mxu0 %v1318
      %v1605 = vpop.f32.mrf.mxu0
      %v1606 = vadd.f32 0.0, %v1605
      %v1607 = vpop.f32.mrf.mxu0
      %v1608 = vadd.f32 0.0, %v1607
      %1609 = vmatmul.bf16.gmra.mxu0 %v1321
      %v1610 = vpop.f32.mrf.mxu0
      %v1611 = vadd.f32 0.0, %v1610
      %v1612 = vpop.f32.mrf.mxu0
      %v1613 = vadd.f32 0.0, %v1612
      %1614 = vmatmul.bf16.gmra.mxu0 %v1324
      %v1615 = vpop.f32.mrf.mxu0
      %v1616 = vadd.f32 0.0, %v1615
      %v1617 = vpop.f32.mrf.mxu0
      %v1618 = vadd.f32 0.0, %v1617
      %1619 = vmatmul.bf16.gmra.mxu0 %v1327
      %v1620 = vpop.f32.mrf.mxu0
      %v1621 = vadd.f32 0.0, %v1620
      %v1622 = vpop.f32.mrf.mxu0
      %v1623 = vadd.f32 0.0, %v1622
      %1624 = vmatmul.bf16.gmra.mxu0 %v1330
      %v1625 = vpop.f32.mrf.mxu0
      %v1626 = vadd.f32 0.0, %v1625
      %v1627 = vpop.f32.mrf.mxu0
      %v1628 = vadd.f32 0.0, %v1627
      %1629 = vmatmul.bf16.gmra.mxu0 %v1333
      %v1630 = vpop.f32.mrf.mxu0
      %v1631 = vadd.f32 0.0, %v1630
      %v1632 = vpop.f32.mrf.mxu0
      %v1633 = vadd.f32 0.0, %v1632
      %1634 = vmatmul.bf16.gmra.mxu0 %v1336
      %v1635 = vpop.f32.mrf.mxu0
      %v1636 = vadd.f32 0.0, %v1635
      %v1637 = vpop.f32.mrf.mxu0
      %v1638 = vadd.f32 0.0, %v1637
      %1639 = vmatmul.bf16.gmra.mxu0 %v1339
      %v1640 = vpop.f32.mrf.mxu0
      %v1641 = vadd.f32 0.0, %v1640
      %v1642 = vpop.f32.mrf.mxu0
      %v1643 = vadd.f32 0.0, %v1642
      %1644 = vmatmul.bf16.gmra.mxu0 %v1342
      %v1645 = vpop.f32.mrf.mxu0
      %v1646 = vadd.f32 0.0, %v1645
      %v1647 = vpop.f32.mrf.mxu0
      %v1648 = vadd.f32 0.0, %v1647
      %1649 = vmatmul.bf16.gmra.mxu0 %v1345
      %v1650 = vpop.f32.mrf.mxu0
      %v1651 = vadd.f32 0.0, %v1650
      %v1652 = vpop.f32.mrf.mxu0
      %v1653 = vadd.f32 0.0, %v1652
      %1654 = vmatmul.bf16.gmra.mxu0 %v1348
      %v1655 = vpop.f32.mrf.mxu0
      %v1656 = vadd.f32 0.0, %v1655
      %v1657 = vpop.f32.mrf.mxu0
      %v1658 = vadd.f32 0.0, %v1657
      %1659 = vmatmul.bf16.gmra.mxu0 %v1351
      %v1660 = vpop.f32.mrf.mxu0
      %v1661 = vadd.f32 0.0, %v1660
      %v1662 = vpop.f32.mrf.mxu0
      %v1663 = vadd.f32 0.0, %v1662
      %1664 = vmatmul.bf16.gmra.mxu0 %v1354
      %v1665 = vpop.f32.mrf.mxu0
      %v1666 = vadd.f32 0.0, %v1665
      %v1667 = vpop.f32.mrf.mxu0
      %v1668 = vadd.f32 0.0, %v1667
      %1669 = vmatmul.bf16.gmra.mxu0 %v1357
      %v1670 = vpop.f32.mrf.mxu0
      %v1671 = vadd.f32 0.0, %v1670
      %v1672 = vpop.f32.mrf.mxu0
      %v1673 = vadd.f32 0.0, %v1672
      %1674 = vmatmul.bf16.gmra.mxu0 %v1360
      %v1675 = vpop.f32.mrf.mxu0
      %v1676 = vadd.f32 0.0, %v1675
      %v1677 = vpop.f32.mrf.mxu0
      %v1678 = vadd.f32 0.0, %v1677
      %1679 = vmatmul.bf16.gmra.mxu0 %v1363
      %v1680 = vpop.f32.mrf.mxu0
      %v1681 = vadd.f32 0.0, %v1680
      %v1682 = vpop.f32.mrf.mxu0
      %v1683 = vadd.f32 0.0, %v1682
      %1684 = vmatmul.bf16.gmra.mxu0 %v1366
      %v1685 = vpop.f32.mrf.mxu0
      %v1686 = vadd.f32 0.0, %v1685
      %v1687 = vpop.f32.mrf.mxu0
      %v1688 = vadd.f32 0.0, %v1687
      %1689 = vmatmul.bf16.gmra.mxu0 %v1369
      %v1690 = vpop.f32.mrf.mxu0
      %v1691 = vadd.f32 0.0, %v1690
      %v1692 = vpop.f32.mrf.mxu0
      %v1693 = vadd.f32 0.0, %v1692
      %1694 = vmatmul.bf16.gmra.mxu0 %v1372
      %v1695 = vpop.f32.mrf.mxu0
      %v1696 = vadd.f32 0.0, %v1695
      %v1697 = vpop.f32.mrf.mxu0
      %v1698 = vadd.f32 0.0, %v1697
      %1699 = vmatmul.bf16.gmra.mxu0 %v1375
      %v1700 = vpop.f32.mrf.mxu0
      %v1701 = vadd.f32 0.0, %v1700
      %v1702 = vpop.f32.mrf.mxu0
      %v1703 = vadd.f32 0.0, %v1702
      %1704 = vmatmul.bf16.gmra.mxu0 %v1378
      %v1705 = vpop.f32.mrf.mxu0
      %v1706 = vadd.f32 0.0, %v1705
      %v1707 = vpop.f32.mrf.mxu0
      %v1708 = vadd.f32 0.0, %v1707
      %1709 = vmatmul.bf16.gmra.mxu0 %v1381
      %v1710 = vpop.f32.mrf.mxu0
      %v1711 = vadd.f32 0.0, %v1710
      %v1712 = vpop.f32.mrf.mxu0
      %v1713 = vadd.f32 0.0, %v1712
      %1714 = vmatmul.bf16.gmra.mxu0 %v1384
      %v1715 = vpop.f32.mrf.mxu0
      %v1716 = vadd.f32 0.0, %v1715
      %v1717 = vpop.f32.mrf.mxu0
      %v1718 = vadd.f32 0.0, %v1717
      %1719 = vmatmul.bf16.gmra.mxu0 %v1387
      %v1720 = vpop.f32.mrf.mxu0
      %v1721 = vadd.f32 0.0, %v1720
      %v1722 = vpop.f32.mrf.mxu0
      %v1723 = vadd.f32 0.0, %v1722
      %1724 = vmatmul.bf16.gmra.mxu0 %v1390
      %v1725 = vpop.f32.mrf.mxu0
      %v1726 = vadd.f32 0.0, %v1725
      %v1727 = vpop.f32.mrf.mxu0
      %v1728 = vadd.f32 0.0, %v1727
      %1729 = vmatmul.bf16.gmra.mxu0 %v1393
      %v1730 = vpop.f32.mrf.mxu0
      %v1731 = vadd.f32 0.0, %v1730
      %v1732 = vpop.f32.mrf.mxu0
      %v1733 = vadd.f32 0.0, %v1732
      %1734 = vmatmul.bf16.gmra.mxu0 %v1396
      %v1735 = vpop.f32.mrf.mxu0
      %v1736 = vadd.f32 0.0, %v1735
      %v1737 = vpop.f32.mrf.mxu0
      %v1738 = vadd.f32 0.0, %v1737
      %1739 = vmatmul.bf16.gmra.mxu0 %v1399
      %v1740 = vpop.f32.mrf.mxu0
      %v1741 = vadd.f32 0.0, %v1740
      %v1742 = vpop.f32.mrf.mxu0
      %v1743 = vadd.f32 0.0, %v1742
      %1744 = vmatmul.bf16.gmra.mxu0 %v1402
      %v1745 = vpop.f32.mrf.mxu0
      %v1746 = vadd.f32 0.0, %v1745
      %v1747 = vpop.f32.mrf.mxu0
      %v1748 = vadd.f32 0.0, %v1747
      %1749 = vmatmul.bf16.gmra.mxu0 %v1405
      %v1750 = vpop.f32.mrf.mxu0
      %v1751 = vadd.f32 0.0, %v1750
      %v1752 = vpop.f32.mrf.mxu0
      %v1753 = vadd.f32 0.0, %v1752
      %1754 = vmatmul.bf16.gmra.mxu0 %v1408
      %v1755 = vpop.f32.mrf.mxu0
      %v1756 = vadd.f32 0.0, %v1755
      %v1757 = vpop.f32.mrf.mxu0
      %v1758 = vadd.f32 0.0, %v1757
      %1759 = vmatmul.bf16.gmra.mxu0 %v1411
      %v1760 = vpop.f32.mrf.mxu0
      %v1761 = vadd.f32 0.0, %v1760
      %v1762 = vpop.f32.mrf.mxu0
      %v1763 = vadd.f32 0.0, %v1762
      %1764 = vmatmul.bf16.gmra.mxu0 %v1414
      %v1765 = vpop.f32.mrf.mxu0
      %v1766 = vadd.f32 0.0, %v1765
      %v1767 = vpop.f32.mrf.mxu0
      %v1768 = vadd.f32 0.0, %v1767
      %1769 = vmatmul.bf16.gmra.mxu0 %v1417
      %v1770 = vpop.f32.mrf.mxu0
      %v1771 = vadd.f32 0.0, %v1770
      %v1772 = vpop.f32.mrf.mxu0
      %v1773 = vadd.f32 0.0, %v1772
      %1774 = vdwg.mxu0
      %v1775 = vsel %vm1214, %v585, 0
      %v1777 = vsel %vm1214, %v586, 0
      %v1779 = vsel %vm1214, %v587, 0
      %v1781 = vsel %vm1214, %v588, 0
      %v1783 = vsel %vm1214, %v589, 0
      %v1785 = vsel %vm1214, %v590, 0
      %v1787 = vsel %vm1214, %v591, 0
      %v1789 = vsel %vm1214, %v592, 0
      %v1791 = vsel %vm1214, %v593, 0
      %v1793 = vsel %vm1214, %v594, 0
      %v1795 = vsel %vm1214, %v595, 0
      %v1797 = vsel %vm1214, %v596, 0
      %v1799 = vsel %vm1214, %v597, 0
      %v1801 = vsel %vm1214, %v598, 0
      %v1803 = vsel %vm1214, %v599, 0
      %v1805 = vsel %vm1214, %v600, 0
      %v1807 = vsel %vm1214, %v601, 0
      %v1809 = vsel %vm1214, %v602, 0
      %v1811 = vsel %vm1214, %v603, 0
      %v1813 = vsel %vm1214, %v604, 0
      %v1815 = vsel %vm1214, %v605, 0
      %v1817 = vsel %vm1214, %v606, 0
      %v1819 = vsel %vm1214, %v607, 0
      %v1821 = vsel %vm1214, %v608, 0
      %v1823 = vsel %vm1214, %v609, 0
      %v1825 = vsel %vm1214, %v610, 0
      %v1827 = vsel %vm1214, %v611, 0
      %v1829 = vsel %vm1214, %v612, 0
      %v1831 = vsel %vm1214, %v613, 0
      %v1833 = vsel %vm1214, %v614, 0
      %v1835 = vsel %vm1214, %v615, 0
      %v1837 = vsel %vm1214, %v616, 0
      %v1839 = vsel %vm1214, %v617, 0
      %v1841 = vsel %vm1214, %v618, 0
      %v1843 = vsel %vm1214, %v619, 0
      %v1845 = vsel %vm1214, %v620, 0
      %v1847 = vsel %vm1214, %v621, 0
      %v1849 = vsel %vm1214, %v622, 0
      %v1851 = vsel %vm1214, %v623, 0
      %v1853 = vsel %vm1214, %v624, 0
      %v1855 = vsel %vm1214, %v625, 0
      %v1857 = vsel %vm1214, %v626, 0
      %v1859 = vsel %vm1214, %v627, 0
      %v1861 = vsel %vm1214, %v628, 0
      %v1863 = vsel %vm1214, %v629, 0
      %v1865 = vsel %vm1214, %v630, 0
      %v1867 = vsel %vm1214, %v631, 0
      %v1869 = vsel %vm1214, %v632, 0
      %v1871 = vsel %vm1214, %v633, 0
      %v1873 = vsel %vm1214, %v634, 0
      %v1875 = vsel %vm1214, %v635, 0
      %v1877 = vsel %vm1214, %v636, 0
      %v1879 = vsel %vm1214, %v637, 0
      %v1881 = vsel %vm1214, %v638, 0
      %v1883 = vsel %vm1214, %v639, 0
      %v1885 = vsel %vm1214, %v640, 0
      %v1887 = vsel %vm1214, %v641, 0
      %v1889 = vsel %vm1214, %v642, 0
      %v1891 = vsel %vm1214, %v643, 0
      %v1893 = vsel %vm1214, %v644, 0
      %v1895 = vsel %vm1214, %v645, 0
      %v1897 = vsel %vm1214, %v646, 0
      %v1899 = vsel %vm1214, %v647, 0
      %v1901 = vsel %vm1214, %v648, 0
      %v1903 = vsel %vm1214, %v649, 0
      %v1905 = vsel %vm1214, %v650, 0
      %v1907 = vsel %vm1214, %v651, 0
      %v1909 = vsel %vm1214, %v652, 0
      %v1912 = vand.u32 %v308, %v1422
      %1914 = vmatpush.bf16.msra.mxu0 0
      %1915 = vmatpush.bf16.msra.mxu0 0
      %1916 = vmatpush.bf16.msra.mxu0 0
      %1917 = vmatpush.bf16.msra.mxu0 0
      %1918 = vmatpush.bf16.msra.mxu0 0
      %1919 = vmatpush.bf16.msra.mxu0 0
      %1920 = vmatpush.bf16.msra.mxu0 0
      %1921 = vmatpush.bf16.msra.mxu0 %v1912
      %1922 = vmatmul.bf16.gmra.mxu0 %v1775
      %v1923 = vpop.f32.mrf.mxu0
      %v1924 = vadd.f32 %v1436, %v1923
      %v1925 = vpop.f32.mrf.mxu0
      %v1926 = vadd.f32 %v1438, %v1925
      %1927 = vmatmul.bf16.gmra.mxu0 %v1777
      %v1928 = vpop.f32.mrf.mxu0
      %v1929 = vadd.f32 %v1441, %v1928
      %v1930 = vpop.f32.mrf.mxu0
      %v1931 = vadd.f32 %v1443, %v1930
      %1932 = vmatmul.bf16.gmra.mxu0 %v1779
      %v1933 = vpop.f32.mrf.mxu0
      %v1934 = vadd.f32 %v1446, %v1933
      %v1935 = vpop.f32.mrf.mxu0
      %v1936 = vadd.f32 %v1448, %v1935
      %1937 = vmatmul.bf16.gmra.mxu0 %v1781
      %v1938 = vpop.f32.mrf.mxu0
      %v1939 = vadd.f32 %v1451, %v1938
      %v1940 = vpop.f32.mrf.mxu0
      %v1941 = vadd.f32 %v1453, %v1940
      %1942 = vmatmul.bf16.gmra.mxu0 %v1783
      %v1943 = vpop.f32.mrf.mxu0
      %v1944 = vadd.f32 %v1456, %v1943
      %v1945 = vpop.f32.mrf.mxu0
      %v1946 = vadd.f32 %v1458, %v1945
      %1947 = vmatmul.bf16.gmra.mxu0 %v1785
      %v1948 = vpop.f32.mrf.mxu0
      %v1949 = vadd.f32 %v1461, %v1948
      %v1950 = vpop.f32.mrf.mxu0
      %v1951 = vadd.f32 %v1463, %v1950
      %1952 = vmatmul.bf16.gmra.mxu0 %v1787
      %v1953 = vpop.f32.mrf.mxu0
      %v1954 = vadd.f32 %v1466, %v1953
      %v1955 = vpop.f32.mrf.mxu0
      %v1956 = vadd.f32 %v1468, %v1955
      %1957 = vmatmul.bf16.gmra.mxu0 %v1789
      %v1958 = vpop.f32.mrf.mxu0
      %v1959 = vadd.f32 %v1471, %v1958
      %v1960 = vpop.f32.mrf.mxu0
      %v1961 = vadd.f32 %v1473, %v1960
      %1962 = vmatmul.bf16.gmra.mxu0 %v1791
      %v1963 = vpop.f32.mrf.mxu0
      %v1964 = vadd.f32 %v1476, %v1963
      %v1965 = vpop.f32.mrf.mxu0
      %v1966 = vadd.f32 %v1478, %v1965
      %1967 = vmatmul.bf16.gmra.mxu0 %v1793
      %v1968 = vpop.f32.mrf.mxu0
      %v1969 = vadd.f32 %v1481, %v1968
      %v1970 = vpop.f32.mrf.mxu0
      %v1971 = vadd.f32 %v1483, %v1970
      %1972 = vmatmul.bf16.gmra.mxu0 %v1795
      %v1973 = vpop.f32.mrf.mxu0
      %v1974 = vadd.f32 %v1486, %v1973
      %v1975 = vpop.f32.mrf.mxu0
      %v1976 = vadd.f32 %v1488, %v1975
      %1977 = vmatmul.bf16.gmra.mxu0 %v1797
      %v1978 = vpop.f32.mrf.mxu0
      %v1979 = vadd.f32 %v1491, %v1978
      %v1980 = vpop.f32.mrf.mxu0
      %v1981 = vadd.f32 %v1493, %v1980
      %1982 = vmatmul.bf16.gmra.mxu0 %v1799
      %v1983 = vpop.f32.mrf.mxu0
      %v1984 = vadd.f32 %v1496, %v1983
      %v1985 = vpop.f32.mrf.mxu0
      %v1986 = vadd.f32 %v1498, %v1985
      %1987 = vmatmul.bf16.gmra.mxu0 %v1801
      %v1988 = vpop.f32.mrf.mxu0
      %v1989 = vadd.f32 %v1501, %v1988
      %v1990 = vpop.f32.mrf.mxu0
      %v1991 = vadd.f32 %v1503, %v1990
      %1992 = vmatmul.bf16.gmra.mxu0 %v1803
      %v1993 = vpop.f32.mrf.mxu0
      %v1994 = vadd.f32 %v1506, %v1993
      %v1995 = vpop.f32.mrf.mxu0
      %v1996 = vadd.f32 %v1508, %v1995
      %1997 = vmatmul.bf16.gmra.mxu0 %v1805
      %v1998 = vpop.f32.mrf.mxu0
      %v1999 = vadd.f32 %v1511, %v1998
      %v2000 = vpop.f32.mrf.mxu0
      %v2001 = vadd.f32 %v1513, %v2000
      %2002 = vmatmul.bf16.gmra.mxu0 %v1807
      %v2003 = vpop.f32.mrf.mxu0
      %v2004 = vadd.f32 %v1516, %v2003
      %v2005 = vpop.f32.mrf.mxu0
      %v2006 = vadd.f32 %v1518, %v2005
      %2007 = vmatmul.bf16.gmra.mxu0 %v1809
      %v2008 = vpop.f32.mrf.mxu0
      %v2009 = vadd.f32 %v1521, %v2008
      %v2010 = vpop.f32.mrf.mxu0
      %v2011 = vadd.f32 %v1523, %v2010
      %2012 = vmatmul.bf16.gmra.mxu0 %v1811
      %v2013 = vpop.f32.mrf.mxu0
      %v2014 = vadd.f32 %v1526, %v2013
      %v2015 = vpop.f32.mrf.mxu0
      %v2016 = vadd.f32 %v1528, %v2015
      %2017 = vmatmul.bf16.gmra.mxu0 %v1813
      %v2018 = vpop.f32.mrf.mxu0
      %v2019 = vadd.f32 %v1531, %v2018
      %v2020 = vpop.f32.mrf.mxu0
      %v2021 = vadd.f32 %v1533, %v2020
      %2022 = vmatmul.bf16.gmra.mxu0 %v1815
      %v2023 = vpop.f32.mrf.mxu0
      %v2024 = vadd.f32 %v1536, %v2023
      %v2025 = vpop.f32.mrf.mxu0
      %v2026 = vadd.f32 %v1538, %v2025
      %2027 = vmatmul.bf16.gmra.mxu0 %v1817
      %v2028 = vpop.f32.mrf.mxu0
      %v2029 = vadd.f32 %v1541, %v2028
      %v2030 = vpop.f32.mrf.mxu0
      %v2031 = vadd.f32 %v1543, %v2030
      %2032 = vmatmul.bf16.gmra.mxu0 %v1819
      %v2033 = vpop.f32.mrf.mxu0
      %v2034 = vadd.f32 %v1546, %v2033
      %v2035 = vpop.f32.mrf.mxu0
      %v2036 = vadd.f32 %v1548, %v2035
      %2037 = vmatmul.bf16.gmra.mxu0 %v1821
      %v2038 = vpop.f32.mrf.mxu0
      %v2039 = vadd.f32 %v1551, %v2038
      %v2040 = vpop.f32.mrf.mxu0
      %v2041 = vadd.f32 %v1553, %v2040
      %2042 = vmatmul.bf16.gmra.mxu0 %v1823
      %v2043 = vpop.f32.mrf.mxu0
      %v2044 = vadd.f32 %v1556, %v2043
      %v2045 = vpop.f32.mrf.mxu0
      %v2046 = vadd.f32 %v1558, %v2045
      %2047 = vmatmul.bf16.gmra.mxu0 %v1825
      %v2048 = vpop.f32.mrf.mxu0
      %v2049 = vadd.f32 %v1561, %v2048
      %v2050 = vpop.f32.mrf.mxu0
      %v2051 = vadd.f32 %v1563, %v2050
      %2052 = vmatmul.bf16.gmra.mxu0 %v1827
      %v2053 = vpop.f32.mrf.mxu0
      %v2054 = vadd.f32 %v1566, %v2053
      %v2055 = vpop.f32.mrf.mxu0
      %v2056 = vadd.f32 %v1568, %v2055
      %2057 = vmatmul.bf16.gmra.mxu0 %v1829
      %v2058 = vpop.f32.mrf.mxu0
      %v2059 = vadd.f32 %v1571, %v2058
      %v2060 = vpop.f32.mrf.mxu0
      %v2061 = vadd.f32 %v1573, %v2060
      %2062 = vmatmul.bf16.gmra.mxu0 %v1831
      %v2063 = vpop.f32.mrf.mxu0
      %v2064 = vadd.f32 %v1576, %v2063
      %v2065 = vpop.f32.mrf.mxu0
      %v2066 = vadd.f32 %v1578, %v2065
      %2067 = vmatmul.bf16.gmra.mxu0 %v1833
      %v2068 = vpop.f32.mrf.mxu0
      %v2069 = vadd.f32 %v1581, %v2068
      %v2070 = vpop.f32.mrf.mxu0
      %v2071 = vadd.f32 %v1583, %v2070
      %2072 = vmatmul.bf16.gmra.mxu0 %v1835
      %v2073 = vpop.f32.mrf.mxu0
      %v2074 = vadd.f32 %v1586, %v2073
      %v2075 = vpop.f32.mrf.mxu0
      %v2076 = vadd.f32 %v1588, %v2075
      %2077 = vmatmul.bf16.gmra.mxu0 %v1837
      %v2078 = vpop.f32.mrf.mxu0
      %v2079 = vadd.f32 %v1591, %v2078
      %v2080 = vpop.f32.mrf.mxu0
      %v2081 = vadd.f32 %v1593, %v2080
      %2082 = vmatmul.bf16.gmra.mxu0 %v1839
      %v2083 = vpop.f32.mrf.mxu0
      %v2084 = vadd.f32 %v1596, %v2083
      %v2085 = vpop.f32.mrf.mxu0
      %v2086 = vadd.f32 %v1598, %v2085
      %2087 = vmatmul.bf16.gmra.mxu0 %v1841
      %v2088 = vpop.f32.mrf.mxu0
      %v2089 = vadd.f32 %v1601, %v2088
      %v2090 = vpop.f32.mrf.mxu0
      %v2091 = vadd.f32 %v1603, %v2090
      %2092 = vmatmul.bf16.gmra.mxu0 %v1843
      %v2093 = vpop.f32.mrf.mxu0
      %v2094 = vadd.f32 %v1606, %v2093
      %v2095 = vpop.f32.mrf.mxu0
      %v2096 = vadd.f32 %v1608, %v2095
      %2097 = vmatmul.bf16.gmra.mxu0 %v1845
      %v2098 = vpop.f32.mrf.mxu0
      %v2099 = vadd.f32 %v1611, %v2098
      %v2100 = vpop.f32.mrf.mxu0
      %v2101 = vadd.f32 %v1613, %v2100
      %2102 = vmatmul.bf16.gmra.mxu0 %v1847
      %v2103 = vpop.f32.mrf.mxu0
      %v2104 = vadd.f32 %v1616, %v2103
      %v2105 = vpop.f32.mrf.mxu0
      %v2106 = vadd.f32 %v1618, %v2105
      %2107 = vmatmul.bf16.gmra.mxu0 %v1849
      %v2108 = vpop.f32.mrf.mxu0
      %v2109 = vadd.f32 %v1621, %v2108
      %v2110 = vpop.f32.mrf.mxu0
      %v2111 = vadd.f32 %v1623, %v2110
      %2112 = vmatmul.bf16.gmra.mxu0 %v1851
      %v2113 = vpop.f32.mrf.mxu0
      %v2114 = vadd.f32 %v1626, %v2113
      %v2115 = vpop.f32.mrf.mxu0
      %v2116 = vadd.f32 %v1628, %v2115
      %2117 = vmatmul.bf16.gmra.mxu0 %v1853
      %v2118 = vpop.f32.mrf.mxu0
      %v2119 = vadd.f32 %v1631, %v2118
      %v2120 = vpop.f32.mrf.mxu0
      %v2121 = vadd.f32 %v1633, %v2120
      %2122 = vmatmul.bf16.gmra.mxu0 %v1855
      %v2123 = vpop.f32.mrf.mxu0
      %v2124 = vadd.f32 %v1636, %v2123
      %v2125 = vpop.f32.mrf.mxu0
      %v2126 = vadd.f32 %v1638, %v2125
      %2127 = vmatmul.bf16.gmra.mxu0 %v1857
      %v2128 = vpop.f32.mrf.mxu0
      %v2129 = vadd.f32 %v1641, %v2128
      %v2130 = vpop.f32.mrf.mxu0
      %v2131 = vadd.f32 %v1643, %v2130
      %2132 = vmatmul.bf16.gmra.mxu0 %v1859
      %v2133 = vpop.f32.mrf.mxu0
      %v2134 = vadd.f32 %v1646, %v2133
      %v2135 = vpop.f32.mrf.mxu0
      %v2136 = vadd.f32 %v1648, %v2135
      %2137 = vmatmul.bf16.gmra.mxu0 %v1861
      %v2138 = vpop.f32.mrf.mxu0
      %v2139 = vadd.f32 %v1651, %v2138
      %v2140 = vpop.f32.mrf.mxu0
      %v2141 = vadd.f32 %v1653, %v2140
      %2142 = vmatmul.bf16.gmra.mxu0 %v1863
      %v2143 = vpop.f32.mrf.mxu0
      %v2144 = vadd.f32 %v1656, %v2143
      %v2145 = vpop.f32.mrf.mxu0
      %v2146 = vadd.f32 %v1658, %v2145
      %2147 = vmatmul.bf16.gmra.mxu0 %v1865
      %v2148 = vpop.f32.mrf.mxu0
      %v2149 = vadd.f32 %v1661, %v2148
      %v2150 = vpop.f32.mrf.mxu0
      %v2151 = vadd.f32 %v1663, %v2150
      %2152 = vmatmul.bf16.gmra.mxu0 %v1867
      %v2153 = vpop.f32.mrf.mxu0
      %v2154 = vadd.f32 %v1666, %v2153
      %v2155 = vpop.f32.mrf.mxu0
      %v2156 = vadd.f32 %v1668, %v2155
      %2157 = vmatmul.bf16.gmra.mxu0 %v1869
      %v2158 = vpop.f32.mrf.mxu0
      %v2159 = vadd.f32 %v1671, %v2158
      %v2160 = vpop.f32.mrf.mxu0
      %v2161 = vadd.f32 %v1673, %v2160
      %2162 = vmatmul.bf16.gmra.mxu0 %v1871
      %v2163 = vpop.f32.mrf.mxu0
      %v2164 = vadd.f32 %v1676, %v2163
      %v2165 = vpop.f32.mrf.mxu0
      %v2166 = vadd.f32 %v1678, %v2165
      %2167 = vmatmul.bf16.gmra.mxu0 %v1873
      %v2168 = vpop.f32.mrf.mxu0
      %v2169 = vadd.f32 %v1681, %v2168
      %v2170 = vpop.f32.mrf.mxu0
      %v2171 = vadd.f32 %v1683, %v2170
      %2172 = vmatmul.bf16.gmra.mxu0 %v1875
      %v2173 = vpop.f32.mrf.mxu0
      %v2174 = vadd.f32 %v1686, %v2173
      %v2175 = vpop.f32.mrf.mxu0
      %v2176 = vadd.f32 %v1688, %v2175
      %2177 = vmatmul.bf16.gmra.mxu0 %v1877
      %v2178 = vpop.f32.mrf.mxu0
      %v2179 = vadd.f32 %v1691, %v2178
      %v2180 = vpop.f32.mrf.mxu0
      %v2181 = vadd.f32 %v1693, %v2180
      %2182 = vmatmul.bf16.gmra.mxu0 %v1879
      %v2183 = vpop.f32.mrf.mxu0
      %v2184 = vadd.f32 %v1696, %v2183
      %v2185 = vpop.f32.mrf.mxu0
      %v2186 = vadd.f32 %v1698, %v2185
      %2187 = vmatmul.bf16.gmra.mxu0 %v1881
      %v2188 = vpop.f32.mrf.mxu0
      %v2189 = vadd.f32 %v1701, %v2188
      %v2190 = vpop.f32.mrf.mxu0
      %v2191 = vadd.f32 %v1703, %v2190
      %2192 = vmatmul.bf16.gmra.mxu0 %v1883
      %v2193 = vpop.f32.mrf.mxu0
      %v2194 = vadd.f32 %v1706, %v2193
      %v2195 = vpop.f32.mrf.mxu0
      %v2196 = vadd.f32 %v1708, %v2195
      %2197 = vmatmul.bf16.gmra.mxu0 %v1885
      %v2198 = vpop.f32.mrf.mxu0
      %v2199 = vadd.f32 %v1711, %v2198
      %v2200 = vpop.f32.mrf.mxu0
      %v2201 = vadd.f32 %v1713, %v2200
      %2202 = vmatmul.bf16.gmra.mxu0 %v1887
      %v2203 = vpop.f32.mrf.mxu0
      %v2204 = vadd.f32 %v1716, %v2203
      %v2205 = vpop.f32.mrf.mxu0
      %v2206 = vadd.f32 %v1718, %v2205
      %2207 = vmatmul.bf16.gmra.mxu0 %v1889
      %v2208 = vpop.f32.mrf.mxu0
      %v2209 = vadd.f32 %v1721, %v2208
      %v2210 = vpop.f32.mrf.mxu0
      %v2211 = vadd.f32 %v1723, %v2210
      %2212 = vmatmul.bf16.gmra.mxu0 %v1891
      %v2213 = vpop.f32.mrf.mxu0
      %v2214 = vadd.f32 %v1726, %v2213
      %v2215 = vpop.f32.mrf.mxu0
      %v2216 = vadd.f32 %v1728, %v2215
      %2217 = vmatmul.bf16.gmra.mxu0 %v1893
      %v2218 = vpop.f32.mrf.mxu0
      %v2219 = vadd.f32 %v1731, %v2218
      %v2220 = vpop.f32.mrf.mxu0
      %v2221 = vadd.f32 %v1733, %v2220
      %2222 = vmatmul.bf16.gmra.mxu0 %v1895
      %v2223 = vpop.f32.mrf.mxu0
      %v2224 = vadd.f32 %v1736, %v2223
      %v2225 = vpop.f32.mrf.mxu0
      %v2226 = vadd.f32 %v1738, %v2225
      %2227 = vmatmul.bf16.gmra.mxu0 %v1897
      %v2228 = vpop.f32.mrf.mxu0
      %v2229 = vadd.f32 %v1741, %v2228
      %v2230 = vpop.f32.mrf.mxu0
      %v2231 = vadd.f32 %v1743, %v2230
      %2232 = vmatmul.bf16.gmra.mxu0 %v1899
      %v2233 = vpop.f32.mrf.mxu0
      %v2234 = vadd.f32 %v1746, %v2233
      %v2235 = vpop.f32.mrf.mxu0
      %v2236 = vadd.f32 %v1748, %v2235
      %2237 = vmatmul.bf16.gmra.mxu0 %v1901
      %v2238 = vpop.f32.mrf.mxu0
      %v2239 = vadd.f32 %v1751, %v2238
      %v2240 = vpop.f32.mrf.mxu0
      %v2241 = vadd.f32 %v1753, %v2240
      %2242 = vmatmul.bf16.gmra.mxu0 %v1903
      %v2243 = vpop.f32.mrf.mxu0
      %v2244 = vadd.f32 %v1756, %v2243
      %v2245 = vpop.f32.mrf.mxu0
      %v2246 = vadd.f32 %v1758, %v2245
      %2247 = vmatmul.bf16.gmra.mxu0 %v1905
      %v2248 = vpop.f32.mrf.mxu0
      %v2249 = vadd.f32 %v1761, %v2248
      %v2250 = vpop.f32.mrf.mxu0
      %v2251 = vadd.f32 %v1763, %v2250
      %2252 = vmatmul.bf16.gmra.mxu0 %v1907
      %v2253 = vpop.f32.mrf.mxu0
      %v2254 = vadd.f32 %v1766, %v2253
      %v2255 = vpop.f32.mrf.mxu0
      %v2256 = vadd.f32 %v1768, %v2255
      %2257 = vmatmul.bf16.gmra.mxu0 %v1909
      %v2258 = vpop.f32.mrf.mxu0
      %v2259 = vadd.f32 %v1771, %v2258
      %v2260 = vpop.f32.mrf.mxu0
      %v2261 = vadd.f32 %v1773, %v2260
      %2262 = vdwg.mxu0
      %v2263 = vld [vmem:[%s165] sm:$0xe]
      %v2264 = vld [vmem:[%s1] sm:$0x8]
      %v2265 = vld [vmem:[%s1 + $0x4] sm:$0x1]
      %v2267 = vunpack.c.l.b16 %v2263
      %v2268 = vpack.c.b16 %v449, %v2267
      %vm2269 = vcmask 1046528
      %v2270 = vrot.slane %v2268, 1
      %v2271 = vrot.slane %v586, 1
      %v2272 = vsel %vm2269, %v2270, %v2271
      %v2273 = vrot.slane %v587, 1
      %v2274 = vsel %vm2269, %v2271, %v2273
      %v2275 = vrot.slane %v588, 1
      %v2276 = vsel %vm2269, %v2273, %v2275
      %v2277 = vrot.slane %v589, 1
      %v2278 = vsel %vm2269, %v2275, %v2277
      %v2279 = vrot.slane %v590, 1
      %v2280 = vsel %vm2269, %v2277, %v2279
      %v2281 = vrot.slane %v591, 1
      %v2282 = vsel %vm2269, %v2279, %v2281
      %v2283 = vrot.slane %v592, 1
      %v2284 = vsel %vm2269, %v2281, %v2283
      %v2285 = vrot.slane %v593, 1
      %v2286 = vsel %vm2269, %v2283, %v2285
      %v2287 = vrot.slane %v594, 1
      %v2288 = vsel %vm2269, %v2285, %v2287
      %v2289 = vrot.slane %v595, 1
      %v2290 = vsel %vm2269, %v2287, %v2289
      %v2291 = vrot.slane %v596, 1
      %v2292 = vsel %vm2269, %v2289, %v2291
      %v2293 = vrot.slane %v597, 1
      %v2294 = vsel %vm2269, %v2291, %v2293
      %v2295 = vrot.slane %v598, 1
      %v2296 = vsel %vm2269, %v2293, %v2295
      %v2297 = vrot.slane %v599, 1
      %v2298 = vsel %vm2269, %v2295, %v2297
      %v2299 = vrot.slane %v600, 1
      %v2300 = vsel %vm2269, %v2297, %v2299
      %v2301 = vrot.slane %v601, 1
      %v2302 = vsel %vm2269, %v2299, %v2301
      %v2303 = vrot.slane %v602, 1
      %v2304 = vsel %vm2269, %v2301, %v2303
      %v2305 = vrot.slane %v603, 1
      %v2306 = vsel %vm2269, %v2303, %v2305
      %v2307 = vrot.slane %v604, 1
      %v2308 = vsel %vm2269, %v2305, %v2307
      %v2309 = vrot.slane %v605, 1
      %v2310 = vsel %vm2269, %v2307, %v2309
      %v2311 = vrot.slane %v606, 1
      %v2312 = vsel %vm2269, %v2309, %v2311
      %v2313 = vrot.slane %v607, 1
      %v2314 = vsel %vm2269, %v2311, %v2313
      %v2315 = vrot.slane %v608, 1
      %v2316 = vsel %vm2269, %v2313, %v2315
      %v2317 = vrot.slane %v609, 1
      %v2318 = vsel %vm2269, %v2315, %v2317
      %v2319 = vrot.slane %v610, 1
      %v2320 = vsel %vm2269, %v2317, %v2319
      %v2321 = vrot.slane %v611, 1
      %v2322 = vsel %vm2269, %v2319, %v2321
      %v2323 = vrot.slane %v612, 1
      %v2324 = vsel %vm2269, %v2321, %v2323
      %v2325 = vrot.slane %v613, 1
      %v2326 = vsel %vm2269, %v2323, %v2325
      %v2327 = vrot.slane %v614, 1
      %v2328 = vsel %vm2269, %v2325, %v2327
      %v2329 = vrot.slane %v615, 1
      %v2330 = vsel %vm2269, %v2327, %v2329
      %v2331 = vrot.slane %v616, 1
      %v2332 = vsel %vm2269, %v2329, %v2331
      %v2333 = vrot.slane %v617, 1
      %v2334 = vsel %vm2269, %v2331, %v2333
      %v2335 = vrot.slane %v618, 1
      %v2336 = vsel %vm2269, %v2333, %v2335
      %v2337 = vrot.slane %v619, 1
      %v2338 = vsel %vm2269, %v2335, %v2337
      %v2339 = vrot.slane %v620, 1
      %v2340 = vsel %vm2269, %v2337, %v2339
      %v2341 = vrot.slane %v621, 1
      %v2342 = vsel %vm2269, %v2339, %v2341
      %v2343 = vrot.slane %v622, 1
      %v2344 = vsel %vm2269, %v2341, %v2343
      %v2345 = vrot.slane %v623, 1
      %v2346 = vsel %vm2269, %v2343, %v2345
      %v2347 = vrot.slane %v624, 1
      %v2348 = vsel %vm2269, %v2345, %v2347
      %v2349 = vrot.slane %v625, 1
      %v2350 = vsel %vm2269, %v2347, %v2349
      %v2351 = vrot.slane %v626, 1
      %v2352 = vsel %vm2269, %v2349, %v2351
      %v2353 = vrot.slane %v627, 1
      %v2354 = vsel %vm2269, %v2351, %v2353
      %v2355 = vrot.slane %v628, 1
      %v2356 = vsel %vm2269, %v2353, %v2355
      %v2357 = vrot.slane %v629, 1
      %v2358 = vsel %vm2269, %v2355, %v2357
      %v2359 = vrot.slane %v630, 1
      %v2360 = vsel %vm2269, %v2357, %v2359
      %v2361 = vrot.slane %v631, 1
      %v2362 = vsel %vm2269, %v2359, %v2361
      %v2363 = vrot.slane %v632, 1
      %v2364 = vsel %vm2269, %v2361, %v2363
      %v2365 = vrot.slane %v633, 1
      %v2366 = vsel %vm2269, %v2363, %v2365
      %v2367 = vrot.slane %v634, 1
      %v2368 = vsel %vm2269, %v2365, %v2367
      %v2369 = vrot.slane %v635, 1
      %v2370 = vsel %vm2269, %v2367, %v2369
      %v2371 = vrot.slane %v636, 1
      %v2372 = vsel %vm2269, %v2369, %v2371
      %v2373 = vrot.slane %v637, 1
      %v2374 = vsel %vm2269, %v2371, %v2373
      %v2375 = vrot.slane %v638, 1
      %v2376 = vsel %vm2269, %v2373, %v2375
      %v2377 = vrot.slane %v639, 1
      %v2378 = vsel %vm2269, %v2375, %v2377
      %v2379 = vrot.slane %v640, 1
      %v2380 = vsel %vm2269, %v2377, %v2379
      %v2381 = vrot.slane %v641, 1
      %v2382 = vsel %vm2269, %v2379, %v2381
      %v2383 = vrot.slane %v642, 1
      %v2384 = vsel %vm2269, %v2381, %v2383
      %v2385 = vrot.slane %v643, 1
      %v2386 = vsel %vm2269, %v2383, %v2385
      %v2387 = vrot.slane %v644, 1
      %v2388 = vsel %vm2269, %v2385, %v2387
      %v2389 = vrot.slane %v645, 1
      %v2390 = vsel %vm2269, %v2387, %v2389
      %v2391 = vrot.slane %v646, 1
      %v2392 = vsel %vm2269, %v2389, %v2391
      %v2393 = vrot.slane %v647, 1
      %v2394 = vsel %vm2269, %v2391, %v2393
      %v2395 = vrot.slane %v648, 1
      %v2396 = vsel %vm2269, %v2393, %v2395
      %v2397 = vrot.slane %v649, 1
      %v2398 = vsel %vm2269, %v2395, %v2397
      %v2399 = vrot.slane %v650, 1
      %v2400 = vsel %vm2269, %v2397, %v2399
      %v2401 = vrot.slane %v651, 1
      %v2402 = vsel %vm2269, %v2399, %v2401
      %v2403 = vrot.slane %v652, 1
      %v2404 = vsel %vm2269, %v2401, %v2403
      %v2405 = vrot.slane %v653, 1
      %v2406 = vsel %vm2269, %v2403, %v2405
      %v2409 = vunpack.c.l.b16 %v2264
      %v2410 = vunpack.c.l.b16 %v2265
      %v2411 = vpack.c.b16 %v2410, %v2409
      %v2412 = vrot.slane %v2411, 3
      %v2414 = vsel %vm1214, %v2272, 0
      %v2417 = vsel %vm1214, %v2274, 0
      %v2420 = vsel %vm1214, %v2276, 0
      %v2423 = vsel %vm1214, %v2278, 0
      %v2426 = vsel %vm1214, %v2280, 0
      %v2429 = vsel %vm1214, %v2282, 0
      %v2432 = vsel %vm1214, %v2284, 0
      %v2435 = vsel %vm1214, %v2286, 0
      %v2438 = vsel %vm1214, %v2288, 0
      %v2441 = vsel %vm1214, %v2290, 0
      %v2444 = vsel %vm1214, %v2292, 0
      %v2447 = vsel %vm1214, %v2294, 0
      %v2450 = vsel %vm1214, %v2296, 0
      %v2453 = vsel %vm1214, %v2298, 0
      %v2456 = vsel %vm1214, %v2300, 0
      %v2459 = vsel %vm1214, %v2302, 0
      %v2462 = vsel %vm1214, %v2304, 0
      %v2465 = vsel %vm1214, %v2306, 0
      %v2468 = vsel %vm1214, %v2308, 0
      %v2471 = vsel %vm1214, %v2310, 0
      %v2474 = vsel %vm1214, %v2312, 0
      %v2477 = vsel %vm1214, %v2314, 0
      %v2480 = vsel %vm1214, %v2316, 0
      %v2483 = vsel %vm1214, %v2318, 0
      %v2486 = vsel %vm1214, %v2320, 0
      %v2489 = vsel %vm1214, %v2322, 0
      %v2492 = vsel %vm1214, %v2324, 0
      %v2495 = vsel %vm1214, %v2326, 0
      %v2498 = vsel %vm1214, %v2328, 0
      %v2501 = vsel %vm1214, %v2330, 0
      %v2504 = vsel %vm1214, %v2332, 0
      %v2507 = vsel %vm1214, %v2334, 0
      %v2510 = vsel %vm1214, %v2336, 0
      %v2513 = vsel %vm1214, %v2338, 0
      %v2516 = vsel %vm1214, %v2340, 0
      %v2519 = vsel %vm1214, %v2342, 0
      %v2522 = vsel %vm1214, %v2344, 0
      %v2525 = vsel %vm1214, %v2346, 0
      %v2528 = vsel %vm1214, %v2348, 0
      %v2531 = vsel %vm1214, %v2350, 0
      %v2534 = vsel %vm1214, %v2352, 0
      %v2537 = vsel %vm1214, %v2354, 0
      %v2540 = vsel %vm1214, %v2356, 0
      %v2543 = vsel %vm1214, %v2358, 0
      %v2546 = vsel %vm1214, %v2360, 0
      %v2549 = vsel %vm1214, %v2362, 0
      %v2552 = vsel %vm1214, %v2364, 0
      %v2555 = vsel %vm1214, %v2366, 0
      %v2558 = vsel %vm1214, %v2368, 0
      %v2561 = vsel %vm1214, %v2370, 0
      %v2564 = vsel %vm1214, %v2372, 0
      %v2567 = vsel %vm1214, %v2374, 0
      %v2570 = vsel %vm1214, %v2376, 0
      %v2573 = vsel %vm1214, %v2378, 0
      %v2576 = vsel %vm1214, %v2380, 0
      %v2579 = vsel %vm1214, %v2382, 0
      %v2582 = vsel %vm1214, %v2384, 0
      %v2585 = vsel %vm1214, %v2386, 0
      %v2588 = vsel %vm1214, %v2388, 0
      %v2591 = vsel %vm1214, %v2390, 0
      %v2594 = vsel %vm1214, %v2392, 0
      %v2597 = vsel %vm1214, %v2394, 0
      %v2600 = vsel %vm1214, %v2396, 0
      %v2603 = vsel %vm1214, %v2398, 0
      %v2606 = vsel %vm1214, %v2400, 0
      %v2609 = vsel %vm1214, %v2402, 0
      %v2612 = vsel %vm1214, %v2404, 0
      %v2615 = vsel %vm1214, %v2406, 0
      %v2618 = vand.u32 %v2412, %v1422
      %2620 = vmatpush.bf16.msra.mxu0 0
      %2621 = vmatpush.bf16.msra.mxu0 0
      %2622 = vmatpush.bf16.msra.mxu0 0
      %2623 = vmatpush.bf16.msra.mxu0 0
      %2624 = vmatpush.bf16.msra.mxu0 0
      %2625 = vmatpush.bf16.msra.mxu0 0
      %2626 = vmatpush.bf16.msra.mxu0 0
      %2627 = vmatpush.bf16.msra.mxu0 %v2618
      %2628 = vmatmul.bf16.gmra.mxu0 %v2414
      %v2629 = vpop.f32.mrf.mxu0
      %v2630 = vadd.f32 0.0, %v2629
      %v2631 = vpop.f32.mrf.mxu0
      %v2632 = vadd.f32 0.0, %v2631
      %2633 = vmatmul.bf16.gmra.mxu0 %v2417
      %v2634 = vpop.f32.mrf.mxu0
      %v2635 = vadd.f32 0.0, %v2634
      %v2636 = vpop.f32.mrf.mxu0
      %v2637 = vadd.f32 0.0, %v2636
      %2638 = vmatmul.bf16.gmra.mxu0 %v2420
      %v2639 = vpop.f32.mrf.mxu0
      %v2640 = vadd.f32 0.0, %v2639
      %v2641 = vpop.f32.mrf.mxu0
      %v2642 = vadd.f32 0.0, %v2641
      %2643 = vmatmul.bf16.gmra.mxu0 %v2423
      %v2644 = vpop.f32.mrf.mxu0
      %v2645 = vadd.f32 0.0, %v2644
      %v2646 = vpop.f32.mrf.mxu0
      %v2647 = vadd.f32 0.0, %v2646
      %2648 = vmatmul.bf16.gmra.mxu0 %v2426
      %v2649 = vpop.f32.mrf.mxu0
      %v2650 = vadd.f32 0.0, %v2649
      %v2651 = vpop.f32.mrf.mxu0
      %v2652 = vadd.f32 0.0, %v2651
      %2653 = vmatmul.bf16.gmra.mxu0 %v2429
      %v2654 = vpop.f32.mrf.mxu0
      %v2655 = vadd.f32 0.0, %v2654
      %v2656 = vpop.f32.mrf.mxu0
      %v2657 = vadd.f32 0.0, %v2656
      %2658 = vmatmul.bf16.gmra.mxu0 %v2432
      %v2659 = vpop.f32.mrf.mxu0
      %v2660 = vadd.f32 0.0, %v2659
      %v2661 = vpop.f32.mrf.mxu0
      %v2662 = vadd.f32 0.0, %v2661
      %2663 = vmatmul.bf16.gmra.mxu0 %v2435
      %v2664 = vpop.f32.mrf.mxu0
      %v2665 = vadd.f32 0.0, %v2664
      %v2666 = vpop.f32.mrf.mxu0
      %v2667 = vadd.f32 0.0, %v2666
      %2668 = vmatmul.bf16.gmra.mxu0 %v2438
      %v2669 = vpop.f32.mrf.mxu0
      %v2670 = vadd.f32 0.0, %v2669
      %v2671 = vpop.f32.mrf.mxu0
      %v2672 = vadd.f32 0.0, %v2671
      %2673 = vmatmul.bf16.gmra.mxu0 %v2441
      %v2674 = vpop.f32.mrf.mxu0
      %v2675 = vadd.f32 0.0, %v2674
      %v2676 = vpop.f32.mrf.mxu0
      %v2677 = vadd.f32 0.0, %v2676
      %2678 = vmatmul.bf16.gmra.mxu0 %v2444
      %v2679 = vpop.f32.mrf.mxu0
      %v2680 = vadd.f32 0.0, %v2679
      %v2681 = vpop.f32.mrf.mxu0
      %v2682 = vadd.f32 0.0, %v2681
      %2683 = vmatmul.bf16.gmra.mxu0 %v2447
      %v2684 = vpop.f32.mrf.mxu0
      %v2685 = vadd.f32 0.0, %v2684
      %v2686 = vpop.f32.mrf.mxu0
      %v2687 = vadd.f32 0.0, %v2686
      %2688 = vmatmul.bf16.gmra.mxu0 %v2450
      %v2689 = vpop.f32.mrf.mxu0
      %v2690 = vadd.f32 0.0, %v2689
      %v2691 = vpop.f32.mrf.mxu0
      %v2692 = vadd.f32 0.0, %v2691
      %2693 = vmatmul.bf16.gmra.mxu0 %v2453
      %v2694 = vpop.f32.mrf.mxu0
      %v2695 = vadd.f32 0.0, %v2694
      %v2696 = vpop.f32.mrf.mxu0
      %v2697 = vadd.f32 0.0, %v2696
      %2698 = vmatmul.bf16.gmra.mxu0 %v2456
      %v2699 = vpop.f32.mrf.mxu0
      %v2700 = vadd.f32 0.0, %v2699
      %v2701 = vpop.f32.mrf.mxu0
      %v2702 = vadd.f32 0.0, %v2701
      %2703 = vmatmul.bf16.gmra.mxu0 %v2459
      %v2704 = vpop.f32.mrf.mxu0
      %v2705 = vadd.f32 0.0, %v2704
      %v2706 = vpop.f32.mrf.mxu0
      %v2707 = vadd.f32 0.0, %v2706
      %2708 = vmatmul.bf16.gmra.mxu0 %v2462
      %v2709 = vpop.f32.mrf.mxu0
      %v2710 = vadd.f32 0.0, %v2709
      %v2711 = vpop.f32.mrf.mxu0
      %v2712 = vadd.f32 0.0, %v2711
      %2713 = vmatmul.bf16.gmra.mxu0 %v2465
      %v2714 = vpop.f32.mrf.mxu0
      %v2715 = vadd.f32 0.0, %v2714
      %v2716 = vpop.f32.mrf.mxu0
      %v2717 = vadd.f32 0.0, %v2716
      %2718 = vmatmul.bf16.gmra.mxu0 %v2468
      %v2719 = vpop.f32.mrf.mxu0
      %v2720 = vadd.f32 0.0, %v2719
      %v2721 = vpop.f32.mrf.mxu0
      %v2722 = vadd.f32 0.0, %v2721
      %2723 = vmatmul.bf16.gmra.mxu0 %v2471
      %v2724 = vpop.f32.mrf.mxu0
      %v2725 = vadd.f32 0.0, %v2724
      %v2726 = vpop.f32.mrf.mxu0
      %v2727 = vadd.f32 0.0, %v2726
      %2728 = vmatmul.bf16.gmra.mxu0 %v2474
      %v2729 = vpop.f32.mrf.mxu0
      %v2730 = vadd.f32 0.0, %v2729
      %v2731 = vpop.f32.mrf.mxu0
      %v2732 = vadd.f32 0.0, %v2731
      %2733 = vmatmul.bf16.gmra.mxu0 %v2477
      %v2734 = vpop.f32.mrf.mxu0
      %v2735 = vadd.f32 0.0, %v2734
      %v2736 = vpop.f32.mrf.mxu0
      %v2737 = vadd.f32 0.0, %v2736
      %2738 = vmatmul.bf16.gmra.mxu0 %v2480
      %v2739 = vpop.f32.mrf.mxu0
      %v2740 = vadd.f32 0.0, %v2739
      %v2741 = vpop.f32.mrf.mxu0
      %v2742 = vadd.f32 0.0, %v2741
      %2743 = vmatmul.bf16.gmra.mxu0 %v2483
      %v2744 = vpop.f32.mrf.mxu0
      %v2745 = vadd.f32 0.0, %v2744
      %v2746 = vpop.f32.mrf.mxu0
      %v2747 = vadd.f32 0.0, %v2746
      %2748 = vmatmul.bf16.gmra.mxu0 %v2486
      %v2749 = vpop.f32.mrf.mxu0
      %v2750 = vadd.f32 0.0, %v2749
      %v2751 = vpop.f32.mrf.mxu0
      %v2752 = vadd.f32 0.0, %v2751
      %2753 = vmatmul.bf16.gmra.mxu0 %v2489
      %v2754 = vpop.f32.mrf.mxu0
      %v2755 = vadd.f32 0.0, %v2754
      %v2756 = vpop.f32.mrf.mxu0
      %v2757 = vadd.f32 0.0, %v2756
      %2758 = vmatmul.bf16.gmra.mxu0 %v2492
      %v2759 = vpop.f32.mrf.mxu0
      %v2760 = vadd.f32 0.0, %v2759
      %v2761 = vpop.f32.mrf.mxu0
      %v2762 = vadd.f32 0.0, %v2761
      %2763 = vmatmul.bf16.gmra.mxu0 %v2495
      %v2764 = vpop.f32.mrf.mxu0
      %v2765 = vadd.f32 0.0, %v2764
      %v2766 = vpop.f32.mrf.mxu0
      %v2767 = vadd.f32 0.0, %v2766
      %2768 = vmatmul.bf16.gmra.mxu0 %v2498
      %v2769 = vpop.f32.mrf.mxu0
      %v2770 = vadd.f32 0.0, %v2769
      %v2771 = vpop.f32.mrf.mxu0
      %v2772 = vadd.f32 0.0, %v2771
      %2773 = vmatmul.bf16.gmra.mxu0 %v2501
      %v2774 = vpop.f32.mrf.mxu0
      %v2775 = vadd.f32 0.0, %v2774
      %v2776 = vpop.f32.mrf.mxu0
      %v2777 = vadd.f32 0.0, %v2776
      %2778 = vmatmul.bf16.gmra.mxu0 %v2504
      %v2779 = vpop.f32.mrf.mxu0
      %v2780 = vadd.f32 0.0, %v2779
      %v2781 = vpop.f32.mrf.mxu0
      %v2782 = vadd.f32 0.0, %v2781
      %2783 = vmatmul.bf16.gmra.mxu0 %v2507
      %v2784 = vpop.f32.mrf.mxu0
      %v2785 = vadd.f32 0.0, %v2784
      %v2786 = vpop.f32.mrf.mxu0
      %v2787 = vadd.f32 0.0, %v2786
      %2788 = vmatmul.bf16.gmra.mxu0 %v2510
      %v2789 = vpop.f32.mrf.mxu0
      %v2790 = vadd.f32 0.0, %v2789
      %v2791 = vpop.f32.mrf.mxu0
      %v2792 = vadd.f32 0.0, %v2791
      %2793 = vmatmul.bf16.gmra.mxu0 %v2513
      %v2794 = vpop.f32.mrf.mxu0
      %v2795 = vadd.f32 0.0, %v2794
      %v2796 = vpop.f32.mrf.mxu0
      %v2797 = vadd.f32 0.0, %v2796
      %2798 = vmatmul.bf16.gmra.mxu0 %v2516
      %v2799 = vpop.f32.mrf.mxu0
      %v2800 = vadd.f32 0.0, %v2799
      %v2801 = vpop.f32.mrf.mxu0
      %v2802 = vadd.f32 0.0, %v2801
      %2803 = vmatmul.bf16.gmra.mxu0 %v2519
      %v2804 = vpop.f32.mrf.mxu0
      %v2805 = vadd.f32 0.0, %v2804
      %v2806 = vpop.f32.mrf.mxu0
      %v2807 = vadd.f32 0.0, %v2806
      %2808 = vmatmul.bf16.gmra.mxu0 %v2522
      %v2809 = vpop.f32.mrf.mxu0
      %v2810 = vadd.f32 0.0, %v2809
      %v2811 = vpop.f32.mrf.mxu0
      %v2812 = vadd.f32 0.0, %v2811
      %2813 = vmatmul.bf16.gmra.mxu0 %v2525
      %v2814 = vpop.f32.mrf.mxu0
      %v2815 = vadd.f32 0.0, %v2814
      %v2816 = vpop.f32.mrf.mxu0
      %v2817 = vadd.f32 0.0, %v2816
      %2818 = vmatmul.bf16.gmra.mxu0 %v2528
      %v2819 = vpop.f32.mrf.mxu0
      %v2820 = vadd.f32 0.0, %v2819
      %v2821 = vpop.f32.mrf.mxu0
      %v2822 = vadd.f32 0.0, %v2821
      %2823 = vmatmul.bf16.gmra.mxu0 %v2531
      %v2824 = vpop.f32.mrf.mxu0
      %v2825 = vadd.f32 0.0, %v2824
      %v2826 = vpop.f32.mrf.mxu0
      %v2827 = vadd.f32 0.0, %v2826
      %2828 = vmatmul.bf16.gmra.mxu0 %v2534
      %v2829 = vpop.f32.mrf.mxu0
      %v2830 = vadd.f32 0.0, %v2829
      %v2831 = vpop.f32.mrf.mxu0
      %v2832 = vadd.f32 0.0, %v2831
      %2833 = vmatmul.bf16.gmra.mxu0 %v2537
      %v2834 = vpop.f32.mrf.mxu0
      %v2835 = vadd.f32 0.0, %v2834
      %v2836 = vpop.f32.mrf.mxu0
      %v2837 = vadd.f32 0.0, %v2836
      %2838 = vmatmul.bf16.gmra.mxu0 %v2540
      %v2839 = vpop.f32.mrf.mxu0
      %v2840 = vadd.f32 0.0, %v2839
      %v2841 = vpop.f32.mrf.mxu0
      %v2842 = vadd.f32 0.0, %v2841
      %2843 = vmatmul.bf16.gmra.mxu0 %v2543
      %v2844 = vpop.f32.mrf.mxu0
      %v2845 = vadd.f32 0.0, %v2844
      %v2846 = vpop.f32.mrf.mxu0
      %v2847 = vadd.f32 0.0, %v2846
      %2848 = vmatmul.bf16.gmra.mxu0 %v2546
      %v2849 = vpop.f32.mrf.mxu0
      %v2850 = vadd.f32 0.0, %v2849
      %v2851 = vpop.f32.mrf.mxu0
      %v2852 = vadd.f32 0.0, %v2851
      %2853 = vmatmul.bf16.gmra.mxu0 %v2549
      %v2854 = vpop.f32.mrf.mxu0
      %v2855 = vadd.f32 0.0, %v2854
      %v2856 = vpop.f32.mrf.mxu0
      %v2857 = vadd.f32 0.0, %v2856
      %2858 = vmatmul.bf16.gmra.mxu0 %v2552
      %v2859 = vpop.f32.mrf.mxu0
      %v2860 = vadd.f32 0.0, %v2859
      %v2861 = vpop.f32.mrf.mxu0
      %v2862 = vadd.f32 0.0, %v2861
      %2863 = vmatmul.bf16.gmra.mxu0 %v2555
      %v2864 = vpop.f32.mrf.mxu0
      %v2865 = vadd.f32 0.0, %v2864
      %v2866 = vpop.f32.mrf.mxu0
      %v2867 = vadd.f32 0.0, %v2866
      %2868 = vmatmul.bf16.gmra.mxu0 %v2558
      %v2869 = vpop.f32.mrf.mxu0
      %v2870 = vadd.f32 0.0, %v2869
      %v2871 = vpop.f32.mrf.mxu0
      %v2872 = vadd.f32 0.0, %v2871
      %2873 = vmatmul.bf16.gmra.mxu0 %v2561
      %v2874 = vpop.f32.mrf.mxu0
      %v2875 = vadd.f32 0.0, %v2874
      %v2876 = vpop.f32.mrf.mxu0
      %v2877 = vadd.f32 0.0, %v2876
      %2878 = vmatmul.bf16.gmra.mxu0 %v2564
      %v2879 = vpop.f32.mrf.mxu0
      %v2880 = vadd.f32 0.0, %v2879
      %v2881 = vpop.f32.mrf.mxu0
      %v2882 = vadd.f32 0.0, %v2881
      %2883 = vmatmul.bf16.gmra.mxu0 %v2567
      %v2884 = vpop.f32.mrf.mxu0
      %v2885 = vadd.f32 0.0, %v2884
      %v2886 = vpop.f32.mrf.mxu0
      %v2887 = vadd.f32 0.0, %v2886
      %2888 = vmatmul.bf16.gmra.mxu0 %v2570
      %v2889 = vpop.f32.mrf.mxu0
      %v2890 = vadd.f32 0.0, %v2889
      %v2891 = vpop.f32.mrf.mxu0
      %v2892 = vadd.f32 0.0, %v2891
      %2893 = vmatmul.bf16.gmra.mxu0 %v2573
      %v2894 = vpop.f32.mrf.mxu0
      %v2895 = vadd.f32 0.0, %v2894
      %v2896 = vpop.f32.mrf.mxu0
      %v2897 = vadd.f32 0.0, %v2896
      %2898 = vmatmul.bf16.gmra.mxu0 %v2576
      %v2899 = vpop.f32.mrf.mxu0
      %v2900 = vadd.f32 0.0, %v2899
      %v2901 = vpop.f32.mrf.mxu0
      %v2902 = vadd.f32 0.0, %v2901
      %2903 = vmatmul.bf16.gmra.mxu0 %v2579
      %v2904 = vpop.f32.mrf.mxu0
      %v2905 = vadd.f32 0.0, %v2904
      %v2906 = vpop.f32.mrf.mxu0
      %v2907 = vadd.f32 0.0, %v2906
      %2908 = vmatmul.bf16.gmra.mxu0 %v2582
      %v2909 = vpop.f32.mrf.mxu0
      %v2910 = vadd.f32 0.0, %v2909
      %v2911 = vpop.f32.mrf.mxu0
      %v2912 = vadd.f32 0.0, %v2911
      %2913 = vmatmul.bf16.gmra.mxu0 %v2585
      %v2914 = vpop.f32.mrf.mxu0
      %v2915 = vadd.f32 0.0, %v2914
      %v2916 = vpop.f32.mrf.mxu0
      %v2917 = vadd.f32 0.0, %v2916
      %2918 = vmatmul.bf16.gmra.mxu0 %v2588
      %v2919 = vpop.f32.mrf.mxu0
      %v2920 = vadd.f32 0.0, %v2919
      %v2921 = vpop.f32.mrf.mxu0
      %v2922 = vadd.f32 0.0, %v2921
      %2923 = vmatmul.bf16.gmra.mxu0 %v2591
      %v2924 = vpop.f32.mrf.mxu0
      %v2925 = vadd.f32 0.0, %v2924
      %v2926 = vpop.f32.mrf.mxu0
      %v2927 = vadd.f32 0.0, %v2926
      %2928 = vmatmul.bf16.gmra.mxu0 %v2594
      %v2929 = vpop.f32.mrf.mxu0
      %v2930 = vadd.f32 0.0, %v2929
      %v2931 = vpop.f32.mrf.mxu0
      %v2932 = vadd.f32 0.0, %v2931
      %2933 = vmatmul.bf16.gmra.mxu0 %v2597
      %v2934 = vpop.f32.mrf.mxu0
      %v2935 = vadd.f32 0.0, %v2934
      %v2936 = vpop.f32.mrf.mxu0
      %v2937 = vadd.f32 0.0, %v2936
      %2938 = vmatmul.bf16.gmra.mxu0 %v2600
      %v2939 = vpop.f32.mrf.mxu0
      %v2940 = vadd.f32 0.0, %v2939
      %v2941 = vpop.f32.mrf.mxu0
      %v2942 = vadd.f32 0.0, %v2941
      %2943 = vmatmul.bf16.gmra.mxu0 %v2603
      %v2944 = vpop.f32.mrf.mxu0
      %v2945 = vadd.f32 0.0, %v2944
      %v2946 = vpop.f32.mrf.mxu0
      %v2947 = vadd.f32 0.0, %v2946
      %2948 = vmatmul.bf16.gmra.mxu0 %v2606
      %v2949 = vpop.f32.mrf.mxu0
      %v2950 = vadd.f32 0.0, %v2949
      %v2951 = vpop.f32.mrf.mxu0
      %v2952 = vadd.f32 0.0, %v2951
      %2953 = vmatmul.bf16.gmra.mxu0 %v2609
      %v2954 = vpop.f32.mrf.mxu0
      %v2955 = vadd.f32 0.0, %v2954
      %v2956 = vpop.f32.mrf.mxu0
      %v2957 = vadd.f32 0.0, %v2956
      %2958 = vmatmul.bf16.gmra.mxu0 %v2612
      %v2959 = vpop.f32.mrf.mxu0
      %v2960 = vadd.f32 0.0, %v2959
      %v2961 = vpop.f32.mrf.mxu0
      %v2962 = vadd.f32 0.0, %v2961
      %2963 = vmatmul.bf16.gmra.mxu0 %v2615
      %v2964 = vpop.f32.mrf.mxu0
      %v2965 = vadd.f32 0.0, %v2964
      %v2966 = vpop.f32.mrf.mxu0
      %v2967 = vadd.f32 0.0, %v2966
      %2968 = vdwg.mxu0
      %v2969 = vadd.f32 %v1924, %v2630
      %v2970 = vadd.f32 %v1926, %v2632
      %v2971 = vadd.f32 %v1929, %v2635
      %v2972 = vadd.f32 %v1931, %v2637
      %v2973 = vadd.f32 %v1934, %v2640
      %v2974 = vadd.f32 %v1936, %v2642
      %v2975 = vadd.f32 %v1939, %v2645
      %v2976 = vadd.f32 %v1941, %v2647
      %v2977 = vadd.f32 %v1944, %v2650
      %v2978 = vadd.f32 %v1946, %v2652
      %v2979 = vadd.f32 %v1949, %v2655
      %v2980 = vadd.f32 %v1951, %v2657
      %v2981 = vadd.f32 %v1954, %v2660
      %v2982 = vadd.f32 %v1956, %v2662
      %v2983 = vadd.f32 %v1959, %v2665
      %v2984 = vadd.f32 %v1961, %v2667
      %v2985 = vadd.f32 %v1964, %v2670
      %v2986 = vadd.f32 %v1966, %v2672
      %v2987 = vadd.f32 %v1969, %v2675
      %v2988 = vadd.f32 %v1971, %v2677
      %v2989 = vadd.f32 %v1974, %v2680
      %v2990 = vadd.f32 %v1976, %v2682
      %v2991 = vadd.f32 %v1979, %v2685
      %v2992 = vadd.f32 %v1981, %v2687
      %v2993 = vadd.f32 %v1984, %v2690
      %v2994 = vadd.f32 %v1986, %v2692
      %v2995 = vadd.f32 %v1989, %v2695
      %v2996 = vadd.f32 %v1991, %v2697
      %v2997 = vadd.f32 %v1994, %v2700
      %v2998 = vadd.f32 %v1996, %v2702
      %v2999 = vadd.f32 %v1999, %v2705
      %v3000 = vadd.f32 %v2001, %v2707
      %v3001 = vadd.f32 %v2004, %v2710
      %v3002 = vadd.f32 %v2006, %v2712
      %v3003 = vadd.f32 %v2009, %v2715
      %v3004 = vadd.f32 %v2011, %v2717
      %v3005 = vadd.f32 %v2014, %v2720
      %v3006 = vadd.f32 %v2016, %v2722
      %v3007 = vadd.f32 %v2019, %v2725
      %v3008 = vadd.f32 %v2021, %v2727
      %v3009 = vadd.f32 %v2024, %v2730
      %v3010 = vadd.f32 %v2026, %v2732
      %v3011 = vadd.f32 %v2029, %v2735
      %v3012 = vadd.f32 %v2031, %v2737
      %v3013 = vadd.f32 %v2034, %v2740
      %v3014 = vadd.f32 %v2036, %v2742
      %v3015 = vadd.f32 %v2039, %v2745
      %v3016 = vadd.f32 %v2041, %v2747
      %v3017 = vadd.f32 %v2044, %v2750
      %v3018 = vadd.f32 %v2046, %v2752
      %v3019 = vadd.f32 %v2049, %v2755
      %v3020 = vadd.f32 %v2051, %v2757
      %v3021 = vadd.f32 %v2054, %v2760
      %v3022 = vadd.f32 %v2056, %v2762
      %v3023 = vadd.f32 %v2059, %v2765
      %v3024 = vadd.f32 %v2061, %v2767
      %v3025 = vadd.f32 %v2064, %v2770
      %v3026 = vadd.f32 %v2066, %v2772
      %v3027 = vadd.f32 %v2069, %v2775
      %v3028 = vadd.f32 %v2071, %v2777
      %v3029 = vadd.f32 %v2074, %v2780
      %v3030 = vadd.f32 %v2076, %v2782
      %v3031 = vadd.f32 %v2079, %v2785
      %v3032 = vadd.f32 %v2081, %v2787
      %v3033 = vadd.f32 %v2084, %v2790
      %v3034 = vadd.f32 %v2086, %v2792
      %v3035 = vadd.f32 %v2089, %v2795
      %v3036 = vadd.f32 %v2091, %v2797
      %v3037 = vadd.f32 %v2094, %v2800
      %v3038 = vadd.f32 %v2096, %v2802
      %v3039 = vadd.f32 %v2099, %v2805
      %v3040 = vadd.f32 %v2101, %v2807
      %v3041 = vadd.f32 %v2104, %v2810
      %v3042 = vadd.f32 %v2106, %v2812
      %v3043 = vadd.f32 %v2109, %v2815
      %v3044 = vadd.f32 %v2111, %v2817
      %v3045 = vadd.f32 %v2114, %v2820
      %v3046 = vadd.f32 %v2116, %v2822
      %v3047 = vadd.f32 %v2119, %v2825
      %v3048 = vadd.f32 %v2121, %v2827
      %v3049 = vadd.f32 %v2124, %v2830
      %v3050 = vadd.f32 %v2126, %v2832
      %v3051 = vadd.f32 %v2129, %v2835
      %v3052 = vadd.f32 %v2131, %v2837
      %v3053 = vadd.f32 %v2134, %v2840
      %v3054 = vadd.f32 %v2136, %v2842
      %v3055 = vadd.f32 %v2139, %v2845
      %v3056 = vadd.f32 %v2141, %v2847
      %v3057 = vadd.f32 %v2144, %v2850
      %v3058 = vadd.f32 %v2146, %v2852
      %v3059 = vadd.f32 %v2149, %v2855
      %v3060 = vadd.f32 %v2151, %v2857
      %v3061 = vadd.f32 %v2154, %v2860
      %v3062 = vadd.f32 %v2156, %v2862
      %v3063 = vadd.f32 %v2159, %v2865
      %v3064 = vadd.f32 %v2161, %v2867
      %v3065 = vadd.f32 %v2164, %v2870
      %v3066 = vadd.f32 %v2166, %v2872
      %v3067 = vadd.f32 %v2169, %v2875
      %v3068 = vadd.f32 %v2171, %v2877
      %v3069 = vadd.f32 %v2174, %v2880
      %v3070 = vadd.f32 %v2176, %v2882
      %v3071 = vadd.f32 %v2179, %v2885
      %v3072 = vadd.f32 %v2181, %v2887
      %v3073 = vadd.f32 %v2184, %v2890
      %v3074 = vadd.f32 %v2186, %v2892
      %v3075 = vadd.f32 %v2189, %v2895
      %v3076 = vadd.f32 %v2191, %v2897
      %v3077 = vadd.f32 %v2194, %v2900
      %v3078 = vadd.f32 %v2196, %v2902
      %v3079 = vadd.f32 %v2199, %v2905
      %v3080 = vadd.f32 %v2201, %v2907
      %v3081 = vadd.f32 %v2204, %v2910
      %v3082 = vadd.f32 %v2206, %v2912
      %v3083 = vadd.f32 %v2209, %v2915
      %v3084 = vadd.f32 %v2211, %v2917
      %v3085 = vadd.f32 %v2214, %v2920
      %v3086 = vadd.f32 %v2216, %v2922
      %v3087 = vadd.f32 %v2219, %v2925
      %v3088 = vadd.f32 %v2221, %v2927
      %v3089 = vadd.f32 %v2224, %v2930
      %v3090 = vadd.f32 %v2226, %v2932
      %v3091 = vadd.f32 %v2229, %v2935
      %v3092 = vadd.f32 %v2231, %v2937
      %v3093 = vadd.f32 %v2234, %v2940
      %v3094 = vadd.f32 %v2236, %v2942
      %v3095 = vadd.f32 %v2239, %v2945
      %v3096 = vadd.f32 %v2241, %v2947
      %v3097 = vadd.f32 %v2244, %v2950
      %v3098 = vadd.f32 %v2246, %v2952
      %v3099 = vadd.f32 %v2249, %v2955
      %v3100 = vadd.f32 %v2251, %v2957
      %v3101 = vadd.f32 %v2254, %v2960
      %v3102 = vadd.f32 %v2256, %v2962
      %v3103 = vadd.f32 %v2259, %v2965
      %v3104 = vadd.f32 %v2261, %v2967
      %v3105 = vld [vmem:[%s165 + $0x10] sm:$0xe]
      %v3106 = vld [vmem:[%s165 + $0x14] sm:$0xf]
      %v3107 = vld [vmem:[%s165 + $0x18] sm:$0xf]
      %v3108 = vld [vmem:[%s165 + $0x1c] sm:$0xf]
      %v3109 = vld [vmem:[%s165 + $0x20] sm:$0xf]
      %v3110 = vld [vmem:[%s165 + $0x24] sm:$0xf]
      %v3111 = vld [vmem:[%s165 + $0x28] sm:$0xf]
      %v3112 = vld [vmem:[%s165 + $0x2c] sm:$0xf]
      %v3113 = vld [vmem:[%s165 + $0x30] sm:$0xf]
      %v3114 = vld [vmem:[%s165 + $0x34] sm:$0xf]
      %v3115 = vld [vmem:[%s165 + $0x38] sm:$0xf]
      %v3116 = vld [vmem:[%s165 + $0x3c] sm:$0xf]
      %v3117 = vld [vmem:[%s165 + $0x40] sm:$0xf]
      %v3118 = vld [vmem:[%s165 + $0x44] sm:$0xf]
      %v3119 = vld [vmem:[%s165 + $0x48] sm:$0xf]
      %v3120 = vld [vmem:[%s165 + $0x4c] sm:$0xf]
      %v3121 = vld [vmem:[%s165 + $0x50] sm:$0xf]
      %v3122 = vld [vmem:[%s165 + $0x54] sm:$0xf]
      %v3123 = vld [vmem:[%s165 + $0x58] sm:$0xf]
      %v3124 = vld [vmem:[%s165 + $0x5c] sm:$0xf]
      %v3125 = vld [vmem:[%s165 + $0x60] sm:$0xf]
      %v3126 = vld [vmem:[%s165 + $0x64] sm:$0xf]
      %v3127 = vld [vmem:[%s165 + $0x68] sm:$0xf]
      %v3128 = vld [vmem:[%s165 + $0x6c] sm:$0xf]
      %v3129 = vld [vmem:[%s165 + $0x70] sm:$0xf]
      %v3130 = vld [vmem:[%s165 + $0x74] sm:$0xf]
      %v3131 = vld [vmem:[%s165 + $0x78] sm:$0xf]
      %v3132 = vld [vmem:[%s165 + $0x7c] sm:$0xf]
      %v3133 = vld [vmem:[%s165 + $0x80] sm:$0xf]
      %v3134 = vld [vmem:[%s165 + $0x84] sm:$0xf]
      %v3135 = vld [vmem:[%s165 + $0x88] sm:$0xf]
      %v3136 = vld [vmem:[%s165 + $0x8c] sm:$0xf]
      %v3137 = vld [vmem:[%s165 + $0x90] sm:$0xf]
      %v3138 = vld [vmem:[%s165 + $0x94] sm:$0xf]
      %v3139 = vld [vmem:[%s165 + $0x98] sm:$0xf]
      %v3140 = vld [vmem:[%s165 + $0x9c] sm:$0xf]
      %v3141 = vld [vmem:[%s165 + $0xa0] sm:$0xf]
      %v3142 = vld [vmem:[%s165 + $0xa4] sm:$0xf]
      %v3143 = vld [vmem:[%s165 + $0xa8] sm:$0xf]
      %v3144 = vld [vmem:[%s165 + $0xac] sm:$0xf]
      %v3145 = vld [vmem:[%s165 + $0xb0] sm:$0xf]
      %v3146 = vld [vmem:[%s165 + $0xb4] sm:$0xf]
      %v3147 = vld [vmem:[%s165 + $0xb8] sm:$0xf]
      %v3148 = vld [vmem:[%s165 + $0xbc] sm:$0xf]
      %v3149 = vld [vmem:[%s165 + $0xc0] sm:$0xf]
      %v3150 = vld [vmem:[%s165 + $0xc4] sm:$0xf]
      %v3151 = vld [vmem:[%s165 + $0xc8] sm:$0xf]
      %v3152 = vld [vmem:[%s165 + $0xcc] sm:$0xf]
      %v3153 = vld [vmem:[%s165 + $0xd0] sm:$0xf]
      %v3154 = vld [vmem:[%s165 + $0xd4] sm:$0xf]
      %v3155 = vld [vmem:[%s165 + $0xd8] sm:$0xf]
      %v3156 = vld [vmem:[%s165 + $0xdc] sm:$0xf]
      %v3157 = vld [vmem:[%s165 + $0xe0] sm:$0xf]
      %v3158 = vld [vmem:[%s165 + $0xe4] sm:$0xf]
      %v3159 = vld [vmem:[%s165 + $0xe8] sm:$0xf]
      %v3160 = vld [vmem:[%s165 + $0xec] sm:$0xf]
      %v3161 = vld [vmem:[%s165 + $0xf0] sm:$0xf]
      %v3162 = vld [vmem:[%s165 + $0xf4] sm:$0xf]
      %v3163 = vld [vmem:[%s165 + $0xf8] sm:$0xf]
      %v3164 = vld [vmem:[%s165 + $0xfc] sm:$0xf]
      %v3165 = vld [vmem:[%s165 + $0x100] sm:$0xf]
      %v3166 = vld [vmem:[%s165 + $0x104] sm:$0xf]
      %v3167 = vld [vmem:[%s165 + $0x108] sm:$0xf]
      %v3168 = vld [vmem:[%s165 + $0x10c] sm:$0xf]
      %v3169 = vld [vmem:[%s165 + $0x110] sm:$0xf]
      %v3170 = vld [vmem:[%s165 + $0x114] sm:$0xf]
      %v3171 = vld [vmem:[%s165 + $0x118] sm:$0xf]
      %v3172 = vld [vmem:[%s165 + $0x11c] sm:$0xf]
      %v3173 = vld [vmem:[%s165 + $0x120] sm:$0xf]
      %v3174 = vld [vmem:[%s165 + $0x124] sm:$0xf]
      %v3175 = vld [vmem:[%s165 + $0x128] sm:$0xf]
      %v3176 = vld [vmem:[%s165 + $0x12c] sm:$0xf]
      %v3177 = vld [vmem:[%s165 + $0x130] sm:$0xf]
      %v3178 = vld [vmem:[%s165 + $0x134] sm:$0xf]
      %v3179 = vld [vmem:[%s165 + $0x138] sm:$0xf]
      %v3180 = vld [vmem:[%s165 + $0x13c] sm:$0xf]
      %v3181 = vld [vmem:[%s165 + $0x140] sm:$0xf]
      %v3182 = vld [vmem:[%s165 + $0x144] sm:$0xf]
      %v3183 = vld [vmem:[%s165 + $0x148] sm:$0xf]
      %v3184 = vld [vmem:[%s165 + $0x14c] sm:$0xf]
      %v3185 = vld [vmem:[%s165 + $0x150] sm:$0xf]
      %v3186 = vld [vmem:[%s165 + $0x154] sm:$0xf]
      %v3187 = vld [vmem:[%s165 + $0x158] sm:$0xf]
      %v3188 = vld [vmem:[%s165 + $0x15c] sm:$0xf]
      %v3189 = vld [vmem:[%s165 + $0x160] sm:$0xf]
      %v3190 = vld [vmem:[%s165 + $0x164] sm:$0xf]
      %v3191 = vld [vmem:[%s165 + $0x168] sm:$0xf]
      %v3192 = vld [vmem:[%s165 + $0x16c] sm:$0xf]
      %v3193 = vld [vmem:[%s165 + $0x170] sm:$0xf]
      %v3194 = vld [vmem:[%s165 + $0x174] sm:$0xf]
      %v3195 = vld [vmem:[%s165 + $0x178] sm:$0xf]
      %v3196 = vld [vmem:[%s165 + $0x17c] sm:$0xf]
      %v3197 = vld [vmem:[%s165 + $0x180] sm:$0xf]
      %v3198 = vld [vmem:[%s165 + $0x184] sm:$0xf]
      %v3199 = vld [vmem:[%s165 + $0x188] sm:$0xf]
      %v3200 = vld [vmem:[%s165 + $0x18c] sm:$0xf]
      %v3201 = vld [vmem:[%s165 + $0x190] sm:$0xf]
      %v3202 = vld [vmem:[%s165 + $0x194] sm:$0xf]
      %v3203 = vld [vmem:[%s165 + $0x198] sm:$0xf]
      %v3204 = vld [vmem:[%s165 + $0x19c] sm:$0xf]
      %v3205 = vld [vmem:[%s165 + $0x1a0] sm:$0xf]
      %v3206 = vld [vmem:[%s165 + $0x1a4] sm:$0xf]
      %v3207 = vld [vmem:[%s165 + $0x1a8] sm:$0xf]
      %v3208 = vld [vmem:[%s165 + $0x1ac] sm:$0xf]
      %v3209 = vld [vmem:[%s165 + $0x1b0] sm:$0xf]
      %v3210 = vld [vmem:[%s165 + $0x1b4] sm:$0xf]
      %v3211 = vld [vmem:[%s165 + $0x1b8] sm:$0xf]
      %v3212 = vld [vmem:[%s165 + $0x1bc] sm:$0xf]
      %v3213 = vld [vmem:[%s165 + $0x1c0] sm:$0xf]
      %v3214 = vld [vmem:[%s165 + $0x1c4] sm:$0xf]
      %v3215 = vld [vmem:[%s165 + $0x1c8] sm:$0xf]
      %v3216 = vld [vmem:[%s165 + $0x1cc] sm:$0xf]
      %v3217 = vld [vmem:[%s165 + $0x1d0] sm:$0xf]
      %v3218 = vld [vmem:[%s165 + $0x1d4] sm:$0xf]
      %v3219 = vld [vmem:[%s165 + $0x1d8] sm:$0xf]
      %v3220 = vld [vmem:[%s165 + $0x1dc] sm:$0xf]
      %v3221 = vld [vmem:[%s165 + $0x1e0] sm:$0xf]
      %v3222 = vld [vmem:[%s165 + $0x1e4] sm:$0xf]
      %v3223 = vld [vmem:[%s165 + $0x1e8] sm:$0xf]
      %v3224 = vld [vmem:[%s165 + $0x1ec] sm:$0xf]
      %v3225 = vld [vmem:[%s165 + $0x1f0] sm:$0xf]
      %v3226 = vld [vmem:[%s165 + $0x1f4] sm:$0xf]
      %v3227 = vld [vmem:[%s165 + $0x1f8] sm:$0xf]
      %v3228 = vld [vmem:[%s165 + $0x1fc] sm:$0xf]
      %v3229 = vld [vmem:[%s165 + $0x200] sm:$0xf]
      %v3230 = vld [vmem:[%s165 + $0x204] sm:$0xf]
      %v3231 = vld [vmem:[%s165 + $0x208] sm:$0xf]
      %v3232 = vld [vmem:[%s165 + $0x20c] sm:$0xf]
      %v3233 = vld [vmem:[%s165 + $0x210] sm:$0xf]
      %v3234 = vld [vmem:[%s165 + $0x214] sm:$0xf]
      %v3235 = vld [vmem:[%s165 + $0x218] sm:$0xf]
      %v3236 = vld [vmem:[%s165 + $0x21c] sm:$0xf]
      %v3237 = vld [vmem:[%s165 + $0x220] sm:$0xf]
      %v3238 = vld [vmem:[%s165 + $0x224] sm:$0xf]
      %v3239 = vld [vmem:[%s165 + $0x228] sm:$0xf]
      %v3240 = vld [vmem:[%s165 + $0x22c] sm:$0xf]
      %v3241 = vld [vmem:[%s165 + $0x230] sm:$0x1]
      %v3242 = vld [vmem:[%s1 + $0x4] sm:$0x3]
      %v3380 = vunpack.c.l.b16 %v3105
      %v3381 = vunpack.c.l.b16 %v3106
      %v3382 = vunpack.c.l.b16 %v3107
      %v3383 = vunpack.c.l.b16 %v3108
      %v3384 = vunpack.c.l.b16 %v3109
      %v3385 = vunpack.c.l.b16 %v3110
      %v3386 = vunpack.c.l.b16 %v3111
      %v3387 = vunpack.c.l.b16 %v3112
      %v3388 = vunpack.c.l.b16 %v3113
      %v3389 = vunpack.c.l.b16 %v3114
      %v3390 = vunpack.c.l.b16 %v3115
      %v3391 = vunpack.c.l.b16 %v3116
      %v3392 = vunpack.c.l.b16 %v3117
      %v3393 = vunpack.c.l.b16 %v3118
      %v3394 = vunpack.c.l.b16 %v3119
      %v3395 = vunpack.c.l.b16 %v3120
      %v3396 = vunpack.c.l.b16 %v3121
      %v3397 = vunpack.c.l.b16 %v3122
      %v3398 = vunpack.c.l.b16 %v3123
      %v3399 = vunpack.c.l.b16 %v3124
      %v3400 = vunpack.c.l.b16 %v3125
      %v3401 = vunpack.c.l.b16 %v3126
      %v3402 = vunpack.c.l.b16 %v3127
      %v3403 = vunpack.c.l.b16 %v3128
      %v3404 = vunpack.c.l.b16 %v3129
      %v3405 = vunpack.c.l.b16 %v3130
      %v3406 = vunpack.c.l.b16 %v3131
      %v3407 = vunpack.c.l.b16 %v3132
      %v3408 = vunpack.c.l.b16 %v3133
      %v3409 = vunpack.c.l.b16 %v3134
      %v3410 = vunpack.c.l.b16 %v3135
      %v3411 = vunpack.c.l.b16 %v3136
      %v3412 = vunpack.c.l.b16 %v3137
      %v3413 = vunpack.c.l.b16 %v3138
      %v3414 = vunpack.c.l.b16 %v3139
      %v3415 = vunpack.c.l.b16 %v3140
      %v3416 = vunpack.c.l.b16 %v3141
      %v3417 = vunpack.c.l.b16 %v3142
      %v3418 = vunpack.c.l.b16 %v3143
      %v3419 = vunpack.c.l.b16 %v3144
      %v3420 = vunpack.c.l.b16 %v3145
      %v3421 = vunpack.c.l.b16 %v3146
      %v3422 = vunpack.c.l.b16 %v3147
      %v3423 = vunpack.c.l.b16 %v3148
      %v3424 = vunpack.c.l.b16 %v3149
      %v3425 = vunpack.c.l.b16 %v3150
      %v3426 = vunpack.c.l.b16 %v3151
      %v3427 = vunpack.c.l.b16 %v3152
      %v3428 = vunpack.c.l.b16 %v3153
      %v3429 = vunpack.c.l.b16 %v3154
      %v3430 = vunpack.c.l.b16 %v3155
      %v3431 = vunpack.c.l.b16 %v3156
      %v3432 = vunpack.c.l.b16 %v3157
      %v3433 = vunpack.c.l.b16 %v3158
      %v3434 = vunpack.c.l.b16 %v3159
      %v3435 = vunpack.c.l.b16 %v3160
      %v3436 = vunpack.c.l.b16 %v3161
      %v3437 = vunpack.c.l.b16 %v3162
      %v3438 = vunpack.c.l.b16 %v3163
      %v3439 = vunpack.c.l.b16 %v3164
      %v3440 = vunpack.c.l.b16 %v3165
      %v3441 = vunpack.c.l.b16 %v3166
      %v3442 = vunpack.c.l.b16 %v3167
      %v3443 = vunpack.c.l.b16 %v3168
      %v3444 = vunpack.c.l.b16 %v3169
      %v3445 = vunpack.c.l.b16 %v3170
      %v3446 = vunpack.c.l.b16 %v3171
      %v3447 = vunpack.c.l.b16 %v3172
      %v3448 = vunpack.c.l.b16 %v3173
      %v3449 = vunpack.c.l.b16 %v3174
      %v3450 = vunpack.c.l.b16 %v3175
      %v3451 = vunpack.c.l.b16 %v3176
      %v3452 = vunpack.c.l.b16 %v3177
      %v3453 = vunpack.c.l.b16 %v3178
      %v3454 = vunpack.c.l.b16 %v3179
      %v3455 = vunpack.c.l.b16 %v3180
      %v3456 = vunpack.c.l.b16 %v3181
      %v3457 = vunpack.c.l.b16 %v3182
      %v3458 = vunpack.c.l.b16 %v3183
      %v3459 = vunpack.c.l.b16 %v3184
      %v3460 = vunpack.c.l.b16 %v3185
      %v3461 = vunpack.c.l.b16 %v3186
      %v3462 = vunpack.c.l.b16 %v3187
      %v3463 = vunpack.c.l.b16 %v3188
      %v3464 = vunpack.c.l.b16 %v3189
      %v3465 = vunpack.c.l.b16 %v3190
      %v3466 = vunpack.c.l.b16 %v3191
      %v3467 = vunpack.c.l.b16 %v3192
      %v3468 = vunpack.c.l.b16 %v3193
      %v3469 = vunpack.c.l.b16 %v3194
      %v3470 = vunpack.c.l.b16 %v3195
      %v3471 = vunpack.c.l.b16 %v3196
      %v3472 = vunpack.c.l.b16 %v3197
      %v3473 = vunpack.c.l.b16 %v3198
      %v3474 = vunpack.c.l.b16 %v3199
      %v3475 = vunpack.c.l.b16 %v3200
      %v3476 = vunpack.c.l.b16 %v3201
      %v3477 = vunpack.c.l.b16 %v3202
      %v3478 = vunpack.c.l.b16 %v3203
      %v3479 = vunpack.c.l.b16 %v3204
      %v3480 = vunpack.c.l.b16 %v3205
      %v3481 = vunpack.c.l.b16 %v3206
      %v3482 = vunpack.c.l.b16 %v3207
      %v3483 = vunpack.c.l.b16 %v3208
      %v3484 = vunpack.c.l.b16 %v3209
      %v3485 = vunpack.c.l.b16 %v3210
      %v3486 = vunpack.c.l.b16 %v3211
      %v3487 = vunpack.c.l.b16 %v3212
      %v3488 = vunpack.c.l.b16 %v3213
      %v3489 = vunpack.c.l.b16 %v3214
      %v3490 = vunpack.c.l.b16 %v3215
      %v3491 = vunpack.c.l.b16 %v3216
      %v3492 = vunpack.c.l.b16 %v3217
      %v3493 = vunpack.c.l.b16 %v3218
      %v3494 = vunpack.c.l.b16 %v3219
      %v3495 = vunpack.c.l.b16 %v3220
      %v3496 = vunpack.c.l.b16 %v3221
      %v3497 = vunpack.c.l.b16 %v3222
      %v3498 = vunpack.c.l.b16 %v3223
      %v3499 = vunpack.c.l.b16 %v3224
      %v3500 = vunpack.c.l.b16 %v3225
      %v3501 = vunpack.c.l.b16 %v3226
      %v3502 = vunpack.c.l.b16 %v3227
      %v3503 = vunpack.c.l.b16 %v3228
      %v3504 = vunpack.c.l.b16 %v3229
      %v3505 = vunpack.c.l.b16 %v3230
      %v3506 = vunpack.c.l.b16 %v3231
      %v3507 = vunpack.c.l.b16 %v3232
      %v3508 = vunpack.c.l.b16 %v3233
      %v3509 = vunpack.c.l.b16 %v3234
      %v3510 = vunpack.c.l.b16 %v3235
      %v3511 = vunpack.c.l.b16 %v3236
      %v3512 = vunpack.c.l.b16 %v3237
      %v3513 = vunpack.c.l.b16 %v3238
      %v3514 = vunpack.c.l.b16 %v3239
      %v3515 = vunpack.c.l.b16 %v3240
      %v3516 = vunpack.c.l.b16 %v3241
      %v3517 = vpack.c.b16 %v3381, %v3380
      %v3518 = vpack.c.b16 %v3383, %v3382
      %v3519 = vpack.c.b16 %v3385, %v3384
      %v3520 = vpack.c.b16 %v3387, %v3386
      %v3521 = vpack.c.b16 %v3389, %v3388
      %v3522 = vpack.c.b16 %v3391, %v3390
      %v3523 = vpack.c.b16 %v3393, %v3392
      %v3524 = vpack.c.b16 %v3395, %v3394
      %v3525 = vpack.c.b16 %v3397, %v3396
      %v3526 = vpack.c.b16 %v3399, %v3398
      %v3527 = vpack.c.b16 %v3401, %v3400
      %v3528 = vpack.c.b16 %v3403, %v3402
      %v3529 = vpack.c.b16 %v3405, %v3404
      %v3530 = vpack.c.b16 %v3407, %v3406
      %v3531 = vpack.c.b16 %v3409, %v3408
      %v3532 = vpack.c.b16 %v3411, %v3410
      %v3533 = vpack.c.b16 %v3413, %v3412
      %v3534 = vpack.c.b16 %v3415, %v3414
      %v3535 = vpack.c.b16 %v3417, %v3416
      %v3536 = vpack.c.b16 %v3419, %v3418
      %v3537 = vpack.c.b16 %v3421, %v3420
      %v3538 = vpack.c.b16 %v3423, %v3422
      %v3539 = vpack.c.b16 %v3425, %v3424
      %v3540 = vpack.c.b16 %v3427, %v3426
      %v3541 = vpack.c.b16 %v3429, %v3428
      %v3542 = vpack.c.b16 %v3431, %v3430
      %v3543 = vpack.c.b16 %v3433, %v3432
      %v3544 = vpack.c.b16 %v3435, %v3434
      %v3545 = vpack.c.b16 %v3437, %v3436
      %v3546 = vpack.c.b16 %v3439, %v3438
      %v3547 = vpack.c.b16 %v3441, %v3440
      %v3548 = vpack.c.b16 %v3443, %v3442
      %v3549 = vpack.c.b16 %v3445, %v3444
      %v3550 = vpack.c.b16 %v3447, %v3446
      %v3551 = vpack.c.b16 %v3449, %v3448
      %v3552 = vpack.c.b16 %v3451, %v3450
      %v3553 = vpack.c.b16 %v3453, %v3452
      %v3554 = vpack.c.b16 %v3455, %v3454
      %v3555 = vpack.c.b16 %v3457, %v3456
      %v3556 = vpack.c.b16 %v3459, %v3458
      %v3557 = vpack.c.b16 %v3461, %v3460
      %v3558 = vpack.c.b16 %v3463, %v3462
      %v3559 = vpack.c.b16 %v3465, %v3464
      %v3560 = vpack.c.b16 %v3467, %v3466
      %v3561 = vpack.c.b16 %v3469, %v3468
      %v3562 = vpack.c.b16 %v3471, %v3470
      %v3563 = vpack.c.b16 %v3473, %v3472
      %v3564 = vpack.c.b16 %v3475, %v3474
      %v3565 = vpack.c.b16 %v3477, %v3476
      %v3566 = vpack.c.b16 %v3479, %v3478
      %v3567 = vpack.c.b16 %v3481, %v3480
      %v3568 = vpack.c.b16 %v3483, %v3482
      %v3569 = vpack.c.b16 %v3485, %v3484
      %v3570 = vpack.c.b16 %v3487, %v3486
      %v3571 = vpack.c.b16 %v3489, %v3488
      %v3572 = vpack.c.b16 %v3491, %v3490
      %v3573 = vpack.c.b16 %v3493, %v3492
      %v3574 = vpack.c.b16 %v3495, %v3494
      %v3575 = vpack.c.b16 %v3497, %v3496
      %v3576 = vpack.c.b16 %v3499, %v3498
      %v3577 = vpack.c.b16 %v3501, %v3500
      %v3578 = vpack.c.b16 %v3503, %v3502
      %v3579 = vpack.c.b16 %v3505, %v3504
      %v3580 = vpack.c.b16 %v3507, %v3506
      %v3581 = vpack.c.b16 %v3509, %v3508
      %v3582 = vpack.c.b16 %v3511, %v3510
      %v3583 = vpack.c.b16 %v3513, %v3512
      %v3584 = vpack.c.b16 %v3515, %v3514
      %v3585 = vpack.c.b16 %v3516, %v3516
      %v3586 = vrot.slane %v3517, 1
      %v3587 = vrot.slane %v3518, 1
      %v3588 = vsel %vm2269, %v3586, %v3587
      %v3589 = vrot.slane %v3519, 1
      %v3590 = vsel %vm2269, %v3587, %v3589
      %v3591 = vrot.slane %v3520, 1
      %v3592 = vsel %vm2269, %v3589, %v3591
      %v3593 = vrot.slane %v3521, 1
      %v3594 = vsel %vm2269, %v3591, %v3593
      %v3595 = vrot.slane %v3522, 1
      %v3596 = vsel %vm2269, %v3593, %v3595
      %v3597 = vrot.slane %v3523, 1
      %v3598 = vsel %vm2269, %v3595, %v3597
      %v3599 = vrot.slane %v3524, 1
      %v3600 = vsel %vm2269, %v3597, %v3599
      %v3601 = vrot.slane %v3525, 1
      %v3602 = vsel %vm2269, %v3599, %v3601
      %v3603 = vrot.slane %v3526, 1
      %v3604 = vsel %vm2269, %v3601, %v3603
      %v3605 = vrot.slane %v3527, 1
      %v3606 = vsel %vm2269, %v3603, %v3605
      %v3607 = vrot.slane %v3528, 1
      %v3608 = vsel %vm2269, %v3605, %v3607
      %v3609 = vrot.slane %v3529, 1
      %v3610 = vsel %vm2269, %v3607, %v3609
      %v3611 = vrot.slane %v3530, 1
      %v3612 = vsel %vm2269, %v3609, %v3611
      %v3613 = vrot.slane %v3531, 1
      %v3614 = vsel %vm2269, %v3611, %v3613
      %v3615 = vrot.slane %v3532, 1
      %v3616 = vsel %vm2269, %v3613, %v3615
      %v3617 = vrot.slane %v3533, 1
      %v3618 = vsel %vm2269, %v3615, %v3617
      %v3619 = vrot.slane %v3534, 1
      %v3620 = vsel %vm2269, %v3617, %v3619
      %v3621 = vrot.slane %v3535, 1
      %v3622 = vsel %vm2269, %v3619, %v3621
      %v3623 = vrot.slane %v3536, 1
      %v3624 = vsel %vm2269, %v3621, %v3623
      %v3625 = vrot.slane %v3537, 1
      %v3626 = vsel %vm2269, %v3623, %v3625
      %v3627 = vrot.slane %v3538, 1
      %v3628 = vsel %vm2269, %v3625, %v3627
      %v3629 = vrot.slane %v3539, 1
      %v3630 = vsel %vm2269, %v3627, %v3629
      %v3631 = vrot.slane %v3540, 1
      %v3632 = vsel %vm2269, %v3629, %v3631
      %v3633 = vrot.slane %v3541, 1
      %v3634 = vsel %vm2269, %v3631, %v3633
      %v3635 = vrot.slane %v3542, 1
      %v3636 = vsel %vm2269, %v3633, %v3635
      %v3637 = vrot.slane %v3543, 1
      %v3638 = vsel %vm2269, %v3635, %v3637
      %v3639 = vrot.slane %v3544, 1
      %v3640 = vsel %vm2269, %v3637, %v3639
      %v3641 = vrot.slane %v3545, 1
      %v3642 = vsel %vm2269, %v3639, %v3641
      %v3643 = vrot.slane %v3546, 1
      %v3644 = vsel %vm2269, %v3641, %v3643
      %v3645 = vrot.slane %v3547, 1
      %v3646 = vsel %vm2269, %v3643, %v3645
      %v3647 = vrot.slane %v3548, 1
      %v3648 = vsel %vm2269, %v3645, %v3647
      %v3649 = vrot.slane %v3549, 1
      %v3650 = vsel %vm2269, %v3647, %v3649
      %v3651 = vrot.slane %v3550, 1
      %v3652 = vsel %vm2269, %v3649, %v3651
      %v3653 = vrot.slane %v3551, 1
      %v3654 = vsel %vm2269, %v3651, %v3653
      %v3655 = vrot.slane %v3552, 1
      %v3656 = vsel %vm2269, %v3653, %v3655
      %v3657 = vrot.slane %v3553, 1
      %v3658 = vsel %vm2269, %v3655, %v3657
      %v3659 = vrot.slane %v3554, 1
      %v3660 = vsel %vm2269, %v3657, %v3659
      %v3661 = vrot.slane %v3555, 1
      %v3662 = vsel %vm2269, %v3659, %v3661
      %v3663 = vrot.slane %v3556, 1
      %v3664 = vsel %vm2269, %v3661, %v3663
      %v3665 = vrot.slane %v3557, 1
      %v3666 = vsel %vm2269, %v3663, %v3665
      %v3667 = vrot.slane %v3558, 1
      %v3668 = vsel %vm2269, %v3665, %v3667
      %v3669 = vrot.slane %v3559, 1
      %v3670 = vsel %vm2269, %v3667, %v3669
      %v3671 = vrot.slane %v3560, 1
      %v3672 = vsel %vm2269, %v3669, %v3671
      %v3673 = vrot.slane %v3561, 1
      %v3674 = vsel %vm2269, %v3671, %v3673
      %v3675 = vrot.slane %v3562, 1
      %v3676 = vsel %vm2269, %v3673, %v3675
      %v3677 = vrot.slane %v3563, 1
      %v3678 = vsel %vm2269, %v3675, %v3677
      %v3679 = vrot.slane %v3564, 1
      %v3680 = vsel %vm2269, %v3677, %v3679
      %v3681 = vrot.slane %v3565, 1
      %v3682 = vsel %vm2269, %v3679, %v3681
      %v3683 = vrot.slane %v3566, 1
      %v3684 = vsel %vm2269, %v3681, %v3683
      %v3685 = vrot.slane %v3567, 1
      %v3686 = vsel %vm2269, %v3683, %v3685
      %v3687 = vrot.slane %v3568, 1
      %v3688 = vsel %vm2269, %v3685, %v3687
      %v3689 = vrot.slane %v3569, 1
      %v3690 = vsel %vm2269, %v3687, %v3689
      %v3691 = vrot.slane %v3570, 1
      %v3692 = vsel %vm2269, %v3689, %v3691
      %v3693 = vrot.slane %v3571, 1
      %v3694 = vsel %vm2269, %v3691, %v3693
      %v3695 = vrot.slane %v3572, 1
      %v3696 = vsel %vm2269, %v3693, %v3695
      %v3697 = vrot.slane %v3573, 1
      %v3698 = vsel %vm2269, %v3695, %v3697
      %v3699 = vrot.slane %v3574, 1
      %v3700 = vsel %vm2269, %v3697, %v3699
      %v3701 = vrot.slane %v3575, 1
      %v3702 = vsel %vm2269, %v3699, %v3701
      %v3703 = vrot.slane %v3576, 1
      %v3704 = vsel %vm2269, %v3701, %v3703
      %v3705 = vrot.slane %v3577, 1
      %v3706 = vsel %vm2269, %v3703, %v3705
      %v3707 = vrot.slane %v3578, 1
      %v3708 = vsel %vm2269, %v3705, %v3707
      %v3709 = vrot.slane %v3579, 1
      %v3710 = vsel %vm2269, %v3707, %v3709
      %v3711 = vrot.slane %v3580, 1
      %v3712 = vsel %vm2269, %v3709, %v3711
      %v3713 = vrot.slane %v3581, 1
      %v3714 = vsel %vm2269, %v3711, %v3713
      %v3715 = vrot.slane %v3582, 1
      %v3716 = vsel %vm2269, %v3713, %v3715
      %v3717 = vrot.slane %v3583, 1
      %v3718 = vsel %vm2269, %v3715, %v3717
      %v3719 = vrot.slane %v3584, 1
      %v3720 = vsel %vm2269, %v3717, %v3719
      %v3721 = vrot.slane %v3585, 1
      %v3722 = vsel %vm2269, %v3719, %v3721
      %v3724 = vunpack.c.l.b16 %v3242
      %v3725 = vpack.c.b16 %v3724, %v3724
      %v3727 = vshrl.u32 %v3725, 16
      %v3729 = vshll.u32 %v3725, 16
      %v3731 = vrot.slane %v3729, 1
      %v3732 = vor.u32 %v3727, %v3731
      %v3734 = vsel %vm1214, %v3588, 0
      %v3737 = vsel %vm1214, %v3590, 0
      %v3740 = vsel %vm1214, %v3592, 0
      %v3743 = vsel %vm1214, %v3594, 0
      %v3746 = vsel %vm1214, %v3596, 0
      %v3749 = vsel %vm1214, %v3598, 0
      %v3752 = vsel %vm1214, %v3600, 0
      %v3755 = vsel %vm1214, %v3602, 0
      %v3758 = vsel %vm1214, %v3604, 0
      %v3761 = vsel %vm1214, %v3606, 0
      %v3764 = vsel %vm1214, %v3608, 0
      %v3767 = vsel %vm1214, %v3610, 0
      %v3770 = vsel %vm1214, %v3612, 0
      %v3773 = vsel %vm1214, %v3614, 0
      %v3776 = vsel %vm1214, %v3616, 0
      %v3779 = vsel %vm1214, %v3618, 0
      %v3782 = vsel %vm1214, %v3620, 0
      %v3785 = vsel %vm1214, %v3622, 0
      %v3788 = vsel %vm1214, %v3624, 0
      %v3791 = vsel %vm1214, %v3626, 0
      %v3794 = vsel %vm1214, %v3628, 0
      %v3797 = vsel %vm1214, %v3630, 0
      %v3800 = vsel %vm1214, %v3632, 0
      %v3803 = vsel %vm1214, %v3634, 0
      %v3806 = vsel %vm1214, %v3636, 0
      %v3809 = vsel %vm1214, %v3638, 0
      %v3812 = vsel %vm1214, %v3640, 0
      %v3815 = vsel %vm1214, %v3642, 0
      %v3818 = vsel %vm1214, %v3644, 0
      %v3821 = vsel %vm1214, %v3646, 0
      %v3824 = vsel %vm1214, %v3648, 0
      %v3827 = vsel %vm1214, %v3650, 0
      %v3830 = vsel %vm1214, %v3652, 0
      %v3833 = vsel %vm1214, %v3654, 0
      %v3836 = vsel %vm1214, %v3656, 0
      %v3839 = vsel %vm1214, %v3658, 0
      %v3842 = vsel %vm1214, %v3660, 0
      %v3845 = vsel %vm1214, %v3662, 0
      %v3848 = vsel %vm1214, %v3664, 0
      %v3851 = vsel %vm1214, %v3666, 0
      %v3854 = vsel %vm1214, %v3668, 0
      %v3857 = vsel %vm1214, %v3670, 0
      %v3860 = vsel %vm1214, %v3672, 0
      %v3863 = vsel %vm1214, %v3674, 0
      %v3866 = vsel %vm1214, %v3676, 0
      %v3869 = vsel %vm1214, %v3678, 0
      %v3872 = vsel %vm1214, %v3680, 0
      %v3875 = vsel %vm1214, %v3682, 0
      %v3878 = vsel %vm1214, %v3684, 0
      %v3881 = vsel %vm1214, %v3686, 0
      %v3884 = vsel %vm1214, %v3688, 0
      %v3887 = vsel %vm1214, %v3690, 0
      %v3890 = vsel %vm1214, %v3692, 0
      %v3893 = vsel %vm1214, %v3694, 0
      %v3896 = vsel %vm1214, %v3696, 0
      %v3899 = vsel %vm1214, %v3698, 0
      %v3902 = vsel %vm1214, %v3700, 0
      %v3905 = vsel %vm1214, %v3702, 0
      %v3908 = vsel %vm1214, %v3704, 0
      %v3911 = vsel %vm1214, %v3706, 0
      %v3914 = vsel %vm1214, %v3708, 0
      %v3917 = vsel %vm1214, %v3710, 0
      %v3920 = vsel %vm1214, %v3712, 0
      %v3923 = vsel %vm1214, %v3714, 0
      %v3926 = vsel %vm1214, %v3716, 0
      %v3929 = vsel %vm1214, %v3718, 0
      %v3932 = vsel %vm1214, %v3720, 0
      %v3935 = vsel %vm1214, %v3722, 0
      %v3938 = vand.u32 %v3732, %v1422
      %3940 = vmatpush.bf16.msra.mxu0 0
      %3941 = vmatpush.bf16.msra.mxu0 0
      %3942 = vmatpush.bf16.msra.mxu0 0
      %3943 = vmatpush.bf16.msra.mxu0 0
      %3944 = vmatpush.bf16.msra.mxu0 0
      %3945 = vmatpush.bf16.msra.mxu0 0
      %3946 = vmatpush.bf16.msra.mxu0 0
      %3947 = vmatpush.bf16.msra.mxu0 %v3938
      %3948 = vmatmul.bf16.gmra.mxu0 %v3734
      %v3949 = vpop.f32.mrf.mxu0
      %v3950 = vadd.f32 0.0, %v3949
      %v3951 = vpop.f32.mrf.mxu0
      %v3952 = vadd.f32 0.0, %v3951
      %3953 = vmatmul.bf16.gmra.mxu0 %v3737
      %v3954 = vpop.f32.mrf.mxu0
      %v3955 = vadd.f32 0.0, %v3954
      %v3956 = vpop.f32.mrf.mxu0
      %v3957 = vadd.f32 0.0, %v3956
      %3958 = vmatmul.bf16.gmra.mxu0 %v3740
      %v3959 = vpop.f32.mrf.mxu0
      %v3960 = vadd.f32 0.0, %v3959
      %v3961 = vpop.f32.mrf.mxu0
      %v3962 = vadd.f32 0.0, %v3961
      %3963 = vmatmul.bf16.gmra.mxu0 %v3743
      %v3964 = vpop.f32.mrf.mxu0
      %v3965 = vadd.f32 0.0, %v3964
      %v3966 = vpop.f32.mrf.mxu0
      %v3967 = vadd.f32 0.0, %v3966
      %3968 = vmatmul.bf16.gmra.mxu0 %v3746
      %v3969 = vpop.f32.mrf.mxu0
      %v3970 = vadd.f32 0.0, %v3969
      %v3971 = vpop.f32.mrf.mxu0
      %v3972 = vadd.f32 0.0, %v3971
      %3973 = vmatmul.bf16.gmra.mxu0 %v3749
      %v3974 = vpop.f32.mrf.mxu0
      %v3975 = vadd.f32 0.0, %v3974
      %v3976 = vpop.f32.mrf.mxu0
      %v3977 = vadd.f32 0.0, %v3976
      %3978 = vmatmul.bf16.gmra.mxu0 %v3752
      %v3979 = vpop.f32.mrf.mxu0
      %v3980 = vadd.f32 0.0, %v3979
      %v3981 = vpop.f32.mrf.mxu0
      %v3982 = vadd.f32 0.0, %v3981
      %3983 = vmatmul.bf16.gmra.mxu0 %v3755
      %v3984 = vpop.f32.mrf.mxu0
      %v3985 = vadd.f32 0.0, %v3984
      %v3986 = vpop.f32.mrf.mxu0
      %v3987 = vadd.f32 0.0, %v3986
      %3988 = vmatmul.bf16.gmra.mxu0 %v3758
      %v3989 = vpop.f32.mrf.mxu0
      %v3990 = vadd.f32 0.0, %v3989
      %v3991 = vpop.f32.mrf.mxu0
      %v3992 = vadd.f32 0.0, %v3991
      %3993 = vmatmul.bf16.gmra.mxu0 %v3761
      %v3994 = vpop.f32.mrf.mxu0
      %v3995 = vadd.f32 0.0, %v3994
      %v3996 = vpop.f32.mrf.mxu0
      %v3997 = vadd.f32 0.0, %v3996
      %3998 = vmatmul.bf16.gmra.mxu0 %v3764
      %v3999 = vpop.f32.mrf.mxu0
      %v4000 = vadd.f32 0.0, %v3999
      %v4001 = vpop.f32.mrf.mxu0
      %v4002 = vadd.f32 0.0, %v4001
      %4003 = vmatmul.bf16.gmra.mxu0 %v3767
      %v4004 = vpop.f32.mrf.mxu0
      %v4005 = vadd.f32 0.0, %v4004
      %v4006 = vpop.f32.mrf.mxu0
      %v4007 = vadd.f32 0.0, %v4006
      %4008 = vmatmul.bf16.gmra.mxu0 %v3770
      %v4009 = vpop.f32.mrf.mxu0
      %v4010 = vadd.f32 0.0, %v4009
      %v4011 = vpop.f32.mrf.mxu0
      %v4012 = vadd.f32 0.0, %v4011
      %4013 = vmatmul.bf16.gmra.mxu0 %v3773
      %v4014 = vpop.f32.mrf.mxu0
      %v4015 = vadd.f32 0.0, %v4014
      %v4016 = vpop.f32.mrf.mxu0
      %v4017 = vadd.f32 0.0, %v4016
      %4018 = vmatmul.bf16.gmra.mxu0 %v3776
      %v4019 = vpop.f32.mrf.mxu0
      %v4020 = vadd.f32 0.0, %v4019
      %v4021 = vpop.f32.mrf.mxu0
      %v4022 = vadd.f32 0.0, %v4021
      %4023 = vmatmul.bf16.gmra.mxu0 %v3779
      %v4024 = vpop.f32.mrf.mxu0
      %v4025 = vadd.f32 0.0, %v4024
      %v4026 = vpop.f32.mrf.mxu0
      %v4027 = vadd.f32 0.0, %v4026
      %4028 = vmatmul.bf16.gmra.mxu0 %v3782
      %v4029 = vpop.f32.mrf.mxu0
      %v4030 = vadd.f32 0.0, %v4029
      %v4031 = vpop.f32.mrf.mxu0
      %v4032 = vadd.f32 0.0, %v4031
      %4033 = vmatmul.bf16.gmra.mxu0 %v3785
      %v4034 = vpop.f32.mrf.mxu0
      %v4035 = vadd.f32 0.0, %v4034
      %v4036 = vpop.f32.mrf.mxu0
      %v4037 = vadd.f32 0.0, %v4036
      %4038 = vmatmul.bf16.gmra.mxu0 %v3788
      %v4039 = vpop.f32.mrf.mxu0
      %v4040 = vadd.f32 0.0, %v4039
      %v4041 = vpop.f32.mrf.mxu0
      %v4042 = vadd.f32 0.0, %v4041
      %4043 = vmatmul.bf16.gmra.mxu0 %v3791
      %v4044 = vpop.f32.mrf.mxu0
      %v4045 = vadd.f32 0.0, %v4044
      %v4046 = vpop.f32.mrf.mxu0
      %v4047 = vadd.f32 0.0, %v4046
      %4048 = vmatmul.bf16.gmra.mxu0 %v3794
      %v4049 = vpop.f32.mrf.mxu0
      %v4050 = vadd.f32 0.0, %v4049
      %v4051 = vpop.f32.mrf.mxu0
      %v4052 = vadd.f32 0.0, %v4051
      %4053 = vmatmul.bf16.gmra.mxu0 %v3797
      %v4054 = vpop.f32.mrf.mxu0
      %v4055 = vadd.f32 0.0, %v4054
      %v4056 = vpop.f32.mrf.mxu0
      %v4057 = vadd.f32 0.0, %v4056
      %4058 = vmatmul.bf16.gmra.mxu0 %v3800
      %v4059 = vpop.f32.mrf.mxu0
      %v4060 = vadd.f32 0.0, %v4059
      %v4061 = vpop.f32.mrf.mxu0
      %v4062 = vadd.f32 0.0, %v4061
      %4063 = vmatmul.bf16.gmra.mxu0 %v3803
      %v4064 = vpop.f32.mrf.mxu0
      %v4065 = vadd.f32 0.0, %v4064
      %v4066 = vpop.f32.mrf.mxu0
      %v4067 = vadd.f32 0.0, %v4066
      %4068 = vmatmul.bf16.gmra.mxu0 %v3806
      %v4069 = vpop.f32.mrf.mxu0
      %v4070 = vadd.f32 0.0, %v4069
      %v4071 = vpop.f32.mrf.mxu0
      %v4072 = vadd.f32 0.0, %v4071
      %4073 = vmatmul.bf16.gmra.mxu0 %v3809
      %v4074 = vpop.f32.mrf.mxu0
      %v4075 = vadd.f32 0.0, %v4074
      %v4076 = vpop.f32.mrf.mxu0
      %v4077 = vadd.f32 0.0, %v4076
      %4078 = vmatmul.bf16.gmra.mxu0 %v3812
      %v4079 = vpop.f32.mrf.mxu0
      %v4080 = vadd.f32 0.0, %v4079
      %v4081 = vpop.f32.mrf.mxu0
      %v4082 = vadd.f32 0.0, %v4081
      %4083 = vmatmul.bf16.gmra.mxu0 %v3815
      %v4084 = vpop.f32.mrf.mxu0
      %v4085 = vadd.f32 0.0, %v4084
      %v4086 = vpop.f32.mrf.mxu0
      %v4087 = vadd.f32 0.0, %v4086
      %4088 = vmatmul.bf16.gmra.mxu0 %v3818
      %v4089 = vpop.f32.mrf.mxu0
      %v4090 = vadd.f32 0.0, %v4089
      %v4091 = vpop.f32.mrf.mxu0
      %v4092 = vadd.f32 0.0, %v4091
      %4093 = vmatmul.bf16.gmra.mxu0 %v3821
      %v4094 = vpop.f32.mrf.mxu0
      %v4095 = vadd.f32 0.0, %v4094
      %v4096 = vpop.f32.mrf.mxu0
      %v4097 = vadd.f32 0.0, %v4096
      %4098 = vmatmul.bf16.gmra.mxu0 %v3824
      %v4099 = vpop.f32.mrf.mxu0
      %v4100 = vadd.f32 0.0, %v4099
      %v4101 = vpop.f32.mrf.mxu0
      %v4102 = vadd.f32 0.0, %v4101
      %4103 = vmatmul.bf16.gmra.mxu0 %v3827
      %v4104 = vpop.f32.mrf.mxu0
      %v4105 = vadd.f32 0.0, %v4104
      %v4106 = vpop.f32.mrf.mxu0
      %v4107 = vadd.f32 0.0, %v4106
      %4108 = vmatmul.bf16.gmra.mxu0 %v3830
      %v4109 = vpop.f32.mrf.mxu0
      %v4110 = vadd.f32 0.0, %v4109
      %v4111 = vpop.f32.mrf.mxu0
      %v4112 = vadd.f32 0.0, %v4111
      %4113 = vmatmul.bf16.gmra.mxu0 %v3833
      %v4114 = vpop.f32.mrf.mxu0
      %v4115 = vadd.f32 0.0, %v4114
      %v4116 = vpop.f32.mrf.mxu0
      %v4117 = vadd.f32 0.0, %v4116
      %4118 = vmatmul.bf16.gmra.mxu0 %v3836
      %v4119 = vpop.f32.mrf.mxu0
      %v4120 = vadd.f32 0.0, %v4119
      %v4121 = vpop.f32.mrf.mxu0
      %v4122 = vadd.f32 0.0, %v4121
      %4123 = vmatmul.bf16.gmra.mxu0 %v3839
      %v4124 = vpop.f32.mrf.mxu0
      %v4125 = vadd.f32 0.0, %v4124
      %v4126 = vpop.f32.mrf.mxu0
      %v4127 = vadd.f32 0.0, %v4126
      %4128 = vmatmul.bf16.gmra.mxu0 %v3842
      %v4129 = vpop.f32.mrf.mxu0
      %v4130 = vadd.f32 0.0, %v4129
      %v4131 = vpop.f32.mrf.mxu0
      %v4132 = vadd.f32 0.0, %v4131
      %4133 = vmatmul.bf16.gmra.mxu0 %v3845
      %v4134 = vpop.f32.mrf.mxu0
      %v4135 = vadd.f32 0.0, %v4134
      %v4136 = vpop.f32.mrf.mxu0
      %v4137 = vadd.f32 0.0, %v4136
      %4138 = vmatmul.bf16.gmra.mxu0 %v3848
      %v4139 = vpop.f32.mrf.mxu0
      %v4140 = vadd.f32 0.0, %v4139
      %v4141 = vpop.f32.mrf.mxu0
      %v4142 = vadd.f32 0.0, %v4141
      %4143 = vmatmul.bf16.gmra.mxu0 %v3851
      %v4144 = vpop.f32.mrf.mxu0
      %v4145 = vadd.f32 0.0, %v4144
      %v4146 = vpop.f32.mrf.mxu0
      %v4147 = vadd.f32 0.0, %v4146
      %4148 = vmatmul.bf16.gmra.mxu0 %v3854
      %v4149 = vpop.f32.mrf.mxu0
      %v4150 = vadd.f32 0.0, %v4149
      %v4151 = vpop.f32.mrf.mxu0
      %v4152 = vadd.f32 0.0, %v4151
      %4153 = vmatmul.bf16.gmra.mxu0 %v3857
      %v4154 = vpop.f32.mrf.mxu0
      %v4155 = vadd.f32 0.0, %v4154
      %v4156 = vpop.f32.mrf.mxu0
      %v4157 = vadd.f32 0.0, %v4156
      %4158 = vmatmul.bf16.gmra.mxu0 %v3860
      %v4159 = vpop.f32.mrf.mxu0
      %v4160 = vadd.f32 0.0, %v4159
      %v4161 = vpop.f32.mrf.mxu0
      %v4162 = vadd.f32 0.0, %v4161
      %4163 = vmatmul.bf16.gmra.mxu0 %v3863
      %v4164 = vpop.f32.mrf.mxu0
      %v4165 = vadd.f32 0.0, %v4164
      %v4166 = vpop.f32.mrf.mxu0
      %v4167 = vadd.f32 0.0, %v4166
      %4168 = vmatmul.bf16.gmra.mxu0 %v3866
      %v4169 = vpop.f32.mrf.mxu0
      %v4170 = vadd.f32 0.0, %v4169
      %v4171 = vpop.f32.mrf.mxu0
      %v4172 = vadd.f32 0.0, %v4171
      %4173 = vmatmul.bf16.gmra.mxu0 %v3869
      %v4174 = vpop.f32.mrf.mxu0
      %v4175 = vadd.f32 0.0, %v4174
      %v4176 = vpop.f32.mrf.mxu0
      %v4177 = vadd.f32 0.0, %v4176
      %4178 = vmatmul.bf16.gmra.mxu0 %v3872
      %v4179 = vpop.f32.mrf.mxu0
      %v4180 = vadd.f32 0.0, %v4179
      %v4181 = vpop.f32.mrf.mxu0
      %v4182 = vadd.f32 0.0, %v4181
      %4183 = vmatmul.bf16.gmra.mxu0 %v3875
      %v4184 = vpop.f32.mrf.mxu0
      %v4185 = vadd.f32 0.0, %v4184
      %v4186 = vpop.f32.mrf.mxu0
      %v4187 = vadd.f32 0.0, %v4186
      %4188 = vmatmul.bf16.gmra.mxu0 %v3878
      %v4189 = vpop.f32.mrf.mxu0
      %v4190 = vadd.f32 0.0, %v4189
      %v4191 = vpop.f32.mrf.mxu0
      %v4192 = vadd.f32 0.0, %v4191
      %4193 = vmatmul.bf16.gmra.mxu0 %v3881
      %v4194 = vpop.f32.mrf.mxu0
      %v4195 = vadd.f32 0.0, %v4194
      %v4196 = vpop.f32.mrf.mxu0
      %v4197 = vadd.f32 0.0, %v4196
      %4198 = vmatmul.bf16.gmra.mxu0 %v3884
      %v4199 = vpop.f32.mrf.mxu0
      %v4200 = vadd.f32 0.0, %v4199
      %v4201 = vpop.f32.mrf.mxu0
      %v4202 = vadd.f32 0.0, %v4201
      %4203 = vmatmul.bf16.gmra.mxu0 %v3887
      %v4204 = vpop.f32.mrf.mxu0
      %v4205 = vadd.f32 0.0, %v4204
      %v4206 = vpop.f32.mrf.mxu0
      %v4207 = vadd.f32 0.0, %v4206
      %4208 = vmatmul.bf16.gmra.mxu0 %v3890
      %v4209 = vpop.f32.mrf.mxu0
      %v4210 = vadd.f32 0.0, %v4209
      %v4211 = vpop.f32.mrf.mxu0
      %v4212 = vadd.f32 0.0, %v4211
      %4213 = vmatmul.bf16.gmra.mxu0 %v3893
      %v4214 = vpop.f32.mrf.mxu0
      %v4215 = vadd.f32 0.0, %v4214
      %v4216 = vpop.f32.mrf.mxu0
      %v4217 = vadd.f32 0.0, %v4216
      %4218 = vmatmul.bf16.gmra.mxu0 %v3896
      %v4219 = vpop.f32.mrf.mxu0
      %v4220 = vadd.f32 0.0, %v4219
      %v4221 = vpop.f32.mrf.mxu0
      %v4222 = vadd.f32 0.0, %v4221
      %4223 = vmatmul.bf16.gmra.mxu0 %v3899
      %v4224 = vpop.f32.mrf.mxu0
      %v4225 = vadd.f32 0.0, %v4224
      %v4226 = vpop.f32.mrf.mxu0
      %v4227 = vadd.f32 0.0, %v4226
      %4228 = vmatmul.bf16.gmra.mxu0 %v3902
      %v4229 = vpop.f32.mrf.mxu0
      %v4230 = vadd.f32 0.0, %v4229
      %v4231 = vpop.f32.mrf.mxu0
      %v4232 = vadd.f32 0.0, %v4231
      %4233 = vmatmul.bf16.gmra.mxu0 %v3905
      %v4234 = vpop.f32.mrf.mxu0
      %v4235 = vadd.f32 0.0, %v4234
      %v4236 = vpop.f32.mrf.mxu0
      %v4237 = vadd.f32 0.0, %v4236
      %4238 = vmatmul.bf16.gmra.mxu0 %v3908
      %v4239 = vpop.f32.mrf.mxu0
      %v4240 = vadd.f32 0.0, %v4239
      %v4241 = vpop.f32.mrf.mxu0
      %v4242 = vadd.f32 0.0, %v4241
      %4243 = vmatmul.bf16.gmra.mxu0 %v3911
      %v4244 = vpop.f32.mrf.mxu0
      %v4245 = vadd.f32 0.0, %v4244
      %v4246 = vpop.f32.mrf.mxu0
      %v4247 = vadd.f32 0.0, %v4246
      %4248 = vmatmul.bf16.gmra.mxu0 %v3914
      %v4249 = vpop.f32.mrf.mxu0
      %v4250 = vadd.f32 0.0, %v4249
      %v4251 = vpop.f32.mrf.mxu0
      %v4252 = vadd.f32 0.0, %v4251
      %4253 = vmatmul.bf16.gmra.mxu0 %v3917
      %v4254 = vpop.f32.mrf.mxu0
      %v4255 = vadd.f32 0.0, %v4254
      %v4256 = vpop.f32.mrf.mxu0
      %v4257 = vadd.f32 0.0, %v4256
      %4258 = vmatmul.bf16.gmra.mxu0 %v3920
      %v4259 = vpop.f32.mrf.mxu0
      %v4260 = vadd.f32 0.0, %v4259
      %v4261 = vpop.f32.mrf.mxu0
      %v4262 = vadd.f32 0.0, %v4261
      %4263 = vmatmul.bf16.gmra.mxu0 %v3923
      %v4264 = vpop.f32.mrf.mxu0
      %v4265 = vadd.f32 0.0, %v4264
      %v4266 = vpop.f32.mrf.mxu0
      %v4267 = vadd.f32 0.0, %v4266
      %4268 = vmatmul.bf16.gmra.mxu0 %v3926
      %v4269 = vpop.f32.mrf.mxu0
      %v4270 = vadd.f32 0.0, %v4269
      %v4271 = vpop.f32.mrf.mxu0
      %v4272 = vadd.f32 0.0, %v4271
      %4273 = vmatmul.bf16.gmra.mxu0 %v3929
      %v4274 = vpop.f32.mrf.mxu0
      %v4275 = vadd.f32 0.0, %v4274
      %v4276 = vpop.f32.mrf.mxu0
      %v4277 = vadd.f32 0.0, %v4276
      %4278 = vmatmul.bf16.gmra.mxu0 %v3932
      %v4279 = vpop.f32.mrf.mxu0
      %v4280 = vadd.f32 0.0, %v4279
      %v4281 = vpop.f32.mrf.mxu0
      %v4282 = vadd.f32 0.0, %v4281
      %4283 = vmatmul.bf16.gmra.mxu0 %v3935
      %v4284 = vpop.f32.mrf.mxu0
      %v4285 = vadd.f32 0.0, %v4284
      %v4286 = vpop.f32.mrf.mxu0
      %v4287 = vadd.f32 0.0, %v4286
      %4288 = vdwg.mxu0
      %v4289 = vadd.f32 %v2969, %v3950
      %v4290 = vadd.f32 %v2970, %v3952
      %v4291 = vadd.f32 %v2971, %v3955
      %v4292 = vadd.f32 %v2972, %v3957
      %v4293 = vadd.f32 %v2973, %v3960
      %v4294 = vadd.f32 %v2974, %v3962
      %v4295 = vadd.f32 %v2975, %v3965
      %v4296 = vadd.f32 %v2976, %v3967
      %v4297 = vadd.f32 %v2977, %v3970
      %v4298 = vadd.f32 %v2978, %v3972
      %v4299 = vadd.f32 %v2979, %v3975
      %v4300 = vadd.f32 %v2980, %v3977
      %v4301 = vadd.f32 %v2981, %v3980
      %v4302 = vadd.f32 %v2982, %v3982
      %v4303 = vadd.f32 %v2983, %v3985
      %v4304 = vadd.f32 %v2984, %v3987
      %v4305 = vadd.f32 %v2985, %v3990
      %v4306 = vadd.f32 %v2986, %v3992
      %v4307 = vadd.f32 %v2987, %v3995
      %v4308 = vadd.f32 %v2988, %v3997
      %v4309 = vadd.f32 %v2989, %v4000
      %v4310 = vadd.f32 %v2990, %v4002
      %v4311 = vadd.f32 %v2991, %v4005
      %v4312 = vadd.f32 %v2992, %v4007
      %v4313 = vadd.f32 %v2993, %v4010
      %v4314 = vadd.f32 %v2994, %v4012
      %v4315 = vadd.f32 %v2995, %v4015
      %v4316 = vadd.f32 %v2996, %v4017
      %v4317 = vadd.f32 %v2997, %v4020
      %v4318 = vadd.f32 %v2998, %v4022
      %v4319 = vadd.f32 %v2999, %v4025
      %v4320 = vadd.f32 %v3000, %v4027
      %v4321 = vadd.f32 %v3001, %v4030
      %v4322 = vadd.f32 %v3002, %v4032
      %v4323 = vadd.f32 %v3003, %v4035
      %v4324 = vadd.f32 %v3004, %v4037
      %v4325 = vadd.f32 %v3005, %v4040
      %v4326 = vadd.f32 %v3006, %v4042
      %v4327 = vadd.f32 %v3007, %v4045
      %v4328 = vadd.f32 %v3008, %v4047
      %v4329 = vadd.f32 %v3009, %v4050
      %v4330 = vadd.f32 %v3010, %v4052
      %v4331 = vadd.f32 %v3011, %v4055
      %v4332 = vadd.f32 %v3012, %v4057
      %v4333 = vadd.f32 %v3013, %v4060
      %v4334 = vadd.f32 %v3014, %v4062
      %v4335 = vadd.f32 %v3015, %v4065
      %v4336 = vadd.f32 %v3016, %v4067
      %v4337 = vadd.f32 %v3017, %v4070
      %v4338 = vadd.f32 %v3018, %v4072
      %v4339 = vadd.f32 %v3019, %v4075
      %v4340 = vadd.f32 %v3020, %v4077
      %v4341 = vadd.f32 %v3021, %v4080
      %v4342 = vadd.f32 %v3022, %v4082
      %v4343 = vadd.f32 %v3023, %v4085
      %v4344 = vadd.f32 %v3024, %v4087
      %v4345 = vadd.f32 %v3025, %v4090
      %v4346 = vadd.f32 %v3026, %v4092
      %v4347 = vadd.f32 %v3027, %v4095
      %v4348 = vadd.f32 %v3028, %v4097
      %v4349 = vadd.f32 %v3029, %v4100
      %v4350 = vadd.f32 %v3030, %v4102
      %v4351 = vadd.f32 %v3031, %v4105
      %v4352 = vadd.f32 %v3032, %v4107
      %v4353 = vadd.f32 %v3033, %v4110
      %v4354 = vadd.f32 %v3034, %v4112
      %v4355 = vadd.f32 %v3035, %v4115
      %v4356 = vadd.f32 %v3036, %v4117
      %v4357 = vadd.f32 %v3037, %v4120
      %v4358 = vadd.f32 %v3038, %v4122
      %v4359 = vadd.f32 %v3039, %v4125
      %v4360 = vadd.f32 %v3040, %v4127
      %v4361 = vadd.f32 %v3041, %v4130
      %v4362 = vadd.f32 %v3042, %v4132
      %v4363 = vadd.f32 %v3043, %v4135
      %v4364 = vadd.f32 %v3044, %v4137
      %v4365 = vadd.f32 %v3045, %v4140
      %v4366 = vadd.f32 %v3046, %v4142
      %v4367 = vadd.f32 %v3047, %v4145
      %v4368 = vadd.f32 %v3048, %v4147
      %v4369 = vadd.f32 %v3049, %v4150
      %v4370 = vadd.f32 %v3050, %v4152
      %v4371 = vadd.f32 %v3051, %v4155
      %v4372 = vadd.f32 %v3052, %v4157
      %v4373 = vadd.f32 %v3053, %v4160
      %v4374 = vadd.f32 %v3054, %v4162
      %v4375 = vadd.f32 %v3055, %v4165
      %v4376 = vadd.f32 %v3056, %v4167
      %v4377 = vadd.f32 %v3057, %v4170
      %v4378 = vadd.f32 %v3058, %v4172
      %v4379 = vadd.f32 %v3059, %v4175
      %v4380 = vadd.f32 %v3060, %v4177
      %v4381 = vadd.f32 %v3061, %v4180
      %v4382 = vadd.f32 %v3062, %v4182
      %v4383 = vadd.f32 %v3063, %v4185
      %v4384 = vadd.f32 %v3064, %v4187
      %v4385 = vadd.f32 %v3065, %v4190
      %v4386 = vadd.f32 %v3066, %v4192
      %v4387 = vadd.f32 %v3067, %v4195
      %v4388 = vadd.f32 %v3068, %v4197
      %v4389 = vadd.f32 %v3069, %v4200
      %v4390 = vadd.f32 %v3070, %v4202
      %v4391 = vadd.f32 %v3071, %v4205
      %v4392 = vadd.f32 %v3072, %v4207
      %v4393 = vadd.f32 %v3073, %v4210
      %v4394 = vadd.f32 %v3074, %v4212
      %v4395 = vadd.f32 %v3075, %v4215
      %v4396 = vadd.f32 %v3076, %v4217
      %v4397 = vadd.f32 %v3077, %v4220
      %v4398 = vadd.f32 %v3078, %v4222
      %v4399 = vadd.f32 %v3079, %v4225
      %v4400 = vadd.f32 %v3080, %v4227
      %v4401 = vadd.f32 %v3081, %v4230
      %v4402 = vadd.f32 %v3082, %v4232
      %v4403 = vadd.f32 %v3083, %v4235
      %v4404 = vadd.f32 %v3084, %v4237
      %v4405 = vadd.f32 %v3085, %v4240
      %v4406 = vadd.f32 %v3086, %v4242
      %v4407 = vadd.f32 %v3087, %v4245
      %v4408 = vadd.f32 %v3088, %v4247
      %v4409 = vadd.f32 %v3089, %v4250
      %v4410 = vadd.f32 %v3090, %v4252
      %v4411 = vadd.f32 %v3091, %v4255
      %v4412 = vadd.f32 %v3092, %v4257
      %v4413 = vadd.f32 %v3093, %v4260
      %v4414 = vadd.f32 %v3094, %v4262
      %v4415 = vadd.f32 %v3095, %v4265
      %v4416 = vadd.f32 %v3096, %v4267
      %v4417 = vadd.f32 %v3097, %v4270
      %v4418 = vadd.f32 %v3098, %v4272
      %v4419 = vadd.f32 %v3099, %v4275
      %v4420 = vadd.f32 %v3100, %v4277
      %v4421 = vadd.f32 %v3101, %v4280
      %v4422 = vadd.f32 %v3102, %v4282
      %v4423 = vadd.f32 %v3103, %v4285
      %v4424 = vadd.f32 %v3104, %v4287
      %v4425 = vld [vmem:[%s165 + $0x230] sm:$0x3]
      %v4426 = vld [vmem:[%s1 + $0x4] sm:$0xc]
      %v4428 = vunpack.c.l.b16 %v4425
      %v4429 = vpack.c.b16 %v4428, %v4428
      %vm4430 = vsmask.f32 6400
      %v4432 = vshrl.u32 %v3517, 16
      %v4434 = vrot.slane %v4432, 1
      %v4435 = vshll.u32 %v3517, 16
      %v4437 = vrot.slane %v4435, 2
      %v4438 = vor.u32 %v4434, %v4437
      %v4440 = vshrl.u32 %v3518, 16
      %v4442 = vrot.slane %v4440, 1
      %v4443 = vshll.u32 %v3518, 16
      %v4445 = vrot.slane %v4443, 2
      %v4446 = vor.u32 %v4442, %v4445
      %v4447 = vsel %vm4430, %v4438, %v4446
      %v4449 = vshrl.u32 %v3519, 16
      %v4451 = vrot.slane %v4449, 1
      %v4452 = vshll.u32 %v3519, 16
      %v4454 = vrot.slane %v4452, 2
      %v4455 = vor.u32 %v4451, %v4454
      %v4456 = vsel %vm4430, %v4446, %v4455
      %v4458 = vshrl.u32 %v3520, 16
      %v4460 = vrot.slane %v4458, 1
      %v4461 = vshll.u32 %v3520, 16
      %v4463 = vrot.slane %v4461, 2
      %v4464 = vor.u32 %v4460, %v4463
      %v4465 = vsel %vm4430, %v4455, %v4464
      %v4467 = vshrl.u32 %v3521, 16
      %v4469 = vrot.slane %v4467, 1
      %v4470 = vshll.u32 %v3521, 16
      %v4472 = vrot.slane %v4470, 2
      %v4473 = vor.u32 %v4469, %v4472
      %v4474 = vsel %vm4430, %v4464, %v4473
      %v4476 = vshrl.u32 %v3522, 16
      %v4478 = vrot.slane %v4476, 1
      %v4479 = vshll.u32 %v3522, 16
      %v4481 = vrot.slane %v4479, 2
      %v4482 = vor.u32 %v4478, %v4481
      %v4483 = vsel %vm4430, %v4473, %v4482
      %v4485 = vshrl.u32 %v3523, 16
      %v4487 = vrot.slane %v4485, 1
      %v4488 = vshll.u32 %v3523, 16
      %v4490 = vrot.slane %v4488, 2
      %v4491 = vor.u32 %v4487, %v4490
      %v4492 = vsel %vm4430, %v4482, %v4491
      %v4494 = vshrl.u32 %v3524, 16
      %v4496 = vrot.slane %v4494, 1
      %v4497 = vshll.u32 %v3524, 16
      %v4499 = vrot.slane %v4497, 2
      %v4500 = vor.u32 %v4496, %v4499
      %v4501 = vsel %vm4430, %v4491, %v4500
      %v4503 = vshrl.u32 %v3525, 16
      %v4505 = vrot.slane %v4503, 1
      %v4506 = vshll.u32 %v3525, 16
      %v4508 = vrot.slane %v4506, 2
      %v4509 = vor.u32 %v4505, %v4508
      %v4510 = vsel %vm4430, %v4500, %v4509
      %v4512 = vshrl.u32 %v3526, 16
      %v4514 = vrot.slane %v4512, 1
      %v4515 = vshll.u32 %v3526, 16
      %v4517 = vrot.slane %v4515, 2
      %v4518 = vor.u32 %v4514, %v4517
      %v4519 = vsel %vm4430, %v4509, %v4518
      %v4521 = vshrl.u32 %v3527, 16
      %v4523 = vrot.slane %v4521, 1
      %v4524 = vshll.u32 %v3527, 16
      %v4526 = vrot.slane %v4524, 2
      %v4527 = vor.u32 %v4523, %v4526
      %v4528 = vsel %vm4430, %v4518, %v4527
      %v4530 = vshrl.u32 %v3528, 16
      %v4532 = vrot.slane %v4530, 1
      %v4533 = vshll.u32 %v3528, 16
      %v4535 = vrot.slane %v4533, 2
      %v4536 = vor.u32 %v4532, %v4535
      %v4537 = vsel %vm4430, %v4527, %v4536
      %v4539 = vshrl.u32 %v3529, 16
      %v4541 = vrot.slane %v4539, 1
      %v4542 = vshll.u32 %v3529, 16
      %v4544 = vrot.slane %v4542, 2
      %v4545 = vor.u32 %v4541, %v4544
      %v4546 = vsel %vm4430, %v4536, %v4545
      %v4548 = vshrl.u32 %v3530, 16
      %v4550 = vrot.slane %v4548, 1
      %v4551 = vshll.u32 %v3530, 16
      %v4553 = vrot.slane %v4551, 2
      %v4554 = vor.u32 %v4550, %v4553
      %v4555 = vsel %vm4430, %v4545, %v4554
      %v4557 = vshrl.u32 %v3531, 16
      %v4559 = vrot.slane %v4557, 1
      %v4560 = vshll.u32 %v3531, 16
      %v4562 = vrot.slane %v4560, 2
      %v4563 = vor.u32 %v4559, %v4562
      %v4564 = vsel %vm4430, %v4554, %v4563
      %v4566 = vshrl.u32 %v3532, 16
      %v4568 = vrot.slane %v4566, 1
      %v4569 = vshll.u32 %v3532, 16
      %v4571 = vrot.slane %v4569, 2
      %v4572 = vor.u32 %v4568, %v4571
      %v4573 = vsel %vm4430, %v4563, %v4572
      %v4575 = vshrl.u32 %v3533, 16
      %v4577 = vrot.slane %v4575, 1
      %v4578 = vshll.u32 %v3533, 16
      %v4580 = vrot.slane %v4578, 2
      %v4581 = vor.u32 %v4577, %v4580
      %v4582 = vsel %vm4430, %v4572, %v4581
      %v4584 = vshrl.u32 %v3534, 16
      %v4586 = vrot.slane %v4584, 1
      %v4587 = vshll.u32 %v3534, 16
      %v4589 = vrot.slane %v4587, 2
      %v4590 = vor.u32 %v4586, %v4589
      %v4591 = vsel %vm4430, %v4581, %v4590
      %v4593 = vshrl.u32 %v3535, 16
      %v4595 = vrot.slane %v4593, 1
      %v4596 = vshll.u32 %v3535, 16
      %v4598 = vrot.slane %v4596, 2
      %v4599 = vor.u32 %v4595, %v4598
      %v4600 = vsel %vm4430, %v4590, %v4599
      %v4602 = vshrl.u32 %v3536, 16
      %v4604 = vrot.slane %v4602, 1
      %v4605 = vshll.u32 %v3536, 16
      %v4607 = vrot.slane %v4605, 2
      %v4608 = vor.u32 %v4604, %v4607
      %v4609 = vsel %vm4430, %v4599, %v4608
      %v4611 = vshrl.u32 %v3537, 16
      %v4613 = vrot.slane %v4611, 1
      %v4614 = vshll.u32 %v3537, 16
      %v4616 = vrot.slane %v4614, 2
      %v4617 = vor.u32 %v4613, %v4616
      %v4618 = vsel %vm4430, %v4608, %v4617
      %v4620 = vshrl.u32 %v3538, 16
      %v4622 = vrot.slane %v4620, 1
      %v4623 = vshll.u32 %v3538, 16
      %v4625 = vrot.slane %v4623, 2
      %v4626 = vor.u32 %v4622, %v4625
      %v4627 = vsel %vm4430, %v4617, %v4626
      %v4629 = vshrl.u32 %v3539, 16
      %v4631 = vrot.slane %v4629, 1
      %v4632 = vshll.u32 %v3539, 16
      %v4634 = vrot.slane %v4632, 2
      %v4635 = vor.u32 %v4631, %v4634
      %v4636 = vsel %vm4430, %v4626, %v4635
      %v4638 = vshrl.u32 %v3540, 16
      %v4640 = vrot.slane %v4638, 1
      %v4641 = vshll.u32 %v3540, 16
      %v4643 = vrot.slane %v4641, 2
      %v4644 = vor.u32 %v4640, %v4643
      %v4645 = vsel %vm4430, %v4635, %v4644
      %v4647 = vshrl.u32 %v3541, 16
      %v4649 = vrot.slane %v4647, 1
      %v4650 = vshll.u32 %v3541, 16
      %v4652 = vrot.slane %v4650, 2
      %v4653 = vor.u32 %v4649, %v4652
      %v4654 = vsel %vm4430, %v4644, %v4653
      %v4656 = vshrl.u32 %v3542, 16
      %v4658 = vrot.slane %v4656, 1
      %v4659 = vshll.u32 %v3542, 16
      %v4661 = vrot.slane %v4659, 2
      %v4662 = vor.u32 %v4658, %v4661
      %v4663 = vsel %vm4430, %v4653, %v4662
      %v4665 = vshrl.u32 %v3543, 16
      %v4667 = vrot.slane %v4665, 1
      %v4668 = vshll.u32 %v3543, 16
      %v4670 = vrot.slane %v4668, 2
      %v4671 = vor.u32 %v4667, %v4670
      %v4672 = vsel %vm4430, %v4662, %v4671
      %v4674 = vshrl.u32 %v3544, 16
      %v4676 = vrot.slane %v4674, 1
      %v4677 = vshll.u32 %v3544, 16
      %v4679 = vrot.slane %v4677, 2
      %v4680 = vor.u32 %v4676, %v4679
      %v4681 = vsel %vm4430, %v4671, %v4680
      %v4683 = vshrl.u32 %v3545, 16
      %v4685 = vrot.slane %v4683, 1
      %v4686 = vshll.u32 %v3545, 16
      %v4688 = vrot.slane %v4686, 2
      %v4689 = vor.u32 %v4685, %v4688
      %v4690 = vsel %vm4430, %v4680, %v4689
      %v4692 = vshrl.u32 %v3546, 16
      %v4694 = vrot.slane %v4692, 1
      %v4695 = vshll.u32 %v3546, 16
      %v4697 = vrot.slane %v4695, 2
      %v4698 = vor.u32 %v4694, %v4697
      %v4699 = vsel %vm4430, %v4689, %v4698
      %v4701 = vshrl.u32 %v3547, 16
      %v4703 = vrot.slane %v4701, 1
      %v4704 = vshll.u32 %v3547, 16
      %v4706 = vrot.slane %v4704, 2
      %v4707 = vor.u32 %v4703, %v4706
      %v4708 = vsel %vm4430, %v4698, %v4707
      %v4710 = vshrl.u32 %v3548, 16
      %v4712 = vrot.slane %v4710, 1
      %v4713 = vshll.u32 %v3548, 16
      %v4715 = vrot.slane %v4713, 2
      %v4716 = vor.u32 %v4712, %v4715
      %v4717 = vsel %vm4430, %v4707, %v4716
      %v4719 = vshrl.u32 %v3549, 16
      %v4721 = vrot.slane %v4719, 1
      %v4722 = vshll.u32 %v3549, 16
      %v4724 = vrot.slane %v4722, 2
      %v4725 = vor.u32 %v4721, %v4724
      %v4726 = vsel %vm4430, %v4716, %v4725
      %v4728 = vshrl.u32 %v3550, 16
      %v4730 = vrot.slane %v4728, 1
      %v4731 = vshll.u32 %v3550, 16
      %v4733 = vrot.slane %v4731, 2
      %v4734 = vor.u32 %v4730, %v4733
      %v4735 = vsel %vm4430, %v4725, %v4734
      %v4737 = vshrl.u32 %v3551, 16
      %v4739 = vrot.slane %v4737, 1
      %v4740 = vshll.u32 %v3551, 16
      %v4742 = vrot.slane %v4740, 2
      %v4743 = vor.u32 %v4739, %v4742
      %v4744 = vsel %vm4430, %v4734, %v4743
      %v4746 = vshrl.u32 %v3552, 16
      %v4748 = vrot.slane %v4746, 1
      %v4749 = vshll.u32 %v3552, 16
      %v4751 = vrot.slane %v4749, 2
      %v4752 = vor.u32 %v4748, %v4751
      %v4753 = vsel %vm4430, %v4743, %v4752
      %v4755 = vshrl.u32 %v3553, 16
      %v4757 = vrot.slane %v4755, 1
      %v4758 = vshll.u32 %v3553, 16
      %v4760 = vrot.slane %v4758, 2
      %v4761 = vor.u32 %v4757, %v4760
      %v4762 = vsel %vm4430, %v4752, %v4761
      %v4764 = vshrl.u32 %v3554, 16
      %v4766 = vrot.slane %v4764, 1
      %v4767 = vshll.u32 %v3554, 16
      %v4769 = vrot.slane %v4767, 2
      %v4770 = vor.u32 %v4766, %v4769
      %v4771 = vsel %vm4430, %v4761, %v4770
      %v4773 = vshrl.u32 %v3555, 16
      %v4775 = vrot.slane %v4773, 1
      %v4776 = vshll.u32 %v3555, 16
      %v4778 = vrot.slane %v4776, 2
      %v4779 = vor.u32 %v4775, %v4778
      %v4780 = vsel %vm4430, %v4770, %v4779
      %v4782 = vshrl.u32 %v3556, 16
      %v4784 = vrot.slane %v4782, 1
      %v4785 = vshll.u32 %v3556, 16
      %v4787 = vrot.slane %v4785, 2
      %v4788 = vor.u32 %v4784, %v4787
      %v4789 = vsel %vm4430, %v4779, %v4788
      %v4791 = vshrl.u32 %v3557, 16
      %v4793 = vrot.slane %v4791, 1
      %v4794 = vshll.u32 %v3557, 16
      %v4796 = vrot.slane %v4794, 2
      %v4797 = vor.u32 %v4793, %v4796
      %v4798 = vsel %vm4430, %v4788, %v4797
      %v4800 = vshrl.u32 %v3558, 16
      %v4802 = vrot.slane %v4800, 1
      %v4803 = vshll.u32 %v3558, 16
      %v4805 = vrot.slane %v4803, 2
      %v4806 = vor.u32 %v4802, %v4805
      %v4807 = vsel %vm4430, %v4797, %v4806
      %v4809 = vshrl.u32 %v3559, 16
      %v4811 = vrot.slane %v4809, 1
      %v4812 = vshll.u32 %v3559, 16
      %v4814 = vrot.slane %v4812, 2
      %v4815 = vor.u32 %v4811, %v4814
      %v4816 = vsel %vm4430, %v4806, %v4815
      %v4818 = vshrl.u32 %v3560, 16
      %v4820 = vrot.slane %v4818, 1
      %v4821 = vshll.u32 %v3560, 16
      %v4823 = vrot.slane %v4821, 2
      %v4824 = vor.u32 %v4820, %v4823
      %v4825 = vsel %vm4430, %v4815, %v4824
      %v4827 = vshrl.u32 %v3561, 16
      %v4829 = vrot.slane %v4827, 1
      %v4830 = vshll.u32 %v3561, 16
      %v4832 = vrot.slane %v4830, 2
      %v4833 = vor.u32 %v4829, %v4832
      %v4834 = vsel %vm4430, %v4824, %v4833
      %v4836 = vshrl.u32 %v3562, 16
      %v4838 = vrot.slane %v4836, 1
      %v4839 = vshll.u32 %v3562, 16
      %v4841 = vrot.slane %v4839, 2
      %v4842 = vor.u32 %v4838, %v4841
      %v4843 = vsel %vm4430, %v4833, %v4842
      %v4845 = vshrl.u32 %v3563, 16
      %v4847 = vrot.slane %v4845, 1
      %v4848 = vshll.u32 %v3563, 16
      %v4850 = vrot.slane %v4848, 2
      %v4851 = vor.u32 %v4847, %v4850
      %v4852 = vsel %vm4430, %v4842, %v4851
      %v4854 = vshrl.u32 %v3564, 16
      %v4856 = vrot.slane %v4854, 1
      %v4857 = vshll.u32 %v3564, 16
      %v4859 = vrot.slane %v4857, 2
      %v4860 = vor.u32 %v4856, %v4859
      %v4861 = vsel %vm4430, %v4851, %v4860
      %v4863 = vshrl.u32 %v3565, 16
      %v4865 = vrot.slane %v4863, 1
      %v4866 = vshll.u32 %v3565, 16
      %v4868 = vrot.slane %v4866, 2
      %v4869 = vor.u32 %v4865, %v4868
      %v4870 = vsel %vm4430, %v4860, %v4869
      %v4872 = vshrl.u32 %v3566, 16
      %v4874 = vrot.slane %v4872, 1
      %v4875 = vshll.u32 %v3566, 16
      %v4877 = vrot.slane %v4875, 2
      %v4878 = vor.u32 %v4874, %v4877
      %v4879 = vsel %vm4430, %v4869, %v4878
      %v4881 = vshrl.u32 %v3567, 16
      %v4883 = vrot.slane %v4881, 1
      %v4884 = vshll.u32 %v3567, 16
      %v4886 = vrot.slane %v4884, 2
      %v4887 = vor.u32 %v4883, %v4886
      %v4888 = vsel %vm4430, %v4878, %v4887
      %v4890 = vshrl.u32 %v3568, 16
      %v4892 = vrot.slane %v4890, 1
      %v4893 = vshll.u32 %v3568, 16
      %v4895 = vrot.slane %v4893, 2
      %v4896 = vor.u32 %v4892, %v4895
      %v4897 = vsel %vm4430, %v4887, %v4896
      %v4899 = vshrl.u32 %v3569, 16
      %v4901 = vrot.slane %v4899, 1
      %v4902 = vshll.u32 %v3569, 16
      %v4904 = vrot.slane %v4902, 2
      %v4905 = vor.u32 %v4901, %v4904
      %v4906 = vsel %vm4430, %v4896, %v4905
      %v4908 = vshrl.u32 %v3570, 16
      %v4910 = vrot.slane %v4908, 1
      %v4911 = vshll.u32 %v3570, 16
      %v4913 = vrot.slane %v4911, 2
      %v4914 = vor.u32 %v4910, %v4913
      %v4915 = vsel %vm4430, %v4905, %v4914
      %v4917 = vshrl.u32 %v3571, 16
      %v4919 = vrot.slane %v4917, 1
      %v4920 = vshll.u32 %v3571, 16
      %v4922 = vrot.slane %v4920, 2
      %v4923 = vor.u32 %v4919, %v4922
      %v4924 = vsel %vm4430, %v4914, %v4923
      %v4926 = vshrl.u32 %v3572, 16
      %v4928 = vrot.slane %v4926, 1
      %v4929 = vshll.u32 %v3572, 16
      %v4931 = vrot.slane %v4929, 2
      %v4932 = vor.u32 %v4928, %v4931
      %v4933 = vsel %vm4430, %v4923, %v4932
      %v4935 = vshrl.u32 %v3573, 16
      %v4937 = vrot.slane %v4935, 1
      %v4938 = vshll.u32 %v3573, 16
      %v4940 = vrot.slane %v4938, 2
      %v4941 = vor.u32 %v4937, %v4940
      %v4942 = vsel %vm4430, %v4932, %v4941
      %v4944 = vshrl.u32 %v3574, 16
      %v4946 = vrot.slane %v4944, 1
      %v4947 = vshll.u32 %v3574, 16
      %v4949 = vrot.slane %v4947, 2
      %v4950 = vor.u32 %v4946, %v4949
      %v4951 = vsel %vm4430, %v4941, %v4950
      %v4953 = vshrl.u32 %v3575, 16
      %v4955 = vrot.slane %v4953, 1
      %v4956 = vshll.u32 %v3575, 16
      %v4958 = vrot.slane %v4956, 2
      %v4959 = vor.u32 %v4955, %v4958
      %v4960 = vsel %vm4430, %v4950, %v4959
      %v4962 = vshrl.u32 %v3576, 16
      %v4964 = vrot.slane %v4962, 1
      %v4965 = vshll.u32 %v3576, 16
      %v4967 = vrot.slane %v4965, 2
      %v4968 = vor.u32 %v4964, %v4967
      %v4969 = vsel %vm4430, %v4959, %v4968
      %v4971 = vshrl.u32 %v3577, 16
      %v4973 = vrot.slane %v4971, 1
      %v4974 = vshll.u32 %v3577, 16
      %v4976 = vrot.slane %v4974, 2
      %v4977 = vor.u32 %v4973, %v4976
      %v4978 = vsel %vm4430, %v4968, %v4977
      %v4980 = vshrl.u32 %v3578, 16
      %v4982 = vrot.slane %v4980, 1
      %v4983 = vshll.u32 %v3578, 16
      %v4985 = vrot.slane %v4983, 2
      %v4986 = vor.u32 %v4982, %v4985
      %v4987 = vsel %vm4430, %v4977, %v4986
      %v4989 = vshrl.u32 %v3579, 16
      %v4991 = vrot.slane %v4989, 1
      %v4992 = vshll.u32 %v3579, 16
      %v4994 = vrot.slane %v4992, 2
      %v4995 = vor.u32 %v4991, %v4994
      %v4996 = vsel %vm4430, %v4986, %v4995
      %v4998 = vshrl.u32 %v3580, 16
      %v5000 = vrot.slane %v4998, 1
      %v5001 = vshll.u32 %v3580, 16
      %v5003 = vrot.slane %v5001, 2
      %v5004 = vor.u32 %v5000, %v5003
      %v5005 = vsel %vm4430, %v4995, %v5004
      %v5007 = vshrl.u32 %v3581, 16
      %v5009 = vrot.slane %v5007, 1
      %v5010 = vshll.u32 %v3581, 16
      %v5012 = vrot.slane %v5010, 2
      %v5013 = vor.u32 %v5009, %v5012
      %v5014 = vsel %vm4430, %v5004, %v5013
      %v5016 = vshrl.u32 %v3582, 16
      %v5018 = vrot.slane %v5016, 1
      %v5019 = vshll.u32 %v3582, 16
      %v5021 = vrot.slane %v5019, 2
      %v5022 = vor.u32 %v5018, %v5021
      %v5023 = vsel %vm4430, %v5013, %v5022
      %v5025 = vshrl.u32 %v3583, 16
      %v5027 = vrot.slane %v5025, 1
      %v5028 = vshll.u32 %v3583, 16
      %v5030 = vrot.slane %v5028, 2
      %v5031 = vor.u32 %v5027, %v5030
      %v5032 = vsel %vm4430, %v5022, %v5031
      %v5034 = vshrl.u32 %v3584, 16
      %v5036 = vrot.slane %v5034, 1
      %v5037 = vshll.u32 %v3584, 16
      %v5039 = vrot.slane %v5037, 2
      %v5040 = vor.u32 %v5036, %v5039
      %v5041 = vsel %vm4430, %v5031, %v5040
      %v5043 = vshrl.u32 %v4429, 16
      %v5045 = vrot.slane %v5043, 1
      %v5046 = vshll.u32 %v4429, 16
      %v5048 = vrot.slane %v5046, 2
      %v5049 = vor.u32 %v5045, %v5048
      %v5050 = vsel %vm4430, %v5040, %v5049
      %v5052 = vunpack.c.l.b16 %v4426
      %v5053 = vpack.c.b16 %v5052, %v5052
      %v5054 = vrot.slane %v5053, 2
      %v5056 = vsel %vm1214, %v4447, 0
      %v5059 = vsel %vm1214, %v4456, 0
      %v5062 = vsel %vm1214, %v4465, 0
      %v5065 = vsel %vm1214, %v4474, 0
      %v5068 = vsel %vm1214, %v4483, 0
      %v5071 = vsel %vm1214, %v4492, 0
      %v5074 = vsel %vm1214, %v4501, 0
      %v5077 = vsel %vm1214, %v4510, 0
      %v5080 = vsel %vm1214, %v4519, 0
      %v5083 = vsel %vm1214, %v4528, 0
      %v5086 = vsel %vm1214, %v4537, 0
      %v5089 = vsel %vm1214, %v4546, 0
      %v5092 = vsel %vm1214, %v4555, 0
      %v5095 = vsel %vm1214, %v4564, 0
      %v5098 = vsel %vm1214, %v4573, 0
      %v5101 = vsel %vm1214, %v4582, 0
      %v5104 = vsel %vm1214, %v4591, 0
      %v5107 = vsel %vm1214, %v4600, 0
      %v5110 = vsel %vm1214, %v4609, 0
      %v5113 = vsel %vm1214, %v4618, 0
      %v5116 = vsel %vm1214, %v4627, 0
      %v5119 = vsel %vm1214, %v4636, 0
      %v5122 = vsel %vm1214, %v4645, 0
      %v5125 = vsel %vm1214, %v4654, 0
      %v5128 = vsel %vm1214, %v4663, 0
      %v5131 = vsel %vm1214, %v4672, 0
      %v5134 = vsel %vm1214, %v4681, 0
      %v5137 = vsel %vm1214, %v4690, 0
      %v5140 = vsel %vm1214, %v4699, 0
      %v5143 = vsel %vm1214, %v4708, 0
      %v5146 = vsel %vm1214, %v4717, 0
      %v5149 = vsel %vm1214, %v4726, 0
      %v5152 = vsel %vm1214, %v4735, 0
      %v5155 = vsel %vm1214, %v4744, 0
      %v5158 = vsel %vm1214, %v4753, 0
      %v5161 = vsel %vm1214, %v4762, 0
      %v5164 = vsel %vm1214, %v4771, 0
      %v5167 = vsel %vm1214, %v4780, 0
      %v5170 = vsel %vm1214, %v4789, 0
      %v5173 = vsel %vm1214, %v4798, 0
      %v5176 = vsel %vm1214, %v4807, 0
      %v5179 = vsel %vm1214, %v4816, 0
      %v5182 = vsel %vm1214, %v4825, 0
      %v5185 = vsel %vm1214, %v4834, 0
      %v5188 = vsel %vm1214, %v4843, 0
      %v5191 = vsel %vm1214, %v4852, 0
      %v5194 = vsel %vm1214, %v4861, 0
      %v5197 = vsel %vm1214, %v4870, 0
      %v5200 = vsel %vm1214, %v4879, 0
      %v5203 = vsel %vm1214, %v4888, 0
      %v5206 = vsel %vm1214, %v4897, 0
      %v5209 = vsel %vm1214, %v4906, 0
      %v5212 = vsel %vm1214, %v4915, 0
      %v5215 = vsel %vm1214, %v4924, 0
      %v5218 = vsel %vm1214, %v4933, 0
      %v5221 = vsel %vm1214, %v4942, 0
      %v5224 = vsel %vm1214, %v4951, 0
      %v5227 = vsel %vm1214, %v4960, 0
      %v5230 = vsel %vm1214, %v4969, 0
      %v5233 = vsel %vm1214, %v4978, 0
      %v5236 = vsel %vm1214, %v4987, 0
      %v5239 = vsel %vm1214, %v4996, 0
      %v5242 = vsel %vm1214, %v5005, 0
      %v5245 = vsel %vm1214, %v5014, 0
      %v5248 = vsel %vm1214, %v5023, 0
      %v5251 = vsel %vm1214, %v5032, 0
      %v5254 = vsel %vm1214, %v5041, 0
      %v5257 = vsel %vm1214, %v5050, 0
      %v5260 = vand.u32 %v5054, %v1422
      %5262 = vmatpush.bf16.msra.mxu0 0
      %5263 = vmatpush.bf16.msra.mxu0 0
      %5264 = vmatpush.bf16.msra.mxu0 0
      %5265 = vmatpush.bf16.msra.mxu0 0
      %5266 = vmatpush.bf16.msra.mxu0 0
      %5267 = vmatpush.bf16.msra.mxu0 0
      %5268 = vmatpush.bf16.msra.mxu0 0
      %5269 = vmatpush.bf16.msra.mxu0 %v5260
      %5270 = vmatmul.bf16.gmra.mxu0 %v5056
      %v5271 = vpop.f32.mrf.mxu0
      %v5272 = vadd.f32 0.0, %v5271
      %v5273 = vpop.f32.mrf.mxu0
      %v5274 = vadd.f32 0.0, %v5273
      %5275 = vmatmul.bf16.gmra.mxu0 %v5059
      %v5276 = vpop.f32.mrf.mxu0
      %v5277 = vadd.f32 0.0, %v5276
      %v5278 = vpop.f32.mrf.mxu0
      %v5279 = vadd.f32 0.0, %v5278
      %5280 = vmatmul.bf16.gmra.mxu0 %v5062
      %v5281 = vpop.f32.mrf.mxu0
      %v5282 = vadd.f32 0.0, %v5281
      %v5283 = vpop.f32.mrf.mxu0
      %v5284 = vadd.f32 0.0, %v5283
      %5285 = vmatmul.bf16.gmra.mxu0 %v5065
      %v5286 = vpop.f32.mrf.mxu0
      %v5287 = vadd.f32 0.0, %v5286
      %v5288 = vpop.f32.mrf.mxu0
      %v5289 = vadd.f32 0.0, %v5288
      %5290 = vmatmul.bf16.gmra.mxu0 %v5068
      %v5291 = vpop.f32.mrf.mxu0
      %v5292 = vadd.f32 0.0, %v5291
      %v5293 = vpop.f32.mrf.mxu0
      %v5294 = vadd.f32 0.0, %v5293
      %5295 = vmatmul.bf16.gmra.mxu0 %v5071
      %v5296 = vpop.f32.mrf.mxu0
      %v5297 = vadd.f32 0.0, %v5296
      %v5298 = vpop.f32.mrf.mxu0
      %v5299 = vadd.f32 0.0, %v5298
      %5300 = vmatmul.bf16.gmra.mxu0 %v5074
      %v5301 = vpop.f32.mrf.mxu0
      %v5302 = vadd.f32 0.0, %v5301
      %v5303 = vpop.f32.mrf.mxu0
      %v5304 = vadd.f32 0.0, %v5303
      %5305 = vmatmul.bf16.gmra.mxu0 %v5077
      %v5306 = vpop.f32.mrf.mxu0
      %v5307 = vadd.f32 0.0, %v5306
      %v5308 = vpop.f32.mrf.mxu0
      %v5309 = vadd.f32 0.0, %v5308
      %5310 = vmatmul.bf16.gmra.mxu0 %v5080
      %v5311 = vpop.f32.mrf.mxu0
      %v5312 = vadd.f32 0.0, %v5311
      %v5313 = vpop.f32.mrf.mxu0
      %v5314 = vadd.f32 0.0, %v5313
      %5315 = vmatmul.bf16.gmra.mxu0 %v5083
      %v5316 = vpop.f32.mrf.mxu0
      %v5317 = vadd.f32 0.0, %v5316
      %v5318 = vpop.f32.mrf.mxu0
      %v5319 = vadd.f32 0.0, %v5318
      %5320 = vmatmul.bf16.gmra.mxu0 %v5086
      %v5321 = vpop.f32.mrf.mxu0
      %v5322 = vadd.f32 0.0, %v5321
      %v5323 = vpop.f32.mrf.mxu0
      %v5324 = vadd.f32 0.0, %v5323
      %5325 = vmatmul.bf16.gmra.mxu0 %v5089
      %v5326 = vpop.f32.mrf.mxu0
      %v5327 = vadd.f32 0.0, %v5326
      %v5328 = vpop.f32.mrf.mxu0
      %v5329 = vadd.f32 0.0, %v5328
      %5330 = vmatmul.bf16.gmra.mxu0 %v5092
      %v5331 = vpop.f32.mrf.mxu0
      %v5332 = vadd.f32 0.0, %v5331
      %v5333 = vpop.f32.mrf.mxu0
      %v5334 = vadd.f32 0.0, %v5333
      %5335 = vmatmul.bf16.gmra.mxu0 %v5095
      %v5336 = vpop.f32.mrf.mxu0
      %v5337 = vadd.f32 0.0, %v5336
      %v5338 = vpop.f32.mrf.mxu0
      %v5339 = vadd.f32 0.0, %v5338
      %5340 = vmatmul.bf16.gmra.mxu0 %v5098
      %v5341 = vpop.f32.mrf.mxu0
      %v5342 = vadd.f32 0.0, %v5341
      %v5343 = vpop.f32.mrf.mxu0
      %v5344 = vadd.f32 0.0, %v5343
      %5345 = vmatmul.bf16.gmra.mxu0 %v5101
      %v5346 = vpop.f32.mrf.mxu0
      %v5347 = vadd.f32 0.0, %v5346
      %v5348 = vpop.f32.mrf.mxu0
      %v5349 = vadd.f32 0.0, %v5348
      %5350 = vmatmul.bf16.gmra.mxu0 %v5104
      %v5351 = vpop.f32.mrf.mxu0
      %v5352 = vadd.f32 0.0, %v5351
      %v5353 = vpop.f32.mrf.mxu0
      %v5354 = vadd.f32 0.0, %v5353
      %5355 = vmatmul.bf16.gmra.mxu0 %v5107
      %v5356 = vpop.f32.mrf.mxu0
      %v5357 = vadd.f32 0.0, %v5356
      %v5358 = vpop.f32.mrf.mxu0
      %v5359 = vadd.f32 0.0, %v5358
      %5360 = vmatmul.bf16.gmra.mxu0 %v5110
      %v5361 = vpop.f32.mrf.mxu0
      %v5362 = vadd.f32 0.0, %v5361
      %v5363 = vpop.f32.mrf.mxu0
      %v5364 = vadd.f32 0.0, %v5363
      %5365 = vmatmul.bf16.gmra.mxu0 %v5113
      %v5366 = vpop.f32.mrf.mxu0
      %v5367 = vadd.f32 0.0, %v5366
      %v5368 = vpop.f32.mrf.mxu0
      %v5369 = vadd.f32 0.0, %v5368
      %5370 = vmatmul.bf16.gmra.mxu0 %v5116
      %v5371 = vpop.f32.mrf.mxu0
      %v5372 = vadd.f32 0.0, %v5371
      %v5373 = vpop.f32.mrf.mxu0
      %v5374 = vadd.f32 0.0, %v5373
      %5375 = vmatmul.bf16.gmra.mxu0 %v5119
      %v5376 = vpop.f32.mrf.mxu0
      %v5377 = vadd.f32 0.0, %v5376
      %v5378 = vpop.f32.mrf.mxu0
      %v5379 = vadd.f32 0.0, %v5378
      %5380 = vmatmul.bf16.gmra.mxu0 %v5122
      %v5381 = vpop.f32.mrf.mxu0
      %v5382 = vadd.f32 0.0, %v5381
      %v5383 = vpop.f32.mrf.mxu0
      %v5384 = vadd.f32 0.0, %v5383
      %5385 = vmatmul.bf16.gmra.mxu0 %v5125
      %v5386 = vpop.f32.mrf.mxu0
      %v5387 = vadd.f32 0.0, %v5386
      %v5388 = vpop.f32.mrf.mxu0
      %v5389 = vadd.f32 0.0, %v5388
      %5390 = vmatmul.bf16.gmra.mxu0 %v5128
      %v5391 = vpop.f32.mrf.mxu0
      %v5392 = vadd.f32 0.0, %v5391
      %v5393 = vpop.f32.mrf.mxu0
      %v5394 = vadd.f32 0.0, %v5393
      %5395 = vmatmul.bf16.gmra.mxu0 %v5131
      %v5396 = vpop.f32.mrf.mxu0
      %v5397 = vadd.f32 0.0, %v5396
      %v5398 = vpop.f32.mrf.mxu0
      %v5399 = vadd.f32 0.0, %v5398
      %5400 = vmatmul.bf16.gmra.mxu0 %v5134
      %v5401 = vpop.f32.mrf.mxu0
      %v5402 = vadd.f32 0.0, %v5401
      %v5403 = vpop.f32.mrf.mxu0
      %v5404 = vadd.f32 0.0, %v5403
      %5405 = vmatmul.bf16.gmra.mxu0 %v5137
      %v5406 = vpop.f32.mrf.mxu0
      %v5407 = vadd.f32 0.0, %v5406
      %v5408 = vpop.f32.mrf.mxu0
      %v5409 = vadd.f32 0.0, %v5408
      %5410 = vmatmul.bf16.gmra.mxu0 %v5140
      %v5411 = vpop.f32.mrf.mxu0
      %v5412 = vadd.f32 0.0, %v5411
      %v5413 = vpop.f32.mrf.mxu0
      %v5414 = vadd.f32 0.0, %v5413
      %5415 = vmatmul.bf16.gmra.mxu0 %v5143
      %v5416 = vpop.f32.mrf.mxu0
      %v5417 = vadd.f32 0.0, %v5416
      %v5418 = vpop.f32.mrf.mxu0
      %v5419 = vadd.f32 0.0, %v5418
      %5420 = vmatmul.bf16.gmra.mxu0 %v5146
      %v5421 = vpop.f32.mrf.mxu0
      %v5422 = vadd.f32 0.0, %v5421
      %v5423 = vpop.f32.mrf.mxu0
      %v5424 = vadd.f32 0.0, %v5423
      %5425 = vmatmul.bf16.gmra.mxu0 %v5149
      %v5426 = vpop.f32.mrf.mxu0
      %v5427 = vadd.f32 0.0, %v5426
      %v5428 = vpop.f32.mrf.mxu0
      %v5429 = vadd.f32 0.0, %v5428
      %5430 = vmatmul.bf16.gmra.mxu0 %v5152
      %v5431 = vpop.f32.mrf.mxu0
      %v5432 = vadd.f32 0.0, %v5431
      %v5433 = vpop.f32.mrf.mxu0
      %v5434 = vadd.f32 0.0, %v5433
      %5435 = vmatmul.bf16.gmra.mxu0 %v5155
      %v5436 = vpop.f32.mrf.mxu0
      %v5437 = vadd.f32 0.0, %v5436
      %v5438 = vpop.f32.mrf.mxu0
      %v5439 = vadd.f32 0.0, %v5438
      %5440 = vmatmul.bf16.gmra.mxu0 %v5158
      %v5441 = vpop.f32.mrf.mxu0
      %v5442 = vadd.f32 0.0, %v5441
      %v5443 = vpop.f32.mrf.mxu0
      %v5444 = vadd.f32 0.0, %v5443
      %5445 = vmatmul.bf16.gmra.mxu0 %v5161
      %v5446 = vpop.f32.mrf.mxu0
      %v5447 = vadd.f32 0.0, %v5446
      %v5448 = vpop.f32.mrf.mxu0
      %v5449 = vadd.f32 0.0, %v5448
      %5450 = vmatmul.bf16.gmra.mxu0 %v5164
      %v5451 = vpop.f32.mrf.mxu0
      %v5452 = vadd.f32 0.0, %v5451
      %v5453 = vpop.f32.mrf.mxu0
      %v5454 = vadd.f32 0.0, %v5453
      %5455 = vmatmul.bf16.gmra.mxu0 %v5167
      %v5456 = vpop.f32.mrf.mxu0
      %v5457 = vadd.f32 0.0, %v5456
      %v5458 = vpop.f32.mrf.mxu0
      %v5459 = vadd.f32 0.0, %v5458
      %5460 = vmatmul.bf16.gmra.mxu0 %v5170
      %v5461 = vpop.f32.mrf.mxu0
      %v5462 = vadd.f32 0.0, %v5461
      %v5463 = vpop.f32.mrf.mxu0
      %v5464 = vadd.f32 0.0, %v5463
      %5465 = vmatmul.bf16.gmra.mxu0 %v5173
      %v5466 = vpop.f32.mrf.mxu0
      %v5467 = vadd.f32 0.0, %v5466
      %v5468 = vpop.f32.mrf.mxu0
      %v5469 = vadd.f32 0.0, %v5468
      %5470 = vmatmul.bf16.gmra.mxu0 %v5176
      %v5471 = vpop.f32.mrf.mxu0
      %v5472 = vadd.f32 0.0, %v5471
      %v5473 = vpop.f32.mrf.mxu0
      %v5474 = vadd.f32 0.0, %v5473
      %5475 = vmatmul.bf16.gmra.mxu0 %v5179
      %v5476 = vpop.f32.mrf.mxu0
      %v5477 = vadd.f32 0.0, %v5476
      %v5478 = vpop.f32.mrf.mxu0
      %v5479 = vadd.f32 0.0, %v5478
      %5480 = vmatmul.bf16.gmra.mxu0 %v5182
      %v5481 = vpop.f32.mrf.mxu0
      %v5482 = vadd.f32 0.0, %v5481
      %v5483 = vpop.f32.mrf.mxu0
      %v5484 = vadd.f32 0.0, %v5483
      %5485 = vmatmul.bf16.gmra.mxu0 %v5185
      %v5486 = vpop.f32.mrf.mxu0
      %v5487 = vadd.f32 0.0, %v5486
      %v5488 = vpop.f32.mrf.mxu0
      %v5489 = vadd.f32 0.0, %v5488
      %5490 = vmatmul.bf16.gmra.mxu0 %v5188
      %v5491 = vpop.f32.mrf.mxu0
      %v5492 = vadd.f32 0.0, %v5491
      %v5493 = vpop.f32.mrf.mxu0
      %v5494 = vadd.f32 0.0, %v5493
      %5495 = vmatmul.bf16.gmra.mxu0 %v5191
      %v5496 = vpop.f32.mrf.mxu0
      %v5497 = vadd.f32 0.0, %v5496
      %v5498 = vpop.f32.mrf.mxu0
      %v5499 = vadd.f32 0.0, %v5498
      %5500 = vmatmul.bf16.gmra.mxu0 %v5194
      %v5501 = vpop.f32.mrf.mxu0
      %v5502 = vadd.f32 0.0, %v5501
      %v5503 = vpop.f32.mrf.mxu0
      %v5504 = vadd.f32 0.0, %v5503
      %5505 = vmatmul.bf16.gmra.mxu0 %v5197
      %v5506 = vpop.f32.mrf.mxu0
      %v5507 = vadd.f32 0.0, %v5506
      %v5508 = vpop.f32.mrf.mxu0
      %v5509 = vadd.f32 0.0, %v5508
      %5510 = vmatmul.bf16.gmra.mxu0 %v5200
      %v5511 = vpop.f32.mrf.mxu0
      %v5512 = vadd.f32 0.0, %v5511
      %v5513 = vpop.f32.mrf.mxu0
      %v5514 = vadd.f32 0.0, %v5513
      %5515 = vmatmul.bf16.gmra.mxu0 %v5203
      %v5516 = vpop.f32.mrf.mxu0
      %v5517 = vadd.f32 0.0, %v5516
      %v5518 = vpop.f32.mrf.mxu0
      %v5519 = vadd.f32 0.0, %v5518
      %5520 = vmatmul.bf16.gmra.mxu0 %v5206
      %v5521 = vpop.f32.mrf.mxu0
      %v5522 = vadd.f32 0.0, %v5521
      %v5523 = vpop.f32.mrf.mxu0
      %v5524 = vadd.f32 0.0, %v5523
      %5525 = vmatmul.bf16.gmra.mxu0 %v5209
      %v5526 = vpop.f32.mrf.mxu0
      %v5527 = vadd.f32 0.0, %v5526
      %v5528 = vpop.f32.mrf.mxu0
      %v5529 = vadd.f32 0.0, %v5528
      %5530 = vmatmul.bf16.gmra.mxu0 %v5212
      %v5531 = vpop.f32.mrf.mxu0
      %v5532 = vadd.f32 0.0, %v5531
      %v5533 = vpop.f32.mrf.mxu0
      %v5534 = vadd.f32 0.0, %v5533
      %5535 = vmatmul.bf16.gmra.mxu0 %v5215
      %v5536 = vpop.f32.mrf.mxu0
      %v5537 = vadd.f32 0.0, %v5536
      %v5538 = vpop.f32.mrf.mxu0
      %v5539 = vadd.f32 0.0, %v5538
      %5540 = vmatmul.bf16.gmra.mxu0 %v5218
      %v5541 = vpop.f32.mrf.mxu0
      %v5542 = vadd.f32 0.0, %v5541
      %v5543 = vpop.f32.mrf.mxu0
      %v5544 = vadd.f32 0.0, %v5543
      %5545 = vmatmul.bf16.gmra.mxu0 %v5221
      %v5546 = vpop.f32.mrf.mxu0
      %v5547 = vadd.f32 0.0, %v5546
      %v5548 = vpop.f32.mrf.mxu0
      %v5549 = vadd.f32 0.0, %v5548
      %5550 = vmatmul.bf16.gmra.mxu0 %v5224
      %v5551 = vpop.f32.mrf.mxu0
      %v5552 = vadd.f32 0.0, %v5551
      %v5553 = vpop.f32.mrf.mxu0
      %v5554 = vadd.f32 0.0, %v5553
      %5555 = vmatmul.bf16.gmra.mxu0 %v5227
      %v5556 = vpop.f32.mrf.mxu0
      %v5557 = vadd.f32 0.0, %v5556
      %v5558 = vpop.f32.mrf.mxu0
      %v5559 = vadd.f32 0.0, %v5558
      %5560 = vmatmul.bf16.gmra.mxu0 %v5230
      %v5561 = vpop.f32.mrf.mxu0
      %v5562 = vadd.f32 0.0, %v5561
      %v5563 = vpop.f32.mrf.mxu0
      %v5564 = vadd.f32 0.0, %v5563
      %5565 = vmatmul.bf16.gmra.mxu0 %v5233
      %v5566 = vpop.f32.mrf.mxu0
      %v5567 = vadd.f32 0.0, %v5566
      %v5568 = vpop.f32.mrf.mxu0
      %v5569 = vadd.f32 0.0, %v5568
      %5570 = vmatmul.bf16.gmra.mxu0 %v5236
      %v5571 = vpop.f32.mrf.mxu0
      %v5572 = vadd.f32 0.0, %v5571
      %v5573 = vpop.f32.mrf.mxu0
      %v5574 = vadd.f32 0.0, %v5573
      %5575 = vmatmul.bf16.gmra.mxu0 %v5239
      %v5576 = vpop.f32.mrf.mxu0
      %v5577 = vadd.f32 0.0, %v5576
      %v5578 = vpop.f32.mrf.mxu0
      %v5579 = vadd.f32 0.0, %v5578
      %5580 = vmatmul.bf16.gmra.mxu0 %v5242
      %v5581 = vpop.f32.mrf.mxu0
      %v5582 = vadd.f32 0.0, %v5581
      %v5583 = vpop.f32.mrf.mxu0
      %v5584 = vadd.f32 0.0, %v5583
      %5585 = vmatmul.bf16.gmra.mxu0 %v5245
      %v5586 = vpop.f32.mrf.mxu0
      %v5587 = vadd.f32 0.0, %v5586
      %v5588 = vpop.f32.mrf.mxu0
      %v5589 = vadd.f32 0.0, %v5588
      %5590 = vmatmul.bf16.gmra.mxu0 %v5248
      %v5591 = vpop.f32.mrf.mxu0
      %v5592 = vadd.f32 0.0, %v5591
      %v5593 = vpop.f32.mrf.mxu0
      %v5594 = vadd.f32 0.0, %v5593
      %5595 = vmatmul.bf16.gmra.mxu0 %v5251
      %v5596 = vpop.f32.mrf.mxu0
      %v5597 = vadd.f32 0.0, %v5596
      %v5598 = vpop.f32.mrf.mxu0
      %v5599 = vadd.f32 0.0, %v5598
      %5600 = vmatmul.bf16.gmra.mxu0 %v5254
      %v5601 = vpop.f32.mrf.mxu0
      %v5602 = vadd.f32 0.0, %v5601
      %v5603 = vpop.f32.mrf.mxu0
      %v5604 = vadd.f32 0.0, %v5603
      %5605 = vmatmul.bf16.gmra.mxu0 %v5257
      %v5606 = vpop.f32.mrf.mxu0
      %v5607 = vadd.f32 0.0, %v5606
      %v5608 = vpop.f32.mrf.mxu0
      %v5609 = vadd.f32 0.0, %v5608
      %5610 = vdwg.mxu0
      %v5611 = vadd.f32 %v4289, %v5272
      %v5612 = vadd.f32 %v4290, %v5274
      %v5613 = vadd.f32 %v4291, %v5277
      %v5614 = vadd.f32 %v4292, %v5279
      %v5615 = vadd.f32 %v4293, %v5282
      %v5616 = vadd.f32 %v4294, %v5284
      %v5617 = vadd.f32 %v4295, %v5287
      %v5618 = vadd.f32 %v4296, %v5289
      %v5619 = vadd.f32 %v4297, %v5292
      %v5620 = vadd.f32 %v4298, %v5294
      %v5621 = vadd.f32 %v4299, %v5297
      %v5622 = vadd.f32 %v4300, %v5299
      %v5623 = vadd.f32 %v4301, %v5302
      %v5624 = vadd.f32 %v4302, %v5304
      %v5625 = vadd.f32 %v4303, %v5307
      %v5626 = vadd.f32 %v4304, %v5309
      %v5627 = vadd.f32 %v4305, %v5312
      %v5628 = vadd.f32 %v4306, %v5314
      %v5629 = vadd.f32 %v4307, %v5317
      %v5630 = vadd.f32 %v4308, %v5319
      %v5631 = vadd.f32 %v4309, %v5322
      %v5632 = vadd.f32 %v4310, %v5324
      %v5633 = vadd.f32 %v4311, %v5327
      %v5634 = vadd.f32 %v4312, %v5329
      %v5635 = vadd.f32 %v4313, %v5332
      %v5636 = vadd.f32 %v4314, %v5334
      %v5637 = vadd.f32 %v4315, %v5337
      %v5638 = vadd.f32 %v4316, %v5339
      %v5639 = vadd.f32 %v4317, %v5342
      %v5640 = vadd.f32 %v4318, %v5344
      %v5641 = vadd.f32 %v4319, %v5347
      %v5642 = vadd.f32 %v4320, %v5349
      %v5643 = vadd.f32 %v4321, %v5352
      %v5644 = vadd.f32 %v4322, %v5354
      %v5645 = vadd.f32 %v4323, %v5357
      %v5646 = vadd.f32 %v4324, %v5359
      %v5647 = vadd.f32 %v4325, %v5362
      %v5648 = vadd.f32 %v4326, %v5364
      %v5649 = vadd.f32 %v4327, %v5367
      %v5650 = vadd.f32 %v4328, %v5369
      %v5651 = vadd.f32 %v4329, %v5372
      %v5652 = vadd.f32 %v4330, %v5374
      %v5653 = vadd.f32 %v4331, %v5377
      %v5654 = vadd.f32 %v4332, %v5379
      %v5655 = vadd.f32 %v4333, %v5382
      %v5656 = vadd.f32 %v4334, %v5384
      %v5657 = vadd.f32 %v4335, %v5387
      %v5658 = vadd.f32 %v4336, %v5389
      %v5659 = vadd.f32 %v4337, %v5392
      %v5660 = vadd.f32 %v4338, %v5394
      %v5661 = vadd.f32 %v4339, %v5397
      %v5662 = vadd.f32 %v4340, %v5399
      %v5663 = vadd.f32 %v4341, %v5402
      %v5664 = vadd.f32 %v4342, %v5404
      %v5665 = vadd.f32 %v4343, %v5407
      %v5666 = vadd.f32 %v4344, %v5409
      %v5667 = vadd.f32 %v4345, %v5412
      %v5668 = vadd.f32 %v4346, %v5414
      %v5669 = vadd.f32 %v4347, %v5417
      %v5670 = vadd.f32 %v4348, %v5419
      %v5671 = vadd.f32 %v4349, %v5422
      %v5672 = vadd.f32 %v4350, %v5424
      %v5673 = vadd.f32 %v4351, %v5427
      %v5674 = vadd.f32 %v4352, %v5429
      %v5675 = vadd.f32 %v4353, %v5432
      %v5676 = vadd.f32 %v4354, %v5434
      %v5677 = vadd.f32 %v4355, %v5437
      %v5678 = vadd.f32 %v4356, %v5439
      %v5679 = vadd.f32 %v4357, %v5442
      %v5680 = vadd.f32 %v4358, %v5444
      %v5681 = vadd.f32 %v4359, %v5447
      %v5682 = vadd.f32 %v4360, %v5449
      %v5683 = vadd.f32 %v4361, %v5452
      %v5684 = vadd.f32 %v4362, %v5454
      %v5685 = vadd.f32 %v4363, %v5457
      %v5686 = vadd.f32 %v4364, %v5459
      %v5687 = vadd.f32 %v4365, %v5462
      %v5688 = vadd.f32 %v4366, %v5464
      %v5689 = vadd.f32 %v4367, %v5467
      %v5690 = vadd.f32 %v4368, %v5469
      %v5691 = vadd.f32 %v4369, %v5472
      %v5692 = vadd.f32 %v4370, %v5474
      %v5693 = vadd.f32 %v4371, %v5477
      %v5694 = vadd.f32 %v4372, %v5479
      %v5695 = vadd.f32 %v4373, %v5482
      %v5696 = vadd.f32 %v4374, %v5484
      %v5697 = vadd.f32 %v4375, %v5487
      %v5698 = vadd.f32 %v4376, %v5489
      %v5699 = vadd.f32 %v4377, %v5492
      %v5700 = vadd.f32 %v4378, %v5494
      %v5701 = vadd.f32 %v4379, %v5497
      %v5702 = vadd.f32 %v4380, %v5499
      %v5703 = vadd.f32 %v4381, %v5502
      %v5704 = vadd.f32 %v4382, %v5504
      %v5705 = vadd.f32 %v4383, %v5507
      %v5706 = vadd.f32 %v4384, %v5509
      %v5707 = vadd.f32 %v4385, %v5512
      %v5708 = vadd.f32 %v4386, %v5514
      %v5709 = vadd.f32 %v4387, %v5517
      %v5710 = vadd.f32 %v4388, %v5519
      %v5711 = vadd.f32 %v4389, %v5522
      %v5712 = vadd.f32 %v4390, %v5524
      %v5713 = vadd.f32 %v4391, %v5527
      %v5714 = vadd.f32 %v4392, %v5529
      %v5715 = vadd.f32 %v4393, %v5532
      %v5716 = vadd.f32 %v4394, %v5534
      %v5717 = vadd.f32 %v4395, %v5537
      %v5718 = vadd.f32 %v4396, %v5539
      %v5719 = vadd.f32 %v4397, %v5542
      %v5720 = vadd.f32 %v4398, %v5544
      %v5721 = vadd.f32 %v4399, %v5547
      %v5722 = vadd.f32 %v4400, %v5549
      %v5723 = vadd.f32 %v4401, %v5552
      %v5724 = vadd.f32 %v4402, %v5554
      %v5725 = vadd.f32 %v4403, %v5557
      %v5726 = vadd.f32 %v4404, %v5559
      %v5727 = vadd.f32 %v4405, %v5562
      %v5728 = vadd.f32 %v4406, %v5564
      %v5729 = vadd.f32 %v4407, %v5567
      %v5730 = vadd.f32 %v4408, %v5569
      %v5731 = vadd.f32 %v4409, %v5572
      %v5732 = vadd.f32 %v4410, %v5574
      %v5733 = vadd.f32 %v4411, %v5577
      %v5734 = vadd.f32 %v4412, %v5579
      %v5735 = vadd.f32 %v4413, %v5582
      %v5736 = vadd.f32 %v4414, %v5584
      %v5737 = vadd.f32 %v4415, %v5587
      %v5738 = vadd.f32 %v4416, %v5589
      %v5739 = vadd.f32 %v4417, %v5592
      %v5740 = vadd.f32 %v4418, %v5594
      %v5741 = vadd.f32 %v4419, %v5597
      %v5742 = vadd.f32 %v4420, %v5599
      %v5743 = vadd.f32 %v4421, %v5602
      %v5744 = vadd.f32 %v4422, %v5604
      %v5745 = vadd.f32 %v4423, %v5607
      %v5746 = vadd.f32 %v4424, %v5609
      %v5747 = vld [vmem:[%s165 + $0x10] sm:$0xc]
      %v5748 = vld [vmem:[%s1 + $0x4] sm:$0x8]
      %v5749 = vld [vmem:[%s1 + $0x8] sm:$0x1]
      %v5751 = vunpack.c.l.b16 %v5747
      %v5752 = vpack.c.b16 %v3381, %v5751
      %vm5753 = vcmask 1045504
      %v5754 = vrot.slane %v5752, 2
      %v5755 = vrot.slane %v3518, 2
      %v5756 = vsel %vm5753, %v5754, %v5755
      %v5757 = vrot.slane %v3519, 2
      %v5758 = vsel %vm5753, %v5755, %v5757
      %v5759 = vrot.slane %v3520, 2
      %v5760 = vsel %vm5753, %v5757, %v5759
      %v5761 = vrot.slane %v3521, 2
      %v5762 = vsel %vm5753, %v5759, %v5761
      %v5763 = vrot.slane %v3522, 2
      %v5764 = vsel %vm5753, %v5761, %v5763
      %v5765 = vrot.slane %v3523, 2
      %v5766 = vsel %vm5753, %v5763, %v5765
      %v5767 = vrot.slane %v3524, 2
      %v5768 = vsel %vm5753, %v5765, %v5767
      %v5769 = vrot.slane %v3525, 2
      %v5770 = vsel %vm5753, %v5767, %v5769
      %v5771 = vrot.slane %v3526, 2
      %v5772 = vsel %vm5753, %v5769, %v5771
      %v5773 = vrot.slane %v3527, 2
      %v5774 = vsel %vm5753, %v5771, %v5773
      %v5775 = vrot.slane %v3528, 2
      %v5776 = vsel %vm5753, %v5773, %v5775
      %v5777 = vrot.slane %v3529, 2
      %v5778 = vsel %vm5753, %v5775, %v5777
      %v5779 = vrot.slane %v3530, 2
      %v5780 = vsel %vm5753, %v5777, %v5779
      %v5781 = vrot.slane %v3531, 2
      %v5782 = vsel %vm5753, %v5779, %v5781
      %v5783 = vrot.slane %v3532, 2
      %v5784 = vsel %vm5753, %v5781, %v5783
      %v5785 = vrot.slane %v3533, 2
      %v5786 = vsel %vm5753, %v5783, %v5785
      %v5787 = vrot.slane %v3534, 2
      %v5788 = vsel %vm5753, %v5785, %v5787
      %v5789 = vrot.slane %v3535, 2
      %v5790 = vsel %vm5753, %v5787, %v5789
      %v5791 = vrot.slane %v3536, 2
      %v5792 = vsel %vm5753, %v5789, %v5791
      %v5793 = vrot.slane %v3537, 2
      %v5794 = vsel %vm5753, %v5791, %v5793
      %v5795 = vrot.slane %v3538, 2
      %v5796 = vsel %vm5753, %v5793, %v5795
      %v5797 = vrot.slane %v3539, 2
      %v5798 = vsel %vm5753, %v5795, %v5797
      %v5799 = vrot.slane %v3540, 2
      %v5800 = vsel %vm5753, %v5797, %v5799
      %v5801 = vrot.slane %v3541, 2
      %v5802 = vsel %vm5753, %v5799, %v5801
      %v5803 = vrot.slane %v3542, 2
      %v5804 = vsel %vm5753, %v5801, %v5803
      %v5805 = vrot.slane %v3543, 2
      %v5806 = vsel %vm5753, %v5803, %v5805
      %v5807 = vrot.slane %v3544, 2
      %v5808 = vsel %vm5753, %v5805, %v5807
      %v5809 = vrot.slane %v3545, 2
      %v5810 = vsel %vm5753, %v5807, %v5809
      %v5811 = vrot.slane %v3546, 2
      %v5812 = vsel %vm5753, %v5809, %v5811
      %v5813 = vrot.slane %v3547, 2
      %v5814 = vsel %vm5753, %v5811, %v5813
      %v5815 = vrot.slane %v3548, 2
      %v5816 = vsel %vm5753, %v5813, %v5815
      %v5817 = vrot.slane %v3549, 2
      %v5818 = vsel %vm5753, %v5815, %v5817
      %v5819 = vrot.slane %v3550, 2
      %v5820 = vsel %vm5753, %v5817, %v5819
      %v5821 = vrot.slane %v3551, 2
      %v5822 = vsel %vm5753, %v5819, %v5821
      %v5823 = vrot.slane %v3552, 2
      %v5824 = vsel %vm5753, %v5821, %v5823
      %v5825 = vrot.slane %v3553, 2
      %v5826 = vsel %vm5753, %v5823, %v5825
      %v5827 = vrot.slane %v3554, 2
      %v5828 = vsel %vm5753, %v5825, %v5827
      %v5829 = vrot.slane %v3555, 2
      %v5830 = vsel %vm5753, %v5827, %v5829
      %v5831 = vrot.slane %v3556, 2
      %v5832 = vsel %vm5753, %v5829, %v5831
      %v5833 = vrot.slane %v3557, 2
      %v5834 = vsel %vm5753, %v5831, %v5833
      %v5835 = vrot.slane %v3558, 2
      %v5836 = vsel %vm5753, %v5833, %v5835
      %v5837 = vrot.slane %v3559, 2
      %v5838 = vsel %vm5753, %v5835, %v5837
      %v5839 = vrot.slane %v3560, 2
      %v5840 = vsel %vm5753, %v5837, %v5839
      %v5841 = vrot.slane %v3561, 2
      %v5842 = vsel %vm5753, %v5839, %v5841
      %v5843 = vrot.slane %v3562, 2
      %v5844 = vsel %vm5753, %v5841, %v5843
      %v5845 = vrot.slane %v3563, 2
      %v5846 = vsel %vm5753, %v5843, %v5845
      %v5847 = vrot.slane %v3564, 2
      %v5848 = vsel %vm5753, %v5845, %v5847
      %v5849 = vrot.slane %v3565, 2
      %v5850 = vsel %vm5753, %v5847, %v5849
      %v5851 = vrot.slane %v3566, 2
      %v5852 = vsel %vm5753, %v5849, %v5851
      %v5853 = vrot.slane %v3567, 2
      %v5854 = vsel %vm5753, %v5851, %v5853
      %v5855 = vrot.slane %v3568, 2
      %v5856 = vsel %vm5753, %v5853, %v5855
      %v5857 = vrot.slane %v3569, 2
      %v5858 = vsel %vm5753, %v5855, %v5857
      %v5859 = vrot.slane %v3570, 2
      %v5860 = vsel %vm5753, %v5857, %v5859
      %v5861 = vrot.slane %v3571, 2
      %v5862 = vsel %vm5753, %v5859, %v5861
      %v5863 = vrot.slane %v3572, 2
      %v5864 = vsel %vm5753, %v5861, %v5863
      %v5865 = vrot.slane %v3573, 2
      %v5866 = vsel %vm5753, %v5863, %v5865
      %v5867 = vrot.slane %v3574, 2
      %v5868 = vsel %vm5753, %v5865, %v5867
      %v5869 = vrot.slane %v3575, 2
      %v5870 = vsel %vm5753, %v5867, %v5869
      %v5871 = vrot.slane %v3576, 2
      %v5872 = vsel %vm5753, %v5869, %v5871
      %v5873 = vrot.slane %v3577, 2
      %v5874 = vsel %vm5753, %v5871, %v5873
      %v5875 = vrot.slane %v3578, 2
      %v5876 = vsel %vm5753, %v5873, %v5875
      %v5877 = vrot.slane %v3579, 2
      %v5878 = vsel %vm5753, %v5875, %v5877
      %v5879 = vrot.slane %v3580, 2
      %v5880 = vsel %vm5753, %v5877, %v5879
      %v5881 = vrot.slane %v3581, 2
      %v5882 = vsel %vm5753, %v5879, %v5881
      %v5883 = vrot.slane %v3582, 2
      %v5884 = vsel %vm5753, %v5881, %v5883
      %v5885 = vrot.slane %v3583, 2
      %v5886 = vsel %vm5753, %v5883, %v5885
      %v5887 = vrot.slane %v3584, 2
      %v5888 = vsel %vm5753, %v5885, %v5887
      %v5889 = vrot.slane %v4429, 2
      %v5890 = vsel %vm5753, %v5887, %v5889
      %v5893 = vunpack.c.l.b16 %v5748
      %v5894 = vunpack.c.l.b16 %v5749
      %v5895 = vpack.c.b16 %v5894, %v5893
      %v5897 = vshrl.u32 %v5895, 16
      %v5899 = vrot.slane %v5897, 3
      %v5900 = vshll.u32 %v5895, 16
      %v5902 = vrot.slane %v5900, 4
      %v5903 = vor.u32 %v5899, %v5902
      %v5905 = vsel %vm1214, %v5756, 0
      %v5908 = vsel %vm1214, %v5758, 0
      %v5911 = vsel %vm1214, %v5760, 0
      %v5914 = vsel %vm1214, %v5762, 0
      %v5917 = vsel %vm1214, %v5764, 0
      %v5920 = vsel %vm1214, %v5766, 0
      %v5923 = vsel %vm1214, %v5768, 0
      %v5926 = vsel %vm1214, %v5770, 0
      %v5929 = vsel %vm1214, %v5772, 0
      %v5932 = vsel %vm1214, %v5774, 0
      %v5935 = vsel %vm1214, %v5776, 0
      %v5938 = vsel %vm1214, %v5778, 0
      %v5941 = vsel %vm1214, %v5780, 0
      %v5944 = vsel %vm1214, %v5782, 0
      %v5947 = vsel %vm1214, %v5784, 0
      %v5950 = vsel %vm1214, %v5786, 0
      %v5953 = vsel %vm1214, %v5788, 0
      %v5956 = vsel %vm1214, %v5790, 0
      %v5959 = vsel %vm1214, %v5792, 0
      %v5962 = vsel %vm1214, %v5794, 0
      %v5965 = vsel %vm1214, %v5796, 0
      %v5968 = vsel %vm1214, %v5798, 0
      %v5971 = vsel %vm1214, %v5800, 0
      %v5974 = vsel %vm1214, %v5802, 0
      %v5977 = vsel %vm1214, %v5804, 0
      %v5980 = vsel %vm1214, %v5806, 0
      %v5983 = vsel %vm1214, %v5808, 0
      %v5986 = vsel %vm1214, %v5810, 0
      %v5989 = vsel %vm1214, %v5812, 0
      %v5992 = vsel %vm1214, %v5814, 0
      %v5995 = vsel %vm1214, %v5816, 0
      %v5998 = vsel %vm1214, %v5818, 0
      %v6001 = vsel %vm1214, %v5820, 0
      %v6004 = vsel %vm1214, %v5822, 0
      %v6007 = vsel %vm1214, %v5824, 0
      %v6010 = vsel %vm1214, %v5826, 0
      %v6013 = vsel %vm1214, %v5828, 0
      %v6016 = vsel %vm1214, %v5830, 0
      %v6019 = vsel %vm1214, %v5832, 0
      %v6022 = vsel %vm1214, %v5834, 0
      %v6025 = vsel %vm1214, %v5836, 0
      %v6028 = vsel %vm1214, %v5838, 0
      %v6031 = vsel %vm1214, %v5840, 0
      %v6034 = vsel %vm1214, %v5842, 0
      %v6037 = vsel %vm1214, %v5844, 0
      %v6040 = vsel %vm1214, %v5846, 0
      %v6043 = vsel %vm1214, %v5848, 0
      %v6046 = vsel %vm1214, %v5850, 0
      %v6049 = vsel %vm1214, %v5852, 0
      %v6052 = vsel %vm1214, %v5854, 0
      %v6055 = vsel %vm1214, %v5856, 0
      %v6058 = vsel %vm1214, %v5858, 0
      %v6061 = vsel %vm1214, %v5860, 0
      %v6064 = vsel %vm1214, %v5862, 0
      %v6067 = vsel %vm1214, %v5864, 0
      %v6070 = vsel %vm1214, %v5866, 0
      %v6073 = vsel %vm1214, %v5868, 0
      %v6076 = vsel %vm1214, %v5870, 0
      %v6079 = vsel %vm1214, %v5872, 0
      %v6082 = vsel %vm1214, %v5874, 0
      %v6085 = vsel %vm1214, %v5876, 0
      %v6088 = vsel %vm1214, %v5878, 0
      %v6091 = vsel %vm1214, %v5880, 0
      %v6094 = vsel %vm1214, %v5882, 0
      %v6097 = vsel %vm1214, %v5884, 0
      %v6100 = vsel %vm1214, %v5886, 0
      %v6103 = vsel %vm1214, %v5888, 0
      %v6106 = vsel %vm1214, %v5890, 0
      %v6109 = vand.u32 %v5903, %v1422
      %6111 = vmatpush.bf16.msra.mxu0 0
      %6112 = vmatpush.bf16.msra.mxu0 0
      %6113 = vmatpush.bf16.msra.mxu0 0
      %6114 = vmatpush.bf16.msra.mxu0 0
      %6115 = vmatpush.bf16.msra.mxu0 0
      %6116 = vmatpush.bf16.msra.mxu0 0
      %6117 = vmatpush.bf16.msra.mxu0 0
      %6118 = vmatpush.bf16.msra.mxu0 %v6109
      %6119 = vmatmul.bf16.gmra.mxu0 %v5905
      %v6120 = vpop.f32.mrf.mxu0
      %v6121 = vadd.f32 0.0, %v6120
      %v6122 = vpop.f32.mrf.mxu0
      %v6123 = vadd.f32 0.0, %v6122
      %6124 = vmatmul.bf16.gmra.mxu0 %v5908
      %v6125 = vpop.f32.mrf.mxu0
      %v6126 = vadd.f32 0.0, %v6125
      %v6127 = vpop.f32.mrf.mxu0
      %v6128 = vadd.f32 0.0, %v6127
      %6129 = vmatmul.bf16.gmra.mxu0 %v5911
      %v6130 = vpop.f32.mrf.mxu0
      %v6131 = vadd.f32 0.0, %v6130
      %v6132 = vpop.f32.mrf.mxu0
      %v6133 = vadd.f32 0.0, %v6132
      %6134 = vmatmul.bf16.gmra.mxu0 %v5914
      %v6135 = vpop.f32.mrf.mxu0
      %v6136 = vadd.f32 0.0, %v6135
      %v6137 = vpop.f32.mrf.mxu0
      %v6138 = vadd.f32 0.0, %v6137
      %6139 = vmatmul.bf16.gmra.mxu0 %v5917
      %v6140 = vpop.f32.mrf.mxu0
      %v6141 = vadd.f32 0.0, %v6140
      %v6142 = vpop.f32.mrf.mxu0
      %v6143 = vadd.f32 0.0, %v6142
      %6144 = vmatmul.bf16.gmra.mxu0 %v5920
      %v6145 = vpop.f32.mrf.mxu0
      %v6146 = vadd.f32 0.0, %v6145
      %v6147 = vpop.f32.mrf.mxu0
      %v6148 = vadd.f32 0.0, %v6147
      %6149 = vmatmul.bf16.gmra.mxu0 %v5923
      %v6150 = vpop.f32.mrf.mxu0
      %v6151 = vadd.f32 0.0, %v6150
      %v6152 = vpop.f32.mrf.mxu0
      %v6153 = vadd.f32 0.0, %v6152
      %6154 = vmatmul.bf16.gmra.mxu0 %v5926
      %v6155 = vpop.f32.mrf.mxu0
      %v6156 = vadd.f32 0.0, %v6155
      %v6157 = vpop.f32.mrf.mxu0
      %v6158 = vadd.f32 0.0, %v6157
      %6159 = vmatmul.bf16.gmra.mxu0 %v5929
      %v6160 = vpop.f32.mrf.mxu0
      %v6161 = vadd.f32 0.0, %v6160
      %v6162 = vpop.f32.mrf.mxu0
      %v6163 = vadd.f32 0.0, %v6162
      %6164 = vmatmul.bf16.gmra.mxu0 %v5932
      %v6165 = vpop.f32.mrf.mxu0
      %v6166 = vadd.f32 0.0, %v6165
      %v6167 = vpop.f32.mrf.mxu0
      %v6168 = vadd.f32 0.0, %v6167
      %6169 = vmatmul.bf16.gmra.mxu0 %v5935
      %v6170 = vpop.f32.mrf.mxu0
      %v6171 = vadd.f32 0.0, %v6170
      %v6172 = vpop.f32.mrf.mxu0
      %v6173 = vadd.f32 0.0, %v6172
      %6174 = vmatmul.bf16.gmra.mxu0 %v5938
      %v6175 = vpop.f32.mrf.mxu0
      %v6176 = vadd.f32 0.0, %v6175
      %v6177 = vpop.f32.mrf.mxu0
      %v6178 = vadd.f32 0.0, %v6177
      %6179 = vmatmul.bf16.gmra.mxu0 %v5941
      %v6180 = vpop.f32.mrf.mxu0
      %v6181 = vadd.f32 0.0, %v6180
      %v6182 = vpop.f32.mrf.mxu0
      %v6183 = vadd.f32 0.0, %v6182
      %6184 = vmatmul.bf16.gmra.mxu0 %v5944
      %v6185 = vpop.f32.mrf.mxu0
      %v6186 = vadd.f32 0.0, %v6185
      %v6187 = vpop.f32.mrf.mxu0
      %v6188 = vadd.f32 0.0, %v6187
      %6189 = vmatmul.bf16.gmra.mxu0 %v5947
      %v6190 = vpop.f32.mrf.mxu0
      %v6191 = vadd.f32 0.0, %v6190
      %v6192 = vpop.f32.mrf.mxu0
      %v6193 = vadd.f32 0.0, %v6192
      %6194 = vmatmul.bf16.gmra.mxu0 %v5950
      %v6195 = vpop.f32.mrf.mxu0
      %v6196 = vadd.f32 0.0, %v6195
      %v6197 = vpop.f32.mrf.mxu0
      %v6198 = vadd.f32 0.0, %v6197
      %6199 = vmatmul.bf16.gmra.mxu0 %v5953
      %v6200 = vpop.f32.mrf.mxu0
      %v6201 = vadd.f32 0.0, %v6200
      %v6202 = vpop.f32.mrf.mxu0
      %v6203 = vadd.f32 0.0, %v6202
      %6204 = vmatmul.bf16.gmra.mxu0 %v5956
      %v6205 = vpop.f32.mrf.mxu0
      %v6206 = vadd.f32 0.0, %v6205
      %v6207 = vpop.f32.mrf.mxu0
      %v6208 = vadd.f32 0.0, %v6207
      %6209 = vmatmul.bf16.gmra.mxu0 %v5959
      %v6210 = vpop.f32.mrf.mxu0
      %v6211 = vadd.f32 0.0, %v6210
      %v6212 = vpop.f32.mrf.mxu0
      %v6213 = vadd.f32 0.0, %v6212
      %6214 = vmatmul.bf16.gmra.mxu0 %v5962
      %v6215 = vpop.f32.mrf.mxu0
      %v6216 = vadd.f32 0.0, %v6215
      %v6217 = vpop.f32.mrf.mxu0
      %v6218 = vadd.f32 0.0, %v6217
      %6219 = vmatmul.bf16.gmra.mxu0 %v5965
      %v6220 = vpop.f32.mrf.mxu0
      %v6221 = vadd.f32 0.0, %v6220
      %v6222 = vpop.f32.mrf.mxu0
      %v6223 = vadd.f32 0.0, %v6222
      %6224 = vmatmul.bf16.gmra.mxu0 %v5968
      %v6225 = vpop.f32.mrf.mxu0
      %v6226 = vadd.f32 0.0, %v6225
      %v6227 = vpop.f32.mrf.mxu0
      %v6228 = vadd.f32 0.0, %v6227
      %6229 = vmatmul.bf16.gmra.mxu0 %v5971
      %v6230 = vpop.f32.mrf.mxu0
      %v6231 = vadd.f32 0.0, %v6230
      %v6232 = vpop.f32.mrf.mxu0
      %v6233 = vadd.f32 0.0, %v6232
      %6234 = vmatmul.bf16.gmra.mxu0 %v5974
      %v6235 = vpop.f32.mrf.mxu0
      %v6236 = vadd.f32 0.0, %v6235
      %v6237 = vpop.f32.mrf.mxu0
      %v6238 = vadd.f32 0.0, %v6237
      %6239 = vmatmul.bf16.gmra.mxu0 %v5977
      %v6240 = vpop.f32.mrf.mxu0
      %v6241 = vadd.f32 0.0, %v6240
      %v6242 = vpop.f32.mrf.mxu0
      %v6243 = vadd.f32 0.0, %v6242
      %6244 = vmatmul.bf16.gmra.mxu0 %v5980
      %v6245 = vpop.f32.mrf.mxu0
      %v6246 = vadd.f32 0.0, %v6245
      %v6247 = vpop.f32.mrf.mxu0
      %v6248 = vadd.f32 0.0, %v6247
      %6249 = vmatmul.bf16.gmra.mxu0 %v5983
      %v6250 = vpop.f32.mrf.mxu0
      %v6251 = vadd.f32 0.0, %v6250
      %v6252 = vpop.f32.mrf.mxu0
      %v6253 = vadd.f32 0.0, %v6252
      %6254 = vmatmul.bf16.gmra.mxu0 %v5986
      %v6255 = vpop.f32.mrf.mxu0
      %v6256 = vadd.f32 0.0, %v6255
      %v6257 = vpop.f32.mrf.mxu0
      %v6258 = vadd.f32 0.0, %v6257
      %6259 = vmatmul.bf16.gmra.mxu0 %v5989
      %v6260 = vpop.f32.mrf.mxu0
      %v6261 = vadd.f32 0.0, %v6260
      %v6262 = vpop.f32.mrf.mxu0
      %v6263 = vadd.f32 0.0, %v6262
      %6264 = vmatmul.bf16.gmra.mxu0 %v5992
      %v6265 = vpop.f32.mrf.mxu0
      %v6266 = vadd.f32 0.0, %v6265
      %v6267 = vpop.f32.mrf.mxu0
      %v6268 = vadd.f32 0.0, %v6267
      %6269 = vmatmul.bf16.gmra.mxu0 %v5995
      %v6270 = vpop.f32.mrf.mxu0
      %v6271 = vadd.f32 0.0, %v6270
      %v6272 = vpop.f32.mrf.mxu0
      %v6273 = vadd.f32 0.0, %v6272
      %6274 = vmatmul.bf16.gmra.mxu0 %v5998
      %v6275 = vpop.f32.mrf.mxu0
      %v6276 = vadd.f32 0.0, %v6275
      %v6277 = vpop.f32.mrf.mxu0
      %v6278 = vadd.f32 0.0, %v6277
      %6279 = vmatmul.bf16.gmra.mxu0 %v6001
      %v6280 = vpop.f32.mrf.mxu0
      %v6281 = vadd.f32 0.0, %v6280
      %v6282 = vpop.f32.mrf.mxu0
      %v6283 = vadd.f32 0.0, %v6282
      %6284 = vmatmul.bf16.gmra.mxu0 %v6004
      %v6285 = vpop.f32.mrf.mxu0
      %v6286 = vadd.f32 0.0, %v6285
      %v6287 = vpop.f32.mrf.mxu0
      %v6288 = vadd.f32 0.0, %v6287
      %6289 = vmatmul.bf16.gmra.mxu0 %v6007
      %v6290 = vpop.f32.mrf.mxu0
      %v6291 = vadd.f32 0.0, %v6290
      %v6292 = vpop.f32.mrf.mxu0
      %v6293 = vadd.f32 0.0, %v6292
      %6294 = vmatmul.bf16.gmra.mxu0 %v6010
      %v6295 = vpop.f32.mrf.mxu0
      %v6296 = vadd.f32 0.0, %v6295
      %v6297 = vpop.f32.mrf.mxu0
      %v6298 = vadd.f32 0.0, %v6297
      %6299 = vmatmul.bf16.gmra.mxu0 %v6013
      %v6300 = vpop.f32.mrf.mxu0
      %v6301 = vadd.f32 0.0, %v6300
      %v6302 = vpop.f32.mrf.mxu0
      %v6303 = vadd.f32 0.0, %v6302
      %6304 = vmatmul.bf16.gmra.mxu0 %v6016
      %v6305 = vpop.f32.mrf.mxu0
      %v6306 = vadd.f32 0.0, %v6305
      %v6307 = vpop.f32.mrf.mxu0
      %v6308 = vadd.f32 0.0, %v6307
      %6309 = vmatmul.bf16.gmra.mxu0 %v6019
      %v6310 = vpop.f32.mrf.mxu0
      %v6311 = vadd.f32 0.0, %v6310
      %v6312 = vpop.f32.mrf.mxu0
      %v6313 = vadd.f32 0.0, %v6312
      %6314 = vmatmul.bf16.gmra.mxu0 %v6022
      %v6315 = vpop.f32.mrf.mxu0
      %v6316 = vadd.f32 0.0, %v6315
      %v6317 = vpop.f32.mrf.mxu0
      %v6318 = vadd.f32 0.0, %v6317
      %6319 = vmatmul.bf16.gmra.mxu0 %v6025
      %v6320 = vpop.f32.mrf.mxu0
      %v6321 = vadd.f32 0.0, %v6320
      %v6322 = vpop.f32.mrf.mxu0
      %v6323 = vadd.f32 0.0, %v6322
      %6324 = vmatmul.bf16.gmra.mxu0 %v6028
      %v6325 = vpop.f32.mrf.mxu0
      %v6326 = vadd.f32 0.0, %v6325
      %v6327 = vpop.f32.mrf.mxu0
      %v6328 = vadd.f32 0.0, %v6327
      %6329 = vmatmul.bf16.gmra.mxu0 %v6031
      %v6330 = vpop.f32.mrf.mxu0
      %v6331 = vadd.f32 0.0, %v6330
      %v6332 = vpop.f32.mrf.mxu0
      %v6333 = vadd.f32 0.0, %v6332
      %6334 = vmatmul.bf16.gmra.mxu0 %v6034
      %v6335 = vpop.f32.mrf.mxu0
      %v6336 = vadd.f32 0.0, %v6335
      %v6337 = vpop.f32.mrf.mxu0
      %v6338 = vadd.f32 0.0, %v6337
      %6339 = vmatmul.bf16.gmra.mxu0 %v6037
      %v6340 = vpop.f32.mrf.mxu0
      %v6341 = vadd.f32 0.0, %v6340
      %v6342 = vpop.f32.mrf.mxu0
      %v6343 = vadd.f32 0.0, %v6342
      %6344 = vmatmul.bf16.gmra.mxu0 %v6040
      %v6345 = vpop.f32.mrf.mxu0
      %v6346 = vadd.f32 0.0, %v6345
      %v6347 = vpop.f32.mrf.mxu0
      %v6348 = vadd.f32 0.0, %v6347
      %6349 = vmatmul.bf16.gmra.mxu0 %v6043
      %v6350 = vpop.f32.mrf.mxu0
      %v6351 = vadd.f32 0.0, %v6350
      %v6352 = vpop.f32.mrf.mxu0
      %v6353 = vadd.f32 0.0, %v6352
      %6354 = vmatmul.bf16.gmra.mxu0 %v6046
      %v6355 = vpop.f32.mrf.mxu0
      %v6356 = vadd.f32 0.0, %v6355
      %v6357 = vpop.f32.mrf.mxu0
      %v6358 = vadd.f32 0.0, %v6357
      %6359 = vmatmul.bf16.gmra.mxu0 %v6049
      %v6360 = vpop.f32.mrf.mxu0
      %v6361 = vadd.f32 0.0, %v6360
      %v6362 = vpop.f32.mrf.mxu0
      %v6363 = vadd.f32 0.0, %v6362
      %6364 = vmatmul.bf16.gmra.mxu0 %v6052
      %v6365 = vpop.f32.mrf.mxu0
      %v6366 = vadd.f32 0.0, %v6365
      %v6367 = vpop.f32.mrf.mxu0
      %v6368 = vadd.f32 0.0, %v6367
      %6369 = vmatmul.bf16.gmra.mxu0 %v6055
      %v6370 = vpop.f32.mrf.mxu0
      %v6371 = vadd.f32 0.0, %v6370
      %v6372 = vpop.f32.mrf.mxu0
      %v6373 = vadd.f32 0.0, %v6372
      %6374 = vmatmul.bf16.gmra.mxu0 %v6058
      %v6375 = vpop.f32.mrf.mxu0
      %v6376 = vadd.f32 0.0, %v6375
      %v6377 = vpop.f32.mrf.mxu0
      %v6378 = vadd.f32 0.0, %v6377
      %6379 = vmatmul.bf16.gmra.mxu0 %v6061
      %v6380 = vpop.f32.mrf.mxu0
      %v6381 = vadd.f32 0.0, %v6380
      %v6382 = vpop.f32.mrf.mxu0
      %v6383 = vadd.f32 0.0, %v6382
      %6384 = vmatmul.bf16.gmra.mxu0 %v6064
      %v6385 = vpop.f32.mrf.mxu0
      %v6386 = vadd.f32 0.0, %v6385
      %v6387 = vpop.f32.mrf.mxu0
      %v6388 = vadd.f32 0.0, %v6387
      %6389 = vmatmul.bf16.gmra.mxu0 %v6067
      %v6390 = vpop.f32.mrf.mxu0
      %v6391 = vadd.f32 0.0, %v6390
      %v6392 = vpop.f32.mrf.mxu0
      %v6393 = vadd.f32 0.0, %v6392
      %6394 = vmatmul.bf16.gmra.mxu0 %v6070
      %v6395 = vpop.f32.mrf.mxu0
      %v6396 = vadd.f32 0.0, %v6395
      %v6397 = vpop.f32.mrf.mxu0
      %v6398 = vadd.f32 0.0, %v6397
      %6399 = vmatmul.bf16.gmra.mxu0 %v6073
      %v6400 = vpop.f32.mrf.mxu0
      %v6401 = vadd.f32 0.0, %v6400
      %v6402 = vpop.f32.mrf.mxu0
      %v6403 = vadd.f32 0.0, %v6402
      %6404 = vmatmul.bf16.gmra.mxu0 %v6076
      %v6405 = vpop.f32.mrf.mxu0
      %v6406 = vadd.f32 0.0, %v6405
      %v6407 = vpop.f32.mrf.mxu0
      %v6408 = vadd.f32 0.0, %v6407
      %6409 = vmatmul.bf16.gmra.mxu0 %v6079
      %v6410 = vpop.f32.mrf.mxu0
      %v6411 = vadd.f32 0.0, %v6410
      %v6412 = vpop.f32.mrf.mxu0
      %v6413 = vadd.f32 0.0, %v6412
      %6414 = vmatmul.bf16.gmra.mxu0 %v6082
      %v6415 = vpop.f32.mrf.mxu0
      %v6416 = vadd.f32 0.0, %v6415
      %v6417 = vpop.f32.mrf.mxu0
      %v6418 = vadd.f32 0.0, %v6417
      %6419 = vmatmul.bf16.gmra.mxu0 %v6085
      %v6420 = vpop.f32.mrf.mxu0
      %v6421 = vadd.f32 0.0, %v6420
      %v6422 = vpop.f32.mrf.mxu0
      %v6423 = vadd.f32 0.0, %v6422
      %6424 = vmatmul.bf16.gmra.mxu0 %v6088
      %v6425 = vpop.f32.mrf.mxu0
      %v6426 = vadd.f32 0.0, %v6425
      %v6427 = vpop.f32.mrf.mxu0
      %v6428 = vadd.f32 0.0, %v6427
      %6429 = vmatmul.bf16.gmra.mxu0 %v6091
      %v6430 = vpop.f32.mrf.mxu0
      %v6431 = vadd.f32 0.0, %v6430
      %v6432 = vpop.f32.mrf.mxu0
      %v6433 = vadd.f32 0.0, %v6432
      %6434 = vmatmul.bf16.gmra.mxu0 %v6094
      %v6435 = vpop.f32.mrf.mxu0
      %v6436 = vadd.f32 0.0, %v6435
      %v6437 = vpop.f32.mrf.mxu0
      %v6438 = vadd.f32 0.0, %v6437
      %6439 = vmatmul.bf16.gmra.mxu0 %v6097
      %v6440 = vpop.f32.mrf.mxu0
      %v6441 = vadd.f32 0.0, %v6440
      %v6442 = vpop.f32.mrf.mxu0
      %v6443 = vadd.f32 0.0, %v6442
      %6444 = vmatmul.bf16.gmra.mxu0 %v6100
      %v6445 = vpop.f32.mrf.mxu0
      %v6446 = vadd.f32 0.0, %v6445
      %v6447 = vpop.f32.mrf.mxu0
      %v6448 = vadd.f32 0.0, %v6447
      %6449 = vmatmul.bf16.gmra.mxu0 %v6103
      %v6450 = vpop.f32.mrf.mxu0
      %v6451 = vadd.f32 0.0, %v6450
      %v6452 = vpop.f32.mrf.mxu0
      %v6453 = vadd.f32 0.0, %v6452
      %6454 = vmatmul.bf16.gmra.mxu0 %v6106
      %v6455 = vpop.f32.mrf.mxu0
      %v6456 = vadd.f32 0.0, %v6455
      %v6457 = vpop.f32.mrf.mxu0
      %v6458 = vadd.f32 0.0, %v6457
      %6459 = vdwg.mxu0
      %v6460 = vadd.f32 %v5611, %v6121
      %v6461 = vadd.f32 %v5612, %v6123
      %v6462 = vadd.f32 %v5613, %v6126
      %v6463 = vadd.f32 %v5614, %v6128
      %v6464 = vadd.f32 %v5615, %v6131
      %v6465 = vadd.f32 %v5616, %v6133
      %v6466 = vadd.f32 %v5617, %v6136
      %v6467 = vadd.f32 %v5618, %v6138
      %v6468 = vadd.f32 %v5619, %v6141
      %v6469 = vadd.f32 %v5620, %v6143
      %v6470 = vadd.f32 %v5621, %v6146
      %v6471 = vadd.f32 %v5622, %v6148
      %v6472 = vadd.f32 %v5623, %v6151
      %v6473 = vadd.f32 %v5624, %v6153
      %v6474 = vadd.f32 %v5625, %v6156
      %v6475 = vadd.f32 %v5626, %v6158
      %v6476 = vadd.f32 %v5627, %v6161
      %v6477 = vadd.f32 %v5628, %v6163
      %v6478 = vadd.f32 %v5629, %v6166
      %v6479 = vadd.f32 %v5630, %v6168
      %v6480 = vadd.f32 %v5631, %v6171
      %v6481 = vadd.f32 %v5632, %v6173
      %v6482 = vadd.f32 %v5633, %v6176
      %v6483 = vadd.f32 %v5634, %v6178
      %v6484 = vadd.f32 %v5635, %v6181
      %v6485 = vadd.f32 %v5636, %v6183
      %v6486 = vadd.f32 %v5637, %v6186
      %v6487 = vadd.f32 %v5638, %v6188
      %v6488 = vadd.f32 %v5639, %v6191
      %v6489 = vadd.f32 %v5640, %v6193
      %v6490 = vadd.f32 %v5641, %v6196
      %v6491 = vadd.f32 %v5642, %v6198
      %v6492 = vadd.f32 %v5643, %v6201
      %v6493 = vadd.f32 %v5644, %v6203
      %v6494 = vadd.f32 %v5645, %v6206
      %v6495 = vadd.f32 %v5646, %v6208
      %v6496 = vadd.f32 %v5647, %v6211
      %v6497 = vadd.f32 %v5648, %v6213
      %v6498 = vadd.f32 %v5649, %v6216
      %v6499 = vadd.f32 %v5650, %v6218
      %v6500 = vadd.f32 %v5651, %v6221
      %v6501 = vadd.f32 %v5652, %v6223
      %v6502 = vadd.f32 %v5653, %v6226
      %v6503 = vadd.f32 %v5654, %v6228
      %v6504 = vadd.f32 %v5655, %v6231
      %v6505 = vadd.f32 %v5656, %v6233
      %v6506 = vadd.f32 %v5657, %v6236
      %v6507 = vadd.f32 %v5658, %v6238
      %v6508 = vadd.f32 %v5659, %v6241
      %v6509 = vadd.f32 %v5660, %v6243
      %v6510 = vadd.f32 %v5661, %v6246
      %v6511 = vadd.f32 %v5662, %v6248
      %v6512 = vadd.f32 %v5663, %v6251
      %v6513 = vadd.f32 %v5664, %v6253
      %v6514 = vadd.f32 %v5665, %v6256
      %v6515 = vadd.f32 %v5666, %v6258
      %v6516 = vadd.f32 %v5667, %v6261
      %v6517 = vadd.f32 %v5668, %v6263
      %v6518 = vadd.f32 %v5669, %v6266
      %v6519 = vadd.f32 %v5670, %v6268
      %v6520 = vadd.f32 %v5671, %v6271
      %v6521 = vadd.f32 %v5672, %v6273
      %v6522 = vadd.f32 %v5673, %v6276
      %v6523 = vadd.f32 %v5674, %v6278
      %v6524 = vadd.f32 %v5675, %v6281
      %v6525 = vadd.f32 %v5676, %v6283
      %v6526 = vadd.f32 %v5677, %v6286
      %v6527 = vadd.f32 %v5678, %v6288
      %v6528 = vadd.f32 %v5679, %v6291
      %v6529 = vadd.f32 %v5680, %v6293
      %v6530 = vadd.f32 %v5681, %v6296
      %v6531 = vadd.f32 %v5682, %v6298
      %v6532 = vadd.f32 %v5683, %v6301
      %v6533 = vadd.f32 %v5684, %v6303
      %v6534 = vadd.f32 %v5685, %v6306
      %v6535 = vadd.f32 %v5686, %v6308
      %v6536 = vadd.f32 %v5687, %v6311
      %v6537 = vadd.f32 %v5688, %v6313
      %v6538 = vadd.f32 %v5689, %v6316
      %v6539 = vadd.f32 %v5690, %v6318
      %v6540 = vadd.f32 %v5691, %v6321
      %v6541 = vadd.f32 %v5692, %v6323
      %v6542 = vadd.f32 %v5693, %v6326
      %v6543 = vadd.f32 %v5694, %v6328
      %v6544 = vadd.f32 %v5695, %v6331
      %v6545 = vadd.f32 %v5696, %v6333
      %v6546 = vadd.f32 %v5697, %v6336
      %v6547 = vadd.f32 %v5698, %v6338
      %v6548 = vadd.f32 %v5699, %v6341
      %v6549 = vadd.f32 %v5700, %v6343
      %v6550 = vadd.f32 %v5701, %v6346
      %v6551 = vadd.f32 %v5702, %v6348
      %v6552 = vadd.f32 %v5703, %v6351
      %v6553 = vadd.f32 %v5704, %v6353
      %v6554 = vadd.f32 %v5705, %v6356
      %v6555 = vadd.f32 %v5706, %v6358
      %v6556 = vadd.f32 %v5707, %v6361
      %v6557 = vadd.f32 %v5708, %v6363
      %v6558 = vadd.f32 %v5709, %v6366
      %v6559 = vadd.f32 %v5710, %v6368
      %v6560 = vadd.f32 %v5711, %v6371
      %v6561 = vadd.f32 %v5712, %v6373
      %v6562 = vadd.f32 %v5713, %v6376
      %v6563 = vadd.f32 %v5714, %v6378
      %v6564 = vadd.f32 %v5715, %v6381
      %v6565 = vadd.f32 %v5716, %v6383
      %v6566 = vadd.f32 %v5717, %v6386
      %v6567 = vadd.f32 %v5718, %v6388
      %v6568 = vadd.f32 %v5719, %v6391
      %v6569 = vadd.f32 %v5720, %v6393
      %v6570 = vadd.f32 %v5721, %v6396
      %v6571 = vadd.f32 %v5722, %v6398
      %v6572 = vadd.f32 %v5723, %v6401
      %v6573 = vadd.f32 %v5724, %v6403
      %v6574 = vadd.f32 %v5725, %v6406
      %v6575 = vadd.f32 %v5726, %v6408
      %v6576 = vadd.f32 %v5727, %v6411
      %v6577 = vadd.f32 %v5728, %v6413
      %v6578 = vadd.f32 %v5729, %v6416
      %v6579 = vadd.f32 %v5730, %v6418
      %v6580 = vadd.f32 %v5731, %v6421
      %v6581 = vadd.f32 %v5732, %v6423
      %v6582 = vadd.f32 %v5733, %v6426
      %v6583 = vadd.f32 %v5734, %v6428
      %v6584 = vadd.f32 %v5735, %v6431
      %v6585 = vadd.f32 %v5736, %v6433
      %v6586 = vadd.f32 %v5737, %v6436
      %v6587 = vadd.f32 %v5738, %v6438
      %v6588 = vadd.f32 %v5739, %v6441
      %v6589 = vadd.f32 %v5740, %v6443
      %v6590 = vadd.f32 %v5741, %v6446
      %v6591 = vadd.f32 %v5742, %v6448
      %v6592 = vadd.f32 %v5743, %v6451
      %v6593 = vadd.f32 %v5744, %v6453
      %v6594 = vadd.f32 %v5745, %v6456
      %v6595 = vadd.f32 %v5746, %v6458
      %v6596 = vld [vmem:[%s165 + $0x20] sm:$0xc]
      %v6597 = vld [vmem:[%s165 + $0x24] sm:$0xf]
      %v6598 = vld [vmem:[%s165 + $0x28] sm:$0xf]
      %v6599 = vld [vmem:[%s165 + $0x2c] sm:$0xf]
      %v6600 = vld [vmem:[%s165 + $0x30] sm:$0xf]
      %v6601 = vld [vmem:[%s165 + $0x34] sm:$0xf]
      %v6602 = vld [vmem:[%s165 + $0x38] sm:$0xf]
      %v6603 = vld [vmem:[%s165 + $0x3c] sm:$0xf]
      %v6604 = vld [vmem:[%s165 + $0x40] sm:$0xf]
      %v6605 = vld [vmem:[%s165 + $0x44] sm:$0xf]
      %v6606 = vld [vmem:[%s165 + $0x48] sm:$0xf]
      %v6607 = vld [vmem:[%s165 + $0x4c] sm:$0xf]
      %v6608 = vld [vmem:[%s165 + $0x50] sm:$0xf]
      %v6609 = vld [vmem:[%s165 + $0x54] sm:$0xf]
      %v6610 = vld [vmem:[%s165 + $0x58] sm:$0xf]
      %v6611 = vld [vmem:[%s165 + $0x5c] sm:$0xf]
      %v6612 = vld [vmem:[%s165 + $0x60] sm:$0xf]
      %v6613 = vld [vmem:[%s165 + $0x64] sm:$0xf]
      %v6614 = vld [vmem:[%s165 + $0x68] sm:$0xf]
      %v6615 = vld [vmem:[%s165 + $0x6c] sm:$0xf]
      %v6616 = vld [vmem:[%s165 + $0x70] sm:$0xf]
      %v6617 = vld [vmem:[%s165 + $0x74] sm:$0xf]
      %v6618 = vld [vmem:[%s165 + $0x78] sm:$0xf]
      %v6619 = vld [vmem:[%s165 + $0x7c] sm:$0xf]
      %v6620 = vld [vmem:[%s165 + $0x80] sm:$0xf]
      %v6621 = vld [vmem:[%s165 + $0x84] sm:$0xf]
      %v6622 = vld [vmem:[%s165 + $0x88] sm:$0xf]
      %v6623 = vld [vmem:[%s165 + $0x8c] sm:$0xf]
      %v6624 = vld [vmem:[%s165 + $0x90] sm:$0xf]
      %v6625 = vld [vmem:[%s165 + $0x94] sm:$0xf]
      %v6626 = vld [vmem:[%s165 + $0x98] sm:$0xf]
      %v6627 = vld [vmem:[%s165 + $0x9c] sm:$0xf]
      %v6628 = vld [vmem:[%s165 + $0xa0] sm:$0xf]
      %v6629 = vld [vmem:[%s165 + $0xa4] sm:$0xf]
      %v6630 = vld [vmem:[%s165 + $0xa8] sm:$0xf]
      %v6631 = vld [vmem:[%s165 + $0xac] sm:$0xf]
      %v6632 = vld [vmem:[%s165 + $0xb0] sm:$0xf]
      %v6633 = vld [vmem:[%s165 + $0xb4] sm:$0xf]
      %v6634 = vld [vmem:[%s165 + $0xb8] sm:$0xf]
      %v6635 = vld [vmem:[%s165 + $0xbc] sm:$0xf]
      %v6636 = vld [vmem:[%s165 + $0xc0] sm:$0xf]
      %v6637 = vld [vmem:[%s165 + $0xc4] sm:$0xf]
      %v6638 = vld [vmem:[%s165 + $0xc8] sm:$0xf]
      %v6639 = vld [vmem:[%s165 + $0xcc] sm:$0xf]
      %v6640 = vld [vmem:[%s165 + $0xd0] sm:$0xf]
      %v6641 = vld [vmem:[%s165 + $0xd4] sm:$0xf]
      %v6642 = vld [vmem:[%s165 + $0xd8] sm:$0xf]
      %v6643 = vld [vmem:[%s165 + $0xdc] sm:$0xf]
      %v6644 = vld [vmem:[%s165 + $0xe0] sm:$0xf]
      %v6645 = vld [vmem:[%s165 + $0xe4] sm:$0xf]
      %v6646 = vld [vmem:[%s165 + $0xe8] sm:$0xf]
      %v6647 = vld [vmem:[%s165 + $0xec] sm:$0xf]
      %v6648 = vld [vmem:[%s165 + $0xf0] sm:$0xf]
      %v6649 = vld [vmem:[%s165 + $0xf4] sm:$0xf]
      %v6650 = vld [vmem:[%s165 + $0xf8] sm:$0xf]
      %v6651 = vld [vmem:[%s165 + $0xfc] sm:$0xf]
      %v6652 = vld [vmem:[%s165 + $0x100] sm:$0xf]
      %v6653 = vld [vmem:[%s165 + $0x104] sm:$0xf]
      %v6654 = vld [vmem:[%s165 + $0x108] sm:$0xf]
      %v6655 = vld [vmem:[%s165 + $0x10c] sm:$0xf]
      %v6656 = vld [vmem:[%s165 + $0x110] sm:$0xf]
      %v6657 = vld [vmem:[%s165 + $0x114] sm:$0xf]
      %v6658 = vld [vmem:[%s165 + $0x118] sm:$0xf]
      %v6659 = vld [vmem:[%s165 + $0x11c] sm:$0xf]
      %v6660 = vld [vmem:[%s165 + $0x120] sm:$0xf]
      %v6661 = vld [vmem:[%s165 + $0x124] sm:$0xf]
      %v6662 = vld [vmem:[%s165 + $0x128] sm:$0xf]
      %v6663 = vld [vmem:[%s165 + $0x12c] sm:$0xf]
      %v6664 = vld [vmem:[%s165 + $0x130] sm:$0xf]
      %v6665 = vld [vmem:[%s165 + $0x134] sm:$0xf]
      %v6666 = vld [vmem:[%s165 + $0x138] sm:$0xf]
      %v6667 = vld [vmem:[%s165 + $0x13c] sm:$0xf]
      %v6668 = vld [vmem:[%s165 + $0x140] sm:$0xf]
      %v6669 = vld [vmem:[%s165 + $0x144] sm:$0xf]
      %v6670 = vld [vmem:[%s165 + $0x148] sm:$0xf]
      %v6671 = vld [vmem:[%s165 + $0x14c] sm:$0xf]
      %v6672 = vld [vmem:[%s165 + $0x150] sm:$0xf]
      %v6673 = vld [vmem:[%s165 + $0x154] sm:$0xf]
      %v6674 = vld [vmem:[%s165 + $0x158] sm:$0xf]
      %v6675 = vld [vmem:[%s165 + $0x15c] sm:$0xf]
      %v6676 = vld [vmem:[%s165 + $0x160] sm:$0xf]
      %v6677 = vld [vmem:[%s165 + $0x164] sm:$0xf]
      %v6678 = vld [vmem:[%s165 + $0x168] sm:$0xf]
      %v6679 = vld [vmem:[%s165 + $0x16c] sm:$0xf]
      %v6680 = vld [vmem:[%s165 + $0x170] sm:$0xf]
      %v6681 = vld [vmem:[%s165 + $0x174] sm:$0xf]
      %v6682 = vld [vmem:[%s165 + $0x178] sm:$0xf]
      %v6683 = vld [vmem:[%s165 + $0x17c] sm:$0xf]
      %v6684 = vld [vmem:[%s165 + $0x180] sm:$0xf]
      %v6685 = vld [vmem:[%s165 + $0x184] sm:$0xf]
      %v6686 = vld [vmem:[%s165 + $0x188] sm:$0xf]
      %v6687 = vld [vmem:[%s165 + $0x18c] sm:$0xf]
      %v6688 = vld [vmem:[%s165 + $0x190] sm:$0xf]
      %v6689 = vld [vmem:[%s165 + $0x194] sm:$0xf]
      %v6690 = vld [vmem:[%s165 + $0x198] sm:$0xf]
      %v6691 = vld [vmem:[%s165 + $0x19c] sm:$0xf]
      %v6692 = vld [vmem:[%s165 + $0x1a0] sm:$0xf]
      %v6693 = vld [vmem:[%s165 + $0x1a4] sm:$0xf]
      %v6694 = vld [vmem:[%s165 + $0x1a8] sm:$0xf]
      %v6695 = vld [vmem:[%s165 + $0x1ac] sm:$0xf]
      %v6696 = vld [vmem:[%s165 + $0x1b0] sm:$0xf]
      %v6697 = vld [vmem:[%s165 + $0x1b4] sm:$0xf]
      %v6698 = vld [vmem:[%s165 + $0x1b8] sm:$0xf]
      %v6699 = vld [vmem:[%s165 + $0x1bc] sm:$0xf]
      %v6700 = vld [vmem:[%s165 + $0x1c0] sm:$0xf]
      %v6701 = vld [vmem:[%s165 + $0x1c4] sm:$0xf]
      %v6702 = vld [vmem:[%s165 + $0x1c8] sm:$0xf]
      %v6703 = vld [vmem:[%s165 + $0x1cc] sm:$0xf]
      %v6704 = vld [vmem:[%s165 + $0x1d0] sm:$0xf]
      %v6705 = vld [vmem:[%s165 + $0x1d4] sm:$0xf]
      %v6706 = vld [vmem:[%s165 + $0x1d8] sm:$0xf]
      %v6707 = vld [vmem:[%s165 + $0x1dc] sm:$0xf]
      %v6708 = vld [vmem:[%s165 + $0x1e0] sm:$0xf]
      %v6709 = vld [vmem:[%s165 + $0x1e4] sm:$0xf]
      %v6710 = vld [vmem:[%s165 + $0x1e8] sm:$0xf]
      %v6711 = vld [vmem:[%s165 + $0x1ec] sm:$0xf]
      %v6712 = vld [vmem:[%s165 + $0x1f0] sm:$0xf]
      %v6713 = vld [vmem:[%s165 + $0x1f4] sm:$0xf]
      %v6714 = vld [vmem:[%s165 + $0x1f8] sm:$0xf]
      %v6715 = vld [vmem:[%s165 + $0x1fc] sm:$0xf]
      %v6716 = vld [vmem:[%s165 + $0x200] sm:$0xf]
      %v6717 = vld [vmem:[%s165 + $0x204] sm:$0xf]
      %v6718 = vld [vmem:[%s165 + $0x208] sm:$0xf]
      %v6719 = vld [vmem:[%s165 + $0x20c] sm:$0xf]
      %v6720 = vld [vmem:[%s165 + $0x210] sm:$0xf]
      %v6721 = vld [vmem:[%s165 + $0x214] sm:$0xf]
      %v6722 = vld [vmem:[%s165 + $0x218] sm:$0xf]
      %v6723 = vld [vmem:[%s165 + $0x21c] sm:$0xf]
      %v6724 = vld [vmem:[%s165 + $0x220] sm:$0xf]
      %v6725 = vld [vmem:[%s165 + $0x224] sm:$0xf]
      %v6726 = vld [vmem:[%s165 + $0x228] sm:$0xf]
      %v6727 = vld [vmem:[%s165 + $0x22c] sm:$0xf]
      %v6728 = vld [vmem:[%s165 + $0x230] sm:$0xf]
      %v6729 = vld [vmem:[%s165 + $0x234] sm:$0xf]
      %v6730 = vld [vmem:[%s165 + $0x238] sm:$0xf]
      %v6731 = vld [vmem:[%s165 + $0x23c] sm:$0xf]
      %v6732 = vld [vmem:[%s165 + $0x240] sm:$0x3]
      %v6733 = vld [vmem:[%s1 + $0x8] sm:$0x6]
      %v6871 = vunpack.c.l.b16 %v6596
      %v6872 = vunpack.c.l.b16 %v6597
      %v6873 = vunpack.c.l.b16 %v6598
      %v6874 = vunpack.c.l.b16 %v6599
      %v6875 = vunpack.c.l.b16 %v6600
      %v6876 = vunpack.c.l.b16 %v6601
      %v6877 = vunpack.c.l.b16 %v6602
      %v6878 = vunpack.c.l.b16 %v6603
      %v6879 = vunpack.c.l.b16 %v6604
      %v6880 = vunpack.c.l.b16 %v6605
      %v6881 = vunpack.c.l.b16 %v6606
      %v6882 = vunpack.c.l.b16 %v6607
      %v6883 = vunpack.c.l.b16 %v6608
      %v6884 = vunpack.c.l.b16 %v6609
      %v6885 = vunpack.c.l.b16 %v6610
      %v6886 = vunpack.c.l.b16 %v6611
      %v6887 = vunpack.c.l.b16 %v6612
      %v6888 = vunpack.c.l.b16 %v6613
      %v6889 = vunpack.c.l.b16 %v6614
      %v6890 = vunpack.c.l.b16 %v6615
      %v6891 = vunpack.c.l.b16 %v6616
      %v6892 = vunpack.c.l.b16 %v6617
      %v6893 = vunpack.c.l.b16 %v6618
      %v6894 = vunpack.c.l.b16 %v6619
      %v6895 = vunpack.c.l.b16 %v6620
      %v6896 = vunpack.c.l.b16 %v6621
      %v6897 = vunpack.c.l.b16 %v6622
      %v6898 = vunpack.c.l.b16 %v6623
      %v6899 = vunpack.c.l.b16 %v6624
      %v6900 = vunpack.c.l.b16 %v6625
      %v6901 = vunpack.c.l.b16 %v6626
      %v6902 = vunpack.c.l.b16 %v6627
      %v6903 = vunpack.c.l.b16 %v6628
      %v6904 = vunpack.c.l.b16 %v6629
      %v6905 = vunpack.c.l.b16 %v6630
      %v6906 = vunpack.c.l.b16 %v6631
      %v6907 = vunpack.c.l.b16 %v6632
      %v6908 = vunpack.c.l.b16 %v6633
      %v6909 = vunpack.c.l.b16 %v6634
      %v6910 = vunpack.c.l.b16 %v6635
      %v6911 = vunpack.c.l.b16 %v6636
      %v6912 = vunpack.c.l.b16 %v6637
      %v6913 = vunpack.c.l.b16 %v6638
      %v6914 = vunpack.c.l.b16 %v6639
      %v6915 = vunpack.c.l.b16 %v6640
      %v6916 = vunpack.c.l.b16 %v6641
      %v6917 = vunpack.c.l.b16 %v6642
      %v6918 = vunpack.c.l.b16 %v6643
      %v6919 = vunpack.c.l.b16 %v6644
      %v6920 = vunpack.c.l.b16 %v6645
      %v6921 = vunpack.c.l.b16 %v6646
      %v6922 = vunpack.c.l.b16 %v6647
      %v6923 = vunpack.c.l.b16 %v6648
      %v6924 = vunpack.c.l.b16 %v6649
      %v6925 = vunpack.c.l.b16 %v6650
      %v6926 = vunpack.c.l.b16 %v6651
      %v6927 = vunpack.c.l.b16 %v6652
      %v6928 = vunpack.c.l.b16 %v6653
      %v6929 = vunpack.c.l.b16 %v6654
      %v6930 = vunpack.c.l.b16 %v6655
      %v6931 = vunpack.c.l.b16 %v6656
      %v6932 = vunpack.c.l.b16 %v6657
      %v6933 = vunpack.c.l.b16 %v6658
      %v6934 = vunpack.c.l.b16 %v6659
      %v6935 = vunpack.c.l.b16 %v6660
      %v6936 = vunpack.c.l.b16 %v6661
      %v6937 = vunpack.c.l.b16 %v6662
      %v6938 = vunpack.c.l.b16 %v6663
      %v6939 = vunpack.c.l.b16 %v6664
      %v6940 = vunpack.c.l.b16 %v6665
      %v6941 = vunpack.c.l.b16 %v6666
      %v6942 = vunpack.c.l.b16 %v6667
      %v6943 = vunpack.c.l.b16 %v6668
      %v6944 = vunpack.c.l.b16 %v6669
      %v6945 = vunpack.c.l.b16 %v6670
      %v6946 = vunpack.c.l.b16 %v6671
      %v6947 = vunpack.c.l.b16 %v6672
      %v6948 = vunpack.c.l.b16 %v6673
      %v6949 = vunpack.c.l.b16 %v6674
      %v6950 = vunpack.c.l.b16 %v6675
      %v6951 = vunpack.c.l.b16 %v6676
      %v6952 = vunpack.c.l.b16 %v6677
      %v6953 = vunpack.c.l.b16 %v6678
      %v6954 = vunpack.c.l.b16 %v6679
      %v6955 = vunpack.c.l.b16 %v6680
      %v6956 = vunpack.c.l.b16 %v6681
      %v6957 = vunpack.c.l.b16 %v6682
      %v6958 = vunpack.c.l.b16 %v6683
      %v6959 = vunpack.c.l.b16 %v6684
      %v6960 = vunpack.c.l.b16 %v6685
      %v6961 = vunpack.c.l.b16 %v6686
      %v6962 = vunpack.c.l.b16 %v6687
      %v6963 = vunpack.c.l.b16 %v6688
      %v6964 = vunpack.c.l.b16 %v6689
      %v6965 = vunpack.c.l.b16 %v6690
      %v6966 = vunpack.c.l.b16 %v6691
      %v6967 = vunpack.c.l.b16 %v6692
      %v6968 = vunpack.c.l.b16 %v6693
      %v6969 = vunpack.c.l.b16 %v6694
      %v6970 = vunpack.c.l.b16 %v6695
      %v6971 = vunpack.c.l.b16 %v6696
      %v6972 = vunpack.c.l.b16 %v6697
      %v6973 = vunpack.c.l.b16 %v6698
      %v6974 = vunpack.c.l.b16 %v6699
      %v6975 = vunpack.c.l.b16 %v6700
      %v6976 = vunpack.c.l.b16 %v6701
      %v6977 = vunpack.c.l.b16 %v6702
      %v6978 = vunpack.c.l.b16 %v6703
      %v6979 = vunpack.c.l.b16 %v6704
      %v6980 = vunpack.c.l.b16 %v6705
      %v6981 = vunpack.c.l.b16 %v6706
      %v6982 = vunpack.c.l.b16 %v6707
      %v6983 = vunpack.c.l.b16 %v6708
      %v6984 = vunpack.c.l.b16 %v6709
      %v6985 = vunpack.c.l.b16 %v6710
      %v6986 = vunpack.c.l.b16 %v6711
      %v6987 = vunpack.c.l.b16 %v6712
      %v6988 = vunpack.c.l.b16 %v6713
      %v6989 = vunpack.c.l.b16 %v6714
      %v6990 = vunpack.c.l.b16 %v6715
      %v6991 = vunpack.c.l.b16 %v6716
      %v6992 = vunpack.c.l.b16 %v6717
      %v6993 = vunpack.c.l.b16 %v6718
      %v6994 = vunpack.c.l.b16 %v6719
      %v6995 = vunpack.c.l.b16 %v6720
      %v6996 = vunpack.c.l.b16 %v6721
      %v6997 = vunpack.c.l.b16 %v6722
      %v6998 = vunpack.c.l.b16 %v6723
      %v6999 = vunpack.c.l.b16 %v6724
      %v7000 = vunpack.c.l.b16 %v6725
      %v7001 = vunpack.c.l.b16 %v6726
      %v7002 = vunpack.c.l.b16 %v6727
      %v7003 = vunpack.c.l.b16 %v6728
      %v7004 = vunpack.c.l.b16 %v6729
      %v7005 = vunpack.c.l.b16 %v6730
      %v7006 = vunpack.c.l.b16 %v6731
      %v7007 = vunpack.c.l.b16 %v6732
      %v7008 = vpack.c.b16 %v6872, %v6871
      %v7009 = vpack.c.b16 %v6874, %v6873
      %v7010 = vpack.c.b16 %v6876, %v6875
      %v7011 = vpack.c.b16 %v6878, %v6877
      %v7012 = vpack.c.b16 %v6880, %v6879
      %v7013 = vpack.c.b16 %v6882, %v6881
      %v7014 = vpack.c.b16 %v6884, %v6883
      %v7015 = vpack.c.b16 %v6886, %v6885
      %v7016 = vpack.c.b16 %v6888, %v6887
      %v7017 = vpack.c.b16 %v6890, %v6889
      %v7018 = vpack.c.b16 %v6892, %v6891
      %v7019 = vpack.c.b16 %v6894, %v6893
      %v7020 = vpack.c.b16 %v6896, %v6895
      %v7021 = vpack.c.b16 %v6898, %v6897
      %v7022 = vpack.c.b16 %v6900, %v6899
      %v7023 = vpack.c.b16 %v6902, %v6901
      %v7024 = vpack.c.b16 %v6904, %v6903
      %v7025 = vpack.c.b16 %v6906, %v6905
      %v7026 = vpack.c.b16 %v6908, %v6907
      %v7027 = vpack.c.b16 %v6910, %v6909
      %v7028 = vpack.c.b16 %v6912, %v6911
      %v7029 = vpack.c.b16 %v6914, %v6913
      %v7030 = vpack.c.b16 %v6916, %v6915
      %v7031 = vpack.c.b16 %v6918, %v6917
      %v7032 = vpack.c.b16 %v6920, %v6919
      %v7033 = vpack.c.b16 %v6922, %v6921
      %v7034 = vpack.c.b16 %v6924, %v6923
      %v7035 = vpack.c.b16 %v6926, %v6925
      %v7036 = vpack.c.b16 %v6928, %v6927
      %v7037 = vpack.c.b16 %v6930, %v6929
      %v7038 = vpack.c.b16 %v6932, %v6931
      %v7039 = vpack.c.b16 %v6934, %v6933
      %v7040 = vpack.c.b16 %v6936, %v6935
      %v7041 = vpack.c.b16 %v6938, %v6937
      %v7042 = vpack.c.b16 %v6940, %v6939
      %v7043 = vpack.c.b16 %v6942, %v6941
      %v7044 = vpack.c.b16 %v6944, %v6943
      %v7045 = vpack.c.b16 %v6946, %v6945
      %v7046 = vpack.c.b16 %v6948, %v6947
      %v7047 = vpack.c.b16 %v6950, %v6949
      %v7048 = vpack.c.b16 %v6952, %v6951
      %v7049 = vpack.c.b16 %v6954, %v6953
      %v7050 = vpack.c.b16 %v6956, %v6955
      %v7051 = vpack.c.b16 %v6958, %v6957
      %v7052 = vpack.c.b16 %v6960, %v6959
      %v7053 = vpack.c.b16 %v6962, %v6961
      %v7054 = vpack.c.b16 %v6964, %v6963
      %v7055 = vpack.c.b16 %v6966, %v6965
      %v7056 = vpack.c.b16 %v6968, %v6967
      %v7057 = vpack.c.b16 %v6970, %v6969
      %v7058 = vpack.c.b16 %v6972, %v6971
      %v7059 = vpack.c.b16 %v6974, %v6973
      %v7060 = vpack.c.b16 %v6976, %v6975
      %v7061 = vpack.c.b16 %v6978, %v6977
      %v7062 = vpack.c.b16 %v6980, %v6979
      %v7063 = vpack.c.b16 %v6982, %v6981
      %v7064 = vpack.c.b16 %v6984, %v6983
      %v7065 = vpack.c.b16 %v6986, %v6985
      %v7066 = vpack.c.b16 %v6988, %v6987
      %v7067 = vpack.c.b16 %v6990, %v6989
      %v7068 = vpack.c.b16 %v6992, %v6991
      %v7069 = vpack.c.b16 %v6994, %v6993
      %v7070 = vpack.c.b16 %v6996, %v6995
      %v7071 = vpack.c.b16 %v6998, %v6997
      %v7072 = vpack.c.b16 %v7000, %v6999
      %v7073 = vpack.c.b16 %v7002, %v7001
      %v7074 = vpack.c.b16 %v7004, %v7003
      %v7075 = vpack.c.b16 %v7006, %v7005
      %v7076 = vpack.c.b16 %v7007, %v7007
      %v7077 = vrot.slane %v7008, 2
      %v7078 = vrot.slane %v7009, 2
      %v7079 = vsel %vm5753, %v7077, %v7078
      %v7080 = vrot.slane %v7010, 2
      %v7081 = vsel %vm5753, %v7078, %v7080
      %v7082 = vrot.slane %v7011, 2
      %v7083 = vsel %vm5753, %v7080, %v7082
      %v7084 = vrot.slane %v7012, 2
      %v7085 = vsel %vm5753, %v7082, %v7084
      %v7086 = vrot.slane %v7013, 2
      %v7087 = vsel %vm5753, %v7084, %v7086
      %v7088 = vrot.slane %v7014, 2
      %v7089 = vsel %vm5753, %v7086, %v7088
      %v7090 = vrot.slane %v7015, 2
      %v7091 = vsel %vm5753, %v7088, %v7090
      %v7092 = vrot.slane %v7016, 2
      %v7093 = vsel %vm5753, %v7090, %v7092
      %v7094 = vrot.slane %v7017, 2
      %v7095 = vsel %vm5753, %v7092, %v7094
      %v7096 = vrot.slane %v7018, 2
      %v7097 = vsel %vm5753, %v7094, %v7096
      %v7098 = vrot.slane %v7019, 2
      %v7099 = vsel %vm5753, %v7096, %v7098
      %v7100 = vrot.slane %v7020, 2
      %v7101 = vsel %vm5753, %v7098, %v7100
      %v7102 = vrot.slane %v7021, 2
      %v7103 = vsel %vm5753, %v7100, %v7102
      %v7104 = vrot.slane %v7022, 2
      %v7105 = vsel %vm5753, %v7102, %v7104
      %v7106 = vrot.slane %v7023, 2
      %v7107 = vsel %vm5753, %v7104, %v7106
      %v7108 = vrot.slane %v7024, 2
      %v7109 = vsel %vm5753, %v7106, %v7108
      %v7110 = vrot.slane %v7025, 2
      %v7111 = vsel %vm5753, %v7108, %v7110
      %v7112 = vrot.slane %v7026, 2
      %v7113 = vsel %vm5753, %v7110, %v7112
      %v7114 = vrot.slane %v7027, 2
      %v7115 = vsel %vm5753, %v7112, %v7114
      %v7116 = vrot.slane %v7028, 2
      %v7117 = vsel %vm5753, %v7114, %v7116
      %v7118 = vrot.slane %v7029, 2
      %v7119 = vsel %vm5753, %v7116, %v7118
      %v7120 = vrot.slane %v7030, 2
      %v7121 = vsel %vm5753, %v7118, %v7120
      %v7122 = vrot.slane %v7031, 2
      %v7123 = vsel %vm5753, %v7120, %v7122
      %v7124 = vrot.slane %v7032, 2
      %v7125 = vsel %vm5753, %v7122, %v7124
      %v7126 = vrot.slane %v7033, 2
      %v7127 = vsel %vm5753, %v7124, %v7126
      %v7128 = vrot.slane %v7034, 2
      %v7129 = vsel %vm5753, %v7126, %v7128
      %v7130 = vrot.slane %v7035, 2
      %v7131 = vsel %vm5753, %v7128, %v7130
      %v7132 = vrot.slane %v7036, 2
      %v7133 = vsel %vm5753, %v7130, %v7132
      %v7134 = vrot.slane %v7037, 2
      %v7135 = vsel %vm5753, %v7132, %v7134
      %v7136 = vrot.slane %v7038, 2
      %v7137 = vsel %vm5753, %v7134, %v7136
      %v7138 = vrot.slane %v7039, 2
      %v7139 = vsel %vm5753, %v7136, %v7138
      %v7140 = vrot.slane %v7040, 2
      %v7141 = vsel %vm5753, %v7138, %v7140
      %v7142 = vrot.slane %v7041, 2
      %v7143 = vsel %vm5753, %v7140, %v7142
      %v7144 = vrot.slane %v7042, 2
      %v7145 = vsel %vm5753, %v7142, %v7144
      %v7146 = vrot.slane %v7043, 2
      %v7147 = vsel %vm5753, %v7144, %v7146
      %v7148 = vrot.slane %v7044, 2
      %v7149 = vsel %vm5753, %v7146, %v7148
      %v7150 = vrot.slane %v7045, 2
      %v7151 = vsel %vm5753, %v7148, %v7150
      %v7152 = vrot.slane %v7046, 2
      %v7153 = vsel %vm5753, %v7150, %v7152
      %v7154 = vrot.slane %v7047, 2
      %v7155 = vsel %vm5753, %v7152, %v7154
      %v7156 = vrot.slane %v7048, 2
      %v7157 = vsel %vm5753, %v7154, %v7156
      %v7158 = vrot.slane %v7049, 2
      %v7159 = vsel %vm5753, %v7156, %v7158
      %v7160 = vrot.slane %v7050, 2
      %v7161 = vsel %vm5753, %v7158, %v7160
      %v7162 = vrot.slane %v7051, 2
      %v7163 = vsel %vm5753, %v7160, %v7162
      %v7164 = vrot.slane %v7052, 2
      %v7165 = vsel %vm5753, %v7162, %v7164
      %v7166 = vrot.slane %v7053, 2
      %v7167 = vsel %vm5753, %v7164, %v7166
      %v7168 = vrot.slane %v7054, 2
      %v7169 = vsel %vm5753, %v7166, %v7168
      %v7170 = vrot.slane %v7055, 2
      %v7171 = vsel %vm5753, %v7168, %v7170
      %v7172 = vrot.slane %v7056, 2
      %v7173 = vsel %vm5753, %v7170, %v7172
      %v7174 = vrot.slane %v7057, 2
      %v7175 = vsel %vm5753, %v7172, %v7174
      %v7176 = vrot.slane %v7058, 2
      %v7177 = vsel %vm5753, %v7174, %v7176
      %v7178 = vrot.slane %v7059, 2
      %v7179 = vsel %vm5753, %v7176, %v7178
      %v7180 = vrot.slane %v7060, 2
      %v7181 = vsel %vm5753, %v7178, %v7180
      %v7182 = vrot.slane %v7061, 2
      %v7183 = vsel %vm5753, %v7180, %v7182
      %v7184 = vrot.slane %v7062, 2
      %v7185 = vsel %vm5753, %v7182, %v7184
      %v7186 = vrot.slane %v7063, 2
      %v7187 = vsel %vm5753, %v7184, %v7186
      %v7188 = vrot.slane %v7064, 2
      %v7189 = vsel %vm5753, %v7186, %v7188
      %v7190 = vrot.slane %v7065, 2
      %v7191 = vsel %vm5753, %v7188, %v7190
      %v7192 = vrot.slane %v7066, 2
      %v7193 = vsel %vm5753, %v7190, %v7192
      %v7194 = vrot.slane %v7067, 2
      %v7195 = vsel %vm5753, %v7192, %v7194
      %v7196 = vrot.slane %v7068, 2
      %v7197 = vsel %vm5753, %v7194, %v7196
      %v7198 = vrot.slane %v7069, 2
      %v7199 = vsel %vm5753, %v7196, %v7198
      %v7200 = vrot.slane %v7070, 2
      %v7201 = vsel %vm5753, %v7198, %v7200
      %v7202 = vrot.slane %v7071, 2
      %v7203 = vsel %vm5753, %v7200, %v7202
      %v7204 = vrot.slane %v7072, 2
      %v7205 = vsel %vm5753, %v7202, %v7204
      %v7206 = vrot.slane %v7073, 2
      %v7207 = vsel %vm5753, %v7204, %v7206
      %v7208 = vrot.slane %v7074, 2
      %v7209 = vsel %vm5753, %v7206, %v7208
      %v7210 = vrot.slane %v7075, 2
      %v7211 = vsel %vm5753, %v7208, %v7210
      %v7212 = vrot.slane %v7076, 2
      %v7213 = vsel %vm5753, %v7210, %v7212
      %v7215 = vunpack.c.l.b16 %v6733
      %v7216 = vpack.c.b16 %v7215, %v7215
      %v7217 = vrot.slane %v7216, 1
      %v7219 = vsel %vm1214, %v7079, 0
      %v7222 = vsel %vm1214, %v7081, 0
      %v7225 = vsel %vm1214, %v7083, 0
      %v7228 = vsel %vm1214, %v7085, 0
      %v7231 = vsel %vm1214, %v7087, 0
      %v7234 = vsel %vm1214, %v7089, 0
      %v7237 = vsel %vm1214, %v7091, 0
      %v7240 = vsel %vm1214, %v7093, 0
      %v7243 = vsel %vm1214, %v7095, 0
      %v7246 = vsel %vm1214, %v7097, 0
      %v7249 = vsel %vm1214, %v7099, 0
      %v7252 = vsel %vm1214, %v7101, 0
      %v7255 = vsel %vm1214, %v7103, 0
      %v7258 = vsel %vm1214, %v7105, 0
      %v7261 = vsel %vm1214, %v7107, 0
      %v7264 = vsel %vm1214, %v7109, 0
      %v7267 = vsel %vm1214, %v7111, 0
      %v7270 = vsel %vm1214, %v7113, 0
      %v7273 = vsel %vm1214, %v7115, 0
      %v7276 = vsel %vm1214, %v7117, 0
      %v7279 = vsel %vm1214, %v7119, 0
      %v7282 = vsel %vm1214, %v7121, 0
      %v7285 = vsel %vm1214, %v7123, 0
      %v7288 = vsel %vm1214, %v7125, 0
      %v7291 = vsel %vm1214, %v7127, 0
      %v7294 = vsel %vm1214, %v7129, 0
      %v7297 = vsel %vm1214, %v7131, 0
      %v7300 = vsel %vm1214, %v7133, 0
      %v7303 = vsel %vm1214, %v7135, 0
      %v7306 = vsel %vm1214, %v7137, 0
      %v7309 = vsel %vm1214, %v7139, 0
      %v7312 = vsel %vm1214, %v7141, 0
      %v7315 = vsel %vm1214, %v7143, 0
      %v7318 = vsel %vm1214, %v7145, 0
      %v7321 = vsel %vm1214, %v7147, 0
      %v7324 = vsel %vm1214, %v7149, 0
      %v7327 = vsel %vm1214, %v7151, 0
      %v7330 = vsel %vm1214, %v7153, 0
      %v7333 = vsel %vm1214, %v7155, 0
      %v7336 = vsel %vm1214, %v7157, 0
      %v7339 = vsel %vm1214, %v7159, 0
      %v7342 = vsel %vm1214, %v7161, 0
      %v7345 = vsel %vm1214, %v7163, 0
      %v7348 = vsel %vm1214, %v7165, 0
      %v7351 = vsel %vm1214, %v7167, 0
      %v7354 = vsel %vm1214, %v7169, 0
      %v7357 = vsel %vm1214, %v7171, 0
      %v7360 = vsel %vm1214, %v7173, 0
      %v7363 = vsel %vm1214, %v7175, 0
      %v7366 = vsel %vm1214, %v7177, 0
      %v7369 = vsel %vm1214, %v7179, 0
      %v7372 = vsel %vm1214, %v7181, 0
      %v7375 = vsel %vm1214, %v7183, 0
      %v7378 = vsel %vm1214, %v7185, 0
      %v7381 = vsel %vm1214, %v7187, 0
      %v7384 = vsel %vm1214, %v7189, 0
      %v7387 = vsel %vm1214, %v7191, 0
      %v7390 = vsel %vm1214, %v7193, 0
      %v7393 = vsel %vm1214, %v7195, 0
      %v7396 = vsel %vm1214, %v7197, 0
      %v7399 = vsel %vm1214, %v7199, 0
      %v7402 = vsel %vm1214, %v7201, 0
      %v7405 = vsel %vm1214, %v7203, 0
      %v7408 = vsel %vm1214, %v7205, 0
      %v7411 = vsel %vm1214, %v7207, 0
      %v7414 = vsel %vm1214, %v7209, 0
      %v7417 = vsel %vm1214, %v7211, 0
      %v7420 = vsel %vm1214, %v7213, 0
      %v7423 = vand.u32 %v7217, %v1422
      %7425 = vmatpush.bf16.msra.mxu0 0
      %7426 = vmatpush.bf16.msra.mxu0 0
      %7427 = vmatpush.bf16.msra.mxu0 0
      %7428 = vmatpush.bf16.msra.mxu0 0
      %7429 = vmatpush.bf16.msra.mxu0 0
      %7430 = vmatpush.bf16.msra.mxu0 0
      %7431 = vmatpush.bf16.msra.mxu0 0
      %7432 = vmatpush.bf16.msra.mxu0 %v7423
      %7433 = vmatmul.bf16.gmra.mxu0 %v7219
      %v7434 = vpop.f32.mrf.mxu0
      %v7435 = vadd.f32 0.0, %v7434
      %v7436 = vpop.f32.mrf.mxu0
      %v7437 = vadd.f32 0.0, %v7436
      %7438 = vmatmul.bf16.gmra.mxu0 %v7222
      %v7439 = vpop.f32.mrf.mxu0
      %v7440 = vadd.f32 0.0, %v7439
      %v7441 = vpop.f32.mrf.mxu0
      %v7442 = vadd.f32 0.0, %v7441
      %7443 = vmatmul.bf16.gmra.mxu0 %v7225
      %v7444 = vpop.f32.mrf.mxu0
      %v7445 = vadd.f32 0.0, %v7444
      %v7446 = vpop.f32.mrf.mxu0
      %v7447 = vadd.f32 0.0, %v7446
      %7448 = vmatmul.bf16.gmra.mxu0 %v7228
      %v7449 = vpop.f32.mrf.mxu0
      %v7450 = vadd.f32 0.0, %v7449
      %v7451 = vpop.f32.mrf.mxu0
      %v7452 = vadd.f32 0.0, %v7451
      %7453 = vmatmul.bf16.gmra.mxu0 %v7231
      %v7454 = vpop.f32.mrf.mxu0
      %v7455 = vadd.f32 0.0, %v7454
      %v7456 = vpop.f32.mrf.mxu0
      %v7457 = vadd.f32 0.0, %v7456
      %7458 = vmatmul.bf16.gmra.mxu0 %v7234
      %v7459 = vpop.f32.mrf.mxu0
      %v7460 = vadd.f32 0.0, %v7459
      %v7461 = vpop.f32.mrf.mxu0
      %v7462 = vadd.f32 0.0, %v7461
      %7463 = vmatmul.bf16.gmra.mxu0 %v7237
      %v7464 = vpop.f32.mrf.mxu0
      %v7465 = vadd.f32 0.0, %v7464
      %v7466 = vpop.f32.mrf.mxu0
      %v7467 = vadd.f32 0.0, %v7466
      %7468 = vmatmul.bf16.gmra.mxu0 %v7240
      %v7469 = vpop.f32.mrf.mxu0
      %v7470 = vadd.f32 0.0, %v7469
      %v7471 = vpop.f32.mrf.mxu0
      %v7472 = vadd.f32 0.0, %v7471
      %7473 = vmatmul.bf16.gmra.mxu0 %v7243
      %v7474 = vpop.f32.mrf.mxu0
      %v7475 = vadd.f32 0.0, %v7474
      %v7476 = vpop.f32.mrf.mxu0
      %v7477 = vadd.f32 0.0, %v7476
      %7478 = vmatmul.bf16.gmra.mxu0 %v7246
      %v7479 = vpop.f32.mrf.mxu0
      %v7480 = vadd.f32 0.0, %v7479
      %v7481 = vpop.f32.mrf.mxu0
      %v7482 = vadd.f32 0.0, %v7481
      %7483 = vmatmul.bf16.gmra.mxu0 %v7249
      %v7484 = vpop.f32.mrf.mxu0
      %v7485 = vadd.f32 0.0, %v7484
      %v7486 = vpop.f32.mrf.mxu0
      %v7487 = vadd.f32 0.0, %v7486
      %7488 = vmatmul.bf16.gmra.mxu0 %v7252
      %v7489 = vpop.f32.mrf.mxu0
      %v7490 = vadd.f32 0.0, %v7489
      %v7491 = vpop.f32.mrf.mxu0
      %v7492 = vadd.f32 0.0, %v7491
      %7493 = vmatmul.bf16.gmra.mxu0 %v7255
      %v7494 = vpop.f32.mrf.mxu0
      %v7495 = vadd.f32 0.0, %v7494
      %v7496 = vpop.f32.mrf.mxu0
      %v7497 = vadd.f32 0.0, %v7496
      %7498 = vmatmul.bf16.gmra.mxu0 %v7258
      %v7499 = vpop.f32.mrf.mxu0
      %v7500 = vadd.f32 0.0, %v7499
      %v7501 = vpop.f32.mrf.mxu0
      %v7502 = vadd.f32 0.0, %v7501
      %7503 = vmatmul.bf16.gmra.mxu0 %v7261
      %v7504 = vpop.f32.mrf.mxu0
      %v7505 = vadd.f32 0.0, %v7504
      %v7506 = vpop.f32.mrf.mxu0
      %v7507 = vadd.f32 0.0, %v7506
      %7508 = vmatmul.bf16.gmra.mxu0 %v7264
      %v7509 = vpop.f32.mrf.mxu0
      %v7510 = vadd.f32 0.0, %v7509
      %v7511 = vpop.f32.mrf.mxu0
      %v7512 = vadd.f32 0.0, %v7511
      %7513 = vmatmul.bf16.gmra.mxu0 %v7267
      %v7514 = vpop.f32.mrf.mxu0
      %v7515 = vadd.f32 0.0, %v7514
      %v7516 = vpop.f32.mrf.mxu0
      %v7517 = vadd.f32 0.0, %v7516
      %7518 = vmatmul.bf16.gmra.mxu0 %v7270
      %v7519 = vpop.f32.mrf.mxu0
      %v7520 = vadd.f32 0.0, %v7519
      %v7521 = vpop.f32.mrf.mxu0
      %v7522 = vadd.f32 0.0, %v7521
      %7523 = vmatmul.bf16.gmra.mxu0 %v7273
      %v7524 = vpop.f32.mrf.mxu0
      %v7525 = vadd.f32 0.0, %v7524
      %v7526 = vpop.f32.mrf.mxu0
      %v7527 = vadd.f32 0.0, %v7526
      %7528 = vmatmul.bf16.gmra.mxu0 %v7276
      %v7529 = vpop.f32.mrf.mxu0
      %v7530 = vadd.f32 0.0, %v7529
      %v7531 = vpop.f32.mrf.mxu0
      %v7532 = vadd.f32 0.0, %v7531
      %7533 = vmatmul.bf16.gmra.mxu0 %v7279
      %v7534 = vpop.f32.mrf.mxu0
      %v7535 = vadd.f32 0.0, %v7534
      %v7536 = vpop.f32.mrf.mxu0
      %v7537 = vadd.f32 0.0, %v7536
      %7538 = vmatmul.bf16.gmra.mxu0 %v7282
      %v7539 = vpop.f32.mrf.mxu0
      %v7540 = vadd.f32 0.0, %v7539
      %v7541 = vpop.f32.mrf.mxu0
      %v7542 = vadd.f32 0.0, %v7541
      %7543 = vmatmul.bf16.gmra.mxu0 %v7285
      %v7544 = vpop.f32.mrf.mxu0
      %v7545 = vadd.f32 0.0, %v7544
      %v7546 = vpop.f32.mrf.mxu0
      %v7547 = vadd.f32 0.0, %v7546
      %7548 = vmatmul.bf16.gmra.mxu0 %v7288
      %v7549 = vpop.f32.mrf.mxu0
      %v7550 = vadd.f32 0.0, %v7549
      %v7551 = vpop.f32.mrf.mxu0
      %v7552 = vadd.f32 0.0, %v7551
      %7553 = vmatmul.bf16.gmra.mxu0 %v7291
      %v7554 = vpop.f32.mrf.mxu0
      %v7555 = vadd.f32 0.0, %v7554
      %v7556 = vpop.f32.mrf.mxu0
      %v7557 = vadd.f32 0.0, %v7556
      %7558 = vmatmul.bf16.gmra.mxu0 %v7294
      %v7559 = vpop.f32.mrf.mxu0
      %v7560 = vadd.f32 0.0, %v7559
      %v7561 = vpop.f32.mrf.mxu0
      %v7562 = vadd.f32 0.0, %v7561
      %7563 = vmatmul.bf16.gmra.mxu0 %v7297
      %v7564 = vpop.f32.mrf.mxu0
      %v7565 = vadd.f32 0.0, %v7564
      %v7566 = vpop.f32.mrf.mxu0
      %v7567 = vadd.f32 0.0, %v7566
      %7568 = vmatmul.bf16.gmra.mxu0 %v7300
      %v7569 = vpop.f32.mrf.mxu0
      %v7570 = vadd.f32 0.0, %v7569
      %v7571 = vpop.f32.mrf.mxu0
      %v7572 = vadd.f32 0.0, %v7571
      %7573 = vmatmul.bf16.gmra.mxu0 %v7303
      %v7574 = vpop.f32.mrf.mxu0
      %v7575 = vadd.f32 0.0, %v7574
      %v7576 = vpop.f32.mrf.mxu0
      %v7577 = vadd.f32 0.0, %v7576
      %7578 = vmatmul.bf16.gmra.mxu0 %v7306
      %v7579 = vpop.f32.mrf.mxu0
      %v7580 = vadd.f32 0.0, %v7579
      %v7581 = vpop.f32.mrf.mxu0
      %v7582 = vadd.f32 0.0, %v7581
      %7583 = vmatmul.bf16.gmra.mxu0 %v7309
      %v7584 = vpop.f32.mrf.mxu0
      %v7585 = vadd.f32 0.0, %v7584
      %v7586 = vpop.f32.mrf.mxu0
      %v7587 = vadd.f32 0.0, %v7586
      %7588 = vmatmul.bf16.gmra.mxu0 %v7312
      %v7589 = vpop.f32.mrf.mxu0
      %v7590 = vadd.f32 0.0, %v7589
      %v7591 = vpop.f32.mrf.mxu0
      %v7592 = vadd.f32 0.0, %v7591
      %7593 = vmatmul.bf16.gmra.mxu0 %v7315
      %v7594 = vpop.f32.mrf.mxu0
      %v7595 = vadd.f32 0.0, %v7594
      %v7596 = vpop.f32.mrf.mxu0
      %v7597 = vadd.f32 0.0, %v7596
      %7598 = vmatmul.bf16.gmra.mxu0 %v7318
      %v7599 = vpop.f32.mrf.mxu0
      %v7600 = vadd.f32 0.0, %v7599
      %v7601 = vpop.f32.mrf.mxu0
      %v7602 = vadd.f32 0.0, %v7601
      %7603 = vmatmul.bf16.gmra.mxu0 %v7321
      %v7604 = vpop.f32.mrf.mxu0
      %v7605 = vadd.f32 0.0, %v7604
      %v7606 = vpop.f32.mrf.mxu0
      %v7607 = vadd.f32 0.0, %v7606
      %7608 = vmatmul.bf16.gmra.mxu0 %v7324
      %v7609 = vpop.f32.mrf.mxu0
      %v7610 = vadd.f32 0.0, %v7609
      %v7611 = vpop.f32.mrf.mxu0
      %v7612 = vadd.f32 0.0, %v7611
      %7613 = vmatmul.bf16.gmra.mxu0 %v7327
      %v7614 = vpop.f32.mrf.mxu0
      %v7615 = vadd.f32 0.0, %v7614
      %v7616 = vpop.f32.mrf.mxu0
      %v7617 = vadd.f32 0.0, %v7616
      %7618 = vmatmul.bf16.gmra.mxu0 %v7330
      %v7619 = vpop.f32.mrf.mxu0
      %v7620 = vadd.f32 0.0, %v7619
      %v7621 = vpop.f32.mrf.mxu0
      %v7622 = vadd.f32 0.0, %v7621
      %7623 = vmatmul.bf16.gmra.mxu0 %v7333
      %v7624 = vpop.f32.mrf.mxu0
      %v7625 = vadd.f32 0.0, %v7624
      %v7626 = vpop.f32.mrf.mxu0
      %v7627 = vadd.f32 0.0, %v7626
      %7628 = vmatmul.bf16.gmra.mxu0 %v7336
      %v7629 = vpop.f32.mrf.mxu0
      %v7630 = vadd.f32 0.0, %v7629
      %v7631 = vpop.f32.mrf.mxu0
      %v7632 = vadd.f32 0.0, %v7631
      %7633 = vmatmul.bf16.gmra.mxu0 %v7339
      %v7634 = vpop.f32.mrf.mxu0
      %v7635 = vadd.f32 0.0, %v7634
      %v7636 = vpop.f32.mrf.mxu0
      %v7637 = vadd.f32 0.0, %v7636
      %7638 = vmatmul.bf16.gmra.mxu0 %v7342
      %v7639 = vpop.f32.mrf.mxu0
      %v7640 = vadd.f32 0.0, %v7639
      %v7641 = vpop.f32.mrf.mxu0
      %v7642 = vadd.f32 0.0, %v7641
      %7643 = vmatmul.bf16.gmra.mxu0 %v7345
      %v7644 = vpop.f32.mrf.mxu0
      %v7645 = vadd.f32 0.0, %v7644
      %v7646 = vpop.f32.mrf.mxu0
      %v7647 = vadd.f32 0.0, %v7646
      %7648 = vmatmul.bf16.gmra.mxu0 %v7348
      %v7649 = vpop.f32.mrf.mxu0
      %v7650 = vadd.f32 0.0, %v7649
      %v7651 = vpop.f32.mrf.mxu0
      %v7652 = vadd.f32 0.0, %v7651
      %7653 = vmatmul.bf16.gmra.mxu0 %v7351
      %v7654 = vpop.f32.mrf.mxu0
      %v7655 = vadd.f32 0.0, %v7654
      %v7656 = vpop.f32.mrf.mxu0
      %v7657 = vadd.f32 0.0, %v7656
      %7658 = vmatmul.bf16.gmra.mxu0 %v7354
      %v7659 = vpop.f32.mrf.mxu0
      %v7660 = vadd.f32 0.0, %v7659
      %v7661 = vpop.f32.mrf.mxu0
      %v7662 = vadd.f32 0.0, %v7661
      %7663 = vmatmul.bf16.gmra.mxu0 %v7357
      %v7664 = vpop.f32.mrf.mxu0
      %v7665 = vadd.f32 0.0, %v7664
      %v7666 = vpop.f32.mrf.mxu0
      %v7667 = vadd.f32 0.0, %v7666
      %7668 = vmatmul.bf16.gmra.mxu0 %v7360
      %v7669 = vpop.f32.mrf.mxu0
      %v7670 = vadd.f32 0.0, %v7669
      %v7671 = vpop.f32.mrf.mxu0
      %v7672 = vadd.f32 0.0, %v7671
      %7673 = vmatmul.bf16.gmra.mxu0 %v7363
      %v7674 = vpop.f32.mrf.mxu0
      %v7675 = vadd.f32 0.0, %v7674
      %v7676 = vpop.f32.mrf.mxu0
      %v7677 = vadd.f32 0.0, %v7676
      %7678 = vmatmul.bf16.gmra.mxu0 %v7366
      %v7679 = vpop.f32.mrf.mxu0
      %v7680 = vadd.f32 0.0, %v7679
      %v7681 = vpop.f32.mrf.mxu0
      %v7682 = vadd.f32 0.0, %v7681
      %7683 = vmatmul.bf16.gmra.mxu0 %v7369
      %v7684 = vpop.f32.mrf.mxu0
      %v7685 = vadd.f32 0.0, %v7684
      %v7686 = vpop.f32.mrf.mxu0
      %v7687 = vadd.f32 0.0, %v7686
      %7688 = vmatmul.bf16.gmra.mxu0 %v7372
      %v7689 = vpop.f32.mrf.mxu0
      %v7690 = vadd.f32 0.0, %v7689
      %v7691 = vpop.f32.mrf.mxu0
      %v7692 = vadd.f32 0.0, %v7691
      %7693 = vmatmul.bf16.gmra.mxu0 %v7375
      %v7694 = vpop.f32.mrf.mxu0
      %v7695 = vadd.f32 0.0, %v7694
      %v7696 = vpop.f32.mrf.mxu0
      %v7697 = vadd.f32 0.0, %v7696
      %7698 = vmatmul.bf16.gmra.mxu0 %v7378
      %v7699 = vpop.f32.mrf.mxu0
      %v7700 = vadd.f32 0.0, %v7699
      %v7701 = vpop.f32.mrf.mxu0
      %v7702 = vadd.f32 0.0, %v7701
      %7703 = vmatmul.bf16.gmra.mxu0 %v7381
      %v7704 = vpop.f32.mrf.mxu0
      %v7705 = vadd.f32 0.0, %v7704
      %v7706 = vpop.f32.mrf.mxu0
      %v7707 = vadd.f32 0.0, %v7706
      %7708 = vmatmul.bf16.gmra.mxu0 %v7384
      %v7709 = vpop.f32.mrf.mxu0
      %v7710 = vadd.f32 0.0, %v7709
      %v7711 = vpop.f32.mrf.mxu0
      %v7712 = vadd.f32 0.0, %v7711
      %7713 = vmatmul.bf16.gmra.mxu0 %v7387
      %v7714 = vpop.f32.mrf.mxu0
      %v7715 = vadd.f32 0.0, %v7714
      %v7716 = vpop.f32.mrf.mxu0
      %v7717 = vadd.f32 0.0, %v7716
      %7718 = vmatmul.bf16.gmra.mxu0 %v7390
      %v7719 = vpop.f32.mrf.mxu0
      %v7720 = vadd.f32 0.0, %v7719
      %v7721 = vpop.f32.mrf.mxu0
      %v7722 = vadd.f32 0.0, %v7721
      %7723 = vmatmul.bf16.gmra.mxu0 %v7393
      %v7724 = vpop.f32.mrf.mxu0
      %v7725 = vadd.f32 0.0, %v7724
      %v7726 = vpop.f32.mrf.mxu0
      %v7727 = vadd.f32 0.0, %v7726
      %7728 = vmatmul.bf16.gmra.mxu0 %v7396
      %v7729 = vpop.f32.mrf.mxu0
      %v7730 = vadd.f32 0.0, %v7729
      %v7731 = vpop.f32.mrf.mxu0
      %v7732 = vadd.f32 0.0, %v7731
      %7733 = vmatmul.bf16.gmra.mxu0 %v7399
      %v7734 = vpop.f32.mrf.mxu0
      %v7735 = vadd.f32 0.0, %v7734
      %v7736 = vpop.f32.mrf.mxu0
      %v7737 = vadd.f32 0.0, %v7736
      %7738 = vmatmul.bf16.gmra.mxu0 %v7402
      %v7739 = vpop.f32.mrf.mxu0
      %v7740 = vadd.f32 0.0, %v7739
      %v7741 = vpop.f32.mrf.mxu0
      %v7742 = vadd.f32 0.0, %v7741
      %7743 = vmatmul.bf16.gmra.mxu0 %v7405
      %v7744 = vpop.f32.mrf.mxu0
      %v7745 = vadd.f32 0.0, %v7744
      %v7746 = vpop.f32.mrf.mxu0
      %v7747 = vadd.f32 0.0, %v7746
      %7748 = vmatmul.bf16.gmra.mxu0 %v7408
      %v7749 = vpop.f32.mrf.mxu0
      %v7750 = vadd.f32 0.0, %v7749
      %v7751 = vpop.f32.mrf.mxu0
      %v7752 = vadd.f32 0.0, %v7751
      %7753 = vmatmul.bf16.gmra.mxu0 %v7411
      %v7754 = vpop.f32.mrf.mxu0
      %v7755 = vadd.f32 0.0, %v7754
      %v7756 = vpop.f32.mrf.mxu0
      %v7757 = vadd.f32 0.0, %v7756
      %7758 = vmatmul.bf16.gmra.mxu0 %v7414
      %v7759 = vpop.f32.mrf.mxu0
      %v7760 = vadd.f32 0.0, %v7759
      %v7761 = vpop.f32.mrf.mxu0
      %v7762 = vadd.f32 0.0, %v7761
      %7763 = vmatmul.bf16.gmra.mxu0 %v7417
      %v7764 = vpop.f32.mrf.mxu0
      %v7765 = vadd.f32 0.0, %v7764
      %v7766 = vpop.f32.mrf.mxu0
      %v7767 = vadd.f32 0.0, %v7766
      %7768 = vmatmul.bf16.gmra.mxu0 %v7420
      %v7769 = vpop.f32.mrf.mxu0
      %v7770 = vadd.f32 0.0, %v7769
      %v7771 = vpop.f32.mrf.mxu0
      %v7772 = vadd.f32 0.0, %v7771
      %7773 = vdwg.mxu0
      %v7774 = vadd.f32 %v6460, %v7435
      %v7775 = vadd.f32 %v6461, %v7437
      %v7776 = vadd.f32 %v6462, %v7440
      %v7777 = vadd.f32 %v6463, %v7442
      %v7778 = vadd.f32 %v6464, %v7445
      %v7779 = vadd.f32 %v6465, %v7447
      %v7780 = vadd.f32 %v6466, %v7450
      %v7781 = vadd.f32 %v6467, %v7452
      %v7782 = vadd.f32 %v6468, %v7455
      %v7783 = vadd.f32 %v6469, %v7457
      %v7784 = vadd.f32 %v6470, %v7460
      %v7785 = vadd.f32 %v6471, %v7462
      %v7786 = vadd.f32 %v6472, %v7465
      %v7787 = vadd.f32 %v6473, %v7467
      %v7788 = vadd.f32 %v6474, %v7470
      %v7789 = vadd.f32 %v6475, %v7472
      %v7790 = vadd.f32 %v6476, %v7475
      %v7791 = vadd.f32 %v6477, %v7477
      %v7792 = vadd.f32 %v6478, %v7480
      %v7793 = vadd.f32 %v6479, %v7482
      %v7794 = vadd.f32 %v6480, %v7485
      %v7795 = vadd.f32 %v6481, %v7487
      %v7796 = vadd.f32 %v6482, %v7490
      %v7797 = vadd.f32 %v6483, %v7492
      %v7798 = vadd.f32 %v6484, %v7495
      %v7799 = vadd.f32 %v6485, %v7497
      %v7800 = vadd.f32 %v6486, %v7500
      %v7801 = vadd.f32 %v6487, %v7502
      %v7802 = vadd.f32 %v6488, %v7505
      %v7803 = vadd.f32 %v6489, %v7507
      %v7804 = vadd.f32 %v6490, %v7510
      %v7805 = vadd.f32 %v6491, %v7512
      %v7806 = vadd.f32 %v6492, %v7515
      %v7807 = vadd.f32 %v6493, %v7517
      %v7808 = vadd.f32 %v6494, %v7520
      %v7809 = vadd.f32 %v6495, %v7522
      %v7810 = vadd.f32 %v6496, %v7525
      %v7811 = vadd.f32 %v6497, %v7527
      %v7812 = vadd.f32 %v6498, %v7530
      %v7813 = vadd.f32 %v6499, %v7532
      %v7814 = vadd.f32 %v6500, %v7535
      %v7815 = vadd.f32 %v6501, %v7537
      %v7816 = vadd.f32 %v6502, %v7540
      %v7817 = vadd.f32 %v6503, %v7542
      %v7818 = vadd.f32 %v6504, %v7545
      %v7819 = vadd.f32 %v6505, %v7547
      %v7820 = vadd.f32 %v6506, %v7550
      %v7821 = vadd.f32 %v6507, %v7552
      %v7822 = vadd.f32 %v6508, %v7555
      %v7823 = vadd.f32 %v6509, %v7557
      %v7824 = vadd.f32 %v6510, %v7560
      %v7825 = vadd.f32 %v6511, %v7562
      %v7826 = vadd.f32 %v6512, %v7565
      %v7827 = vadd.f32 %v6513, %v7567
      %v7828 = vadd.f32 %v6514, %v7570
      %v7829 = vadd.f32 %v6515, %v7572
      %v7830 = vadd.f32 %v6516, %v7575
      %v7831 = vadd.f32 %v6517, %v7577
      %v7832 = vadd.f32 %v6518, %v7580
      %v7833 = vadd.f32 %v6519, %v7582
      %v7834 = vadd.f32 %v6520, %v7585
      %v7835 = vadd.f32 %v6521, %v7587
      %v7836 = vadd.f32 %v6522, %v7590
      %v7837 = vadd.f32 %v6523, %v7592
      %v7838 = vadd.f32 %v6524, %v7595
      %v7839 = vadd.f32 %v6525, %v7597
      %v7840 = vadd.f32 %v6526, %v7600
      %v7841 = vadd.f32 %v6527, %v7602
      %v7842 = vadd.f32 %v6528, %v7605
      %v7843 = vadd.f32 %v6529, %v7607
      %v7844 = vadd.f32 %v6530, %v7610
      %v7845 = vadd.f32 %v6531, %v7612
      %v7846 = vadd.f32 %v6532, %v7615
      %v7847 = vadd.f32 %v6533, %v7617
      %v7848 = vadd.f32 %v6534, %v7620
      %v7849 = vadd.f32 %v6535, %v7622
      %v7850 = vadd.f32 %v6536, %v7625
      %v7851 = vadd.f32 %v6537, %v7627
      %v7852 = vadd.f32 %v6538, %v7630
      %v7853 = vadd.f32 %v6539, %v7632
      %v7854 = vadd.f32 %v6540, %v7635
      %v7855 = vadd.f32 %v6541, %v7637
      %v7856 = vadd.f32 %v6542, %v7640
      %v7857 = vadd.f32 %v6543, %v7642
      %v7858 = vadd.f32 %v6544, %v7645
      %v7859 = vadd.f32 %v6545, %v7647
      %v7860 = vadd.f32 %v6546, %v7650
      %v7861 = vadd.f32 %v6547, %v7652
      %v7862 = vadd.f32 %v6548, %v7655
      %v7863 = vadd.f32 %v6549, %v7657
      %v7864 = vadd.f32 %v6550, %v7660
      %v7865 = vadd.f32 %v6551, %v7662
      %v7866 = vadd.f32 %v6552, %v7665
      %v7867 = vadd.f32 %v6553, %v7667
      %v7868 = vadd.f32 %v6554, %v7670
      %v7869 = vadd.f32 %v6555, %v7672
      %v7870 = vadd.f32 %v6556, %v7675
      %v7871 = vadd.f32 %v6557, %v7677
      %v7872 = vadd.f32 %v6558, %v7680
      %v7873 = vadd.f32 %v6559, %v7682
      %v7874 = vadd.f32 %v6560, %v7685
      %v7875 = vadd.f32 %v6561, %v7687
      %v7876 = vadd.f32 %v6562, %v7690
      %v7877 = vadd.f32 %v6563, %v7692
      %v7878 = vadd.f32 %v6564, %v7695
      %v7879 = vadd.f32 %v6565, %v7697
      %v7880 = vadd.f32 %v6566, %v7700
      %v7881 = vadd.f32 %v6567, %v7702
      %v7882 = vadd.f32 %v6568, %v7705
      %v7883 = vadd.f32 %v6569, %v7707
      %v7884 = vadd.f32 %v6570, %v7710
      %v7885 = vadd.f32 %v6571, %v7712
      %v7886 = vadd.f32 %v6572, %v7715
      %v7887 = vadd.f32 %v6573, %v7717
      %v7888 = vadd.f32 %v6574, %v7720
      %v7889 = vadd.f32 %v6575, %v7722
      %v7890 = vadd.f32 %v6576, %v7725
      %v7891 = vadd.f32 %v6577, %v7727
      %v7892 = vadd.f32 %v6578, %v7730
      %v7893 = vadd.f32 %v6579, %v7732
      %v7894 = vadd.f32 %v6580, %v7735
      %v7895 = vadd.f32 %v6581, %v7737
      %v7896 = vadd.f32 %v6582, %v7740
      %v7897 = vadd.f32 %v6583, %v7742
      %v7898 = vadd.f32 %v6584, %v7745
      %v7899 = vadd.f32 %v6585, %v7747
      %v7900 = vadd.f32 %v6586, %v7750
      %v7901 = vadd.f32 %v6587, %v7752
      %v7902 = vadd.f32 %v6588, %v7755
      %v7903 = vadd.f32 %v6589, %v7757
      %v7904 = vadd.f32 %v6590, %v7760
      %v7905 = vadd.f32 %v6591, %v7762
      %v7906 = vadd.f32 %v6592, %v7765
      %v7907 = vadd.f32 %v6593, %v7767
      %v7908 = vadd.f32 %v6594, %v7770
      %v7909 = vadd.f32 %v6595, %v7772
      %v7910 = vld [vmem:[%s165 + $0x240] sm:$0x7]
      %v7911 = vld [vmem:[%s1 + $0x8] sm:$0xc]
      %v7913 = vunpack.c.l.b16 %v7910
      %v7914 = vpack.c.b16 %v7913, %v7913
      %vm7915 = vsmask.f32 5376
      %v7917 = vshrl.u32 %v7008, 16
      %v7919 = vrot.slane %v7917, 2
      %v7920 = vshll.u32 %v7008, 16
      %v7922 = vrot.slane %v7920, 3
      %v7923 = vor.u32 %v7919, %v7922
      %v7925 = vshrl.u32 %v7009, 16
      %v7927 = vrot.slane %v7925, 2
      %v7928 = vshll.u32 %v7009, 16
      %v7930 = vrot.slane %v7928, 3
      %v7931 = vor.u32 %v7927, %v7930
      %v7932 = vsel %vm7915, %v7923, %v7931
      %v7934 = vshrl.u32 %v7010, 16
      %v7936 = vrot.slane %v7934, 2
      %v7937 = vshll.u32 %v7010, 16
      %v7939 = vrot.slane %v7937, 3
      %v7940 = vor.u32 %v7936, %v7939
      %v7941 = vsel %vm7915, %v7931, %v7940
      %v7943 = vshrl.u32 %v7011, 16
      %v7945 = vrot.slane %v7943, 2
      %v7946 = vshll.u32 %v7011, 16
      %v7948 = vrot.slane %v7946, 3
      %v7949 = vor.u32 %v7945, %v7948
      %v7950 = vsel %vm7915, %v7940, %v7949
      %v7952 = vshrl.u32 %v7012, 16
      %v7954 = vrot.slane %v7952, 2
      %v7955 = vshll.u32 %v7012, 16
      %v7957 = vrot.slane %v7955, 3
      %v7958 = vor.u32 %v7954, %v7957
      %v7959 = vsel %vm7915, %v7949, %v7958
      %v7961 = vshrl.u32 %v7013, 16
      %v7963 = vrot.slane %v7961, 2
      %v7964 = vshll.u32 %v7013, 16
      %v7966 = vrot.slane %v7964, 3
      %v7967 = vor.u32 %v7963, %v7966
      %v7968 = vsel %vm7915, %v7958, %v7967
      %v7970 = vshrl.u32 %v7014, 16
      %v7972 = vrot.slane %v7970, 2
      %v7973 = vshll.u32 %v7014, 16
      %v7975 = vrot.slane %v7973, 3
      %v7976 = vor.u32 %v7972, %v7975
      %v7977 = vsel %vm7915, %v7967, %v7976
      %v7979 = vshrl.u32 %v7015, 16
      %v7981 = vrot.slane %v7979, 2
      %v7982 = vshll.u32 %v7015, 16
      %v7984 = vrot.slane %v7982, 3
      %v7985 = vor.u32 %v7981, %v7984
      %v7986 = vsel %vm7915, %v7976, %v7985
      %v7988 = vshrl.u32 %v7016, 16
      %v7990 = vrot.slane %v7988, 2
      %v7991 = vshll.u32 %v7016, 16
      %v7993 = vrot.slane %v7991, 3
      %v7994 = vor.u32 %v7990, %v7993
      %v7995 = vsel %vm7915, %v7985, %v7994
      %v7997 = vshrl.u32 %v7017, 16
      %v7999 = vrot.slane %v7997, 2
      %v8000 = vshll.u32 %v7017, 16
      %v8002 = vrot.slane %v8000, 3
      %v8003 = vor.u32 %v7999, %v8002
      %v8004 = vsel %vm7915, %v7994, %v8003
      %v8006 = vshrl.u32 %v7018, 16
      %v8008 = vrot.slane %v8006, 2
      %v8009 = vshll.u32 %v7018, 16
      %v8011 = vrot.slane %v8009, 3
      %v8012 = vor.u32 %v8008, %v8011
      %v8013 = vsel %vm7915, %v8003, %v8012
      %v8015 = vshrl.u32 %v7019, 16
      %v8017 = vrot.slane %v8015, 2
      %v8018 = vshll.u32 %v7019, 16
      %v8020 = vrot.slane %v8018, 3
      %v8021 = vor.u32 %v8017, %v8020
      %v8022 = vsel %vm7915, %v8012, %v8021
      %v8024 = vshrl.u32 %v7020, 16
      %v8026 = vrot.slane %v8024, 2
      %v8027 = vshll.u32 %v7020, 16
      %v8029 = vrot.slane %v8027, 3
      %v8030 = vor.u32 %v8026, %v8029
      %v8031 = vsel %vm7915, %v8021, %v8030
      %v8033 = vshrl.u32 %v7021, 16
      %v8035 = vrot.slane %v8033, 2
      %v8036 = vshll.u32 %v7021, 16
      %v8038 = vrot.slane %v8036, 3
      %v8039 = vor.u32 %v8035, %v8038
      %v8040 = vsel %vm7915, %v8030, %v8039
      %v8042 = vshrl.u32 %v7022, 16
      %v8044 = vrot.slane %v8042, 2
      %v8045 = vshll.u32 %v7022, 16
      %v8047 = vrot.slane %v8045, 3
      %v8048 = vor.u32 %v8044, %v8047
      %v8049 = vsel %vm7915, %v8039, %v8048
      %v8051 = vshrl.u32 %v7023, 16
      %v8053 = vrot.slane %v8051, 2
      %v8054 = vshll.u32 %v7023, 16
      %v8056 = vrot.slane %v8054, 3
      %v8057 = vor.u32 %v8053, %v8056
      %v8058 = vsel %vm7915, %v8048, %v8057
      %v8060 = vshrl.u32 %v7024, 16
      %v8062 = vrot.slane %v8060, 2
      %v8063 = vshll.u32 %v7024, 16
      %v8065 = vrot.slane %v8063, 3
      %v8066 = vor.u32 %v8062, %v8065
      %v8067 = vsel %vm7915, %v8057, %v8066
      %v8069 = vshrl.u32 %v7025, 16
      %v8071 = vrot.slane %v8069, 2
      %v8072 = vshll.u32 %v7025, 16
      %v8074 = vrot.slane %v8072, 3
      %v8075 = vor.u32 %v8071, %v8074
      %v8076 = vsel %vm7915, %v8066, %v8075
      %v8078 = vshrl.u32 %v7026, 16
      %v8080 = vrot.slane %v8078, 2
      %v8081 = vshll.u32 %v7026, 16
      %v8083 = vrot.slane %v8081, 3
      %v8084 = vor.u32 %v8080, %v8083
      %v8085 = vsel %vm7915, %v8075, %v8084
      %v8087 = vshrl.u32 %v7027, 16
      %v8089 = vrot.slane %v8087, 2
      %v8090 = vshll.u32 %v7027, 16
      %v8092 = vrot.slane %v8090, 3
      %v8093 = vor.u32 %v8089, %v8092
      %v8094 = vsel %vm7915, %v8084, %v8093
      %v8096 = vshrl.u32 %v7028, 16
      %v8098 = vrot.slane %v8096, 2
      %v8099 = vshll.u32 %v7028, 16
      %v8101 = vrot.slane %v8099, 3
      %v8102 = vor.u32 %v8098, %v8101
      %v8103 = vsel %vm7915, %v8093, %v8102
      %v8105 = vshrl.u32 %v7029, 16
      %v8107 = vrot.slane %v8105, 2
      %v8108 = vshll.u32 %v7029, 16
      %v8110 = vrot.slane %v8108, 3
      %v8111 = vor.u32 %v8107, %v8110
      %v8112 = vsel %vm7915, %v8102, %v8111
      %v8114 = vshrl.u32 %v7030, 16
      %v8116 = vrot.slane %v8114, 2
      %v8117 = vshll.u32 %v7030, 16
      %v8119 = vrot.slane %v8117, 3
      %v8120 = vor.u32 %v8116, %v8119
      %v8121 = vsel %vm7915, %v8111, %v8120
      %v8123 = vshrl.u32 %v7031, 16
      %v8125 = vrot.slane %v8123, 2
      %v8126 = vshll.u32 %v7031, 16
      %v8128 = vrot.slane %v8126, 3
      %v8129 = vor.u32 %v8125, %v8128
      %v8130 = vsel %vm7915, %v8120, %v8129
      %v8132 = vshrl.u32 %v7032, 16
      %v8134 = vrot.slane %v8132, 2
      %v8135 = vshll.u32 %v7032, 16
      %v8137 = vrot.slane %v8135, 3
      %v8138 = vor.u32 %v8134, %v8137
      %v8139 = vsel %vm7915, %v8129, %v8138
      %v8141 = vshrl.u32 %v7033, 16
      %v8143 = vrot.slane %v8141, 2
      %v8144 = vshll.u32 %v7033, 16
      %v8146 = vrot.slane %v8144, 3
      %v8147 = vor.u32 %v8143, %v8146
      %v8148 = vsel %vm7915, %v8138, %v8147
      %v8150 = vshrl.u32 %v7034, 16
      %v8152 = vrot.slane %v8150, 2
      %v8153 = vshll.u32 %v7034, 16
      %v8155 = vrot.slane %v8153, 3
      %v8156 = vor.u32 %v8152, %v8155
      %v8157 = vsel %vm7915, %v8147, %v8156
      %v8159 = vshrl.u32 %v7035, 16
      %v8161 = vrot.slane %v8159, 2
      %v8162 = vshll.u32 %v7035, 16
      %v8164 = vrot.slane %v8162, 3
      %v8165 = vor.u32 %v8161, %v8164
      %v8166 = vsel %vm7915, %v8156, %v8165
      %v8168 = vshrl.u32 %v7036, 16
      %v8170 = vrot.slane %v8168, 2
      %v8171 = vshll.u32 %v7036, 16
      %v8173 = vrot.slane %v8171, 3
      %v8174 = vor.u32 %v8170, %v8173
      %v8175 = vsel %vm7915, %v8165, %v8174
      %v8177 = vshrl.u32 %v7037, 16
      %v8179 = vrot.slane %v8177, 2
      %v8180 = vshll.u32 %v7037, 16
      %v8182 = vrot.slane %v8180, 3
      %v8183 = vor.u32 %v8179, %v8182
      %v8184 = vsel %vm7915, %v8174, %v8183
      %v8186 = vshrl.u32 %v7038, 16
      %v8188 = vrot.slane %v8186, 2
      %v8189 = vshll.u32 %v7038, 16
      %v8191 = vrot.slane %v8189, 3
      %v8192 = vor.u32 %v8188, %v8191
      %v8193 = vsel %vm7915, %v8183, %v8192
      %v8195 = vshrl.u32 %v7039, 16
      %v8197 = vrot.slane %v8195, 2
      %v8198 = vshll.u32 %v7039, 16
      %v8200 = vrot.slane %v8198, 3
      %v8201 = vor.u32 %v8197, %v8200
      %v8202 = vsel %vm7915, %v8192, %v8201
      %v8204 = vshrl.u32 %v7040, 16
      %v8206 = vrot.slane %v8204, 2
      %v8207 = vshll.u32 %v7040, 16
      %v8209 = vrot.slane %v8207, 3
      %v8210 = vor.u32 %v8206, %v8209
      %v8211 = vsel %vm7915, %v8201, %v8210
      %v8213 = vshrl.u32 %v7041, 16
      %v8215 = vrot.slane %v8213, 2
      %v8216 = vshll.u32 %v7041, 16
      %v8218 = vrot.slane %v8216, 3
      %v8219 = vor.u32 %v8215, %v8218
      %v8220 = vsel %vm7915, %v8210, %v8219
      %v8222 = vshrl.u32 %v7042, 16
      %v8224 = vrot.slane %v8222, 2
      %v8225 = vshll.u32 %v7042, 16
      %v8227 = vrot.slane %v8225, 3
      %v8228 = vor.u32 %v8224, %v8227
      %v8229 = vsel %vm7915, %v8219, %v8228
      %v8231 = vshrl.u32 %v7043, 16
      %v8233 = vrot.slane %v8231, 2
      %v8234 = vshll.u32 %v7043, 16
      %v8236 = vrot.slane %v8234, 3
      %v8237 = vor.u32 %v8233, %v8236
      %v8238 = vsel %vm7915, %v8228, %v8237
      %v8240 = vshrl.u32 %v7044, 16
      %v8242 = vrot.slane %v8240, 2
      %v8243 = vshll.u32 %v7044, 16
      %v8245 = vrot.slane %v8243, 3
      %v8246 = vor.u32 %v8242, %v8245
      %v8247 = vsel %vm7915, %v8237, %v8246
      %v8249 = vshrl.u32 %v7045, 16
      %v8251 = vrot.slane %v8249, 2
      %v8252 = vshll.u32 %v7045, 16
      %v8254 = vrot.slane %v8252, 3
      %v8255 = vor.u32 %v8251, %v8254
      %v8256 = vsel %vm7915, %v8246, %v8255
      %v8258 = vshrl.u32 %v7046, 16
      %v8260 = vrot.slane %v8258, 2
      %v8261 = vshll.u32 %v7046, 16
      %v8263 = vrot.slane %v8261, 3
      %v8264 = vor.u32 %v8260, %v8263
      %v8265 = vsel %vm7915, %v8255, %v8264
      %v8267 = vshrl.u32 %v7047, 16
      %v8269 = vrot.slane %v8267, 2
      %v8270 = vshll.u32 %v7047, 16
      %v8272 = vrot.slane %v8270, 3
      %v8273 = vor.u32 %v8269, %v8272
      %v8274 = vsel %vm7915, %v8264, %v8273
      %v8276 = vshrl.u32 %v7048, 16
      %v8278 = vrot.slane %v8276, 2
      %v8279 = vshll.u32 %v7048, 16
      %v8281 = vrot.slane %v8279, 3
      %v8282 = vor.u32 %v8278, %v8281
      %v8283 = vsel %vm7915, %v8273, %v8282
      %v8285 = vshrl.u32 %v7049, 16
      %v8287 = vrot.slane %v8285, 2
      %v8288 = vshll.u32 %v7049, 16
      %v8290 = vrot.slane %v8288, 3
      %v8291 = vor.u32 %v8287, %v8290
      %v8292 = vsel %vm7915, %v8282, %v8291
      %v8294 = vshrl.u32 %v7050, 16
      %v8296 = vrot.slane %v8294, 2
      %v8297 = vshll.u32 %v7050, 16
      %v8299 = vrot.slane %v8297, 3
      %v8300 = vor.u32 %v8296, %v8299
      %v8301 = vsel %vm7915, %v8291, %v8300
      %v8303 = vshrl.u32 %v7051, 16
      %v8305 = vrot.slane %v8303, 2
      %v8306 = vshll.u32 %v7051, 16
      %v8308 = vrot.slane %v8306, 3
      %v8309 = vor.u32 %v8305, %v8308
      %v8310 = vsel %vm7915, %v8300, %v8309
      %v8312 = vshrl.u32 %v7052, 16
      %v8314 = vrot.slane %v8312, 2
      %v8315 = vshll.u32 %v7052, 16
      %v8317 = vrot.slane %v8315, 3
      %v8318 = vor.u32 %v8314, %v8317
      %v8319 = vsel %vm7915, %v8309, %v8318
      %v8321 = vshrl.u32 %v7053, 16
      %v8323 = vrot.slane %v8321, 2
      %v8324 = vshll.u32 %v7053, 16
      %v8326 = vrot.slane %v8324, 3
      %v8327 = vor.u32 %v8323, %v8326
      %v8328 = vsel %vm7915, %v8318, %v8327
      %v8330 = vshrl.u32 %v7054, 16
      %v8332 = vrot.slane %v8330, 2
      %v8333 = vshll.u32 %v7054, 16
      %v8335 = vrot.slane %v8333, 3
      %v8336 = vor.u32 %v8332, %v8335
      %v8337 = vsel %vm7915, %v8327, %v8336
      %v8339 = vshrl.u32 %v7055, 16
      %v8341 = vrot.slane %v8339, 2
      %v8342 = vshll.u32 %v7055, 16
      %v8344 = vrot.slane %v8342, 3
      %v8345 = vor.u32 %v8341, %v8344
      %v8346 = vsel %vm7915, %v8336, %v8345
      %v8348 = vshrl.u32 %v7056, 16
      %v8350 = vrot.slane %v8348, 2
      %v8351 = vshll.u32 %v7056, 16
      %v8353 = vrot.slane %v8351, 3
      %v8354 = vor.u32 %v8350, %v8353
      %v8355 = vsel %vm7915, %v8345, %v8354
      %v8357 = vshrl.u32 %v7057, 16
      %v8359 = vrot.slane %v8357, 2
      %v8360 = vshll.u32 %v7057, 16
      %v8362 = vrot.slane %v8360, 3
      %v8363 = vor.u32 %v8359, %v8362
      %v8364 = vsel %vm7915, %v8354, %v8363
      %v8366 = vshrl.u32 %v7058, 16
      %v8368 = vrot.slane %v8366, 2
      %v8369 = vshll.u32 %v7058, 16
      %v8371 = vrot.slane %v8369, 3
      %v8372 = vor.u32 %v8368, %v8371
      %v8373 = vsel %vm7915, %v8363, %v8372
      %v8375 = vshrl.u32 %v7059, 16
      %v8377 = vrot.slane %v8375, 2
      %v8378 = vshll.u32 %v7059, 16
      %v8380 = vrot.slane %v8378, 3
      %v8381 = vor.u32 %v8377, %v8380
      %v8382 = vsel %vm7915, %v8372, %v8381
      %v8384 = vshrl.u32 %v7060, 16
      %v8386 = vrot.slane %v8384, 2
      %v8387 = vshll.u32 %v7060, 16
      %v8389 = vrot.slane %v8387, 3
      %v8390 = vor.u32 %v8386, %v8389
      %v8391 = vsel %vm7915, %v8381, %v8390
      %v8393 = vshrl.u32 %v7061, 16
      %v8395 = vrot.slane %v8393, 2
      %v8396 = vshll.u32 %v7061, 16
      %v8398 = vrot.slane %v8396, 3
      %v8399 = vor.u32 %v8395, %v8398
      %v8400 = vsel %vm7915, %v8390, %v8399
      %v8402 = vshrl.u32 %v7062, 16
      %v8404 = vrot.slane %v8402, 2
      %v8405 = vshll.u32 %v7062, 16
      %v8407 = vrot.slane %v8405, 3
      %v8408 = vor.u32 %v8404, %v8407
      %v8409 = vsel %vm7915, %v8399, %v8408
      %v8411 = vshrl.u32 %v7063, 16
      %v8413 = vrot.slane %v8411, 2
      %v8414 = vshll.u32 %v7063, 16
      %v8416 = vrot.slane %v8414, 3
      %v8417 = vor.u32 %v8413, %v8416
      %v8418 = vsel %vm7915, %v8408, %v8417
      %v8420 = vshrl.u32 %v7064, 16
      %v8422 = vrot.slane %v8420, 2
      %v8423 = vshll.u32 %v7064, 16
      %v8425 = vrot.slane %v8423, 3
      %v8426 = vor.u32 %v8422, %v8425
      %v8427 = vsel %vm7915, %v8417, %v8426
      %v8429 = vshrl.u32 %v7065, 16
      %v8431 = vrot.slane %v8429, 2
      %v8432 = vshll.u32 %v7065, 16
      %v8434 = vrot.slane %v8432, 3
      %v8435 = vor.u32 %v8431, %v8434
      %v8436 = vsel %vm7915, %v8426, %v8435
      %v8438 = vshrl.u32 %v7066, 16
      %v8440 = vrot.slane %v8438, 2
      %v8441 = vshll.u32 %v7066, 16
      %v8443 = vrot.slane %v8441, 3
      %v8444 = vor.u32 %v8440, %v8443
      %v8445 = vsel %vm7915, %v8435, %v8444
      %v8447 = vshrl.u32 %v7067, 16
      %v8449 = vrot.slane %v8447, 2
      %v8450 = vshll.u32 %v7067, 16
      %v8452 = vrot.slane %v8450, 3
      %v8453 = vor.u32 %v8449, %v8452
      %v8454 = vsel %vm7915, %v8444, %v8453
      %v8456 = vshrl.u32 %v7068, 16
      %v8458 = vrot.slane %v8456, 2
      %v8459 = vshll.u32 %v7068, 16
      %v8461 = vrot.slane %v8459, 3
      %v8462 = vor.u32 %v8458, %v8461
      %v8463 = vsel %vm7915, %v8453, %v8462
      %v8465 = vshrl.u32 %v7069, 16
      %v8467 = vrot.slane %v8465, 2
      %v8468 = vshll.u32 %v7069, 16
      %v8470 = vrot.slane %v8468, 3
      %v8471 = vor.u32 %v8467, %v8470
      %v8472 = vsel %vm7915, %v8462, %v8471
      %v8474 = vshrl.u32 %v7070, 16
      %v8476 = vrot.slane %v8474, 2
      %v8477 = vshll.u32 %v7070, 16
      %v8479 = vrot.slane %v8477, 3
      %v8480 = vor.u32 %v8476, %v8479
      %v8481 = vsel %vm7915, %v8471, %v8480
      %v8483 = vshrl.u32 %v7071, 16
      %v8485 = vrot.slane %v8483, 2
      %v8486 = vshll.u32 %v7071, 16
      %v8488 = vrot.slane %v8486, 3
      %v8489 = vor.u32 %v8485, %v8488
      %v8490 = vsel %vm7915, %v8480, %v8489
      %v8492 = vshrl.u32 %v7072, 16
      %v8494 = vrot.slane %v8492, 2
      %v8495 = vshll.u32 %v7072, 16
      %v8497 = vrot.slane %v8495, 3
      %v8498 = vor.u32 %v8494, %v8497
      %v8499 = vsel %vm7915, %v8489, %v8498
      %v8501 = vshrl.u32 %v7073, 16
      %v8503 = vrot.slane %v8501, 2
      %v8504 = vshll.u32 %v7073, 16
      %v8506 = vrot.slane %v8504, 3
      %v8507 = vor.u32 %v8503, %v8506
      %v8508 = vsel %vm7915, %v8498, %v8507
      %v8510 = vshrl.u32 %v7074, 16
      %v8512 = vrot.slane %v8510, 2
      %v8513 = vshll.u32 %v7074, 16
      %v8515 = vrot.slane %v8513, 3
      %v8516 = vor.u32 %v8512, %v8515
      %v8517 = vsel %vm7915, %v8507, %v8516
      %v8519 = vshrl.u32 %v7075, 16
      %v8521 = vrot.slane %v8519, 2
      %v8522 = vshll.u32 %v7075, 16
      %v8524 = vrot.slane %v8522, 3
      %v8525 = vor.u32 %v8521, %v8524
      %v8526 = vsel %vm7915, %v8516, %v8525
      %v8528 = vshrl.u32 %v7914, 16
      %v8530 = vrot.slane %v8528, 2
      %v8531 = vshll.u32 %v7914, 16
      %v8533 = vrot.slane %v8531, 3
      %v8534 = vor.u32 %v8530, %v8533
      %v8535 = vsel %vm7915, %v8525, %v8534
      %v8537 = vunpack.c.l.b16 %v7911
      %v8538 = vpack.c.b16 %v8537, %v8537
      %v8540 = vshrl.u32 %v8538, 16
      %v8542 = vrot.slane %v8540, 2
      %v8543 = vshll.u32 %v8538, 16
      %v8545 = vrot.slane %v8543, 3
      %v8546 = vor.u32 %v8542, %v8545
      %v8548 = vsel %vm1214, %v7932, 0
      %v8551 = vsel %vm1214, %v7941, 0
      %v8554 = vsel %vm1214, %v7950, 0
      %v8557 = vsel %vm1214, %v7959, 0
      %v8560 = vsel %vm1214, %v7968, 0
      %v8563 = vsel %vm1214, %v7977, 0
      %v8566 = vsel %vm1214, %v7986, 0
      %v8569 = vsel %vm1214, %v7995, 0
      %v8572 = vsel %vm1214, %v8004, 0
      %v8575 = vsel %vm1214, %v8013, 0
      %v8578 = vsel %vm1214, %v8022, 0
      %v8581 = vsel %vm1214, %v8031, 0
      %v8584 = vsel %vm1214, %v8040, 0
      %v8587 = vsel %vm1214, %v8049, 0
      %v8590 = vsel %vm1214, %v8058, 0
      %v8593 = vsel %vm1214, %v8067, 0
      %v8596 = vsel %vm1214, %v8076, 0
      %v8599 = vsel %vm1214, %v8085, 0
      %v8602 = vsel %vm1214, %v8094, 0
      %v8605 = vsel %vm1214, %v8103, 0
      %v8608 = vsel %vm1214, %v8112, 0
      %v8611 = vsel %vm1214, %v8121, 0
      %v8614 = vsel %vm1214, %v8130, 0
      %v8617 = vsel %vm1214, %v8139, 0
      %v8620 = vsel %vm1214, %v8148, 0
      %v8623 = vsel %vm1214, %v8157, 0
      %v8626 = vsel %vm1214, %v8166, 0
      %v8629 = vsel %vm1214, %v8175, 0
      %v8632 = vsel %vm1214, %v8184, 0
      %v8635 = vsel %vm1214, %v8193, 0
      %v8638 = vsel %vm1214, %v8202, 0
      %v8641 = vsel %vm1214, %v8211, 0
      %v8644 = vsel %vm1214, %v8220, 0
      %v8647 = vsel %vm1214, %v8229, 0
      %v8650 = vsel %vm1214, %v8238, 0
      %v8653 = vsel %vm1214, %v8247, 0
      %v8656 = vsel %vm1214, %v8256, 0
      %v8659 = vsel %vm1214, %v8265, 0
      %v8662 = vsel %vm1214, %v8274, 0
      %v8665 = vsel %vm1214, %v8283, 0
      %v8668 = vsel %vm1214, %v8292, 0
      %v8671 = vsel %vm1214, %v8301, 0
      %v8674 = vsel %vm1214, %v8310, 0
      %v8677 = vsel %vm1214, %v8319, 0
      %v8680 = vsel %vm1214, %v8328, 0
      %v8683 = vsel %vm1214, %v8337, 0
      %v8686 = vsel %vm1214, %v8346, 0
      %v8689 = vsel %vm1214, %v8355, 0
      %v8692 = vsel %vm1214, %v8364, 0
      %v8695 = vsel %vm1214, %v8373, 0
      %v8698 = vsel %vm1214, %v8382, 0
      %v8701 = vsel %vm1214, %v8391, 0
      %v8704 = vsel %vm1214, %v8400, 0
      %v8707 = vsel %vm1214, %v8409, 0
      %v8710 = vsel %vm1214, %v8418, 0
      %v8713 = vsel %vm1214, %v8427, 0
      %v8716 = vsel %vm1214, %v8436, 0
      %v8719 = vsel %vm1214, %v8445, 0
      %v8722 = vsel %vm1214, %v8454, 0
      %v8725 = vsel %vm1214, %v8463, 0
      %v8728 = vsel %vm1214, %v8472, 0
      %v8731 = vsel %vm1214, %v8481, 0
      %v8734 = vsel %vm1214, %v8490, 0
      %v8737 = vsel %vm1214, %v8499, 0
      %v8740 = vsel %vm1214, %v8508, 0
      %v8743 = vsel %vm1214, %v8517, 0
      %v8746 = vsel %vm1214, %v8526, 0
      %v8749 = vsel %vm1214, %v8535, 0
      %v8752 = vand.u32 %v8546, %v1422
      %8754 = vmatpush.bf16.msra.mxu0 0
      %8755 = vmatpush.bf16.msra.mxu0 0
      %8756 = vmatpush.bf16.msra.mxu0 0
      %8757 = vmatpush.bf16.msra.mxu0 0
      %8758 = vmatpush.bf16.msra.mxu0 0
      %8759 = vmatpush.bf16.msra.mxu0 0
      %8760 = vmatpush.bf16.msra.mxu0 0
      %8761 = vmatpush.bf16.msra.mxu0 %v8752
      %8762 = vmatmul.bf16.gmra.mxu0 %v8548
      %v8763 = vpop.f32.mrf.mxu0
      %v8764 = vadd.f32 0.0, %v8763
      %v8765 = vpop.f32.mrf.mxu0
      %v8766 = vadd.f32 0.0, %v8765
      %8767 = vmatmul.bf16.gmra.mxu0 %v8551
      %v8768 = vpop.f32.mrf.mxu0
      %v8769 = vadd.f32 0.0, %v8768
      %v8770 = vpop.f32.mrf.mxu0
      %v8771 = vadd.f32 0.0, %v8770
      %8772 = vmatmul.bf16.gmra.mxu0 %v8554
      %v8773 = vpop.f32.mrf.mxu0
      %v8774 = vadd.f32 0.0, %v8773
      %v8775 = vpop.f32.mrf.mxu0
      %v8776 = vadd.f32 0.0, %v8775
      %8777 = vmatmul.bf16.gmra.mxu0 %v8557
      %v8778 = vpop.f32.mrf.mxu0
      %v8779 = vadd.f32 0.0, %v8778
      %v8780 = vpop.f32.mrf.mxu0
      %v8781 = vadd.f32 0.0, %v8780
      %8782 = vmatmul.bf16.gmra.mxu0 %v8560
      %v8783 = vpop.f32.mrf.mxu0
      %v8784 = vadd.f32 0.0, %v8783
      %v8785 = vpop.f32.mrf.mxu0
      %v8786 = vadd.f32 0.0, %v8785
      %8787 = vmatmul.bf16.gmra.mxu0 %v8563
      %v8788 = vpop.f32.mrf.mxu0
      %v8789 = vadd.f32 0.0, %v8788
      %v8790 = vpop.f32.mrf.mxu0
      %v8791 = vadd.f32 0.0, %v8790
      %8792 = vmatmul.bf16.gmra.mxu0 %v8566
      %v8793 = vpop.f32.mrf.mxu0
      %v8794 = vadd.f32 0.0, %v8793
      %v8795 = vpop.f32.mrf.mxu0
      %v8796 = vadd.f32 0.0, %v8795
      %8797 = vmatmul.bf16.gmra.mxu0 %v8569
      %v8798 = vpop.f32.mrf.mxu0
      %v8799 = vadd.f32 0.0, %v8798
      %v8800 = vpop.f32.mrf.mxu0
      %v8801 = vadd.f32 0.0, %v8800
      %8802 = vmatmul.bf16.gmra.mxu0 %v8572
      %v8803 = vpop.f32.mrf.mxu0
      %v8804 = vadd.f32 0.0, %v8803
      %v8805 = vpop.f32.mrf.mxu0
      %v8806 = vadd.f32 0.0, %v8805
      %8807 = vmatmul.bf16.gmra.mxu0 %v8575
      %v8808 = vpop.f32.mrf.mxu0
      %v8809 = vadd.f32 0.0, %v8808
      %v8810 = vpop.f32.mrf.mxu0
      %v8811 = vadd.f32 0.0, %v8810
      %8812 = vmatmul.bf16.gmra.mxu0 %v8578
      %v8813 = vpop.f32.mrf.mxu0
      %v8814 = vadd.f32 0.0, %v8813
      %v8815 = vpop.f32.mrf.mxu0
      %v8816 = vadd.f32 0.0, %v8815
      %8817 = vmatmul.bf16.gmra.mxu0 %v8581
      %v8818 = vpop.f32.mrf.mxu0
      %v8819 = vadd.f32 0.0, %v8818
      %v8820 = vpop.f32.mrf.mxu0
      %v8821 = vadd.f32 0.0, %v8820
      %8822 = vmatmul.bf16.gmra.mxu0 %v8584
      %v8823 = vpop.f32.mrf.mxu0
      %v8824 = vadd.f32 0.0, %v8823
      %v8825 = vpop.f32.mrf.mxu0
      %v8826 = vadd.f32 0.0, %v8825
      %8827 = vmatmul.bf16.gmra.mxu0 %v8587
      %v8828 = vpop.f32.mrf.mxu0
      %v8829 = vadd.f32 0.0, %v8828
      %v8830 = vpop.f32.mrf.mxu0
      %v8831 = vadd.f32 0.0, %v8830
      %8832 = vmatmul.bf16.gmra.mxu0 %v8590
      %v8833 = vpop.f32.mrf.mxu0
      %v8834 = vadd.f32 0.0, %v8833
      %v8835 = vpop.f32.mrf.mxu0
      %v8836 = vadd.f32 0.0, %v8835
      %8837 = vmatmul.bf16.gmra.mxu0 %v8593
      %v8838 = vpop.f32.mrf.mxu0
      %v8839 = vadd.f32 0.0, %v8838
      %v8840 = vpop.f32.mrf.mxu0
      %v8841 = vadd.f32 0.0, %v8840
      %8842 = vmatmul.bf16.gmra.mxu0 %v8596
      %v8843 = vpop.f32.mrf.mxu0
      %v8844 = vadd.f32 0.0, %v8843
      %v8845 = vpop.f32.mrf.mxu0
      %v8846 = vadd.f32 0.0, %v8845
      %8847 = vmatmul.bf16.gmra.mxu0 %v8599
      %v8848 = vpop.f32.mrf.mxu0
      %v8849 = vadd.f32 0.0, %v8848
      %v8850 = vpop.f32.mrf.mxu0
      %v8851 = vadd.f32 0.0, %v8850
      %8852 = vmatmul.bf16.gmra.mxu0 %v8602
      %v8853 = vpop.f32.mrf.mxu0
      %v8854 = vadd.f32 0.0, %v8853
      %v8855 = vpop.f32.mrf.mxu0
      %v8856 = vadd.f32 0.0, %v8855
      %8857 = vmatmul.bf16.gmra.mxu0 %v8605
      %v8858 = vpop.f32.mrf.mxu0
      %v8859 = vadd.f32 0.0, %v8858
      %v8860 = vpop.f32.mrf.mxu0
      %v8861 = vadd.f32 0.0, %v8860
      %8862 = vmatmul.bf16.gmra.mxu0 %v8608
      %v8863 = vpop.f32.mrf.mxu0
      %v8864 = vadd.f32 0.0, %v8863
      %v8865 = vpop.f32.mrf.mxu0
      %v8866 = vadd.f32 0.0, %v8865
      %8867 = vmatmul.bf16.gmra.mxu0 %v8611
      %v8868 = vpop.f32.mrf.mxu0
      %v8869 = vadd.f32 0.0, %v8868
      %v8870 = vpop.f32.mrf.mxu0
      %v8871 = vadd.f32 0.0, %v8870
      %8872 = vmatmul.bf16.gmra.mxu0 %v8614
      %v8873 = vpop.f32.mrf.mxu0
      %v8874 = vadd.f32 0.0, %v8873
      %v8875 = vpop.f32.mrf.mxu0
      %v8876 = vadd.f32 0.0, %v8875
      %8877 = vmatmul.bf16.gmra.mxu0 %v8617
      %v8878 = vpop.f32.mrf.mxu0
      %v8879 = vadd.f32 0.0, %v8878
      %v8880 = vpop.f32.mrf.mxu0
      %v8881 = vadd.f32 0.0, %v8880
      %8882 = vmatmul.bf16.gmra.mxu0 %v8620
      %v8883 = vpop.f32.mrf.mxu0
      %v8884 = vadd.f32 0.0, %v8883
      %v8885 = vpop.f32.mrf.mxu0
      %v8886 = vadd.f32 0.0, %v8885
      %8887 = vmatmul.bf16.gmra.mxu0 %v8623
      %v8888 = vpop.f32.mrf.mxu0
      %v8889 = vadd.f32 0.0, %v8888
      %v8890 = vpop.f32.mrf.mxu0
      %v8891 = vadd.f32 0.0, %v8890
      %8892 = vmatmul.bf16.gmra.mxu0 %v8626
      %v8893 = vpop.f32.mrf.mxu0
      %v8894 = vadd.f32 0.0, %v8893
      %v8895 = vpop.f32.mrf.mxu0
      %v8896 = vadd.f32 0.0, %v8895
      %8897 = vmatmul.bf16.gmra.mxu0 %v8629
      %v8898 = vpop.f32.mrf.mxu0
      %v8899 = vadd.f32 0.0, %v8898
      %v8900 = vpop.f32.mrf.mxu0
      %v8901 = vadd.f32 0.0, %v8900
      %8902 = vmatmul.bf16.gmra.mxu0 %v8632
      %v8903 = vpop.f32.mrf.mxu0
      %v8904 = vadd.f32 0.0, %v8903
      %v8905 = vpop.f32.mrf.mxu0
      %v8906 = vadd.f32 0.0, %v8905
      %8907 = vmatmul.bf16.gmra.mxu0 %v8635
      %v8908 = vpop.f32.mrf.mxu0
      %v8909 = vadd.f32 0.0, %v8908
      %v8910 = vpop.f32.mrf.mxu0
      %v8911 = vadd.f32 0.0, %v8910
      %8912 = vmatmul.bf16.gmra.mxu0 %v8638
      %v8913 = vpop.f32.mrf.mxu0
      %v8914 = vadd.f32 0.0, %v8913
      %v8915 = vpop.f32.mrf.mxu0
      %v8916 = vadd.f32 0.0, %v8915
      %8917 = vmatmul.bf16.gmra.mxu0 %v8641
      %v8918 = vpop.f32.mrf.mxu0
      %v8919 = vadd.f32 0.0, %v8918
      %v8920 = vpop.f32.mrf.mxu0
      %v8921 = vadd.f32 0.0, %v8920
      %8922 = vmatmul.bf16.gmra.mxu0 %v8644
      %v8923 = vpop.f32.mrf.mxu0
      %v8924 = vadd.f32 0.0, %v8923
      %v8925 = vpop.f32.mrf.mxu0
      %v8926 = vadd.f32 0.0, %v8925
      %8927 = vmatmul.bf16.gmra.mxu0 %v8647
      %v8928 = vpop.f32.mrf.mxu0
      %v8929 = vadd.f32 0.0, %v8928
      %v8930 = vpop.f32.mrf.mxu0
      %v8931 = vadd.f32 0.0, %v8930
      %8932 = vmatmul.bf16.gmra.mxu0 %v8650
      %v8933 = vpop.f32.mrf.mxu0
      %v8934 = vadd.f32 0.0, %v8933
      %v8935 = vpop.f32.mrf.mxu0
      %v8936 = vadd.f32 0.0, %v8935
      %8937 = vmatmul.bf16.gmra.mxu0 %v8653
      %v8938 = vpop.f32.mrf.mxu0
      %v8939 = vadd.f32 0.0, %v8938
      %v8940 = vpop.f32.mrf.mxu0
      %v8941 = vadd.f32 0.0, %v8940
      %8942 = vmatmul.bf16.gmra.mxu0 %v8656
      %v8943 = vpop.f32.mrf.mxu0
      %v8944 = vadd.f32 0.0, %v8943
      %v8945 = vpop.f32.mrf.mxu0
      %v8946 = vadd.f32 0.0, %v8945
      %8947 = vmatmul.bf16.gmra.mxu0 %v8659
      %v8948 = vpop.f32.mrf.mxu0
      %v8949 = vadd.f32 0.0, %v8948
      %v8950 = vpop.f32.mrf.mxu0
      %v8951 = vadd.f32 0.0, %v8950
      %8952 = vmatmul.bf16.gmra.mxu0 %v8662
      %v8953 = vpop.f32.mrf.mxu0
      %v8954 = vadd.f32 0.0, %v8953
      %v8955 = vpop.f32.mrf.mxu0
      %v8956 = vadd.f32 0.0, %v8955
      %8957 = vmatmul.bf16.gmra.mxu0 %v8665
      %v8958 = vpop.f32.mrf.mxu0
      %v8959 = vadd.f32 0.0, %v8958
      %v8960 = vpop.f32.mrf.mxu0
      %v8961 = vadd.f32 0.0, %v8960
      %8962 = vmatmul.bf16.gmra.mxu0 %v8668
      %v8963 = vpop.f32.mrf.mxu0
      %v8964 = vadd.f32 0.0, %v8963
      %v8965 = vpop.f32.mrf.mxu0
      %v8966 = vadd.f32 0.0, %v8965
      %8967 = vmatmul.bf16.gmra.mxu0 %v8671
      %v8968 = vpop.f32.mrf.mxu0
      %v8969 = vadd.f32 0.0, %v8968
      %v8970 = vpop.f32.mrf.mxu0
      %v8971 = vadd.f32 0.0, %v8970
      %8972 = vmatmul.bf16.gmra.mxu0 %v8674
      %v8973 = vpop.f32.mrf.mxu0
      %v8974 = vadd.f32 0.0, %v8973
      %v8975 = vpop.f32.mrf.mxu0
      %v8976 = vadd.f32 0.0, %v8975
      %8977 = vmatmul.bf16.gmra.mxu0 %v8677
      %v8978 = vpop.f32.mrf.mxu0
      %v8979 = vadd.f32 0.0, %v8978
      %v8980 = vpop.f32.mrf.mxu0
      %v8981 = vadd.f32 0.0, %v8980
      %8982 = vmatmul.bf16.gmra.mxu0 %v8680
      %v8983 = vpop.f32.mrf.mxu0
      %v8984 = vadd.f32 0.0, %v8983
      %v8985 = vpop.f32.mrf.mxu0
      %v8986 = vadd.f32 0.0, %v8985
      %8987 = vmatmul.bf16.gmra.mxu0 %v8683
      %v8988 = vpop.f32.mrf.mxu0
      %v8989 = vadd.f32 0.0, %v8988
      %v8990 = vpop.f32.mrf.mxu0
      %v8991 = vadd.f32 0.0, %v8990
      %8992 = vmatmul.bf16.gmra.mxu0 %v8686
      %v8993 = vpop.f32.mrf.mxu0
      %v8994 = vadd.f32 0.0, %v8993
      %v8995 = vpop.f32.mrf.mxu0
      %v8996 = vadd.f32 0.0, %v8995
      %8997 = vmatmul.bf16.gmra.mxu0 %v8689
      %v8998 = vpop.f32.mrf.mxu0
      %v8999 = vadd.f32 0.0, %v8998
      %v9000 = vpop.f32.mrf.mxu0
      %v9001 = vadd.f32 0.0, %v9000
      %9002 = vmatmul.bf16.gmra.mxu0 %v8692
      %v9003 = vpop.f32.mrf.mxu0
      %v9004 = vadd.f32 0.0, %v9003
      %v9005 = vpop.f32.mrf.mxu0
      %v9006 = vadd.f32 0.0, %v9005
      %9007 = vmatmul.bf16.gmra.mxu0 %v8695
      %v9008 = vpop.f32.mrf.mxu0
      %v9009 = vadd.f32 0.0, %v9008
      %v9010 = vpop.f32.mrf.mxu0
      %v9011 = vadd.f32 0.0, %v9010
      %9012 = vmatmul.bf16.gmra.mxu0 %v8698
      %v9013 = vpop.f32.mrf.mxu0
      %v9014 = vadd.f32 0.0, %v9013
      %v9015 = vpop.f32.mrf.mxu0
      %v9016 = vadd.f32 0.0, %v9015
      %9017 = vmatmul.bf16.gmra.mxu0 %v8701
      %v9018 = vpop.f32.mrf.mxu0
      %v9019 = vadd.f32 0.0, %v9018
      %v9020 = vpop.f32.mrf.mxu0
      %v9021 = vadd.f32 0.0, %v9020
      %9022 = vmatmul.bf16.gmra.mxu0 %v8704
      %v9023 = vpop.f32.mrf.mxu0
      %v9024 = vadd.f32 0.0, %v9023
      %v9025 = vpop.f32.mrf.mxu0
      %v9026 = vadd.f32 0.0, %v9025
      %9027 = vmatmul.bf16.gmra.mxu0 %v8707
      %v9028 = vpop.f32.mrf.mxu0
      %v9029 = vadd.f32 0.0, %v9028
      %v9030 = vpop.f32.mrf.mxu0
      %v9031 = vadd.f32 0.0, %v9030
      %9032 = vmatmul.bf16.gmra.mxu0 %v8710
      %v9033 = vpop.f32.mrf.mxu0
      %v9034 = vadd.f32 0.0, %v9033
      %v9035 = vpop.f32.mrf.mxu0
      %v9036 = vadd.f32 0.0, %v9035
      %9037 = vmatmul.bf16.gmra.mxu0 %v8713
      %v9038 = vpop.f32.mrf.mxu0
      %v9039 = vadd.f32 0.0, %v9038
      %v9040 = vpop.f32.mrf.mxu0
      %v9041 = vadd.f32 0.0, %v9040
      %9042 = vmatmul.bf16.gmra.mxu0 %v8716
      %v9043 = vpop.f32.mrf.mxu0
      %v9044 = vadd.f32 0.0, %v9043
      %v9045 = vpop.f32.mrf.mxu0
      %v9046 = vadd.f32 0.0, %v9045
      %9047 = vmatmul.bf16.gmra.mxu0 %v8719
      %v9048 = vpop.f32.mrf.mxu0
      %v9049 = vadd.f32 0.0, %v9048
      %v9050 = vpop.f32.mrf.mxu0
      %v9051 = vadd.f32 0.0, %v9050
      %9052 = vmatmul.bf16.gmra.mxu0 %v8722
      %v9053 = vpop.f32.mrf.mxu0
      %v9054 = vadd.f32 0.0, %v9053
      %v9055 = vpop.f32.mrf.mxu0
      %v9056 = vadd.f32 0.0, %v9055
      %9057 = vmatmul.bf16.gmra.mxu0 %v8725
      %v9058 = vpop.f32.mrf.mxu0
      %v9059 = vadd.f32 0.0, %v9058
      %v9060 = vpop.f32.mrf.mxu0
      %v9061 = vadd.f32 0.0, %v9060
      %9062 = vmatmul.bf16.gmra.mxu0 %v8728
      %v9063 = vpop.f32.mrf.mxu0
      %v9064 = vadd.f32 0.0, %v9063
      %v9065 = vpop.f32.mrf.mxu0
      %v9066 = vadd.f32 0.0, %v9065
      %9067 = vmatmul.bf16.gmra.mxu0 %v8731
      %v9068 = vpop.f32.mrf.mxu0
      %v9069 = vadd.f32 0.0, %v9068
      %v9070 = vpop.f32.mrf.mxu0
      %v9071 = vadd.f32 0.0, %v9070
      %9072 = vmatmul.bf16.gmra.mxu0 %v8734
      %v9073 = vpop.f32.mrf.mxu0
      %v9074 = vadd.f32 0.0, %v9073
      %v9075 = vpop.f32.mrf.mxu0
      %v9076 = vadd.f32 0.0, %v9075
      %9077 = vmatmul.bf16.gmra.mxu0 %v8737
      %v9078 = vpop.f32.mrf.mxu0
      %v9079 = vadd.f32 0.0, %v9078
      %v9080 = vpop.f32.mrf.mxu0
      %v9081 = vadd.f32 0.0, %v9080
      %9082 = vmatmul.bf16.gmra.mxu0 %v8740
      %v9083 = vpop.f32.mrf.mxu0
      %v9084 = vadd.f32 0.0, %v9083
      %v9085 = vpop.f32.mrf.mxu0
      %v9086 = vadd.f32 0.0, %v9085
      %9087 = vmatmul.bf16.gmra.mxu0 %v8743
      %v9088 = vpop.f32.mrf.mxu0
      %v9089 = vadd.f32 0.0, %v9088
      %v9090 = vpop.f32.mrf.mxu0
      %v9091 = vadd.f32 0.0, %v9090
      %9092 = vmatmul.bf16.gmra.mxu0 %v8746
      %v9093 = vpop.f32.mrf.mxu0
      %v9094 = vadd.f32 0.0, %v9093
      %v9095 = vpop.f32.mrf.mxu0
      %v9096 = vadd.f32 0.0, %v9095
      %9097 = vmatmul.bf16.gmra.mxu0 %v8749
      %v9098 = vpop.f32.mrf.mxu0
      %v9099 = vadd.f32 0.0, %v9098
      %v9100 = vpop.f32.mrf.mxu0
      %v9101 = vadd.f32 0.0, %v9100
      %9102 = vdwg.mxu0
      %v9103 = vadd.f32 %v7774, %v8764
      %v9104 = vadd.f32 %v7775, %v8766
      %v9105 = vadd.f32 %v7776, %v8769
      %v9106 = vadd.f32 %v7777, %v8771
      %v9107 = vadd.f32 %v7778, %v8774
      %v9108 = vadd.f32 %v7779, %v8776
      %v9109 = vadd.f32 %v7780, %v8779
      %v9110 = vadd.f32 %v7781, %v8781
      %v9111 = vadd.f32 %v7782, %v8784
      %v9112 = vadd.f32 %v7783, %v8786
      %v9113 = vadd.f32 %v7784, %v8789
      %v9114 = vadd.f32 %v7785, %v8791
      %v9115 = vadd.f32 %v7786, %v8794
      %v9116 = vadd.f32 %v7787, %v8796
      %v9117 = vadd.f32 %v7788, %v8799
      %v9118 = vadd.f32 %v7789, %v8801
      %v9119 = vadd.f32 %v7790, %v8804
      %v9120 = vadd.f32 %v7791, %v8806
      %v9121 = vadd.f32 %v7792, %v8809
      %v9122 = vadd.f32 %v7793, %v8811
      %v9123 = vadd.f32 %v7794, %v8814
      %v9124 = vadd.f32 %v7795, %v8816
      %v9125 = vadd.f32 %v7796, %v8819
      %v9126 = vadd.f32 %v7797, %v8821
      %v9127 = vadd.f32 %v7798, %v8824
      %v9128 = vadd.f32 %v7799, %v8826
      %v9129 = vadd.f32 %v7800, %v8829
      %v9130 = vadd.f32 %v7801, %v8831
      %v9131 = vadd.f32 %v7802, %v8834
      %v9132 = vadd.f32 %v7803, %v8836
      %v9133 = vadd.f32 %v7804, %v8839
      %v9134 = vadd.f32 %v7805, %v8841
      %v9135 = vadd.f32 %v7806, %v8844
      %v9136 = vadd.f32 %v7807, %v8846
      %v9137 = vadd.f32 %v7808, %v8849
      %v9138 = vadd.f32 %v7809, %v8851
      %v9139 = vadd.f32 %v7810, %v8854
      %v9140 = vadd.f32 %v7811, %v8856
      %v9141 = vadd.f32 %v7812, %v8859
      %v9142 = vadd.f32 %v7813, %v8861
      %v9143 = vadd.f32 %v7814, %v8864
      %v9144 = vadd.f32 %v7815, %v8866
      %v9145 = vadd.f32 %v7816, %v8869
      %v9146 = vadd.f32 %v7817, %v8871
      %v9147 = vadd.f32 %v7818, %v8874
      %v9148 = vadd.f32 %v7819, %v8876
      %v9149 = vadd.f32 %v7820, %v8879
      %v9150 = vadd.f32 %v7821, %v8881
      %v9151 = vadd.f32 %v7822, %v8884
      %v9152 = vadd.f32 %v7823, %v8886
      %v9153 = vadd.f32 %v7824, %v8889
      %v9154 = vadd.f32 %v7825, %v8891
      %v9155 = vadd.f32 %v7826, %v8894
      %v9156 = vadd.f32 %v7827, %v8896
      %v9157 = vadd.f32 %v7828, %v8899
      %v9158 = vadd.f32 %v7829, %v8901
      %v9159 = vadd.f32 %v7830, %v8904
      %v9160 = vadd.f32 %v7831, %v8906
      %v9161 = vadd.f32 %v7832, %v8909
      %v9162 = vadd.f32 %v7833, %v8911
      %v9163 = vadd.f32 %v7834, %v8914
      %v9164 = vadd.f32 %v7835, %v8916
      %v9165 = vadd.f32 %v7836, %v8919
      %v9166 = vadd.f32 %v7837, %v8921
      %v9167 = vadd.f32 %v7838, %v8924
      %v9168 = vadd.f32 %v7839, %v8926
      %v9169 = vadd.f32 %v7840, %v8929
      %v9170 = vadd.f32 %v7841, %v8931
      %v9171 = vadd.f32 %v7842, %v8934
      %v9172 = vadd.f32 %v7843, %v8936
      %v9173 = vadd.f32 %v7844, %v8939
      %v9174 = vadd.f32 %v7845, %v8941
      %v9175 = vadd.f32 %v7846, %v8944
      %v9176 = vadd.f32 %v7847, %v8946
      %v9177 = vadd.f32 %v7848, %v8949
      %v9178 = vadd.f32 %v7849, %v8951
      %v9179 = vadd.f32 %v7850, %v8954
      %v9180 = vadd.f32 %v7851, %v8956
      %v9181 = vadd.f32 %v7852, %v8959
      %v9182 = vadd.f32 %v7853, %v8961
      %v9183 = vadd.f32 %v7854, %v8964
      %v9184 = vadd.f32 %v7855, %v8966
      %v9185 = vadd.f32 %v7856, %v8969
      %v9186 = vadd.f32 %v7857, %v8971
      %v9187 = vadd.f32 %v7858, %v8974
      %v9188 = vadd.f32 %v7859, %v8976
      %v9189 = vadd.f32 %v7860, %v8979
      %v9190 = vadd.f32 %v7861, %v8981
      %v9191 = vadd.f32 %v7862, %v8984
      %v9192 = vadd.f32 %v7863, %v8986
      %v9193 = vadd.f32 %v7864, %v8989
      %v9194 = vadd.f32 %v7865, %v8991
      %v9195 = vadd.f32 %v7866, %v8994
      %v9196 = vadd.f32 %v7867, %v8996
      %v9197 = vadd.f32 %v7868, %v8999
      %v9198 = vadd.f32 %v7869, %v9001
      %v9199 = vadd.f32 %v7870, %v9004
      %v9200 = vadd.f32 %v7871, %v9006
      %v9201 = vadd.f32 %v7872, %v9009
      %v9202 = vadd.f32 %v7873, %v9011
      %v9203 = vadd.f32 %v7874, %v9014
      %v9204 = vadd.f32 %v7875, %v9016
      %v9205 = vadd.f32 %v7876, %v9019
      %v9206 = vadd.f32 %v7877, %v9021
      %v9207 = vadd.f32 %v7878, %v9024
      %v9208 = vadd.f32 %v7879, %v9026
      %v9209 = vadd.f32 %v7880, %v9029
      %v9210 = vadd.f32 %v7881, %v9031
      %v9211 = vadd.f32 %v7882, %v9034
      %v9212 = vadd.f32 %v7883, %v9036
      %v9213 = vadd.f32 %v7884, %v9039
      %v9214 = vadd.f32 %v7885, %v9041
      %v9215 = vadd.f32 %v7886, %v9044
      %v9216 = vadd.f32 %v7887, %v9046
      %v9217 = vadd.f32 %v7888, %v9049
      %v9218 = vadd.f32 %v7889, %v9051
      %v9219 = vadd.f32 %v7890, %v9054
      %v9220 = vadd.f32 %v7891, %v9056
      %v9221 = vadd.f32 %v7892, %v9059
      %v9222 = vadd.f32 %v7893, %v9061
      %v9223 = vadd.f32 %v7894, %v9064
      %v9224 = vadd.f32 %v7895, %v9066
      %v9225 = vadd.f32 %v7896, %v9069
      %v9226 = vadd.f32 %v7897, %v9071
      %v9227 = vadd.f32 %v7898, %v9074
      %v9228 = vadd.f32 %v7899, %v9076
      %v9229 = vadd.f32 %v7900, %v9079
      %v9230 = vadd.f32 %v7901, %v9081
      %v9231 = vadd.f32 %v7902, %v9084
      %v9232 = vadd.f32 %v7903, %v9086
      %v9233 = vadd.f32 %v7904, %v9089
      %v9234 = vadd.f32 %v7905, %v9091
      %v9235 = vadd.f32 %v7906, %v9094
      %v9236 = vadd.f32 %v7907, %v9096
      %v9237 = vadd.f32 %v7908, %v9099
      %v9238 = vadd.f32 %v7909, %v9101
      %v9239 = vld [vmem:[%s165 + $0x20] sm:$0x8]
      %v9240 = vld [vmem:[%s1 + $0xc] sm:$0x3]
      %v9242 = vunpack.c.l.b16 %v9239
      %v9243 = vpack.c.b16 %v6872, %v9242
      %vm9244 = vcmask 1044480
      %v9245 = vrot.slane %v9243, 3
      %v9246 = vrot.slane %v7009, 3
      %v9247 = vsel %vm9244, %v9245, %v9246
      %v9248 = vrot.slane %v7010, 3
      %v9249 = vsel %vm9244, %v9246, %v9248
      %v9250 = vrot.slane %v7011, 3
      %v9251 = vsel %vm9244, %v9248, %v9250
      %v9252 = vrot.slane %v7012, 3
      %v9253 = vsel %vm9244, %v9250, %v9252
      %v9254 = vrot.slane %v7013, 3
      %v9255 = vsel %vm9244, %v9252, %v9254
      %v9256 = vrot.slane %v7014, 3
      %v9257 = vsel %vm9244, %v9254, %v9256
      %v9258 = vrot.slane %v7015, 3
      %v9259 = vsel %vm9244, %v9256, %v9258
      %v9260 = vrot.slane %v7016, 3
      %v9261 = vsel %vm9244, %v9258, %v9260
      %v9262 = vrot.slane %v7017, 3
      %v9263 = vsel %vm9244, %v9260, %v9262
      %v9264 = vrot.slane %v7018, 3
      %v9265 = vsel %vm9244, %v9262, %v9264
      %v9266 = vrot.slane %v7019, 3
      %v9267 = vsel %vm9244, %v9264, %v9266
      %v9268 = vrot.slane %v7020, 3
      %v9269 = vsel %vm9244, %v9266, %v9268
      %v9270 = vrot.slane %v7021, 3
      %v9271 = vsel %vm9244, %v9268, %v9270
      %v9272 = vrot.slane %v7022, 3
      %v9273 = vsel %vm9244, %v9270, %v9272
      %v9274 = vrot.slane %v7023, 3
      %v9275 = vsel %vm9244, %v9272, %v9274
      %v9276 = vrot.slane %v7024, 3
      %v9277 = vsel %vm9244, %v9274, %v9276
      %v9278 = vrot.slane %v7025, 3
      %v9279 = vsel %vm9244, %v9276, %v9278
      %v9280 = vrot.slane %v7026, 3
      %v9281 = vsel %vm9244, %v9278, %v9280
      %v9282 = vrot.slane %v7027, 3
      %v9283 = vsel %vm9244, %v9280, %v9282
      %v9284 = vrot.slane %v7028, 3
      %v9285 = vsel %vm9244, %v9282, %v9284
      %v9286 = vrot.slane %v7029, 3
      %v9287 = vsel %vm9244, %v9284, %v9286
      %v9288 = vrot.slane %v7030, 3
      %v9289 = vsel %vm9244, %v9286, %v9288
      %v9290 = vrot.slane %v7031, 3
      %v9291 = vsel %vm9244, %v9288, %v9290
      %v9292 = vrot.slane %v7032, 3
      %v9293 = vsel %vm9244, %v9290, %v9292
      %v9294 = vrot.slane %v7033, 3
      %v9295 = vsel %vm9244, %v9292, %v9294
      %v9296 = vrot.slane %v7034, 3
      %v9297 = vsel %vm9244, %v9294, %v9296
      %v9298 = vrot.slane %v7035, 3
      %v9299 = vsel %vm9244, %v9296, %v9298
      %v9300 = vrot.slane %v7036, 3
      %v9301 = vsel %vm9244, %v9298, %v9300
      %v9302 = vrot.slane %v7037, 3
      %v9303 = vsel %vm9244, %v9300, %v9302
      %v9304 = vrot.slane %v7038, 3
      %v9305 = vsel %vm9244, %v9302, %v9304
      %v9306 = vrot.slane %v7039, 3
      %v9307 = vsel %vm9244, %v9304, %v9306
      %v9308 = vrot.slane %v7040, 3
      %v9309 = vsel %vm9244, %v9306, %v9308
      %v9310 = vrot.slane %v7041, 3
      %v9311 = vsel %vm9244, %v9308, %v9310
      %v9312 = vrot.slane %v7042, 3
      %v9313 = vsel %vm9244, %v9310, %v9312
      %v9314 = vrot.slane %v7043, 3
      %v9315 = vsel %vm9244, %v9312, %v9314
      %v9316 = vrot.slane %v7044, 3
      %v9317 = vsel %vm9244, %v9314, %v9316
      %v9318 = vrot.slane %v7045, 3
      %v9319 = vsel %vm9244, %v9316, %v9318
      %v9320 = vrot.slane %v7046, 3
      %v9321 = vsel %vm9244, %v9318, %v9320
      %v9322 = vrot.slane %v7047, 3
      %v9323 = vsel %vm9244, %v9320, %v9322
      %v9324 = vrot.slane %v7048, 3
      %v9325 = vsel %vm9244, %v9322, %v9324
      %v9326 = vrot.slane %v7049, 3
      %v9327 = vsel %vm9244, %v9324, %v9326
      %v9328 = vrot.slane %v7050, 3
      %v9329 = vsel %vm9244, %v9326, %v9328
      %v9330 = vrot.slane %v7051, 3
      %v9331 = vsel %vm9244, %v9328, %v9330
      %v9332 = vrot.slane %v7052, 3
      %v9333 = vsel %vm9244, %v9330, %v9332
      %v9334 = vrot.slane %v7053, 3
      %v9335 = vsel %vm9244, %v9332, %v9334
      %v9336 = vrot.slane %v7054, 3
      %v9337 = vsel %vm9244, %v9334, %v9336
      %v9338 = vrot.slane %v7055, 3
      %v9339 = vsel %vm9244, %v9336, %v9338
      %v9340 = vrot.slane %v7056, 3
      %v9341 = vsel %vm9244, %v9338, %v9340
      %v9342 = vrot.slane %v7057, 3
      %v9343 = vsel %vm9244, %v9340, %v9342
      %v9344 = vrot.slane %v7058, 3
      %v9345 = vsel %vm9244, %v9342, %v9344
      %v9346 = vrot.slane %v7059, 3
      %v9347 = vsel %vm9244, %v9344, %v9346
      %v9348 = vrot.slane %v7060, 3
      %v9349 = vsel %vm9244, %v9346, %v9348
      %v9350 = vrot.slane %v7061, 3
      %v9351 = vsel %vm9244, %v9348, %v9350
      %v9352 = vrot.slane %v7062, 3
      %v9353 = vsel %vm9244, %v9350, %v9352
      %v9354 = vrot.slane %v7063, 3
      %v9355 = vsel %vm9244, %v9352, %v9354
      %v9356 = vrot.slane %v7064, 3
      %v9357 = vsel %vm9244, %v9354, %v9356
      %v9358 = vrot.slane %v7065, 3
      %v9359 = vsel %vm9244, %v9356, %v9358
      %v9360 = vrot.slane %v7066, 3
      %v9361 = vsel %vm9244, %v9358, %v9360
      %v9362 = vrot.slane %v7067, 3
      %v9363 = vsel %vm9244, %v9360, %v9362
      %v9364 = vrot.slane %v7068, 3
      %v9365 = vsel %vm9244, %v9362, %v9364
      %v9366 = vrot.slane %v7069, 3
      %v9367 = vsel %vm9244, %v9364, %v9366
      %v9368 = vrot.slane %v7070, 3
      %v9369 = vsel %vm9244, %v9366, %v9368
      %v9370 = vrot.slane %v7071, 3
      %v9371 = vsel %vm9244, %v9368, %v9370
      %v9372 = vrot.slane %v7072, 3
      %v9373 = vsel %vm9244, %v9370, %v9372
      %v9374 = vrot.slane %v7073, 3
      %v9375 = vsel %vm9244, %v9372, %v9374
      %v9376 = vrot.slane %v7074, 3
      %v9377 = vsel %vm9244, %v9374, %v9376
      %v9378 = vrot.slane %v7075, 3
      %v9379 = vsel %vm9244, %v9376, %v9378
      %v9380 = vrot.slane %v7914, 3
      %v9381 = vsel %vm9244, %v9378, %v9380
      %v9383 = vsel %vm1214, %v9247, 0
      %v9386 = vsel %vm1214, %v9249, 0
      %v9389 = vsel %vm1214, %v9251, 0
      %v9392 = vsel %vm1214, %v9253, 0
      %v9395 = vsel %vm1214, %v9255, 0
      %v9398 = vsel %vm1214, %v9257, 0
      %v9401 = vsel %vm1214, %v9259, 0
      %v9404 = vsel %vm1214, %v9261, 0
      %v9407 = vsel %vm1214, %v9263, 0
      %v9410 = vsel %vm1214, %v9265, 0
      %v9413 = vsel %vm1214, %v9267, 0
      %v9416 = vsel %vm1214, %v9269, 0
      %v9419 = vsel %vm1214, %v9271, 0
      %v9422 = vsel %vm1214, %v9273, 0
      %v9425 = vsel %vm1214, %v9275, 0
      %v9428 = vsel %vm1214, %v9277, 0
      %v9431 = vsel %vm1214, %v9279, 0
      %v9434 = vsel %vm1214, %v9281, 0
      %v9437 = vsel %vm1214, %v9283, 0
      %v9440 = vsel %vm1214, %v9285, 0
      %v9443 = vsel %vm1214, %v9287, 0
      %v9446 = vsel %vm1214, %v9289, 0
      %v9449 = vsel %vm1214, %v9291, 0
      %v9452 = vsel %vm1214, %v9293, 0
      %v9455 = vsel %vm1214, %v9295, 0
      %v9458 = vsel %vm1214, %v9297, 0
      %v9461 = vsel %vm1214, %v9299, 0
      %v9464 = vsel %vm1214, %v9301, 0
      %v9467 = vsel %vm1214, %v9303, 0
      %v9470 = vsel %vm1214, %v9305, 0
      %v9473 = vsel %vm1214, %v9307, 0
      %v9476 = vsel %vm1214, %v9309, 0
      %v9479 = vsel %vm1214, %v9311, 0
      %v9482 = vsel %vm1214, %v9313, 0
      %v9485 = vsel %vm1214, %v9315, 0
      %v9488 = vsel %vm1214, %v9317, 0
      %v9491 = vsel %vm1214, %v9319, 0
      %v9494 = vsel %vm1214, %v9321, 0
      %v9497 = vsel %vm1214, %v9323, 0
      %v9500 = vsel %vm1214, %v9325, 0
      %v9503 = vsel %vm1214, %v9327, 0
      %v9506 = vsel %vm1214, %v9329, 0
      %v9509 = vsel %vm1214, %v9331, 0
      %v9512 = vsel %vm1214, %v9333, 0
      %v9515 = vsel %vm1214, %v9335, 0
      %v9518 = vsel %vm1214, %v9337, 0
      %v9521 = vsel %vm1214, %v9339, 0
      %v9524 = vsel %vm1214, %v9341, 0
      %v9527 = vsel %vm1214, %v9343, 0
      %v9530 = vsel %vm1214, %v9345, 0
      %v9533 = vsel %vm1214, %v9347, 0
      %v9536 = vsel %vm1214, %v9349, 0
      %v9539 = vsel %vm1214, %v9351, 0
      %v9542 = vsel %vm1214, %v9353, 0
      %v9545 = vsel %vm1214, %v9355, 0
      %v9548 = vsel %vm1214, %v9357, 0
      %v9551 = vsel %vm1214, %v9359, 0
      %v9554 = vsel %vm1214, %v9361, 0
      %v9557 = vsel %vm1214, %v9363, 0
      %v9560 = vsel %vm1214, %v9365, 0
      %v9563 = vsel %vm1214, %v9367, 0
      %v9566 = vsel %vm1214, %v9369, 0
      %v9569 = vsel %vm1214, %v9371, 0
      %v9572 = vsel %vm1214, %v9373, 0
      %v9575 = vsel %vm1214, %v9375, 0
      %v9578 = vsel %vm1214, %v9377, 0
      %v9581 = vsel %vm1214, %v9379, 0
      %v9584 = vsel %vm1214, %v9381, 0
      %v9587 = vand.u32 %v9240, %v1422
      %9589 = vmatpush.bf16.msra.mxu0 0
      %9590 = vmatpush.bf16.msra.mxu0 0
      %9591 = vmatpush.bf16.msra.mxu0 0
      %9592 = vmatpush.bf16.msra.mxu0 0
      %9593 = vmatpush.bf16.msra.mxu0 0
      %9594 = vmatpush.bf16.msra.mxu0 0
      %9595 = vmatpush.bf16.msra.mxu0 0
      %9596 = vmatpush.bf16.msra.mxu0 %v9587
      %9597 = vmatmul.bf16.gmra.mxu0 %v9383
      %v9598 = vpop.f32.mrf.mxu0
      %v9599 = vadd.f32 0.0, %v9598
      %v9600 = vpop.f32.mrf.mxu0
      %v9601 = vadd.f32 0.0, %v9600
      %9602 = vmatmul.bf16.gmra.mxu0 %v9386
      %v9603 = vpop.f32.mrf.mxu0
      %v9604 = vadd.f32 0.0, %v9603
      %v9605 = vpop.f32.mrf.mxu0
      %v9606 = vadd.f32 0.0, %v9605
      %9607 = vmatmul.bf16.gmra.mxu0 %v9389
      %v9608 = vpop.f32.mrf.mxu0
      %v9609 = vadd.f32 0.0, %v9608
      %v9610 = vpop.f32.mrf.mxu0
      %v9611 = vadd.f32 0.0, %v9610
      %9612 = vmatmul.bf16.gmra.mxu0 %v9392
      %v9613 = vpop.f32.mrf.mxu0
      %v9614 = vadd.f32 0.0, %v9613
      %v9615 = vpop.f32.mrf.mxu0
      %v9616 = vadd.f32 0.0, %v9615
      %9617 = vmatmul.bf16.gmra.mxu0 %v9395
      %v9618 = vpop.f32.mrf.mxu0
      %v9619 = vadd.f32 0.0, %v9618
      %v9620 = vpop.f32.mrf.mxu0
      %v9621 = vadd.f32 0.0, %v9620
      %9622 = vmatmul.bf16.gmra.mxu0 %v9398
      %v9623 = vpop.f32.mrf.mxu0
      %v9624 = vadd.f32 0.0, %v9623
      %v9625 = vpop.f32.mrf.mxu0
      %v9626 = vadd.f32 0.0, %v9625
      %9627 = vmatmul.bf16.gmra.mxu0 %v9401
      %v9628 = vpop.f32.mrf.mxu0
      %v9629 = vadd.f32 0.0, %v9628
      %v9630 = vpop.f32.mrf.mxu0
      %v9631 = vadd.f32 0.0, %v9630
      %9632 = vmatmul.bf16.gmra.mxu0 %v9404
      %v9633 = vpop.f32.mrf.mxu0
      %v9634 = vadd.f32 0.0, %v9633
      %v9635 = vpop.f32.mrf.mxu0
      %v9636 = vadd.f32 0.0, %v9635
      %9637 = vmatmul.bf16.gmra.mxu0 %v9407
      %v9638 = vpop.f32.mrf.mxu0
      %v9639 = vadd.f32 0.0, %v9638
      %v9640 = vpop.f32.mrf.mxu0
      %v9641 = vadd.f32 0.0, %v9640
      %9642 = vmatmul.bf16.gmra.mxu0 %v9410
      %v9643 = vpop.f32.mrf.mxu0
      %v9644 = vadd.f32 0.0, %v9643
      %v9645 = vpop.f32.mrf.mxu0
      %v9646 = vadd.f32 0.0, %v9645
      %9647 = vmatmul.bf16.gmra.mxu0 %v9413
      %v9648 = vpop.f32.mrf.mxu0
      %v9649 = vadd.f32 0.0, %v9648
      %v9650 = vpop.f32.mrf.mxu0
      %v9651 = vadd.f32 0.0, %v9650
      %9652 = vmatmul.bf16.gmra.mxu0 %v9416
      %v9653 = vpop.f32.mrf.mxu0
      %v9654 = vadd.f32 0.0, %v9653
      %v9655 = vpop.f32.mrf.mxu0
      %v9656 = vadd.f32 0.0, %v9655
      %9657 = vmatmul.bf16.gmra.mxu0 %v9419
      %v9658 = vpop.f32.mrf.mxu0
      %v9659 = vadd.f32 0.0, %v9658
      %v9660 = vpop.f32.mrf.mxu0
      %v9661 = vadd.f32 0.0, %v9660
      %9662 = vmatmul.bf16.gmra.mxu0 %v9422
      %v9663 = vpop.f32.mrf.mxu0
      %v9664 = vadd.f32 0.0, %v9663
      %v9665 = vpop.f32.mrf.mxu0
      %v9666 = vadd.f32 0.0, %v9665
      %9667 = vmatmul.bf16.gmra.mxu0 %v9425
      %v9668 = vpop.f32.mrf.mxu0
      %v9669 = vadd.f32 0.0, %v9668
      %v9670 = vpop.f32.mrf.mxu0
      %v9671 = vadd.f32 0.0, %v9670
      %9672 = vmatmul.bf16.gmra.mxu0 %v9428
      %v9673 = vpop.f32.mrf.mxu0
      %v9674 = vadd.f32 0.0, %v9673
      %v9675 = vpop.f32.mrf.mxu0
      %v9676 = vadd.f32 0.0, %v9675
      %9677 = vmatmul.bf16.gmra.mxu0 %v9431
      %v9678 = vpop.f32.mrf.mxu0
      %v9679 = vadd.f32 0.0, %v9678
      %v9680 = vpop.f32.mrf.mxu0
      %v9681 = vadd.f32 0.0, %v9680
      %9682 = vmatmul.bf16.gmra.mxu0 %v9434
      %v9683 = vpop.f32.mrf.mxu0
      %v9684 = vadd.f32 0.0, %v9683
      %v9685 = vpop.f32.mrf.mxu0
      %v9686 = vadd.f32 0.0, %v9685
      %9687 = vmatmul.bf16.gmra.mxu0 %v9437
      %v9688 = vpop.f32.mrf.mxu0
      %v9689 = vadd.f32 0.0, %v9688
      %v9690 = vpop.f32.mrf.mxu0
      %v9691 = vadd.f32 0.0, %v9690
      %9692 = vmatmul.bf16.gmra.mxu0 %v9440
      %v9693 = vpop.f32.mrf.mxu0
      %v9694 = vadd.f32 0.0, %v9693
      %v9695 = vpop.f32.mrf.mxu0
      %v9696 = vadd.f32 0.0, %v9695
      %9697 = vmatmul.bf16.gmra.mxu0 %v9443
      %v9698 = vpop.f32.mrf.mxu0
      %v9699 = vadd.f32 0.0, %v9698
      %v9700 = vpop.f32.mrf.mxu0
      %v9701 = vadd.f32 0.0, %v9700
      %9702 = vmatmul.bf16.gmra.mxu0 %v9446
      %v9703 = vpop.f32.mrf.mxu0
      %v9704 = vadd.f32 0.0, %v9703
      %v9705 = vpop.f32.mrf.mxu0
      %v9706 = vadd.f32 0.0, %v9705
      %9707 = vmatmul.bf16.gmra.mxu0 %v9449
      %v9708 = vpop.f32.mrf.mxu0
      %v9709 = vadd.f32 0.0, %v9708
      %v9710 = vpop.f32.mrf.mxu0
      %v9711 = vadd.f32 0.0, %v9710
      %9712 = vmatmul.bf16.gmra.mxu0 %v9452
      %v9713 = vpop.f32.mrf.mxu0
      %v9714 = vadd.f32 0.0, %v9713
      %v9715 = vpop.f32.mrf.mxu0
      %v9716 = vadd.f32 0.0, %v9715
      %9717 = vmatmul.bf16.gmra.mxu0 %v9455
      %v9718 = vpop.f32.mrf.mxu0
      %v9719 = vadd.f32 0.0, %v9718
      %v9720 = vpop.f32.mrf.mxu0
      %v9721 = vadd.f32 0.0, %v9720
      %9722 = vmatmul.bf16.gmra.mxu0 %v9458
      %v9723 = vpop.f32.mrf.mxu0
      %v9724 = vadd.f32 0.0, %v9723
      %v9725 = vpop.f32.mrf.mxu0
      %v9726 = vadd.f32 0.0, %v9725
      %9727 = vmatmul.bf16.gmra.mxu0 %v9461
      %v9728 = vpop.f32.mrf.mxu0
      %v9729 = vadd.f32 0.0, %v9728
      %v9730 = vpop.f32.mrf.mxu0
      %v9731 = vadd.f32 0.0, %v9730
      %9732 = vmatmul.bf16.gmra.mxu0 %v9464
      %v9733 = vpop.f32.mrf.mxu0
      %v9734 = vadd.f32 0.0, %v9733
      %v9735 = vpop.f32.mrf.mxu0
      %v9736 = vadd.f32 0.0, %v9735
      %9737 = vmatmul.bf16.gmra.mxu0 %v9467
      %v9738 = vpop.f32.mrf.mxu0
      %v9739 = vadd.f32 0.0, %v9738
      %v9740 = vpop.f32.mrf.mxu0
      %v9741 = vadd.f32 0.0, %v9740
      %9742 = vmatmul.bf16.gmra.mxu0 %v9470
      %v9743 = vpop.f32.mrf.mxu0
      %v9744 = vadd.f32 0.0, %v9743
      %v9745 = vpop.f32.mrf.mxu0
      %v9746 = vadd.f32 0.0, %v9745
      %9747 = vmatmul.bf16.gmra.mxu0 %v9473
      %v9748 = vpop.f32.mrf.mxu0
      %v9749 = vadd.f32 0.0, %v9748
      %v9750 = vpop.f32.mrf.mxu0
      %v9751 = vadd.f32 0.0, %v9750
      %9752 = vmatmul.bf16.gmra.mxu0 %v9476
      %v9753 = vpop.f32.mrf.mxu0
      %v9754 = vadd.f32 0.0, %v9753
      %v9755 = vpop.f32.mrf.mxu0
      %v9756 = vadd.f32 0.0, %v9755
      %9757 = vmatmul.bf16.gmra.mxu0 %v9479
      %v9758 = vpop.f32.mrf.mxu0
      %v9759 = vadd.f32 0.0, %v9758
      %v9760 = vpop.f32.mrf.mxu0
      %v9761 = vadd.f32 0.0, %v9760
      %9762 = vmatmul.bf16.gmra.mxu0 %v9482
      %v9763 = vpop.f32.mrf.mxu0
      %v9764 = vadd.f32 0.0, %v9763
      %v9765 = vpop.f32.mrf.mxu0
      %v9766 = vadd.f32 0.0, %v9765
      %9767 = vmatmul.bf16.gmra.mxu0 %v9485
      %v9768 = vpop.f32.mrf.mxu0
      %v9769 = vadd.f32 0.0, %v9768
      %v9770 = vpop.f32.mrf.mxu0
      %v9771 = vadd.f32 0.0, %v9770
      %9772 = vmatmul.bf16.gmra.mxu0 %v9488
      %v9773 = vpop.f32.mrf.mxu0
      %v9774 = vadd.f32 0.0, %v9773
      %v9775 = vpop.f32.mrf.mxu0
      %v9776 = vadd.f32 0.0, %v9775
      %9777 = vmatmul.bf16.gmra.mxu0 %v9491
      %v9778 = vpop.f32.mrf.mxu0
      %v9779 = vadd.f32 0.0, %v9778
      %v9780 = vpop.f32.mrf.mxu0
      %v9781 = vadd.f32 0.0, %v9780
      %9782 = vmatmul.bf16.gmra.mxu0 %v9494
      %v9783 = vpop.f32.mrf.mxu0
      %v9784 = vadd.f32 0.0, %v9783
      %v9785 = vpop.f32.mrf.mxu0
      %v9786 = vadd.f32 0.0, %v9785
      %9787 = vmatmul.bf16.gmra.mxu0 %v9497
      %v9788 = vpop.f32.mrf.mxu0
      %v9789 = vadd.f32 0.0, %v9788
      %v9790 = vpop.f32.mrf.mxu0
      %v9791 = vadd.f32 0.0, %v9790
      %9792 = vmatmul.bf16.gmra.mxu0 %v9500
      %v9793 = vpop.f32.mrf.mxu0
      %v9794 = vadd.f32 0.0, %v9793
      %v9795 = vpop.f32.mrf.mxu0
      %v9796 = vadd.f32 0.0, %v9795
      %9797 = vmatmul.bf16.gmra.mxu0 %v9503
      %v9798 = vpop.f32.mrf.mxu0
      %v9799 = vadd.f32 0.0, %v9798
      %v9800 = vpop.f32.mrf.mxu0
      %v9801 = vadd.f32 0.0, %v9800
      %9802 = vmatmul.bf16.gmra.mxu0 %v9506
      %v9803 = vpop.f32.mrf.mxu0
      %v9804 = vadd.f32 0.0, %v9803
      %v9805 = vpop.f32.mrf.mxu0
      %v9806 = vadd.f32 0.0, %v9805
      %9807 = vmatmul.bf16.gmra.mxu0 %v9509
      %v9808 = vpop.f32.mrf.mxu0
      %v9809 = vadd.f32 0.0, %v9808
      %v9810 = vpop.f32.mrf.mxu0
      %v9811 = vadd.f32 0.0, %v9810
      %9812 = vmatmul.bf16.gmra.mxu0 %v9512
      %v9813 = vpop.f32.mrf.mxu0
      %v9814 = vadd.f32 0.0, %v9813
      %v9815 = vpop.f32.mrf.mxu0
      %v9816 = vadd.f32 0.0, %v9815
      %9817 = vmatmul.bf16.gmra.mxu0 %v9515
      %v9818 = vpop.f32.mrf.mxu0
      %v9819 = vadd.f32 0.0, %v9818
      %v9820 = vpop.f32.mrf.mxu0
      %v9821 = vadd.f32 0.0, %v9820
      %9822 = vmatmul.bf16.gmra.mxu0 %v9518
      %v9823 = vpop.f32.mrf.mxu0
      %v9824 = vadd.f32 0.0, %v9823
      %v9825 = vpop.f32.mrf.mxu0
      %v9826 = vadd.f32 0.0, %v9825
      %9827 = vmatmul.bf16.gmra.mxu0 %v9521
      %v9828 = vpop.f32.mrf.mxu0
      %v9829 = vadd.f32 0.0, %v9828
      %v9830 = vpop.f32.mrf.mxu0
      %v9831 = vadd.f32 0.0, %v9830
      %9832 = vmatmul.bf16.gmra.mxu0 %v9524
      %v9833 = vpop.f32.mrf.mxu0
      %v9834 = vadd.f32 0.0, %v9833
      %v9835 = vpop.f32.mrf.mxu0
      %v9836 = vadd.f32 0.0, %v9835
      %9837 = vmatmul.bf16.gmra.mxu0 %v9527
      %v9838 = vpop.f32.mrf.mxu0
      %v9839 = vadd.f32 0.0, %v9838
      %v9840 = vpop.f32.mrf.mxu0
      %v9841 = vadd.f32 0.0, %v9840
      %9842 = vmatmul.bf16.gmra.mxu0 %v9530
      %v9843 = vpop.f32.mrf.mxu0
      %v9844 = vadd.f32 0.0, %v9843
      %v9845 = vpop.f32.mrf.mxu0
      %v9846 = vadd.f32 0.0, %v9845
      %9847 = vmatmul.bf16.gmra.mxu0 %v9533
      %v9848 = vpop.f32.mrf.mxu0
      %v9849 = vadd.f32 0.0, %v9848
      %v9850 = vpop.f32.mrf.mxu0
      %v9851 = vadd.f32 0.0, %v9850
      %9852 = vmatmul.bf16.gmra.mxu0 %v9536
      %v9853 = vpop.f32.mrf.mxu0
      %v9854 = vadd.f32 0.0, %v9853
      %v9855 = vpop.f32.mrf.mxu0
      %v9856 = vadd.f32 0.0, %v9855
      %9857 = vmatmul.bf16.gmra.mxu0 %v9539
      %v9858 = vpop.f32.mrf.mxu0
      %v9859 = vadd.f32 0.0, %v9858
      %v9860 = vpop.f32.mrf.mxu0
      %v9861 = vadd.f32 0.0, %v9860
      %9862 = vmatmul.bf16.gmra.mxu0 %v9542
      %v9863 = vpop.f32.mrf.mxu0
      %v9864 = vadd.f32 0.0, %v9863
      %v9865 = vpop.f32.mrf.mxu0
      %v9866 = vadd.f32 0.0, %v9865
      %9867 = vmatmul.bf16.gmra.mxu0 %v9545
      %v9868 = vpop.f32.mrf.mxu0
      %v9869 = vadd.f32 0.0, %v9868
      %v9870 = vpop.f32.mrf.mxu0
      %v9871 = vadd.f32 0.0, %v9870
      %9872 = vmatmul.bf16.gmra.mxu0 %v9548
      %v9873 = vpop.f32.mrf.mxu0
      %v9874 = vadd.f32 0.0, %v9873
      %v9875 = vpop.f32.mrf.mxu0
      %v9876 = vadd.f32 0.0, %v9875
      %9877 = vmatmul.bf16.gmra.mxu0 %v9551
      %v9878 = vpop.f32.mrf.mxu0
      %v9879 = vadd.f32 0.0, %v9878
      %v9880 = vpop.f32.mrf.mxu0
      %v9881 = vadd.f32 0.0, %v9880
      %9882 = vmatmul.bf16.gmra.mxu0 %v9554
      %v9883 = vpop.f32.mrf.mxu0
      %v9884 = vadd.f32 0.0, %v9883
      %v9885 = vpop.f32.mrf.mxu0
      %v9886 = vadd.f32 0.0, %v9885
      %9887 = vmatmul.bf16.gmra.mxu0 %v9557
      %v9888 = vpop.f32.mrf.mxu0
      %v9889 = vadd.f32 0.0, %v9888
      %v9890 = vpop.f32.mrf.mxu0
      %v9891 = vadd.f32 0.0, %v9890
      %9892 = vmatmul.bf16.gmra.mxu0 %v9560
      %v9893 = vpop.f32.mrf.mxu0
      %v9894 = vadd.f32 0.0, %v9893
      %v9895 = vpop.f32.mrf.mxu0
      %v9896 = vadd.f32 0.0, %v9895
      %9897 = vmatmul.bf16.gmra.mxu0 %v9563
      %v9898 = vpop.f32.mrf.mxu0
      %v9899 = vadd.f32 0.0, %v9898
      %v9900 = vpop.f32.mrf.mxu0
      %v9901 = vadd.f32 0.0, %v9900
      %9902 = vmatmul.bf16.gmra.mxu0 %v9566
      %v9903 = vpop.f32.mrf.mxu0
      %v9904 = vadd.f32 0.0, %v9903
      %v9905 = vpop.f32.mrf.mxu0
      %v9906 = vadd.f32 0.0, %v9905
      %9907 = vmatmul.bf16.gmra.mxu0 %v9569
      %v9908 = vpop.f32.mrf.mxu0
      %v9909 = vadd.f32 0.0, %v9908
      %v9910 = vpop.f32.mrf.mxu0
      %v9911 = vadd.f32 0.0, %v9910
      %9912 = vmatmul.bf16.gmra.mxu0 %v9572
      %v9913 = vpop.f32.mrf.mxu0
      %v9914 = vadd.f32 0.0, %v9913
      %v9915 = vpop.f32.mrf.mxu0
      %v9916 = vadd.f32 0.0, %v9915
      %9917 = vmatmul.bf16.gmra.mxu0 %v9575
      %v9918 = vpop.f32.mrf.mxu0
      %v9919 = vadd.f32 0.0, %v9918
      %v9920 = vpop.f32.mrf.mxu0
      %v9921 = vadd.f32 0.0, %v9920
      %9922 = vmatmul.bf16.gmra.mxu0 %v9578
      %v9923 = vpop.f32.mrf.mxu0
      %v9924 = vadd.f32 0.0, %v9923
      %v9925 = vpop.f32.mrf.mxu0
      %v9926 = vadd.f32 0.0, %v9925
      %9927 = vmatmul.bf16.gmra.mxu0 %v9581
      %v9928 = vpop.f32.mrf.mxu0
      %v9929 = vadd.f32 0.0, %v9928
      %v9930 = vpop.f32.mrf.mxu0
      %v9931 = vadd.f32 0.0, %v9930
      %9932 = vmatmul.bf16.gmra.mxu0 %v9584
      %v9933 = vpop.f32.mrf.mxu0
      %v9934 = vadd.f32 0.0, %v9933
      %v9935 = vpop.f32.mrf.mxu0
      %v9936 = vadd.f32 0.0, %v9935
      %9937 = vdwg.mxu0
      %v9938 = vadd.f32 %v9103, %v9599
      %v9939 = vadd.f32 %v9104, %v9601
      %v9940 = vadd.f32 %v9105, %v9604
      %v9941 = vadd.f32 %v9106, %v9606
      %v9942 = vadd.f32 %v9107, %v9609
      %v9943 = vadd.f32 %v9108, %v9611
      %v9944 = vadd.f32 %v9109, %v9614
      %v9945 = vadd.f32 %v9110, %v9616
      %v9946 = vadd.f32 %v9111, %v9619
      %v9947 = vadd.f32 %v9112, %v9621
      %v9948 = vadd.f32 %v9113, %v9624
      %v9949 = vadd.f32 %v9114, %v9626
      %v9950 = vadd.f32 %v9115, %v9629
      %v9951 = vadd.f32 %v9116, %v9631
      %v9952 = vadd.f32 %v9117, %v9634
      %v9953 = vadd.f32 %v9118, %v9636
      %v9954 = vadd.f32 %v9119, %v9639
      %v9955 = vadd.f32 %v9120, %v9641
      %v9956 = vadd.f32 %v9121, %v9644
      %v9957 = vadd.f32 %v9122, %v9646
      %v9958 = vadd.f32 %v9123, %v9649
      %v9959 = vadd.f32 %v9124, %v9651
      %v9960 = vadd.f32 %v9125, %v9654
      %v9961 = vadd.f32 %v9126, %v9656
      %v9962 = vadd.f32 %v9127, %v9659
      %v9963 = vadd.f32 %v9128, %v9661
      %v9964 = vadd.f32 %v9129, %v9664
      %v9965 = vadd.f32 %v9130, %v9666
      %v9966 = vadd.f32 %v9131, %v9669
      %v9967 = vadd.f32 %v9132, %v9671
      %v9968 = vadd.f32 %v9133, %v9674
      %v9969 = vadd.f32 %v9134, %v9676
      %v9970 = vadd.f32 %v9135, %v9679
      %v9971 = vadd.f32 %v9136, %v9681
      %v9972 = vadd.f32 %v9137, %v9684
      %v9973 = vadd.f32 %v9138, %v9686
      %v9974 = vadd.f32 %v9139, %v9689
      %v9975 = vadd.f32 %v9140, %v9691
      %v9976 = vadd.f32 %v9141, %v9694
      %v9977 = vadd.f32 %v9142, %v9696
      %v9978 = vadd.f32 %v9143, %v9699
      %v9979 = vadd.f32 %v9144, %v9701
      %v9980 = vadd.f32 %v9145, %v9704
      %v9981 = vadd.f32 %v9146, %v9706
      %v9982 = vadd.f32 %v9147, %v9709
      %v9983 = vadd.f32 %v9148, %v9711
      %v9984 = vadd.f32 %v9149, %v9714
      %v9985 = vadd.f32 %v9150, %v9716
      %v9986 = vadd.f32 %v9151, %v9719
      %v9987 = vadd.f32 %v9152, %v9721
      %v9988 = vadd.f32 %v9153, %v9724
      %v9989 = vadd.f32 %v9154, %v9726
      %v9990 = vadd.f32 %v9155, %v9729
      %v9991 = vadd.f32 %v9156, %v9731
      %v9992 = vadd.f32 %v9157, %v9734
      %v9993 = vadd.f32 %v9158, %v9736
      %v9994 = vadd.f32 %v9159, %v9739
      %v9995 = vadd.f32 %v9160, %v9741
      %v9996 = vadd.f32 %v9161, %v9744
      %v9997 = vadd.f32 %v9162, %v9746
      %v9998 = vadd.f32 %v9163, %v9749
      %v9999 = vadd.f32 %v9164, %v9751
      %v10000 = vadd.f32 %v9165, %v9754
      %v10001 = vadd.f32 %v9166, %v9756
      %v10002 = vadd.f32 %v9167, %v9759
      %v10003 = vadd.f32 %v9168, %v9761
      %v10004 = vadd.f32 %v9169, %v9764
      %v10005 = vadd.f32 %v9170, %v9766
      %v10006 = vadd.f32 %v9171, %v9769
      %v10007 = vadd.f32 %v9172, %v9771
      %v10008 = vadd.f32 %v9173, %v9774
      %v10009 = vadd.f32 %v9174, %v9776
      %v10010 = vadd.f32 %v9175, %v9779
      %v10011 = vadd.f32 %v9176, %v9781
      %v10012 = vadd.f32 %v9177, %v9784
      %v10013 = vadd.f32 %v9178, %v9786
      %v10014 = vadd.f32 %v9179, %v9789
      %v10015 = vadd.f32 %v9180, %v9791
      %v10016 = vadd.f32 %v9181, %v9794
      %v10017 = vadd.f32 %v9182, %v9796
      %v10018 = vadd.f32 %v9183, %v9799
      %v10019 = vadd.f32 %v9184, %v9801
      %v10020 = vadd.f32 %v9185, %v9804
      %v10021 = vadd.f32 %v9186, %v9806
      %v10022 = vadd.f32 %v9187, %v9809
      %v10023 = vadd.f32 %v9188, %v9811
      %v10024 = vadd.f32 %v9189, %v9814
      %v10025 = vadd.f32 %v9190, %v9816
      %v10026 = vadd.f32 %v9191, %v9819
      %v10027 = vadd.f32 %v9192, %v9821
      %v10028 = vadd.f32 %v9193, %v9824
      %v10029 = vadd.f32 %v9194, %v9826
      %v10030 = vadd.f32 %v9195, %v9829
      %v10031 = vadd.f32 %v9196, %v9831
      %v10032 = vadd.f32 %v9197, %v9834
      %v10033 = vadd.f32 %v9198, %v9836
      %v10034 = vadd.f32 %v9199, %v9839
      %v10035 = vadd.f32 %v9200, %v9841
      %v10036 = vadd.f32 %v9201, %v9844
      %v10037 = vadd.f32 %v9202, %v9846
      %v10038 = vadd.f32 %v9203, %v9849
      %v10039 = vadd.f32 %v9204, %v9851
      %v10040 = vadd.f32 %v9205, %v9854
      %v10041 = vadd.f32 %v9206, %v9856
      %v10042 = vadd.f32 %v9207, %v9859
      %v10043 = vadd.f32 %v9208, %v9861
      %v10044 = vadd.f32 %v9209, %v9864
      %v10045 = vadd.f32 %v9210, %v9866
      %v10046 = vadd.f32 %v9211, %v9869
      %v10047 = vadd.f32 %v9212, %v9871
      %v10048 = vadd.f32 %v9213, %v9874
      %v10049 = vadd.f32 %v9214, %v9876
      %v10050 = vadd.f32 %v9215, %v9879
      %v10051 = vadd.f32 %v9216, %v9881
      %v10052 = vadd.f32 %v9217, %v9884
      %v10053 = vadd.f32 %v9218, %v9886
      %v10054 = vadd.f32 %v9219, %v9889
      %v10055 = vadd.f32 %v9220, %v9891
      %v10056 = vadd.f32 %v9221, %v9894
      %v10057 = vadd.f32 %v9222, %v9896
      %v10058 = vadd.f32 %v9223, %v9899
      %v10059 = vadd.f32 %v9224, %v9901
      %v10060 = vadd.f32 %v9225, %v9904
      %v10061 = vadd.f32 %v9226, %v9906
      %v10062 = vadd.f32 %v9227, %v9909
      %v10063 = vadd.f32 %v9228, %v9911
      %v10064 = vadd.f32 %v9229, %v9914
      %v10065 = vadd.f32 %v9230, %v9916
      %v10066 = vadd.f32 %v9231, %v9919
      %v10067 = vadd.f32 %v9232, %v9921
      %v10068 = vadd.f32 %v9233, %v9924
      %v10069 = vadd.f32 %v9234, %v9926
      %v10070 = vadd.f32 %v9235, %v9929
      %v10071 = vadd.f32 %v9236, %v9931
      %v10072 = vadd.f32 %v9237, %v9934
      %v10073 = vadd.f32 %v9238, %v9936
      %v10074 = vld [vmem:[%s2] sm:$0x1]
      %v10076 = vperm.slane %v10074, 0
      %v10078 = vadd.f32 %v9938, %v10076
      %v10079 = vadd.f32 %v9939, %v10076
      %v10080 = vadd.f32 %v9940, %v10076
      %v10081 = vadd.f32 %v9941, %v10076
      %v10082 = vadd.f32 %v9942, %v10076
      %v10083 = vadd.f32 %v9943, %v10076
      %v10084 = vadd.f32 %v9944, %v10076
      %v10085 = vadd.f32 %v9945, %v10076
      %v10086 = vadd.f32 %v9946, %v10076
      %v10087 = vadd.f32 %v9947, %v10076
      %v10088 = vadd.f32 %v9948, %v10076
      %v10089 = vadd.f32 %v9949, %v10076
      %v10090 = vadd.f32 %v9950, %v10076
      %v10091 = vadd.f32 %v9951, %v10076
      %v10092 = vadd.f32 %v9952, %v10076
      %v10093 = vadd.f32 %v9953, %v10076
      %v10094 = vadd.f32 %v9954, %v10076
      %v10095 = vadd.f32 %v9955, %v10076
      %v10096 = vadd.f32 %v9956, %v10076
      %v10097 = vadd.f32 %v9957, %v10076
      %v10098 = vadd.f32 %v9958, %v10076
      %v10099 = vadd.f32 %v9959, %v10076
      %v10100 = vadd.f32 %v9960, %v10076
      %v10101 = vadd.f32 %v9961, %v10076
      %v10102 = vadd.f32 %v9962, %v10076
      %v10103 = vadd.f32 %v9963, %v10076
      %v10104 = vadd.f32 %v9964, %v10076
      %v10105 = vadd.f32 %v9965, %v10076
      %v10106 = vadd.f32 %v9966, %v10076
      %v10107 = vadd.f32 %v9967, %v10076
      %v10108 = vadd.f32 %v9968, %v10076
      %v10109 = vadd.f32 %v9969, %v10076
      %v10110 = vadd.f32 %v9970, %v10076
      %v10111 = vadd.f32 %v9971, %v10076
      %v10112 = vadd.f32 %v9972, %v10076
      %v10113 = vadd.f32 %v9973, %v10076
      %v10114 = vadd.f32 %v9974, %v10076
      %v10115 = vadd.f32 %v9975, %v10076
      %v10116 = vadd.f32 %v9976, %v10076
      %v10117 = vadd.f32 %v9977, %v10076
      %v10118 = vadd.f32 %v9978, %v10076
      %v10119 = vadd.f32 %v9979, %v10076
      %v10120 = vadd.f32 %v9980, %v10076
      %v10121 = vadd.f32 %v9981, %v10076
      %v10122 = vadd.f32 %v9982, %v10076
      %v10123 = vadd.f32 %v9983, %v10076
      %v10124 = vadd.f32 %v9984, %v10076
      %v10125 = vadd.f32 %v9985, %v10076
      %v10126 = vadd.f32 %v9986, %v10076
      %v10127 = vadd.f32 %v9987, %v10076
      %v10128 = vadd.f32 %v9988, %v10076
      %v10129 = vadd.f32 %v9989, %v10076
      %v10130 = vadd.f32 %v9990, %v10076
      %v10131 = vadd.f32 %v9991, %v10076
      %v10132 = vadd.f32 %v9992, %v10076
      %v10133 = vadd.f32 %v9993, %v10076
      %v10134 = vadd.f32 %v9994, %v10076
      %v10135 = vadd.f32 %v9995, %v10076
      %v10136 = vadd.f32 %v9996, %v10076
      %v10137 = vadd.f32 %v9997, %v10076
      %v10138 = vadd.f32 %v9998, %v10076
      %v10139 = vadd.f32 %v9999, %v10076
      %v10140 = vadd.f32 %v10000, %v10076
      %v10141 = vadd.f32 %v10001, %v10076
      %v10142 = vadd.f32 %v10002, %v10076
      %v10143 = vadd.f32 %v10003, %v10076
      %v10144 = vadd.f32 %v10004, %v10076
      %v10145 = vadd.f32 %v10005, %v10076
      %v10146 = vadd.f32 %v10006, %v10076
      %v10147 = vadd.f32 %v10007, %v10076
      %v10148 = vadd.f32 %v10008, %v10076
      %v10149 = vadd.f32 %v10009, %v10076
      %v10150 = vadd.f32 %v10010, %v10076
      %v10151 = vadd.f32 %v10011, %v10076
      %v10152 = vadd.f32 %v10012, %v10076
      %v10153 = vadd.f32 %v10013, %v10076
      %v10154 = vadd.f32 %v10014, %v10076
      %v10155 = vadd.f32 %v10015, %v10076
      %v10156 = vadd.f32 %v10016, %v10076
      %v10157 = vadd.f32 %v10017, %v10076
      %v10158 = vadd.f32 %v10018, %v10076
      %v10159 = vadd.f32 %v10019, %v10076
      %v10160 = vadd.f32 %v10020, %v10076
      %v10161 = vadd.f32 %v10021, %v10076
      %v10162 = vadd.f32 %v10022, %v10076
      %v10163 = vadd.f32 %v10023, %v10076
      %v10164 = vadd.f32 %v10024, %v10076
      %v10165 = vadd.f32 %v10025, %v10076
      %v10166 = vadd.f32 %v10026, %v10076
      %v10167 = vadd.f32 %v10027, %v10076
      %v10168 = vadd.f32 %v10028, %v10076
      %v10169 = vadd.f32 %v10029, %v10076
      %v10170 = vadd.f32 %v10030, %v10076
      %v10171 = vadd.f32 %v10031, %v10076
      %v10172 = vadd.f32 %v10032, %v10076
      %v10173 = vadd.f32 %v10033, %v10076
      %v10174 = vadd.f32 %v10034, %v10076
      %v10175 = vadd.f32 %v10035, %v10076
      %v10176 = vadd.f32 %v10036, %v10076
      %v10177 = vadd.f32 %v10037, %v10076
      %v10178 = vadd.f32 %v10038, %v10076
      %v10179 = vadd.f32 %v10039, %v10076
      %v10180 = vadd.f32 %v10040, %v10076
      %v10181 = vadd.f32 %v10041, %v10076
      %v10182 = vadd.f32 %v10042, %v10076
      %v10183 = vadd.f32 %v10043, %v10076
      %v10184 = vadd.f32 %v10044, %v10076
      %v10185 = vadd.f32 %v10045, %v10076
      %v10186 = vadd.f32 %v10046, %v10076
      %v10187 = vadd.f32 %v10047, %v10076
      %v10188 = vadd.f32 %v10048, %v10076
      %v10189 = vadd.f32 %v10049, %v10076
      %v10190 = vadd.f32 %v10050, %v10076
      %v10191 = vadd.f32 %v10051, %v10076
      %v10192 = vadd.f32 %v10052, %v10076
      %v10193 = vadd.f32 %v10053, %v10076
      %v10194 = vadd.f32 %v10054, %v10076
      %v10195 = vadd.f32 %v10055, %v10076
      %v10196 = vadd.f32 %v10056, %v10076
      %v10197 = vadd.f32 %v10057, %v10076
      %v10198 = vadd.f32 %v10058, %v10076
      %v10199 = vadd.f32 %v10059, %v10076
      %v10200 = vadd.f32 %v10060, %v10076
      %v10201 = vadd.f32 %v10061, %v10076
      %v10202 = vadd.f32 %v10062, %v10076
      %v10203 = vadd.f32 %v10063, %v10076
      %v10204 = vadd.f32 %v10064, %v10076
      %v10205 = vadd.f32 %v10065, %v10076
      %v10206 = vadd.f32 %v10066, %v10076
      %v10207 = vadd.f32 %v10067, %v10076
      %v10208 = vadd.f32 %v10068, %v10076
      %v10209 = vadd.f32 %v10069, %v10076
      %v10210 = vadd.f32 %v10070, %v10076
      %v10211 = vadd.f32 %v10071, %v10076
      %v10212 = vadd.f32 %v10072, %v10076
      %v10213 = vadd.f32 %v10073, %v10076
      %v10214 = vmax.f32 %v10078, 0.0
      %v10215 = vmax.f32 %v10079, 0.0
      %v10216 = vmax.f32 %v10080, 0.0
      %v10217 = vmax.f32 %v10081, 0.0
      %v10218 = vmax.f32 %v10082, 0.0
      %v10219 = vmax.f32 %v10083, 0.0
      %v10220 = vmax.f32 %v10084, 0.0
      %v10221 = vmax.f32 %v10085, 0.0
      %v10222 = vmax.f32 %v10086, 0.0
      %v10223 = vmax.f32 %v10087, 0.0
      %v10224 = vmax.f32 %v10088, 0.0
      %v10225 = vmax.f32 %v10089, 0.0
      %v10226 = vmax.f32 %v10090, 0.0
      %v10227 = vmax.f32 %v10091, 0.0
      %v10228 = vmax.f32 %v10092, 0.0
      %v10229 = vmax.f32 %v10093, 0.0
      %v10230 = vmax.f32 %v10094, 0.0
      %v10231 = vmax.f32 %v10095, 0.0
      %v10232 = vmax.f32 %v10096, 0.0
      %v10233 = vmax.f32 %v10097, 0.0
      %v10234 = vmax.f32 %v10098, 0.0
      %v10235 = vmax.f32 %v10099, 0.0
      %v10236 = vmax.f32 %v10100, 0.0
      %v10237 = vmax.f32 %v10101, 0.0
      %v10238 = vmax.f32 %v10102, 0.0
      %v10239 = vmax.f32 %v10103, 0.0
      %v10240 = vmax.f32 %v10104, 0.0
      %v10241 = vmax.f32 %v10105, 0.0
      %v10242 = vmax.f32 %v10106, 0.0
      %v10243 = vmax.f32 %v10107, 0.0
      %v10244 = vmax.f32 %v10108, 0.0
      %v10245 = vmax.f32 %v10109, 0.0
      %v10246 = vmax.f32 %v10110, 0.0
      %v10247 = vmax.f32 %v10111, 0.0
      %v10248 = vmax.f32 %v10112, 0.0
      %v10249 = vmax.f32 %v10113, 0.0
      %v10250 = vmax.f32 %v10114, 0.0
      %v10251 = vmax.f32 %v10115, 0.0
      %v10252 = vmax.f32 %v10116, 0.0
      %v10253 = vmax.f32 %v10117, 0.0
      %v10254 = vmax.f32 %v10118, 0.0
      %v10255 = vmax.f32 %v10119, 0.0
      %v10256 = vmax.f32 %v10120, 0.0
      %v10257 = vmax.f32 %v10121, 0.0
      %v10258 = vmax.f32 %v10122, 0.0
      %v10259 = vmax.f32 %v10123, 0.0
      %v10260 = vmax.f32 %v10124, 0.0
      %v10261 = vmax.f32 %v10125, 0.0
      %v10262 = vmax.f32 %v10126, 0.0
      %v10263 = vmax.f32 %v10127, 0.0
      %v10264 = vmax.f32 %v10128, 0.0
      %v10265 = vmax.f32 %v10129, 0.0
      %v10266 = vmax.f32 %v10130, 0.0
      %v10267 = vmax.f32 %v10131, 0.0
      %v10268 = vmax.f32 %v10132, 0.0
      %v10269 = vmax.f32 %v10133, 0.0
      %v10270 = vmax.f32 %v10134, 0.0
      %v10271 = vmax.f32 %v10135, 0.0
      %v10272 = vmax.f32 %v10136, 0.0
      %v10273 = vmax.f32 %v10137, 0.0
      %v10274 = vmax.f32 %v10138, 0.0
      %v10275 = vmax.f32 %v10139, 0.0
      %v10276 = vmax.f32 %v10140, 0.0
      %v10277 = vmax.f32 %v10141, 0.0
      %v10278 = vmax.f32 %v10142, 0.0
      %v10279 = vmax.f32 %v10143, 0.0
      %v10280 = vmax.f32 %v10144, 0.0
      %v10281 = vmax.f32 %v10145, 0.0
      %v10282 = vmax.f32 %v10146, 0.0
      %v10283 = vmax.f32 %v10147, 0.0
      %v10284 = vmax.f32 %v10148, 0.0
      %v10285 = vmax.f32 %v10149, 0.0
      %v10286 = vmax.f32 %v10150, 0.0
      %v10287 = vmax.f32 %v10151, 0.0
      %v10288 = vmax.f32 %v10152, 0.0
      %v10289 = vmax.f32 %v10153, 0.0
      %v10290 = vmax.f32 %v10154, 0.0
      %v10291 = vmax.f32 %v10155, 0.0
      %v10292 = vmax.f32 %v10156, 0.0
      %v10293 = vmax.f32 %v10157, 0.0
      %v10294 = vmax.f32 %v10158, 0.0
      %v10295 = vmax.f32 %v10159, 0.0
      %v10296 = vmax.f32 %v10160, 0.0
      %v10297 = vmax.f32 %v10161, 0.0
      %v10298 = vmax.f32 %v10162, 0.0
      %v10299 = vmax.f32 %v10163, 0.0
      %v10300 = vmax.f32 %v10164, 0.0
      %v10301 = vmax.f32 %v10165, 0.0
      %v10302 = vmax.f32 %v10166, 0.0
      %v10303 = vmax.f32 %v10167, 0.0
      %v10304 = vmax.f32 %v10168, 0.0
      %v10305 = vmax.f32 %v10169, 0.0
      %v10306 = vmax.f32 %v10170, 0.0
      %v10307 = vmax.f32 %v10171, 0.0
      %v10308 = vmax.f32 %v10172, 0.0
      %v10309 = vmax.f32 %v10173, 0.0
      %v10310 = vmax.f32 %v10174, 0.0
      %v10311 = vmax.f32 %v10175, 0.0
      %v10312 = vmax.f32 %v10176, 0.0
      %v10313 = vmax.f32 %v10177, 0.0
      %v10314 = vmax.f32 %v10178, 0.0
      %v10315 = vmax.f32 %v10179, 0.0
      %v10316 = vmax.f32 %v10180, 0.0
      %v10317 = vmax.f32 %v10181, 0.0
      %v10318 = vmax.f32 %v10182, 0.0
      %v10319 = vmax.f32 %v10183, 0.0
      %v10320 = vmax.f32 %v10184, 0.0
      %v10321 = vmax.f32 %v10185, 0.0
      %v10322 = vmax.f32 %v10186, 0.0
      %v10323 = vmax.f32 %v10187, 0.0
      %v10324 = vmax.f32 %v10188, 0.0
      %v10325 = vmax.f32 %v10189, 0.0
      %v10326 = vmax.f32 %v10190, 0.0
      %v10327 = vmax.f32 %v10191, 0.0
      %v10328 = vmax.f32 %v10192, 0.0
      %v10329 = vmax.f32 %v10193, 0.0
      %v10330 = vmax.f32 %v10194, 0.0
      %v10331 = vmax.f32 %v10195, 0.0
      %v10332 = vmax.f32 %v10196, 0.0
      %v10333 = vmax.f32 %v10197, 0.0
      %v10334 = vmax.f32 %v10198, 0.0
      %v10335 = vmax.f32 %v10199, 0.0
      %v10336 = vmax.f32 %v10200, 0.0
      %v10337 = vmax.f32 %v10201, 0.0
      %v10338 = vmax.f32 %v10202, 0.0
      %v10339 = vmax.f32 %v10203, 0.0
      %v10340 = vmax.f32 %v10204, 0.0
      %v10341 = vmax.f32 %v10205, 0.0
      %v10342 = vmax.f32 %v10206, 0.0
      %v10343 = vmax.f32 %v10207, 0.0
      %v10344 = vmax.f32 %v10208, 0.0
      %v10345 = vmax.f32 %v10209, 0.0
      %v10346 = vmax.f32 %v10210, 0.0
      %v10347 = vmax.f32 %v10211, 0.0
      %v10348 = vmax.f32 %v10212, 0.0
      %v10349 = vmax.f32 %v10213, 0.0
      %v10350 = vpack.c.bf16 %v10214, %v10214
      %v10351 = vpack.c.bf16 %v10215, %v10215
      %v10352 = vpack.c.bf16 %v10216, %v10216
      %v10353 = vpack.c.bf16 %v10217, %v10217
      %v10354 = vpack.c.bf16 %v10218, %v10218
      %v10355 = vpack.c.bf16 %v10219, %v10219
      %v10356 = vpack.c.bf16 %v10220, %v10220
      %v10357 = vpack.c.bf16 %v10221, %v10221
      %v10358 = vpack.c.bf16 %v10222, %v10222
      %v10359 = vpack.c.bf16 %v10223, %v10223
      %v10360 = vpack.c.bf16 %v10224, %v10224
      %v10361 = vpack.c.bf16 %v10225, %v10225
      %v10362 = vpack.c.bf16 %v10226, %v10226
      %v10363 = vpack.c.bf16 %v10227, %v10227
      %v10364 = vpack.c.bf16 %v10228, %v10228
      %v10365 = vpack.c.bf16 %v10229, %v10229
      %v10366 = vpack.c.bf16 %v10230, %v10230
      %v10367 = vpack.c.bf16 %v10231, %v10231
      %v10368 = vpack.c.bf16 %v10232, %v10232
      %v10369 = vpack.c.bf16 %v10233, %v10233
      %v10370 = vpack.c.bf16 %v10234, %v10234
      %v10371 = vpack.c.bf16 %v10235, %v10235
      %v10372 = vpack.c.bf16 %v10236, %v10236
      %v10373 = vpack.c.bf16 %v10237, %v10237
      %v10374 = vpack.c.bf16 %v10238, %v10238
      %v10375 = vpack.c.bf16 %v10239, %v10239
      %v10376 = vpack.c.bf16 %v10240, %v10240
      %v10377 = vpack.c.bf16 %v10241, %v10241
      %v10378 = vpack.c.bf16 %v10242, %v10242
      %v10379 = vpack.c.bf16 %v10243, %v10243
      %v10380 = vpack.c.bf16 %v10244, %v10244
      %v10381 = vpack.c.bf16 %v10245, %v10245
      %v10382 = vpack.c.bf16 %v10246, %v10246
      %v10383 = vpack.c.bf16 %v10247, %v10247
      %v10384 = vpack.c.bf16 %v10248, %v10248
      %v10385 = vpack.c.bf16 %v10249, %v10249
      %v10386 = vpack.c.bf16 %v10250, %v10250
      %v10387 = vpack.c.bf16 %v10251, %v10251
      %v10388 = vpack.c.bf16 %v10252, %v10252
      %v10389 = vpack.c.bf16 %v10253, %v10253
      %v10390 = vpack.c.bf16 %v10254, %v10254
      %v10391 = vpack.c.bf16 %v10255, %v10255
      %v10392 = vpack.c.bf16 %v10256, %v10256
      %v10393 = vpack.c.bf16 %v10257, %v10257
      %v10394 = vpack.c.bf16 %v10258, %v10258
      %v10395 = vpack.c.bf16 %v10259, %v10259
      %v10396 = vpack.c.bf16 %v10260, %v10260
      %v10397 = vpack.c.bf16 %v10261, %v10261
      %v10398 = vpack.c.bf16 %v10262, %v10262
      %v10399 = vpack.c.bf16 %v10263, %v10263
      %v10400 = vpack.c.bf16 %v10264, %v10264
      %v10401 = vpack.c.bf16 %v10265, %v10265
      %v10402 = vpack.c.bf16 %v10266, %v10266
      %v10403 = vpack.c.bf16 %v10267, %v10267
      %v10404 = vpack.c.bf16 %v10268, %v10268
      %v10405 = vpack.c.bf16 %v10269, %v10269
      %v10406 = vpack.c.bf16 %v10270, %v10270
      %v10407 = vpack.c.bf16 %v10271, %v10271
      %v10408 = vpack.c.bf16 %v10272, %v10272
      %v10409 = vpack.c.bf16 %v10273, %v10273
      %v10410 = vpack.c.bf16 %v10274, %v10274
      %v10411 = vpack.c.bf16 %v10275, %v10275
      %v10412 = vpack.c.bf16 %v10276, %v10276
      %v10413 = vpack.c.bf16 %v10277, %v10277
      %v10414 = vpack.c.bf16 %v10278, %v10278
      %v10415 = vpack.c.bf16 %v10279, %v10279
      %v10416 = vpack.c.bf16 %v10280, %v10280
      %v10417 = vpack.c.bf16 %v10281, %v10281
      %v10418 = vpack.c.bf16 %v10282, %v10282
      %v10419 = vpack.c.bf16 %v10283, %v10283
      %v10420 = vpack.c.bf16 %v10284, %v10284
      %v10421 = vpack.c.bf16 %v10285, %v10285
      %v10422 = vpack.c.bf16 %v10286, %v10286
      %v10423 = vpack.c.bf16 %v10287, %v10287
      %v10424 = vpack.c.bf16 %v10288, %v10288
      %v10425 = vpack.c.bf16 %v10289, %v10289
      %v10426 = vpack.c.bf16 %v10290, %v10290
      %v10427 = vpack.c.bf16 %v10291, %v10291
      %v10428 = vpack.c.bf16 %v10292, %v10292
      %v10429 = vpack.c.bf16 %v10293, %v10293
      %v10430 = vpack.c.bf16 %v10294, %v10294
      %v10431 = vpack.c.bf16 %v10295, %v10295
      %v10432 = vpack.c.bf16 %v10296, %v10296
      %v10433 = vpack.c.bf16 %v10297, %v10297
      %v10434 = vpack.c.bf16 %v10298, %v10298
      %v10435 = vpack.c.bf16 %v10299, %v10299
      %v10436 = vpack.c.bf16 %v10300, %v10300
      %v10437 = vpack.c.bf16 %v10301, %v10301
      %v10438 = vpack.c.bf16 %v10302, %v10302
      %v10439 = vpack.c.bf16 %v10303, %v10303
      %v10440 = vpack.c.bf16 %v10304, %v10304
      %v10441 = vpack.c.bf16 %v10305, %v10305
      %v10442 = vpack.c.bf16 %v10306, %v10306
      %v10443 = vpack.c.bf16 %v10307, %v10307
      %v10444 = vpack.c.bf16 %v10308, %v10308
      %v10445 = vpack.c.bf16 %v10309, %v10309
      %v10446 = vpack.c.bf16 %v10310, %v10310
      %v10447 = vpack.c.bf16 %v10311, %v10311
      %v10448 = vpack.c.bf16 %v10312, %v10312
      %v10449 = vpack.c.bf16 %v10313, %v10313
      %v10450 = vpack.c.bf16 %v10314, %v10314
      %v10451 = vpack.c.bf16 %v10315, %v10315
      %v10452 = vpack.c.bf16 %v10316, %v10316
      %v10453 = vpack.c.bf16 %v10317, %v10317
      %v10454 = vpack.c.bf16 %v10318, %v10318
      %v10455 = vpack.c.bf16 %v10319, %v10319
      %v10456 = vpack.c.bf16 %v10320, %v10320
      %v10457 = vpack.c.bf16 %v10321, %v10321
      %v10458 = vpack.c.bf16 %v10322, %v10322
      %v10459 = vpack.c.bf16 %v10323, %v10323
      %v10460 = vpack.c.bf16 %v10324, %v10324
      %v10461 = vpack.c.bf16 %v10325, %v10325
      %v10462 = vpack.c.bf16 %v10326, %v10326
      %v10463 = vpack.c.bf16 %v10327, %v10327
      %v10464 = vpack.c.bf16 %v10328, %v10328
      %v10465 = vpack.c.bf16 %v10329, %v10329
      %v10466 = vpack.c.bf16 %v10330, %v10330
      %v10467 = vpack.c.bf16 %v10331, %v10331
      %v10468 = vpack.c.bf16 %v10332, %v10332
      %v10469 = vpack.c.bf16 %v10333, %v10333
      %v10470 = vpack.c.bf16 %v10334, %v10334
      %v10471 = vpack.c.bf16 %v10335, %v10335
      %v10472 = vpack.c.bf16 %v10336, %v10336
      %v10473 = vpack.c.bf16 %v10337, %v10337
      %v10474 = vpack.c.bf16 %v10338, %v10338
      %v10475 = vpack.c.bf16 %v10339, %v10339
      %v10476 = vpack.c.bf16 %v10340, %v10340
      %v10477 = vpack.c.bf16 %v10341, %v10341
      %v10478 = vpack.c.bf16 %v10342, %v10342
      %v10479 = vpack.c.bf16 %v10343, %v10343
      %v10480 = vpack.c.bf16 %v10344, %v10344
      %v10481 = vpack.c.bf16 %v10345, %v10345
      %v10482 = vpack.c.bf16 %v10346, %v10346
      %v10483 = vpack.c.bf16 %v10347, %v10347
      %v10484 = vpack.c.bf16 %v10348, %v10348
      %v10485 = vpack.c.bf16 %v10349, %v10349
      %vm10486 = vcmask 519168
      %10487 = vst.msk [vmem:[%s170] sm:$0xf] %vm10486, %v10350
      %10488 = vst.msk [vmem:[%s170 + $0x4] sm:$0xf] %vm10486, %v10351
      %10489 = vst.msk [vmem:[%s170 + $0x8] sm:$0xf] %vm10486, %v10352
      %10490 = vst.msk [vmem:[%s170 + $0xc] sm:$0xf] %vm10486, %v10353
      %10491 = vst.msk [vmem:[%s170 + $0x10] sm:$0xf] %vm10486, %v10354
      %10492 = vst.msk [vmem:[%s170 + $0x14] sm:$0xf] %vm10486, %v10355
      %10493 = vst.msk [vmem:[%s170 + $0x18] sm:$0xf] %vm10486, %v10356
      %10494 = vst.msk [vmem:[%s170 + $0x1c] sm:$0xf] %vm10486, %v10357
      %10495 = vst.msk [vmem:[%s170 + $0x20] sm:$0xf] %vm10486, %v10358
      %10496 = vst.msk [vmem:[%s170 + $0x24] sm:$0xf] %vm10486, %v10359
      %10497 = vst.msk [vmem:[%s170 + $0x28] sm:$0xf] %vm10486, %v10360
      %10498 = vst.msk [vmem:[%s170 + $0x2c] sm:$0xf] %vm10486, %v10361
      %10499 = vst.msk [vmem:[%s170 + $0x30] sm:$0xf] %vm10486, %v10362
      %10500 = vst.msk [vmem:[%s170 + $0x34] sm:$0xf] %vm10486, %v10363
      %10501 = vst.msk [vmem:[%s170 + $0x38] sm:$0xf] %vm10486, %v10364
      %10502 = vst.msk [vmem:[%s170 + $0x3c] sm:$0xf] %vm10486, %v10365
      %10503 = vst.msk [vmem:[%s170 + $0x40] sm:$0xf] %vm10486, %v10366
      %10504 = vst.msk [vmem:[%s170 + $0x44] sm:$0xf] %vm10486, %v10367
      %10505 = vst.msk [vmem:[%s170 + $0x48] sm:$0xf] %vm10486, %v10368
      %10506 = vst.msk [vmem:[%s170 + $0x4c] sm:$0xf] %vm10486, %v10369
      %10507 = vst.msk [vmem:[%s170 + $0x50] sm:$0xf] %vm10486, %v10370
      %10508 = vst.msk [vmem:[%s170 + $0x54] sm:$0xf] %vm10486, %v10371
      %10509 = vst.msk [vmem:[%s170 + $0x58] sm:$0xf] %vm10486, %v10372
      %10510 = vst.msk [vmem:[%s170 + $0x5c] sm:$0xf] %vm10486, %v10373
      %10511 = vst.msk [vmem:[%s170 + $0x60] sm:$0xf] %vm10486, %v10374
      %10512 = vst.msk [vmem:[%s170 + $0x64] sm:$0xf] %vm10486, %v10375
      %10513 = vst.msk [vmem:[%s170 + $0x68] sm:$0xf] %vm10486, %v10376
      %10514 = vst.msk [vmem:[%s170 + $0x6c] sm:$0xf] %vm10486, %v10377
      %10515 = vst.msk [vmem:[%s170 + $0x70] sm:$0xf] %vm10486, %v10378
      %10516 = vst.msk [vmem:[%s170 + $0x74] sm:$0xf] %vm10486, %v10379
      %10517 = vst.msk [vmem:[%s170 + $0x78] sm:$0xf] %vm10486, %v10380
      %10518 = vst.msk [vmem:[%s170 + $0x7c] sm:$0xf] %vm10486, %v10381
      %10519 = vst.msk [vmem:[%s170 + $0x80] sm:$0xf] %vm10486, %v10382
      %10520 = vst.msk [vmem:[%s170 + $0x84] sm:$0xf] %vm10486, %v10383
      %10521 = vst.msk [vmem:[%s170 + $0x88] sm:$0xf] %vm10486, %v10384
      %10522 = vst.msk [vmem:[%s170 + $0x8c] sm:$0xf] %vm10486, %v10385
      %10523 = vst.msk [vmem:[%s170 + $0x90] sm:$0xf] %vm10486, %v10386
      %10524 = vst.msk [vmem:[%s170 + $0x94] sm:$0xf] %vm10486, %v10387
      %10525 = vst.msk [vmem:[%s170 + $0x98] sm:$0xf] %vm10486, %v10388
      %10526 = vst.msk [vmem:[%s170 + $0x9c] sm:$0xf] %vm10486, %v10389
      %10527 = vst.msk [vmem:[%s170 + $0xa0] sm:$0xf] %vm10486, %v10390
      %10528 = vst.msk [vmem:[%s170 + $0xa4] sm:$0xf] %vm10486, %v10391
      %10529 = vst.msk [vmem:[%s170 + $0xa8] sm:$0xf] %vm10486, %v10392
      %10530 = vst.msk [vmem:[%s170 + $0xac] sm:$0xf] %vm10486, %v10393
      %10531 = vst.msk [vmem:[%s170 + $0xb0] sm:$0xf] %vm10486, %v10394
      %10532 = vst.msk [vmem:[%s170 + $0xb4] sm:$0xf] %vm10486, %v10395
      %10533 = vst.msk [vmem:[%s170 + $0xb8] sm:$0xf] %vm10486, %v10396
      %10534 = vst.msk [vmem:[%s170 + $0xbc] sm:$0xf] %vm10486, %v10397
      %10535 = vst.msk [vmem:[%s170 + $0xc0] sm:$0xf] %vm10486, %v10398
      %10536 = vst.msk [vmem:[%s170 + $0xc4] sm:$0xf] %vm10486, %v10399
      %10537 = vst.msk [vmem:[%s170 + $0xc8] sm:$0xf] %vm10486, %v10400
      %10538 = vst.msk [vmem:[%s170 + $0xcc] sm:$0xf] %vm10486, %v10401
      %10539 = vst.msk [vmem:[%s170 + $0xd0] sm:$0xf] %vm10486, %v10402
      %10540 = vst.msk [vmem:[%s170 + $0xd4] sm:$0xf] %vm10486, %v10403
      %10541 = vst.msk [vmem:[%s170 + $0xd8] sm:$0xf] %vm10486, %v10404
      %10542 = vst.msk [vmem:[%s170 + $0xdc] sm:$0xf] %vm10486, %v10405
      %10543 = vst.msk [vmem:[%s170 + $0xe0] sm:$0xf] %vm10486, %v10406
      %10544 = vst.msk [vmem:[%s170 + $0xe4] sm:$0xf] %vm10486, %v10407
      %10545 = vst.msk [vmem:[%s170 + $0xe8] sm:$0xf] %vm10486, %v10408
      %10546 = vst.msk [vmem:[%s170 + $0xec] sm:$0xf] %vm10486, %v10409
      %10547 = vst.msk [vmem:[%s170 + $0xf0] sm:$0xf] %vm10486, %v10410
      %10548 = vst.msk [vmem:[%s170 + $0xf4] sm:$0xf] %vm10486, %v10411
      %10549 = vst.msk [vmem:[%s170 + $0xf8] sm:$0xf] %vm10486, %v10412
      %10550 = vst.msk [vmem:[%s170 + $0xfc] sm:$0xf] %vm10486, %v10413
      %10551 = vst.msk [vmem:[%s170 + $0x100] sm:$0xf] %vm10486, %v10414
      %10552 = vst.msk [vmem:[%s170 + $0x104] sm:$0xf] %vm10486, %v10415
      %10553 = vst.msk [vmem:[%s170 + $0x108] sm:$0xf] %vm10486, %v10416
      %10554 = vst.msk [vmem:[%s170 + $0x10c] sm:$0xf] %vm10486, %v10417
      %10555 = vst.msk [vmem:[%s170 + $0x110] sm:$0xf] %vm10486, %v10418
      %10556 = vst.msk [vmem:[%s170 + $0x114] sm:$0xf] %vm10486, %v10419
      %10557 = vst.msk [vmem:[%s170 + $0x118] sm:$0xf] %vm10486, %v10420
      %10558 = vst.msk [vmem:[%s170 + $0x11c] sm:$0xf] %vm10486, %v10421
      %10559 = vst.msk [vmem:[%s170 + $0x120] sm:$0xf] %vm10486, %v10422
      %10560 = vst.msk [vmem:[%s170 + $0x124] sm:$0xf] %vm10486, %v10423
      %10561 = vst.msk [vmem:[%s170 + $0x128] sm:$0xf] %vm10486, %v10424
      %10562 = vst.msk [vmem:[%s170 + $0x12c] sm:$0xf] %vm10486, %v10425
      %10563 = vst.msk [vmem:[%s170 + $0x130] sm:$0xf] %vm10486, %v10426
      %10564 = vst.msk [vmem:[%s170 + $0x134] sm:$0xf] %vm10486, %v10427
      %10565 = vst.msk [vmem:[%s170 + $0x138] sm:$0xf] %vm10486, %v10428
      %10566 = vst.msk [vmem:[%s170 + $0x13c] sm:$0xf] %vm10486, %v10429
      %10567 = vst.msk [vmem:[%s170 + $0x140] sm:$0xf] %vm10486, %v10430
      %10568 = vst.msk [vmem:[%s170 + $0x144] sm:$0xf] %vm10486, %v10431
      %10569 = vst.msk [vmem:[%s170 + $0x148] sm:$0xf] %vm10486, %v10432
      %10570 = vst.msk [vmem:[%s170 + $0x14c] sm:$0xf] %vm10486, %v10433
      %10571 = vst.msk [vmem:[%s170 + $0x150] sm:$0xf] %vm10486, %v10434
      %10572 = vst.msk [vmem:[%s170 + $0x154] sm:$0xf] %vm10486, %v10435
      %10573 = vst.msk [vmem:[%s170 + $0x158] sm:$0xf] %vm10486, %v10436
      %10574 = vst.msk [vmem:[%s170 + $0x15c] sm:$0xf] %vm10486, %v10437
      %10575 = vst.msk [vmem:[%s170 + $0x160] sm:$0xf] %vm10486, %v10438
      %10576 = vst.msk [vmem:[%s170 + $0x164] sm:$0xf] %vm10486, %v10439
      %10577 = vst.msk [vmem:[%s170 + $0x168] sm:$0xf] %vm10486, %v10440
      %10578 = vst.msk [vmem:[%s170 + $0x16c] sm:$0xf] %vm10486, %v10441
      %10579 = vst.msk [vmem:[%s170 + $0x170] sm:$0xf] %vm10486, %v10442
      %10580 = vst.msk [vmem:[%s170 + $0x174] sm:$0xf] %vm10486, %v10443
      %10581 = vst.msk [vmem:[%s170 + $0x178] sm:$0xf] %vm10486, %v10444
      %10582 = vst.msk [vmem:[%s170 + $0x17c] sm:$0xf] %vm10486, %v10445
      %10583 = vst.msk [vmem:[%s170 + $0x180] sm:$0xf] %vm10486, %v10446
      %10584 = vst.msk [vmem:[%s170 + $0x184] sm:$0xf] %vm10486, %v10447
      %10585 = vst.msk [vmem:[%s170 + $0x188] sm:$0xf] %vm10486, %v10448
      %10586 = vst.msk [vmem:[%s170 + $0x18c] sm:$0xf] %vm10486, %v10449
      %10587 = vst.msk [vmem:[%s170 + $0x190] sm:$0xf] %vm10486, %v10450
      %10588 = vst.msk [vmem:[%s170 + $0x194] sm:$0xf] %vm10486, %v10451
      %10589 = vst.msk [vmem:[%s170 + $0x198] sm:$0xf] %vm10486, %v10452
      %10590 = vst.msk [vmem:[%s170 + $0x19c] sm:$0xf] %vm10486, %v10453
      %10591 = vst.msk [vmem:[%s170 + $0x1a0] sm:$0xf] %vm10486, %v10454
      %10592 = vst.msk [vmem:[%s170 + $0x1a4] sm:$0xf] %vm10486, %v10455
      %10593 = vst.msk [vmem:[%s170 + $0x1a8] sm:$0xf] %vm10486, %v10456
      %10594 = vst.msk [vmem:[%s170 + $0x1ac] sm:$0xf] %vm10486, %v10457
      %10595 = vst.msk [vmem:[%s170 + $0x1b0] sm:$0xf] %vm10486, %v10458
      %10596 = vst.msk [vmem:[%s170 + $0x1b4] sm:$0xf] %vm10486, %v10459
      %10597 = vst.msk [vmem:[%s170 + $0x1b8] sm:$0xf] %vm10486, %v10460
      %10598 = vst.msk [vmem:[%s170 + $0x1bc] sm:$0xf] %vm10486, %v10461
      %10599 = vst.msk [vmem:[%s170 + $0x1c0] sm:$0xf] %vm10486, %v10462
      %10600 = vst.msk [vmem:[%s170 + $0x1c4] sm:$0xf] %vm10486, %v10463
      %10601 = vst.msk [vmem:[%s170 + $0x1c8] sm:$0xf] %vm10486, %v10464
      %10602 = vst.msk [vmem:[%s170 + $0x1cc] sm:$0xf] %vm10486, %v10465
      %10603 = vst.msk [vmem:[%s170 + $0x1d0] sm:$0xf] %vm10486, %v10466
      %10604 = vst.msk [vmem:[%s170 + $0x1d4] sm:$0xf] %vm10486, %v10467
      %10605 = vst.msk [vmem:[%s170 + $0x1d8] sm:$0xf] %vm10486, %v10468
      %10606 = vst.msk [vmem:[%s170 + $0x1dc] sm:$0xf] %vm10486, %v10469
      %10607 = vst.msk [vmem:[%s170 + $0x1e0] sm:$0xf] %vm10486, %v10470
      %10608 = vst.msk [vmem:[%s170 + $0x1e4] sm:$0xf] %vm10486, %v10471
      %10609 = vst.msk [vmem:[%s170 + $0x1e8] sm:$0xf] %vm10486, %v10472
      %10610 = vst.msk [vmem:[%s170 + $0x1ec] sm:$0xf] %vm10486, %v10473
      %10611 = vst.msk [vmem:[%s170 + $0x1f0] sm:$0xf] %vm10486, %v10474
      %10612 = vst.msk [vmem:[%s170 + $0x1f4] sm:$0xf] %vm10486, %v10475
      %10613 = vst.msk [vmem:[%s170 + $0x1f8] sm:$0xf] %vm10486, %v10476
      %10614 = vst.msk [vmem:[%s170 + $0x1fc] sm:$0xf] %vm10486, %v10477
      %10615 = vst.msk [vmem:[%s170 + $0x200] sm:$0xf] %vm10486, %v10478
      %10616 = vst.msk [vmem:[%s170 + $0x204] sm:$0xf] %vm10486, %v10479
      %10617 = vst.msk [vmem:[%s170 + $0x208] sm:$0xf] %vm10486, %v10480
      %10618 = vst.msk [vmem:[%s170 + $0x20c] sm:$0xf] %vm10486, %v10481
      %10619 = vst.msk [vmem:[%s170 + $0x210] sm:$0xf] %vm10486, %v10482
      %10620 = vst.msk [vmem:[%s170 + $0x214] sm:$0xf] %vm10486, %v10483
      %10621 = vst.msk [vmem:[%s170 + $0x218] sm:$0xf] %vm10486, %v10484
      %10622 = vst.msk [vmem:[%s170 + $0x21c] sm:$0xf] %vm10486, %v10485
      %p10623 = scmp.lt.s32.totalorder %s14, 1
      %s10624 = scalar_select %p10623, %s14, 1
      %s10625 = smul.addr %s10624, 136
      %s10626 = smul.addr %s10625, 4
      %s10627 = scalar_lea.vmem %s3, %s10626
      // Predicated region
      $region33: #{tpu_custom_call.1} parent=31 // pred_check
        %p10628 = pneg %p100
      $region34: #{tpu_custom_call.1} parent=31 // pred_check_branch
        %10630 = sbr.rel (%p10628) target = $region36
      $region35: #{tpu_custom_call.1} parent=31 // pred_region
        _
      $region36: #{tpu_custom_call.1} parent=31 // pred_fallthru
        _
    $region32: #{tpu_custom_call.1} parent=5 // pred_fallthru
      _
    %p10631 = scmp.le.s32.totalorder 2, %s9
    // Predicated region
    $region37: #{tpu_custom_call.1} parent=5 // pred_check
      %p10632 = pneg %p10631
    $region38: #{tpu_custom_call.1} parent=5 // pred_check_branch
      %10634 = sbr.rel (%p10632) target = $region40
    $region39: #{tpu_custom_call.1} parent=5 // pred_region
      %s10635 = ssub.s32 %s9, 2
      // Predicated region
      $region41: #{tpu_custom_call.1} parent=39 // pred_check
        %p10636 = pneg %p106
      $region42: #{tpu_custom_call.1} parent=39 // pred_check_branch
        %10638 = sbr.rel (%p10636) target = $region44
      $region43: #{tpu_custom_call.1} parent=39 // pred_region
        %p10639 = scmp.lt.s32.totalorder %s15, 1
        %s10640 = scalar_select %p10639, %s15, 1
        %s10641 = smul.addr %s10640, 136
        %s10642 = smul.addr %s10641, 4
        %s10643 = scalar_lea.vmem %s3, %s10642
      $region44: #{tpu_custom_call.1} parent=39 // pred_fallthru
        _
    $region40: #{tpu_custom_call.1} parent=5 // pred_fallthru
      _
  $region6: #{tpu_custom_call.1} parent=0 // loop_footer
    %s13 = sadd.s32 1, %s9
  $region7: #{tpu_custom_call.1} parent=0 // loop_footer_branch
    %8 = sbr.rel target = $region3
  $region8: #{tpu_custom_call.1} parent=0 // loop_exit
    _

</llo_original>
